<compile_context>
chip_gen: v5e
topology: v5e:2x2
jax: 0.10.0
libtpu: 0.0.40
codegen_flags: <defaults>
</compile_context>

<pallas_src>
import functools
import math

import numpy as np
import jax
import jax.numpy as jnp
from jax.experimental import pallas as pl
from jax.experimental.pallas import tpu as pltpu


def _round_up(a, b):
    return (a + b - 1) // b * b


@functools.lru_cache(maxsize=None)
def _vmem_limit_bytes():
    """Per-generation VMEM budget: ~3/4 of per-core VMEM, clamped to [48, 112] MiB."""
    try:
        cap = int(pltpu.get_tpu_info().vmem_capacity_bytes)
        if cap > 0:
            return max(48 * 1024 * 1024, min((cap * 3) // 4, 112 * 1024 * 1024))
    except Exception:
        pass
    return 48 * 1024 * 1024  # safe on v7x (64 MiB / TC) and v5e/v6e (128 MiB)


# ----------------------------------------------------------------------------
# Pallas kernels
# ----------------------------------------------------------------------------
def _conv_pool_kernel(p_ref, w1_ref, b1_ref, w2_ref, b2_ref, o_ref):
    """Fused conv1+ReLU+conv2+ReLU+2x2 maxpool on one row-tile of pooled positions.

    p_ref : (TILE_M, 128) bf16 -- lane-dense packed patches, col = quad*32 + tap
    w1_ref: (128, 1152) bf16   -- block-diag conv1-embedded filter (4 quadrant blocks)
    b1_ref: (1, 1152)   f32
    w2_ref: (1152, 256) bf16   -- block-diag conv2 filter (quad q -> cols q*64:(q+1)*64)
    b2_ref: (1, 64)     f32
    o_ref : (TILE_M, 64) bf16  -- pooled conv features, rows = (n, yo, xo)
    """
    h = jnp.dot(p_ref[...], w1_ref[...], preferred_element_type=jnp.float32) + b1_ref[...]
    h = jnp.maximum(h, 0.0).astype(jnp.bfloat16)           # relu(conv1) at 9 offsets, 4 quads
    z = jnp.dot(h, w2_ref[...], preferred_element_type=jnp.float32)   # (TILE_M, 256)
    half = z.shape[1] // 2
    m = jnp.maximum(z[:, :half], z[:, half:])               # max(q0,q2) | max(q1,q3)  (aligned)
    oc = m.shape[1] // 2
    zp = jnp.maximum(m[:, :oc], m[:, oc:])                  # full 2x2 max-pool (TILE_M, 64)
    o_ref[...] = jnp.maximum(zp + b2_ref[...], 0.0).astype(o_ref.dtype)


def _mlp_kernel(x_ref, w1_ref, b1_ref, w2_ref, b2_ref, o_ref):
    """Fused linear_1 + bias + ReLU + linear_2 + bias (output padded to 128 lanes)."""
    h = jnp.dot(x_ref[...], w1_ref[...], preferred_element_type=jnp.float32) + b1_ref[...]
    h = jnp.maximum(h, 0.0).astype(jnp.bfloat16)
    o = jnp.dot(h, w2_ref[...], preferred_element_type=jnp.float32) + b2_ref[...]
    o_ref[...] = o.astype(o_ref.dtype)


# ----------------------------------------------------------------------------
# Kernel wrappers
# ----------------------------------------------------------------------------
def conv_pool_stage(packed, w1_bd, b1_bd, w2_bd, b2):
    """packed: (M, 128) bf16 with M = N*144.  Returns (M, 64) bf16 pooled features."""
    M, KP = packed.shape
    KH = w1_bd.shape[1]          # 1152
    ZC = w2_bd.shape[1]          # 256
    OC = b2.shape[1]             # 64
    # Multi-sample tiles (~8 samples / 1152 rows); shrink so the grid has >= 2 steps
    # (v7x has 2 TensorCores) while keeping every tile a multiple of 8 sublanes.
    tile_m = min(1152, _round_up(max(-(-M // 2), 8), 8))
    mpad = _round_up(M, tile_m)
    if mpad != M:
        packed = jnp.pad(packed, ((0, mpad - M), (0, 0)))
    out = pl.pallas_call(
        _conv_pool_kernel,
        out_shape=jax.ShapeDtypeStruct((mpad, OC), jnp.bfloat16),
        grid=(mpad // tile_m,),
        in_specs=[
            pl.BlockSpec((tile_m, KP), lambda i: (i, 0)),
            pl.BlockSpec((KP, KH), lambda i: (0, 0)),    # weights stay VMEM-resident
            pl.BlockSpec((1, KH), lambda i: (0, 0)),
            pl.BlockSpec((KH, ZC), lambda i: (0, 0)),
            pl.BlockSpec((1, OC), lambda i: (0, 0)),
        ],
        out_specs=pl.BlockSpec((tile_m, OC), lambda i: (i, 0)),
        compiler_params=pltpu.CompilerParams(
            dimension_semantics=("parallel",),
            vmem_limit_bytes=_vmem_limit_bytes(),
        ),
    )(packed, w1_bd, b1_bd, w2_bd, b2)
    return out[:M]


def mlp_stage(x, wl1, bl1, wl2, bl2):
    """x: (N, 9216) bf16 (NHWC-flatten order).  Returns (N, 128) f32 logits (padded)."""
    N, K = x.shape
    H = wl1.shape[1]             # 128
    O = wl2.shape[1]             # 128 (n_classes padded to lane-dense width)
    # Up to 256 samples / tile; aim for >= 2 grid steps when the batch allows it.
    tile_b = min(256, max(8, _round_up(-(-N // 2), 8)))
    npad = _round_up(N, tile_b)
    if npad != N:
        x = jnp.pad(x, ((0, npad - N), (0, 0)))
    out = pl.pallas_call(
        _mlp_kernel,
        out_shape=jax.ShapeDtypeStruct((npad, O), jnp.float32),
        grid=(npad // tile_b,),
        in_specs=[
            pl.BlockSpec((tile_b, K), lambda i: (i, 0)),
            pl.BlockSpec((K, H), lambda i: (0, 0)),
            pl.BlockSpec((1, H), lambda i: (0, 0)),
            pl.BlockSpec((H, O), lambda i: (0, 0)),
            pl.BlockSpec((1, O), lambda i: (0, 0)),
        ],
        out_specs=pl.BlockSpec((tile_b, O), lambda i: (i, 0)),
        compiler_params=pltpu.CompilerParams(
            dimension_semantics=("parallel",),
            vmem_limit_bytes=_vmem_limit_bytes(),
        ),
    )(x, wl1, bl1, wl2, bl2)
    return out[:N]


# ----------------------------------------------------------------------------
# XLA glue: lane-dense packed 5x5 patches (~37 KB/sample bf16, 128-lane minor dim)
# ----------------------------------------------------------------------------
def _build_packed_patches(x2):
    """x2: (N, 28, 28) -> (N*144, 128) bf16.

    Row (n, yo, xo); column quad*32 + (p*5+q) with quad = a*2 + b holds
    x[n, a + 2*yo + p, b + 2*xo + q]  (taps 25..31 of each quadrant block are zero).
    Grouping by pooling quadrant lets the kernel realize the 2x2 max-pool as an
    elementwise max over column blocks (no strided/reshape ops in-kernel).
    """
    N = x2.shape[0]
    x2b = x2.astype(jnp.bfloat16)        # cast before slicing: halves glue HBM traffic
    quads = []
    for a in range(2):
        for b in range(2):
            taps = [x2b[:, a + p:a + p + 23:2, b + q:b + q + 23:2]
                    for p in range(5) for q in range(5)]
            quad = jnp.stack(taps, axis=-1)                               # (N, 12, 12, 25)
            quads.append(jnp.pad(quad, ((0, 0), (0, 0), (0, 0), (0, 7)))) # taps 25 -> 32
    packed = jnp.concatenate(quads, axis=-1)                              # (N, 12, 12, 128)
    return packed.reshape(N * 144, 128)


# ----------------------------------------------------------------------------
# Parameter initialization (matches CNN_DropOut.weight_reinit / nn.Linear defaults)
# ----------------------------------------------------------------------------
def init_params(key, only_digits=True, input_dim=1):
    n_classes = 10 if only_digits else 62
    k = jax.random.split(key, 6)

    std1 = math.sqrt(2.0 / (3 * 3 * 32))
    std2 = math.sqrt(2.0 / (3 * 3 * 64))
    w1 = std1 * jax.random.normal(k[0], (32, input_dim, 3, 3), jnp.float32)
    b1 = jnp.zeros((32,), jnp.float32)
    w2 = std2 * jax.random.normal(k[1], (64, 32, 3, 3), jnp.float32)
    b2 = jnp.zeros((64,), jnp.float32)

    bnd1 = 1.0 / math.sqrt(9216)
    wl1 = jax.random.uniform(k[2], (128, 9216), jnp.float32, -bnd1, bnd1)
    bl1 = jax.random.uniform(k[3], (128,), jnp.float32, -bnd1, bnd1)
    bnd2 = 1.0 / math.sqrt(128)
    wl2 = jax.random.uniform(k[4], (n_classes, 128), jnp.float32, -bnd2, bnd2)
    bl2 = jax.random.uniform(k[5], (n_classes,), jnp.float32, -bnd2, bnd2)

    return dict(w1=w1, b1=b1, w2=w2, b2=b2, wl1=wl1, bl1=bl1, wl2=wl2, bl2=bl2)


# ----------------------------------------------------------------------------
# One-time weight preparation (outside the jitted forward): fold conv1 into the
# conv2 matmul, build block-diagonal quadrant weights, permute/pad/cast everything.
# ----------------------------------------------------------------------------
def prepare_params(params):
    w1 = np.asarray(params["w1"], np.float32)    # (32, 1, 3, 3)
    b1 = np.asarray(params["b1"], np.float32)    # (32,)
    w2 = np.asarray(params["w2"], np.float32)    # (64, 32, 3, 3)
    b2 = np.asarray(params["b2"], np.float32)    # (64,)
    wl1 = np.asarray(params["wl1"], np.float32)  # (128, 9216)
    bl1 = np.asarray(params["bl1"], np.float32)  # (128,)
    wl2 = np.asarray(params["wl2"], np.float32)  # (nc, 128)
    bl2 = np.asarray(params["bl2"], np.float32)  # (nc,)

    assert w1.shape[1] == 1  # TODO(synk): input_dim > 1 not supported by the fused conv kernel.
    oc1 = w1.shape[0]        # 32
    oc2 = w2.shape[0]        # 64
    hd = wl1.shape[0]        # 128
    assert wl1.shape == (hd, oc2 * 12 * 12)

    # conv1 filter embedded in the 5x5 window at each of the 9 conv2 tap offsets.
    # Column index = t*oc1 + c1 with t = dy2*3 + dx2 ; row index = p*5 + q.
    w1cat = np.zeros((25, 9, oc1), np.float32)
    for t in range(9):
        dy2, dx2 = t // 3, t % 3
        for dy in range(3):
            for dx in range(3):
                w1cat[(dy2 + dy) * 5 + (dx2 + dx), t, :] = w1[:, 0, dy, dx]
    w1cat = w1cat.reshape(25, 9 * oc1)                            # (25, 288)
    b1cat = np.tile(b1, 9)                                        # (288,)

    # conv2 filter with rows ordered (tap, c1) to match w1cat's columns.
    w2cat = np.transpose(w2, (2, 3, 1, 0)).reshape(9 * oc1, oc2)  # (288, 64)

    # Block-diagonal embedding over the 4 pooling quadrants (lane-dense packed patches):
    #   patches column layout: quad*32 + tap  (taps 25..31 zero-padded)
    #   w1_bd: rows q*32+tap -> cols q*288:(q+1)*288 ; w2_bd: rows q*288.. -> cols q*64..
    kh = 9 * oc1                                                  # 288
    w1_bd = np.zeros((128, 4 * kh), np.float32)                   # (128, 1152)
    w2_bd = np.zeros((4 * kh, 4 * oc2), np.float32)               # (1152, 256)
    for q in range(4):
        w1_bd[q * 32:q * 32 + 25, q * kh:(q + 1) * kh] = w1cat
        w2_bd[q * kh:(q + 1) * kh, q * oc2:(q + 1) * oc2] = w2cat
    b1_bd = np.tile(b1cat, 4).reshape(1, 4 * kh)                  # (1, 1152)

    # linear_1: permute K from NCHW-flatten (c,h,w) to NHWC-flatten (h,w,c); transpose to (K, H).
    wl1k = wl1.reshape(hd, oc2, 12, 12).transpose(2, 3, 1, 0).reshape(oc2 * 144, hd)

    # linear_2: transpose to (H, nc) and pad n_classes up to a lane-dense 128.
    nc = wl2.shape[0]
    ocp = _round_up(max(nc, 128), 128)
    wl2k = np.zeros((hd, ocp), np.float32)
    wl2k[:, :nc] = wl2.T
    bl2k = np.zeros((1, ocp), np.float32)
    bl2k[0, :nc] = bl2

    f32, bf16 = jnp.float32, jnp.bfloat16
    return dict(
        w1_bd=jnp.asarray(w1_bd, bf16), b1_bd=jnp.asarray(b1_bd, f32),
        w2_bd=jnp.asarray(w2_bd, bf16), b2=jnp.asarray(b2.reshape(1, oc2), f32),
        wl1=jnp.asarray(wl1k, bf16), bl1=jnp.asarray(bl1.reshape(1, hd), f32),
        wl2=jnp.asarray(wl2k, bf16), bl2=jnp.asarray(bl2k, f32),
    )


# ----------------------------------------------------------------------------
# Forward pass (mirrors CNN_DropOut.forward, dropout = identity / eval mode)
# ----------------------------------------------------------------------------
@functools.partial(jax.jit, static_argnames=("n_classes",))
def cnn_dropout_forward(x, kparams, *, n_classes=10):
    if x.ndim == 3:                       # (N, 28, 28) -> add channel dim like the module
        x = x[:, None, :, :]
    N, C, H, W = x.shape
    assert C == 1 and H == 28 and W == 28, (N, C, H, W)
    x2 = x[:, 0, :, :]

    packed = _build_packed_patches(x2)                                 # (N*144, 128) bf16
    pooled = conv_pool_stage(packed, kparams["w1_bd"], kparams["b1_bd"],
                             kparams["w2_bd"], kparams["b2"])          # (N*144, 64) bf16
    # dropout_1: identity in eval mode.
    feat = pooled.reshape(N, 12 * 12 * 64)        # NHWC flatten; wl1 is pre-permuted to match
    logits = mlp_stage(feat, kparams["wl1"], kparams["bl1"],
                       kparams["wl2"], kparams["bl2"])                 # (N, 128) f32
    # dropout_2: identity in eval mode.
    return logits[:, :n_classes]


# ----------------------------------------------------------------------------
# Pure-XLA f32 reference (for a numerical sanity check only)
# ----------------------------------------------------------------------------
def reference_forward(x, params):
    if x.ndim == 3:
        x = x[:, None, :, :]
    x = x.astype(jnp.float32)
    dn = ("NCHW", "OIHW", "NCHW")
    y = jax.lax.conv_general_dilated(x, params["w1"], (1, 1), "VALID", dimension_numbers=dn)
    y = jax.nn.relu(y + params["b1"][None, :, None, None])
    y = jax.lax.conv_general_dilated(y, params["w2"], (1, 1), "VALID", dimension_numbers=dn)
    y = jax.nn.relu(y + params["b2"][None, :, None, None])
    N = y.shape[0]
    y = y.reshape(N, 64, 12, 2, 12, 2).max(axis=(3, 5))    # 2x2 max-pool, stride 2
    y = y.reshape(N, 9216)                                  # NCHW flatten
    y = jax.nn.relu(y @ params["wl1"].T + params["bl1"])
    return y @ params["wl2"].T + params["bl2"]


if __name__ == "__main__":
    key = jax.random.PRNGKey(0)
    pkey, xkey = jax.random.split(key)
    params = init_params(pkey, only_digits=True, input_dim=1)
    kparams = prepare_params(params)

    # Input must be 28x28 single-channel (linear_1 expects 9216 = 64*12*12).
    x = jax.random.normal(xkey, (2, 1, 28, 28), jnp.float32)

    out = cnn_dropout_forward(x, kparams, n_classes=10)
    out = jax.block_until_ready(out)
    assert out.shape == (2, 10), out.shape
    assert bool(jnp.all(jnp.isfinite(out)))

    # Loose-tolerance check against the f32 XLA reference (kernels use bf16 MXU inputs).
    ref = reference_forward(x, params)
    max_err = float(jnp.max(jnp.abs(out - ref)))
    assert max_err < 5e-2, f"max abs error vs reference: {max_err}"

    print("KERNEL_OK")
</pallas_src>

<mosaic_0001>
module attributes {stable_mosaic.version = 11 : i64} {
  func.func @_conv_pool_kernel(%arg0: i32, %arg1: memref<144x128xbf16, #tpu.memory_space<vmem>>, %arg2: memref<128x1152xbf16, #tpu.memory_space<vmem>>, %arg3: memref<1x1152xf32, #tpu.memory_space<vmem>>, %arg4: memref<1152x256xbf16, #tpu.memory_space<vmem>>, %arg5: memref<1x64xf32, #tpu.memory_space<vmem>>, %arg6: memref<144x64xbf16, #tpu.memory_space<vmem>>) attributes {dimension_semantics = [#tpu.dimension_semantics<parallel>], iteration_bounds = array<i64: 2>, scalar_prefetch = 0 : i64, scratch_operands = 0 : i64, tpu.core_type = #tpu.core_type<tc>, window_params = [{transform_indices = @transform_0, window_bounds = array<i64: 144, 128>}, {pipeline_mode = #tpu.pipeline_mode<synchronous>, transform_indices = @transform_1, window_bounds = array<i64: 128, 1152>}, {pipeline_mode = #tpu.pipeline_mode<synchronous>, transform_indices = @transform_2, window_bounds = array<i64: 1, 1152>}, {pipeline_mode = #tpu.pipeline_mode<synchronous>, transform_indices = @transform_3, window_bounds = array<i64: 1152, 256>}, {pipeline_mode = #tpu.pipeline_mode<synchronous>, transform_indices = @transform_4, window_bounds = array<i64: 1, 64>}, {transform_indices = @transform_5, window_bounds = array<i64: 144, 64>}]} {
    %c0 = arith.constant 0 : index
    %c0_0 = arith.constant 0 : index
    %0 = vector.load %arg1[%c0, %c0_0] : memref<144x128xbf16, #tpu.memory_space<vmem>>, vector<144x128xbf16>
    %c0_1 = arith.constant 0 : index
    %c0_2 = arith.constant 0 : index
    %1 = vector.load %arg2[%c0_1, %c0_2] : memref<128x1152xbf16, #tpu.memory_space<vmem>>, vector<128x1152xbf16>
    %cst = arith.constant dense<0.000000e+00> : vector<144x1152xf32>
    %2 = tpu.matmul %0, %1, %cst {dimension_numbers = #tpu.dot_dimension_numbers<[1], [0], [0], [1], [0, 0, 1, 1], [], []>} : vector<144x128xbf16>, vector<128x1152xbf16>, vector<144x1152xf32> -> vector<144x1152xf32>
    %c0_3 = arith.constant 0 : index
    %c0_4 = arith.constant 0 : index
    %3 = vector.load %arg3[%c0_3, %c0_4] : memref<1x1152xf32, #tpu.memory_space<vmem>>, vector<1x1152xf32>
    %4 = vector.broadcast %3 : vector<1x1152xf32> to vector<144x1152xf32>
    %5 = arith.addf %2, %4 : vector<144x1152xf32>
    %cst_5 = arith.constant 0.000000e+00 : f32
    %6 = vector.broadcast %cst_5 : f32 to vector<144x1152xf32>
    %7 = arith.maximumf %5, %6 : vector<144x1152xf32>
    %8 = arith.truncf %7 : vector<144x1152xf32> to vector<144x1152xbf16>
    %c0_6 = arith.constant 0 : index
    %c0_7 = arith.constant 0 : index
    %9 = vector.load %arg4[%c0_6, %c0_7] : memref<1152x256xbf16, #tpu.memory_space<vmem>>, vector<1152x256xbf16>
    %cst_8 = arith.constant dense<0.000000e+00> : vector<144x256xf32>
    %10 = tpu.matmul %8, %9, %cst_8 {dimension_numbers = #tpu.dot_dimension_numbers<[1], [0], [0], [1], [0, 0, 1, 1], [], []>} : vector<144x1152xbf16>, vector<1152x256xbf16>, vector<144x256xf32> -> vector<144x256xf32>
    %11 = vector.extract_strided_slice %10 {offsets = [0, 0], sizes = [144, 128], strides = [1, 1]} : vector<144x256xf32> to vector<144x128xf32>
    %12 = vector.extract_strided_slice %10 {offsets = [0, 128], sizes = [144, 128], strides = [1, 1]} : vector<144x256xf32> to vector<144x128xf32>
    %13 = arith.maximumf %11, %12 : vector<144x128xf32>
    %14 = vector.extract_strided_slice %13 {offsets = [0, 0], sizes = [144, 64], strides = [1, 1]} : vector<144x128xf32> to vector<144x64xf32>
    %15 = vector.extract_strided_slice %13 {offsets = [0, 64], sizes = [144, 64], strides = [1, 1]} : vector<144x128xf32> to vector<144x64xf32>
    %16 = arith.maximumf %14, %15 : vector<144x64xf32>
    %c0_9 = arith.constant 0 : index
    %c0_10 = arith.constant 0 : index
    %17 = vector.load %arg5[%c0_9, %c0_10] : memref<1x64xf32, #tpu.memory_space<vmem>>, vector<1x64xf32>
    %18 = vector.broadcast %17 : vector<1x64xf32> to vector<144x64xf32>
    %19 = arith.addf %16, %18 : vector<144x64xf32>
    %cst_11 = arith.constant 0.000000e+00 : f32
    %20 = vector.broadcast %cst_11 : f32 to vector<144x64xf32>
    %21 = arith.maximumf %19, %20 : vector<144x64xf32>
    %22 = arith.truncf %21 : vector<144x64xf32> to vector<144x64xbf16>
    %c0_12 = arith.constant 0 : index
    %c0_13 = arith.constant 0 : index
    %23 = vector.load %arg6[%c0_12, %c0_13] : memref<144x64xbf16, #tpu.memory_space<vmem>>, vector<144x64xbf16>
    tpu.vector_store %arg6[%c0_12, %c0_13], %22 {strides = array<i32>} : memref<144x64xbf16, #tpu.memory_space<vmem>>, vector<144x64xbf16>,
    return
  }
  func.func @transform_0(%arg0: i32) -> (i32, i32) {
    %c0_i32 = arith.constant 0 : i32
    %c0_i32_0 = arith.constant 0 : i32
    return %arg0, %c0_i32 : i32, i32
  }
  func.func @transform_1(%arg0: i32) -> (i32, i32) {
    %c0_i32 = arith.constant 0 : i32
    %c0_i32_0 = arith.constant 0 : i32
    %c0_i32_1 = arith.constant 0 : i32
    return %c0_i32, %c0_i32_0 : i32, i32
  }
  func.func @transform_2(%arg0: i32) -> (i32, i32) {
    %c0_i32 = arith.constant 0 : i32
    %c0_i32_0 = arith.constant 0 : i32
    %c0_i32_1 = arith.constant 0 : i32
    return %c0_i32, %c0_i32_0 : i32, i32
  }
  func.func @transform_3(%arg0: i32) -> (i32, i32) {
    %c0_i32 = arith.constant 0 : i32
    %c0_i32_0 = arith.constant 0 : i32
    %c0_i32_1 = arith.constant 0 : i32
    return %c0_i32, %c0_i32_0 : i32, i32
  }
  func.func @transform_4(%arg0: i32) -> (i32, i32) {
    %c0_i32 = arith.constant 0 : i32
    %c0_i32_0 = arith.constant 0 : i32
    %c0_i32_1 = arith.constant 0 : i32
    return %c0_i32, %c0_i32_0 : i32, i32
  }
  func.func @transform_5(%arg0: i32) -> (i32, i32) {
    %c0_i32 = arith.constant 0 : i32
    %c0_i32_0 = arith.constant 0 : i32
    return %arg0, %c0_i32 : i32, i32
  }
}

module attributes {stable_mosaic.version = 11 : i64} {
  func.func @_mlp_kernel(%arg0: i32, %arg1: memref<8x9216xbf16, #tpu.memory_space<vmem>>, %arg2: memref<9216x128xbf16, #tpu.memory_space<vmem>>, %arg3: memref<1x128xf32, #tpu.memory_space<vmem>>, %arg4: memref<128x128xbf16, #tpu.memory_space<vmem>>, %arg5: memref<1x128xf32, #tpu.memory_space<vmem>>, %arg6: memref<8x128xf32, #tpu.memory_space<vmem>>) attributes {dimension_semantics = [#tpu.dimension_semantics<parallel>], iteration_bounds = array<i64: 1>, scalar_prefetch = 0 : i64, scratch_operands = 0 : i64, tpu.core_type = #tpu.core_type<tc>, window_params = [{transform_indices = @transform_0, window_bounds = array<i64: 8, 9216>}, {pipeline_mode = #tpu.pipeline_mode<synchronous>, transform_indices = @transform_1, window_bounds = array<i64: 9216, 128>}, {pipeline_mode = #tpu.pipeline_mode<synchronous>, transform_indices = @transform_2, window_bounds = array<i64: 1, 128>}, {pipeline_mode = #tpu.pipeline_mode<synchronous>, transform_indices = @transform_3, window_bounds = array<i64: 128, 128>}, {pipeline_mode = #tpu.pipeline_mode<synchronous>, transform_indices = @transform_4, window_bounds = array<i64: 1, 128>}, {transform_indices = @transform_5, window_bounds = array<i64: 8, 128>}]} {
    %c0 = arith.constant 0 : index
    %c0_0 = arith.constant 0 : index
    %0 = vector.load %arg1[%c0, %c0_0] : memref<8x9216xbf16, #tpu.memory_space<vmem>>, vector<8x9216xbf16>
    %c0_1 = arith.constant 0 : index
    %c0_2 = arith.constant 0 : index
    %1 = vector.load %arg2[%c0_1, %c0_2] : memref<9216x128xbf16, #tpu.memory_space<vmem>>, vector<9216x128xbf16>
    %cst = arith.constant dense<0.000000e+00> : vector<8x128xf32>
    %2 = tpu.matmul %0, %1, %cst {dimension_numbers = #tpu.dot_dimension_numbers<[1], [0], [0], [1], [0, 0, 1, 1], [], []>} : vector<8x9216xbf16>, vector<9216x128xbf16>, vector<8x128xf32> -> vector<8x128xf32>
    %c0_3 = arith.constant 0 : index
    %c0_4 = arith.constant 0 : index
    %3 = vector.load %arg3[%c0_3, %c0_4] : memref<1x128xf32, #tpu.memory_space<vmem>>, vector<1x128xf32>
    %4 = vector.broadcast %3 : vector<1x128xf32> to vector<8x128xf32>
    %5 = arith.addf %2, %4 : vector<8x128xf32>
    %cst_5 = arith.constant 0.000000e+00 : f32
    %6 = vector.broadcast %cst_5 : f32 to vector<8x128xf32>
    %7 = arith.maximumf %5, %6 : vector<8x128xf32>
    %8 = arith.truncf %7 : vector<8x128xf32> to vector<8x128xbf16>
    %c0_6 = arith.constant 0 : index
    %c0_7 = arith.constant 0 : index
    %9 = vector.load %arg4[%c0_6, %c0_7] : memref<128x128xbf16, #tpu.memory_space<vmem>>, vector<128x128xbf16>
    %cst_8 = arith.constant dense<0.000000e+00> : vector<8x128xf32>
    %10 = tpu.matmul %8, %9, %cst_8 {dimension_numbers = #tpu.dot_dimension_numbers<[1], [0], [0], [1], [0, 0, 1, 1], [], []>} : vector<8x128xbf16>, vector<128x128xbf16>, vector<8x128xf32> -> vector<8x128xf32>
    %c0_9 = arith.constant 0 : index
    %c0_10 = arith.constant 0 : index
    %11 = vector.load %arg5[%c0_9, %c0_10] : memref<1x128xf32, #tpu.memory_space<vmem>>, vector<1x128xf32>
    %12 = vector.broadcast %11 : vector<1x128xf32> to vector<8x128xf32>
    %13 = arith.addf %10, %12 : vector<8x128xf32>
    %c0_11 = arith.constant 0 : index
    %c0_12 = arith.constant 0 : index
    %14 = vector.load %arg6[%c0_11, %c0_12] : memref<8x128xf32, #tpu.memory_space<vmem>>, vector<8x128xf32>
    tpu.vector_store %arg6[%c0_11, %c0_12], %13 {strides = array<i32>} : memref<8x128xf32, #tpu.memory_space<vmem>>, vector<8x128xf32>,
    return
  }
  func.func @transform_0(%arg0: i32) -> (i32, i32) {
    %c0_i32 = arith.constant 0 : i32
    %c0_i32_0 = arith.constant 0 : i32
    return %arg0, %c0_i32 : i32, i32
  }
  func.func @transform_1(%arg0: i32) -> (i32, i32) {
    %c0_i32 = arith.constant 0 : i32
    %c0_i32_0 = arith.constant 0 : i32
    %c0_i32_1 = arith.constant 0 : i32
    return %c0_i32, %c0_i32_0 : i32, i32
  }
  func.func @transform_2(%arg0: i32) -> (i32, i32) {
    %c0_i32 = arith.constant 0 : i32
    %c0_i32_0 = arith.constant 0 : i32
    %c0_i32_1 = arith.constant 0 : i32
    return %c0_i32, %c0_i32_0 : i32, i32
  }
  func.func @transform_3(%arg0: i32) -> (i32, i32) {
    %c0_i32 = arith.constant 0 : i32
    %c0_i32_0 = arith.constant 0 : i32
    %c0_i32_1 = arith.constant 0 : i32
    return %c0_i32, %c0_i32_0 : i32, i32
  }
  func.func @transform_4(%arg0: i32) -> (i32, i32) {
    %c0_i32 = arith.constant 0 : i32
    %c0_i32_0 = arith.constant 0 : i32
    %c0_i32_1 = arith.constant 0 : i32
    return %c0_i32, %c0_i32_0 : i32, i32
  }
  func.func @transform_5(%arg0: i32) -> (i32, i32) {
    %c0_i32 = arith.constant 0 : i32
    %c0_i32_0 = arith.constant 0 : i32
    return %arg0, %c0_i32 : i32, i32
  }
}

</mosaic_0001>

<llo_original>
// kernel: cnn_dropout_forward.2
$region0: #{cnn_dropout_forward.2}
  #allocation0 [shape = 'u32[]', space=smem, size = 0x4, offset = 0x4, fixed_abs, tag = 'smem constant byte address 0x4 - core index']
  #allocation1 [shape = 'u32[72,128]{1,0:T(1,128)}', space=vmem, size = 0x9000, scoped, tag = 'internal scratch']
  %s0 = inlined_call_operand.vmem [shape: bf16[288,128], index: 0, kind: input, shape index: {}]
  %s1 = inlined_call_operand.vmem [shape: bf16[128,1152], index: 1, kind: input, shape index: {}]
  %s2 = inlined_call_operand.vmem [shape: f32[1,1152], index: 2, kind: input, shape index: {}]
  %s3 = inlined_call_operand.vmem [shape: bf16[1152,256], index: 3, kind: input, shape index: {}]
  %s4 = inlined_call_operand.vmem [shape: f32[1,64], index: 4, kind: input, shape index: {}]
  %s5 = inlined_call_operand.vmem [shape: bf16[288,64], index: 5, kind: output, shape index: {}]
  %s6 = sld [smem:[#allocation0]]
  $region53: #{cnn_dropout_forward.2} parent=0
    _
  %s8 = ssub.s32 1, %s6
  %s9 = scalar_select 0, %s8, %s6
  loop: start=0, step=1, limit=4
  $region2: #{cnn_dropout_forward.2} parent=0 // loop_pre_header
    _
  $region3: #{cnn_dropout_forward.2} parent=0 // loop_header
    %s11 = sphi 0, %s15
    %p12 = scmp.ge.s32.totalorder %s11, 4
    %s21 = sphi 0, %s23
    %s24 = sphi 0, %s21
    %s25 = sphi 0, %s24
    %s41 = sphi 0, %s25
    %s45 = sphi 0, %s45
    %s47 = sphi 0, %s45
    %s48 = sphi 0, %s47
    %s62 = sphi 0, %s48
    %s66 = sphi 0, %s66
    %s68 = sphi 0, %s66
    %s69 = sphi 0, %s68
    %s83 = sphi 0, %s69
    %s87 = sphi 0, %s87
    %s89 = sphi 0, %s87
    %s90 = sphi 0, %s89
    %s104 = sphi 0, %s90
    %s108 = sphi 0, %s108
    %s110 = sphi 0, %s108
    %s111 = sphi 0, %s110
    %s125 = sphi 0, %s111
    %s131 = sphi 0, %s133
    %s134 = sphi 0, %s131
    %s135 = sphi 0, %s134
    %s151 = sphi 0, %s135
  $region4: #{cnn_dropout_forward.2} parent=0 // loop_header_branch
    %14 = sbr.rel (%p12) target = $region8
  $region5: #{cnn_dropout_forward.2} parent=0 // loop_body
    %s16 = ssub.s32 %s11, 1
    %s17 = ssub.s32 %s11, 2
    %s18 = sadd.s32 %s11, 1
    %s19 = ssub.s32 %s11, %s18
    %p20 = scmp.eq.s32.totalorder %s19, 0
    %s22 = sadd.s32 %s21, 1
    %s23 = scalar_select %p20, %s21, %s22
    %p26 = pneg %p20
    %p27 = scmp.eq.s32.totalorder %s11, 1
    %p28 = por %p26, %p27
    %p29 = scmp.ne.s32.totalorder %s21, %s24
    %p30 = scmp.eq.s32.totalorder %s11, 0
    %p31 = por %p29, %p30
    %p32 = scmp.ne.s32.totalorder %s21, %s24
    %p33 = scmp.eq.s32.totalorder %s16, 1
    %p34 = por %p32, %p33
    %p35 = scmp.ne.s32.totalorder %s24, %s25
    %p36 = scmp.eq.s32.totalorder %s16, 0
    %p37 = por %p35, %p36
    %p38 = scmp.ne.s32.totalorder %s24, %s25
    %p39 = scmp.eq.s32.totalorder %s17, 1
    %p40 = por %p38, %p39
    %p42 = scmp.ne.s32.totalorder %s25, %s41
    %p43 = scmp.eq.s32.totalorder %s17, 0
    %p44 = por %p42, %p43
    %s46 = sadd.s32 %s45, 1
    %p49 = scmp.eq.s32.totalorder %s11, 1
    %p50 = scmp.ne.s32.totalorder %s45, %s47
    %p51 = scmp.eq.s32.totalorder %s11, 0
    %p52 = por %p50, %p51
    %p53 = scmp.ne.s32.totalorder %s45, %s47
    %p54 = scmp.eq.s32.totalorder %s16, 1
    %p55 = por %p53, %p54
    %p56 = scmp.ne.s32.totalorder %s47, %s48
    %p57 = scmp.eq.s32.totalorder %s16, 0
    %p58 = por %p56, %p57
    %p59 = scmp.ne.s32.totalorder %s47, %s48
    %p60 = scmp.eq.s32.totalorder %s17, 1
    %p61 = por %p59, %p60
    %p63 = scmp.ne.s32.totalorder %s48, %s62
    %p64 = scmp.eq.s32.totalorder %s17, 0
    %p65 = por %p63, %p64
    %s67 = sadd.s32 %s66, 1
    %p70 = scmp.eq.s32.totalorder %s11, 1
    %p71 = scmp.ne.s32.totalorder %s66, %s68
    %p72 = scmp.eq.s32.totalorder %s11, 0
    %p73 = por %p71, %p72
    %p74 = scmp.ne.s32.totalorder %s66, %s68
    %p75 = scmp.eq.s32.totalorder %s16, 1
    %p76 = por %p74, %p75
    %p77 = scmp.ne.s32.totalorder %s68, %s69
    %p78 = scmp.eq.s32.totalorder %s16, 0
    %p79 = por %p77, %p78
    %p80 = scmp.ne.s32.totalorder %s68, %s69
    %p81 = scmp.eq.s32.totalorder %s17, 1
    %p82 = por %p80, %p81
    %p84 = scmp.ne.s32.totalorder %s69, %s83
    %p85 = scmp.eq.s32.totalorder %s17, 0
    %p86 = por %p84, %p85
    %s88 = sadd.s32 %s87, 1
    %p91 = scmp.eq.s32.totalorder %s11, 1
    %p92 = scmp.ne.s32.totalorder %s87, %s89
    %p93 = scmp.eq.s32.totalorder %s11, 0
    %p94 = por %p92, %p93
    %p95 = scmp.ne.s32.totalorder %s87, %s89
    %p96 = scmp.eq.s32.totalorder %s16, 1
    %p97 = por %p95, %p96
    %p98 = scmp.ne.s32.totalorder %s89, %s90
    %p99 = scmp.eq.s32.totalorder %s16, 0
    %p100 = por %p98, %p99
    %p101 = scmp.ne.s32.totalorder %s89, %s90
    %p102 = scmp.eq.s32.totalorder %s17, 1
    %p103 = por %p101, %p102
    %p105 = scmp.ne.s32.totalorder %s90, %s104
    %p106 = scmp.eq.s32.totalorder %s17, 0
    %p107 = por %p105, %p106
    %s109 = sadd.s32 %s108, 1
    %p112 = scmp.eq.s32.totalorder %s11, 1
    %p113 = scmp.ne.s32.totalorder %s108, %s110
    %p114 = scmp.eq.s32.totalorder %s11, 0
    %p115 = por %p113, %p114
    %p116 = scmp.ne.s32.totalorder %s108, %s110
    %p117 = scmp.eq.s32.totalorder %s16, 1
    %p118 = por %p116, %p117
    %p119 = scmp.ne.s32.totalorder %s110, %s111
    %p120 = scmp.eq.s32.totalorder %s16, 0
    %p121 = por %p119, %p120
    %p122 = scmp.ne.s32.totalorder %s110, %s111
    %p123 = scmp.eq.s32.totalorder %s17, 1
    %p124 = por %p122, %p123
    %p126 = scmp.ne.s32.totalorder %s111, %s125
    %p127 = scmp.eq.s32.totalorder %s17, 0
    %p128 = por %p126, %p127
    %s129 = ssub.s32 %s11, %s18
    %p130 = scmp.eq.s32.totalorder %s129, 0
    %s132 = sadd.s32 %s131, 1
    %s133 = scalar_select %p130, %s131, %s132
    %p136 = pneg %p130
    %p137 = scmp.eq.s32.totalorder %s11, 1
    %p138 = por %p136, %p137
    %p139 = scmp.ne.s32.totalorder %s131, %s134
    %p140 = scmp.eq.s32.totalorder %s11, 0
    %p141 = por %p139, %p140
    %p142 = scmp.ne.s32.totalorder %s131, %s134
    %p143 = scmp.eq.s32.totalorder %s16, 1
    %p144 = por %p142, %p143
    %p145 = scmp.ne.s32.totalorder %s134, %s135
    %p146 = scmp.eq.s32.totalorder %s16, 0
    %p147 = por %p145, %p146
    %p148 = scmp.ne.s32.totalorder %s134, %s135
    %p149 = scmp.eq.s32.totalorder %s17, 1
    %p150 = por %p148, %p149
    %p152 = scmp.ne.s32.totalorder %s135, %s151
    %p153 = scmp.eq.s32.totalorder %s17, 0
    %p154 = por %p152, %p153
    %p155 = scmp.le.s32.totalorder 1, %s11
    %p156 = scmp.lt.s32.totalorder %s11, 3
    %p157 = pnand %p155, %p156
    %p158 = pneg %p157
    // Predicated region
    $region9: #{cnn_dropout_forward.2} parent=5 // pred_check
      _
    $region10: #{cnn_dropout_forward.2} parent=5 // pred_check_branch
      %160 = sbr.rel (%p157) target = $region12
    $region11: #{cnn_dropout_forward.2} parent=5 // pred_region
      %s161 = ssub.s32 %s11, 1
      // Predicated region
      $region13: #{cnn_dropout_forward.2} parent=11 // pred_check
        %p162 = pneg %p58
      $region14: #{cnn_dropout_forward.2} parent=11 // pred_check_branch
        %164 = sbr.rel (%p162) target = $region16
      $region15: #{cnn_dropout_forward.2} parent=11 // pred_region
        _
      $region16: #{cnn_dropout_forward.2} parent=11 // pred_fallthru
        _
      // Predicated region
      $region17: #{cnn_dropout_forward.2} parent=11 // pred_check
        %p165 = pneg %p79
      $region18: #{cnn_dropout_forward.2} parent=11 // pred_check_branch
        %167 = sbr.rel (%p165) target = $region20
      $region19: #{cnn_dropout_forward.2} parent=11 // pred_region
        _
      $region20: #{cnn_dropout_forward.2} parent=11 // pred_fallthru
        _
      // Predicated region
      $region21: #{cnn_dropout_forward.2} parent=11 // pred_check
        %p168 = pneg %p100
      $region22: #{cnn_dropout_forward.2} parent=11 // pred_check_branch
        %170 = sbr.rel (%p168) target = $region24
      $region23: #{cnn_dropout_forward.2} parent=11 // pred_region
        _
      $region24: #{cnn_dropout_forward.2} parent=11 // pred_fallthru
        _
      // Predicated region
      $region25: #{cnn_dropout_forward.2} parent=11 // pred_check
        %p171 = pneg %p121
      $region26: #{cnn_dropout_forward.2} parent=11 // pred_check_branch
        %173 = sbr.rel (%p171) target = $region28
      $region27: #{cnn_dropout_forward.2} parent=11 // pred_region
        _
      $region28: #{cnn_dropout_forward.2} parent=11 // pred_fallthru
        _
    $region12: #{cnn_dropout_forward.2} parent=5 // pred_fallthru
      _
    %p174 = scmp.lt.s32.totalorder %s11, 2
    // Predicated region
    $region29: #{cnn_dropout_forward.2} parent=5 // pred_check
      %p175 = pneg %p174
    $region30: #{cnn_dropout_forward.2} parent=5 // pred_check_branch
      %177 = sbr.rel (%p175) target = $region32
    $region31: #{cnn_dropout_forward.2} parent=5 // pred_region
      // Predicated region
      $region33: #{cnn_dropout_forward.2} parent=31 // pred_check
        %p178 = pneg %p31
      $region34: #{cnn_dropout_forward.2} parent=31 // pred_check_branch
        %180 = sbr.rel (%p178) target = $region36
      $region35: #{cnn_dropout_forward.2} parent=31 // pred_region
        %s181 = smul.u32 18, %s11
        %p182 = scmp.lt.s32.totalorder %s181, 35
        %s183 = scalar_select %p182, %s181, 35
        %s184 = smul.addr %s183, 4
        %s185 = scalar_lea.vmem %s0, %s184
        %s186 = smul.u32 18, %s11
      $region36: #{cnn_dropout_forward.2} parent=31 // pred_fallthru
        _
    $region32: #{cnn_dropout_forward.2} parent=5 // pred_fallthru
      _
    %p187 = scmp.le.s32.totalorder 1, %s11
    %p188 = scmp.lt.s32.totalorder %s11, 3
    %p189 = pnand %p187, %p188
    %p190 = pneg %p189
    // Predicated region
    $region37: #{cnn_dropout_forward.2} parent=5 // pred_check
      _
    $region38: #{cnn_dropout_forward.2} parent=5 // pred_check_branch
      %192 = sbr.rel (%p189) target = $region40
    $region39: #{cnn_dropout_forward.2} parent=5 // pred_region
      %s193 = ssub.s32 %s11, 1
      %s194 = smul.u32 18, %s16
      %p195 = scmp.lt.s32.totalorder %s194, 35
      %s196 = scalar_select %p195, %s194, 35
      %s197 = smul.addr %s196, 4
      %s198 = scalar_lea.vmem %s0, %s197
      %p199 = pneg %p37
      %p200 = pneg %p34
      %p201 = pneg %p58
      %p202 = pneg %p55
      %p203 = pneg %p79
      %p204 = pneg %p76
      %p205 = pneg %p100
      %p206 = pneg %p97
      %p207 = pneg %p121
      %p208 = pneg %p118
      %p209 = pneg %p147
      %p210 = pneg %p144
      %s211 = smul.u32 18, %s16
      %p212 = scmp.lt.s32.totalorder %s211, 35
      %s213 = scalar_select %p212, %s211, 35
      %s214 = smul.addr %s213, 4
      %s215 = scalar_lea.vmem %s5, %s214
      %s216 = smul.u32 18, %s16
      %p217 = scmp.lt.s32.totalorder %s216, 35
      %s218 = scalar_select %p217, %s216, 35
      %s219 = smul.addr %s218, 4
      %s220 = scalar_lea.vmem %s0, %s219
      %s221 = smul.u32 18, %s16
      %s222 = smul.u32 18, %s16
      %p223 = scmp.lt.s32.totalorder %s222, 35
      %s224 = scalar_select %p223, %s222, 35
      %s225 = smul.addr %s224, 4
      %s226 = scalar_lea.vmem %s5, %s225
      %s227 = smul.u32 18, %s16
      %v228 = vld [vmem:[%s220] sm:$0xf]
      %v229 = vld [vmem:[%s220 + $0x4] sm:$0xf]
      %v230 = vld [vmem:[%s220 + $0x8] sm:$0xf]
      %v231 = vld [vmem:[%s220 + $0xc] sm:$0xf]
      %v232 = vld [vmem:[%s220 + $0x10] sm:$0xf]
      %v233 = vld [vmem:[%s220 + $0x14] sm:$0xf]
      %v234 = vld [vmem:[%s220 + $0x18] sm:$0xf]
      %v235 = vld [vmem:[%s220 + $0x1c] sm:$0xf]
      %v236 = vld [vmem:[%s220 + $0x20] sm:$0xf]
      %v237 = vld [vmem:[%s220 + $0x24] sm:$0xf]
      %v238 = vld [vmem:[%s220 + $0x28] sm:$0xf]
      %v239 = vld [vmem:[%s220 + $0x2c] sm:$0xf]
      %v240 = vld [vmem:[%s220 + $0x30] sm:$0xf]
      %v241 = vld [vmem:[%s220 + $0x34] sm:$0xf]
      %v242 = vld [vmem:[%s220 + $0x38] sm:$0xf]
      %v243 = vld [vmem:[%s220 + $0x3c] sm:$0xf]
      %v244 = vld [vmem:[%s220 + $0x40] sm:$0xf]
      %v245 = vld [vmem:[%s220 + $0x44] sm:$0xf]
      %v246 = vld [vmem:[%s1] sm:$0xff]
      %v247 = vld [vmem:[%s1 + $0x8] sm:$0xff]
      %v248 = vld [vmem:[%s1 + $0x10] sm:$0xff]
      %v249 = vld [vmem:[%s1 + $0x18] sm:$0xff]
      %v250 = vld [vmem:[%s1 + $0x20] sm:$0xf]
      %v251 = vld [vmem:[%s1 + $0x24] sm:$0xff]
      %v252 = vld [vmem:[%s1 + $0x2c] sm:$0xff]
      %v253 = vld [vmem:[%s1 + $0x34] sm:$0xff]
      %v254 = vld [vmem:[%s1 + $0x3c] sm:$0xff]
      %v255 = vld [vmem:[%s1 + $0x44] sm:$0xf]
      %v256 = vld [vmem:[%s1 + $0x48] sm:$0xff]
      %v257 = vld [vmem:[%s1 + $0x50] sm:$0xff]
      %v258 = vld [vmem:[%s1 + $0x58] sm:$0xff]
      %v259 = vld [vmem:[%s1 + $0x60] sm:$0xff]
      %v260 = vld [vmem:[%s1 + $0x68] sm:$0xf]
      %v261 = vld [vmem:[%s1 + $0x6c] sm:$0xff]
      %v262 = vld [vmem:[%s1 + $0x74] sm:$0xff]
      %v263 = vld [vmem:[%s1 + $0x7c] sm:$0xff]
      %v264 = vld [vmem:[%s1 + $0x84] sm:$0xff]
      %v265 = vld [vmem:[%s1 + $0x8c] sm:$0xf]
      %v266 = vld [vmem:[%s1 + $0x90] sm:$0xff]
      %v267 = vld [vmem:[%s1 + $0x98] sm:$0xff]
      %v268 = vld [vmem:[%s1 + $0xa0] sm:$0xff]
      %v269 = vld [vmem:[%s1 + $0xa8] sm:$0xff]
      %v270 = vld [vmem:[%s1 + $0xb0] sm:$0xf]
      %v271 = vld [vmem:[%s1 + $0xb4] sm:$0xff]
      %v272 = vld [vmem:[%s1 + $0xbc] sm:$0xff]
      %v273 = vld [vmem:[%s1 + $0xc4] sm:$0xff]
      %v274 = vld [vmem:[%s1 + $0xcc] sm:$0xff]
      %v275 = vld [vmem:[%s1 + $0xd4] sm:$0xf]
      %v276 = vld [vmem:[%s1 + $0xd8] sm:$0xff]
      %v277 = vld [vmem:[%s1 + $0xe0] sm:$0xff]
      %v278 = vld [vmem:[%s1 + $0xe8] sm:$0xff]
      %v279 = vld [vmem:[%s1 + $0xf0] sm:$0xff]
      %v280 = vld [vmem:[%s1 + $0xf8] sm:$0xf]
      %v281 = vld [vmem:[%s1 + $0xfc] sm:$0xff]
      %v282 = vld [vmem:[%s1 + $0x104] sm:$0xff]
      %v283 = vld [vmem:[%s1 + $0x10c] sm:$0xff]
      %v284 = vld [vmem:[%s1 + $0x114] sm:$0xff]
      %v285 = vld [vmem:[%s1 + $0x11c] sm:$0xf]
      %v286 = vld [vmem:[%s1 + $0x120] sm:$0xff]
      %v287 = vld [vmem:[%s1 + $0x128] sm:$0xff]
      %v288 = vld [vmem:[%s1 + $0x130] sm:$0xff]
      %v289 = vld [vmem:[%s1 + $0x138] sm:$0xff]
      %v290 = vld [vmem:[%s1 + $0x140] sm:$0xf]
      %v291 = vld [vmem:[%s1 + $0x144] sm:$0xff]
      %v292 = vld [vmem:[%s1 + $0x14c] sm:$0xff]
      %v293 = vld [vmem:[%s1 + $0x154] sm:$0xff]
      %v294 = vld [vmem:[%s1 + $0x15c] sm:$0xff]
      %v295 = vld [vmem:[%s1 + $0x164] sm:$0xf]
      %v296 = vld [vmem:[%s1 + $0x168] sm:$0xff]
      %v297 = vld [vmem:[%s1 + $0x170] sm:$0xff]
      %v298 = vld [vmem:[%s1 + $0x178] sm:$0xff]
      %v299 = vld [vmem:[%s1 + $0x180] sm:$0xff]
      %v300 = vld [vmem:[%s1 + $0x188] sm:$0xf]
      %v301 = vld [vmem:[%s1 + $0x18c] sm:$0xff]
      %v302 = vld [vmem:[%s1 + $0x194] sm:$0xff]
      %v303 = vld [vmem:[%s1 + $0x19c] sm:$0xff]
      %v304 = vld [vmem:[%s1 + $0x1a4] sm:$0xff]
      %v305 = vld [vmem:[%s1 + $0x1ac] sm:$0xf]
      %v306 = vld [vmem:[%s1 + $0x1b0] sm:$0xff]
      %v307 = vld [vmem:[%s1 + $0x1b8] sm:$0xff]
      %v308 = vld [vmem:[%s1 + $0x1c0] sm:$0xff]
      %v309 = vld [vmem:[%s1 + $0x1c8] sm:$0xff]
      %v310 = vld [vmem:[%s1 + $0x1d0] sm:$0xf]
      %v311 = vld [vmem:[%s1 + $0x1d4] sm:$0xff]
      %v312 = vld [vmem:[%s1 + $0x1dc] sm:$0xff]
      %v313 = vld [vmem:[%s1 + $0x1e4] sm:$0xff]
      %v314 = vld [vmem:[%s1 + $0x1ec] sm:$0xff]
      %v315 = vld [vmem:[%s1 + $0x1f4] sm:$0xf]
      %v316 = vld [vmem:[%s1 + $0x1f8] sm:$0xff]
      %v317 = vld [vmem:[%s1 + $0x200] sm:$0xff]
      %v318 = vld [vmem:[%s1 + $0x208] sm:$0xff]
      %v319 = vld [vmem:[%s1 + $0x210] sm:$0xff]
      %v320 = vld [vmem:[%s1 + $0x218] sm:$0xf]
      %v321 = vld [vmem:[%s1 + $0x21c] sm:$0xff]
      %v322 = vld [vmem:[%s1 + $0x224] sm:$0xff]
      %v323 = vld [vmem:[%s1 + $0x22c] sm:$0xff]
      %v324 = vld [vmem:[%s1 + $0x234] sm:$0xff]
      %v325 = vld [vmem:[%s1 + $0x23c] sm:$0xf]
      %v326 = vld [vmem:[%s2] sm:$0xff]
      %v327 = vld [vmem:[%s2 + $0x8] sm:$0x1]
      %v330 = vperm.slane %v326, 0
      %v331 = vperm.slane %v326, 1
      %v332 = vperm.slane %v326, 2
      %v333 = vperm.slane %v326, 3
      %v334 = vperm.slane %v326, 4
      %v335 = vperm.slane %v326, 5
      %v336 = vperm.slane %v326, 6
      %v337 = vperm.slane %v326, 7
      %v338 = vperm.slane %v327, 0
      %v366 = vunpack.c.l.b16 %v228
      %v367 = vunpack.c.l.b16 %v229
      %v368 = vunpack.c.l.b16 %v230
      %v369 = vunpack.c.l.b16 %v231
      %v370 = vunpack.c.l.b16 %v232
      %v371 = vunpack.c.l.b16 %v233
      %v372 = vunpack.c.l.b16 %v234
      %v373 = vunpack.c.l.b16 %v235
      %v374 = vunpack.c.l.b16 %v236
      %v375 = vunpack.c.l.b16 %v237
      %v376 = vunpack.c.l.b16 %v238
      %v377 = vunpack.c.l.b16 %v239
      %v378 = vunpack.c.l.b16 %v240
      %v379 = vunpack.c.l.b16 %v241
      %v380 = vunpack.c.l.b16 %v242
      %v381 = vunpack.c.l.b16 %v243
      %v382 = vunpack.c.l.b16 %v244
      %v383 = vunpack.c.l.b16 %v245
      %v384 = vpack.c.b16 %v367, %v366
      %v385 = vpack.c.b16 %v369, %v368
      %v386 = vpack.c.b16 %v371, %v370
      %v387 = vpack.c.b16 %v373, %v372
      %v388 = vpack.c.b16 %v375, %v374
      %v389 = vpack.c.b16 %v377, %v376
      %v390 = vpack.c.b16 %v379, %v378
      %v391 = vpack.c.b16 %v381, %v380
      %v392 = vpack.c.b16 %v383, %v382
      %v482 = vunpack.c.l.b16 %v246
      %v483 = vunpack.c.h.b16 %v246
      %v484 = vunpack.c.l.b16 %v247
      %v485 = vunpack.c.h.b16 %v247
      %v486 = vunpack.c.l.b16 %v248
      %v487 = vunpack.c.h.b16 %v248
      %v488 = vunpack.c.l.b16 %v249
      %v489 = vunpack.c.h.b16 %v249
      %v490 = vunpack.c.l.b16 %v250
      %v491 = vunpack.c.l.b16 %v251
      %v492 = vunpack.c.h.b16 %v251
      %v493 = vunpack.c.l.b16 %v252
      %v494 = vunpack.c.h.b16 %v252
      %v495 = vunpack.c.l.b16 %v253
      %v496 = vunpack.c.h.b16 %v253
      %v497 = vunpack.c.l.b16 %v254
      %v498 = vunpack.c.h.b16 %v254
      %v499 = vunpack.c.l.b16 %v255
      %v500 = vunpack.c.l.b16 %v256
      %v501 = vunpack.c.h.b16 %v256
      %v502 = vunpack.c.l.b16 %v257
      %v503 = vunpack.c.h.b16 %v257
      %v504 = vunpack.c.l.b16 %v258
      %v505 = vunpack.c.h.b16 %v258
      %v506 = vunpack.c.l.b16 %v259
      %v507 = vunpack.c.h.b16 %v259
      %v508 = vunpack.c.l.b16 %v260
      %v509 = vunpack.c.l.b16 %v261
      %v510 = vunpack.c.h.b16 %v261
      %v511 = vunpack.c.l.b16 %v262
      %v512 = vunpack.c.h.b16 %v262
      %v513 = vunpack.c.l.b16 %v263
      %v514 = vunpack.c.h.b16 %v263
      %v515 = vunpack.c.l.b16 %v264
      %v516 = vunpack.c.h.b16 %v264
      %v517 = vunpack.c.l.b16 %v265
      %v518 = vunpack.c.l.b16 %v266
      %v519 = vunpack.c.h.b16 %v266
      %v520 = vunpack.c.l.b16 %v267
      %v521 = vunpack.c.h.b16 %v267
      %v522 = vunpack.c.l.b16 %v268
      %v523 = vunpack.c.h.b16 %v268
      %v524 = vunpack.c.l.b16 %v269
      %v525 = vunpack.c.h.b16 %v269
      %v526 = vunpack.c.l.b16 %v270
      %v527 = vunpack.c.l.b16 %v271
      %v528 = vunpack.c.h.b16 %v271
      %v529 = vunpack.c.l.b16 %v272
      %v530 = vunpack.c.h.b16 %v272
      %v531 = vunpack.c.l.b16 %v273
      %v532 = vunpack.c.h.b16 %v273
      %v533 = vunpack.c.l.b16 %v274
      %v534 = vunpack.c.h.b16 %v274
      %v535 = vunpack.c.l.b16 %v275
      %v536 = vunpack.c.l.b16 %v276
      %v537 = vunpack.c.h.b16 %v276
      %v538 = vunpack.c.l.b16 %v277
      %v539 = vunpack.c.h.b16 %v277
      %v540 = vunpack.c.l.b16 %v278
      %v541 = vunpack.c.h.b16 %v278
      %v542 = vunpack.c.l.b16 %v279
      %v543 = vunpack.c.h.b16 %v279
      %v544 = vunpack.c.l.b16 %v280
      %v545 = vunpack.c.l.b16 %v281
      %v546 = vunpack.c.h.b16 %v281
      %v547 = vunpack.c.l.b16 %v282
      %v548 = vunpack.c.h.b16 %v282
      %v549 = vunpack.c.l.b16 %v283
      %v550 = vunpack.c.h.b16 %v283
      %v551 = vunpack.c.l.b16 %v284
      %v552 = vunpack.c.h.b16 %v284
      %v553 = vunpack.c.l.b16 %v285
      %v554 = vunpack.c.l.b16 %v286
      %v555 = vunpack.c.h.b16 %v286
      %v556 = vunpack.c.l.b16 %v287
      %v557 = vunpack.c.h.b16 %v287
      %v558 = vunpack.c.l.b16 %v288
      %v559 = vunpack.c.h.b16 %v288
      %v560 = vunpack.c.l.b16 %v289
      %v561 = vunpack.c.h.b16 %v289
      %v562 = vunpack.c.l.b16 %v290
      %v563 = vunpack.c.l.b16 %v291
      %v564 = vunpack.c.h.b16 %v291
      %v565 = vunpack.c.l.b16 %v292
      %v566 = vunpack.c.h.b16 %v292
      %v567 = vunpack.c.l.b16 %v293
      %v568 = vunpack.c.h.b16 %v293
      %v569 = vunpack.c.l.b16 %v294
      %v570 = vunpack.c.h.b16 %v294
      %v571 = vunpack.c.l.b16 %v295
      %v572 = vunpack.c.l.b16 %v296
      %v573 = vunpack.c.h.b16 %v296
      %v574 = vunpack.c.l.b16 %v297
      %v575 = vunpack.c.h.b16 %v297
      %v576 = vunpack.c.l.b16 %v298
      %v577 = vunpack.c.h.b16 %v298
      %v578 = vunpack.c.l.b16 %v299
      %v579 = vunpack.c.h.b16 %v299
      %v580 = vunpack.c.l.b16 %v300
      %v581 = vunpack.c.l.b16 %v301
      %v582 = vunpack.c.h.b16 %v301
      %v583 = vunpack.c.l.b16 %v302
      %v584 = vunpack.c.h.b16 %v302
      %v585 = vunpack.c.l.b16 %v303
      %v586 = vunpack.c.h.b16 %v303
      %v587 = vunpack.c.l.b16 %v304
      %v588 = vunpack.c.h.b16 %v304
      %v589 = vunpack.c.l.b16 %v305
      %v590 = vunpack.c.l.b16 %v306
      %v591 = vunpack.c.h.b16 %v306
      %v592 = vunpack.c.l.b16 %v307
      %v593 = vunpack.c.h.b16 %v307
      %v594 = vunpack.c.l.b16 %v308
      %v595 = vunpack.c.h.b16 %v308
      %v596 = vunpack.c.l.b16 %v309
      %v597 = vunpack.c.h.b16 %v309
      %v598 = vunpack.c.l.b16 %v310
      %v599 = vunpack.c.l.b16 %v311
      %v600 = vunpack.c.h.b16 %v311
      %v601 = vunpack.c.l.b16 %v312
      %v602 = vunpack.c.h.b16 %v312
      %v603 = vunpack.c.l.b16 %v313
      %v604 = vunpack.c.h.b16 %v313
      %v605 = vunpack.c.l.b16 %v314
      %v606 = vunpack.c.h.b16 %v314
      %v607 = vunpack.c.l.b16 %v315
      %v608 = vunpack.c.l.b16 %v316
      %v609 = vunpack.c.h.b16 %v316
      %v610 = vunpack.c.l.b16 %v317
      %v611 = vunpack.c.h.b16 %v317
      %v612 = vunpack.c.l.b16 %v318
      %v613 = vunpack.c.h.b16 %v318
      %v614 = vunpack.c.l.b16 %v319
      %v615 = vunpack.c.h.b16 %v319
      %v616 = vunpack.c.l.b16 %v320
      %v617 = vunpack.c.l.b16 %v321
      %v618 = vunpack.c.h.b16 %v321
      %v619 = vunpack.c.l.b16 %v322
      %v620 = vunpack.c.h.b16 %v322
      %v621 = vunpack.c.l.b16 %v323
      %v622 = vunpack.c.h.b16 %v323
      %v623 = vunpack.c.l.b16 %v324
      %v624 = vunpack.c.h.b16 %v324
      %v625 = vunpack.c.l.b16 %v325
      %v626 = vpack.c.b16 %v491, %v482
      %v627 = vpack.c.b16 %v492, %v483
      %v628 = vpack.c.b16 %v493, %v484
      %v629 = vpack.c.b16 %v494, %v485
      %v630 = vpack.c.b16 %v495, %v486
      %v631 = vpack.c.b16 %v496, %v487
      %v632 = vpack.c.b16 %v497, %v488
      %v633 = vpack.c.b16 %v498, %v489
      %v634 = vpack.c.b16 %v499, %v490
      %v635 = vpack.c.b16 %v509, %v500
      %v636 = vpack.c.b16 %v510, %v501
      %v637 = vpack.c.b16 %v511, %v502
      %v638 = vpack.c.b16 %v512, %v503
      %v639 = vpack.c.b16 %v513, %v504
      %v640 = vpack.c.b16 %v514, %v505
      %v641 = vpack.c.b16 %v515, %v506
      %v642 = vpack.c.b16 %v516, %v507
      %v643 = vpack.c.b16 %v517, %v508
      %v644 = vpack.c.b16 %v527, %v518
      %v645 = vpack.c.b16 %v528, %v519
      %v646 = vpack.c.b16 %v529, %v520
      %v647 = vpack.c.b16 %v530, %v521
      %v648 = vpack.c.b16 %v531, %v522
      %v649 = vpack.c.b16 %v532, %v523
      %v650 = vpack.c.b16 %v533, %v524
      %v651 = vpack.c.b16 %v534, %v525
      %v652 = vpack.c.b16 %v535, %v526
      %v653 = vpack.c.b16 %v545, %v536
      %v654 = vpack.c.b16 %v546, %v537
      %v655 = vpack.c.b16 %v547, %v538
      %v656 = vpack.c.b16 %v548, %v539
      %v657 = vpack.c.b16 %v549, %v540
      %v658 = vpack.c.b16 %v550, %v541
      %v659 = vpack.c.b16 %v551, %v542
      %v660 = vpack.c.b16 %v552, %v543
      %v661 = vpack.c.b16 %v553, %v544
      %v662 = vpack.c.b16 %v563, %v554
      %v663 = vpack.c.b16 %v564, %v555
      %v664 = vpack.c.b16 %v565, %v556
      %v665 = vpack.c.b16 %v566, %v557
      %v666 = vpack.c.b16 %v567, %v558
      %v667 = vpack.c.b16 %v568, %v559
      %v668 = vpack.c.b16 %v569, %v560
      %v669 = vpack.c.b16 %v570, %v561
      %v670 = vpack.c.b16 %v571, %v562
      %v671 = vpack.c.b16 %v581, %v572
      %v672 = vpack.c.b16 %v582, %v573
      %v673 = vpack.c.b16 %v583, %v574
      %v674 = vpack.c.b16 %v584, %v575
      %v675 = vpack.c.b16 %v585, %v576
      %v676 = vpack.c.b16 %v586, %v577
      %v677 = vpack.c.b16 %v587, %v578
      %v678 = vpack.c.b16 %v588, %v579
      %v679 = vpack.c.b16 %v589, %v580
      %v680 = vpack.c.b16 %v599, %v590
      %v681 = vpack.c.b16 %v600, %v591
      %v682 = vpack.c.b16 %v601, %v592
      %v683 = vpack.c.b16 %v602, %v593
      %v684 = vpack.c.b16 %v603, %v594
      %v685 = vpack.c.b16 %v604, %v595
      %v686 = vpack.c.b16 %v605, %v596
      %v687 = vpack.c.b16 %v606, %v597
      %v688 = vpack.c.b16 %v607, %v598
      %v689 = vpack.c.b16 %v617, %v608
      %v690 = vpack.c.b16 %v618, %v609
      %v691 = vpack.c.b16 %v619, %v610
      %v692 = vpack.c.b16 %v620, %v611
      %v693 = vpack.c.b16 %v621, %v612
      %v694 = vpack.c.b16 %v622, %v613
      %v695 = vpack.c.b16 %v623, %v614
      %v696 = vpack.c.b16 %v624, %v615
      %v697 = vpack.c.b16 %v625, %v616
      %770 = vmatpush.bf16.msra.mxu0 %v689
      %771 = vmatpush.bf16.msra.mxu0 %v680
      %772 = vmatpush.bf16.msra.mxu0 %v671
      %773 = vmatpush.bf16.msra.mxu0 %v662
      %774 = vmatpush.bf16.msra.mxu0 %v653
      %775 = vmatpush.bf16.msra.mxu0 %v644
      %776 = vmatpush.bf16.msra.mxu0 %v635
      %777 = vmatpush.bf16.msra.mxu0 %v626
      %778 = vmatmul.bf16.gmra.mxu0 %v384
      %v779 = vpop.f32.mrf.mxu0
      %v780 = vadd.f32 %v330, %v779
      %v781 = vpop.f32.mrf.mxu0
      %v782 = vadd.f32 %v330, %v781
      %783 = vmatmul.bf16.gmra.mxu0 %v385
      %v784 = vpop.f32.mrf.mxu0
      %v785 = vadd.f32 %v330, %v784
      %v786 = vpop.f32.mrf.mxu0
      %v787 = vadd.f32 %v330, %v786
      %788 = vmatmul.bf16.gmra.mxu0 %v386
      %v789 = vpop.f32.mrf.mxu0
      %v790 = vadd.f32 %v330, %v789
      %v791 = vpop.f32.mrf.mxu0
      %v792 = vadd.f32 %v330, %v791
      %793 = vmatmul.bf16.gmra.mxu0 %v387
      %v794 = vpop.f32.mrf.mxu0
      %v795 = vadd.f32 %v330, %v794
      %v796 = vpop.f32.mrf.mxu0
      %v797 = vadd.f32 %v330, %v796
      %798 = vmatmul.bf16.gmra.mxu0 %v388
      %v799 = vpop.f32.mrf.mxu0
      %v800 = vadd.f32 %v330, %v799
      %v801 = vpop.f32.mrf.mxu0
      %v802 = vadd.f32 %v330, %v801
      %803 = vmatmul.bf16.gmra.mxu0 %v389
      %v804 = vpop.f32.mrf.mxu0
      %v805 = vadd.f32 %v330, %v804
      %v806 = vpop.f32.mrf.mxu0
      %v807 = vadd.f32 %v330, %v806
      %808 = vmatmul.bf16.gmra.mxu0 %v390
      %v809 = vpop.f32.mrf.mxu0
      %v810 = vadd.f32 %v330, %v809
      %v811 = vpop.f32.mrf.mxu0
      %v812 = vadd.f32 %v330, %v811
      %813 = vmatmul.bf16.gmra.mxu0 %v391
      %v814 = vpop.f32.mrf.mxu0
      %v815 = vadd.f32 %v330, %v814
      %v816 = vpop.f32.mrf.mxu0
      %v817 = vadd.f32 %v330, %v816
      %818 = vmatmul.bf16.gmra.mxu0 %v392
      %v819 = vpop.f32.mrf.mxu0
      %v820 = vadd.f32 %v330, %v819
      %v821 = vpop.f32.mrf.mxu0
      %v822 = vadd.f32 %v330, %v821
      %823 = vdwg.mxu0
      %824 = vmatpush.bf16.msra.mxu0 %v690
      %825 = vmatpush.bf16.msra.mxu0 %v681
      %826 = vmatpush.bf16.msra.mxu0 %v672
      %827 = vmatpush.bf16.msra.mxu0 %v663
      %828 = vmatpush.bf16.msra.mxu0 %v654
      %829 = vmatpush.bf16.msra.mxu0 %v645
      %830 = vmatpush.bf16.msra.mxu0 %v636
      %831 = vmatpush.bf16.msra.mxu0 %v627
      %832 = vmatmul.bf16.gmra.mxu0 %v384
      %v833 = vpop.f32.mrf.mxu0
      %v834 = vadd.f32 %v331, %v833
      %v835 = vpop.f32.mrf.mxu0
      %v836 = vadd.f32 %v331, %v835
      %837 = vmatmul.bf16.gmra.mxu0 %v385
      %v838 = vpop.f32.mrf.mxu0
      %v839 = vadd.f32 %v331, %v838
      %v840 = vpop.f32.mrf.mxu0
      %v841 = vadd.f32 %v331, %v840
      %842 = vmatmul.bf16.gmra.mxu0 %v386
      %v843 = vpop.f32.mrf.mxu0
      %v844 = vadd.f32 %v331, %v843
      %v845 = vpop.f32.mrf.mxu0
      %v846 = vadd.f32 %v331, %v845
      %847 = vmatmul.bf16.gmra.mxu0 %v387
      %v848 = vpop.f32.mrf.mxu0
      %v849 = vadd.f32 %v331, %v848
      %v850 = vpop.f32.mrf.mxu0
      %v851 = vadd.f32 %v331, %v850
      %852 = vmatmul.bf16.gmra.mxu0 %v388
      %v853 = vpop.f32.mrf.mxu0
      %v854 = vadd.f32 %v331, %v853
      %v855 = vpop.f32.mrf.mxu0
      %v856 = vadd.f32 %v331, %v855
      %857 = vmatmul.bf16.gmra.mxu0 %v389
      %v858 = vpop.f32.mrf.mxu0
      %v859 = vadd.f32 %v331, %v858
      %v860 = vpop.f32.mrf.mxu0
      %v861 = vadd.f32 %v331, %v860
      %862 = vmatmul.bf16.gmra.mxu0 %v390
      %v863 = vpop.f32.mrf.mxu0
      %v864 = vadd.f32 %v331, %v863
      %v865 = vpop.f32.mrf.mxu0
      %v866 = vadd.f32 %v331, %v865
      %867 = vmatmul.bf16.gmra.mxu0 %v391
      %v868 = vpop.f32.mrf.mxu0
      %v869 = vadd.f32 %v331, %v868
      %v870 = vpop.f32.mrf.mxu0
      %v871 = vadd.f32 %v331, %v870
      %872 = vmatmul.bf16.gmra.mxu0 %v392
      %v873 = vpop.f32.mrf.mxu0
      %v874 = vadd.f32 %v331, %v873
      %v875 = vpop.f32.mrf.mxu0
      %v876 = vadd.f32 %v331, %v875
      %877 = vdwg.mxu0
      %878 = vmatpush.bf16.msra.mxu0 %v691
      %879 = vmatpush.bf16.msra.mxu0 %v682
      %880 = vmatpush.bf16.msra.mxu0 %v673
      %881 = vmatpush.bf16.msra.mxu0 %v664
      %882 = vmatpush.bf16.msra.mxu0 %v655
      %883 = vmatpush.bf16.msra.mxu0 %v646
      %884 = vmatpush.bf16.msra.mxu0 %v637
      %885 = vmatpush.bf16.msra.mxu0 %v628
      %886 = vmatmul.bf16.gmra.mxu0 %v384
      %v887 = vpop.f32.mrf.mxu0
      %v888 = vadd.f32 %v332, %v887
      %v889 = vpop.f32.mrf.mxu0
      %v890 = vadd.f32 %v332, %v889
      %891 = vmatmul.bf16.gmra.mxu0 %v385
      %v892 = vpop.f32.mrf.mxu0
      %v893 = vadd.f32 %v332, %v892
      %v894 = vpop.f32.mrf.mxu0
      %v895 = vadd.f32 %v332, %v894
      %896 = vmatmul.bf16.gmra.mxu0 %v386
      %v897 = vpop.f32.mrf.mxu0
      %v898 = vadd.f32 %v332, %v897
      %v899 = vpop.f32.mrf.mxu0
      %v900 = vadd.f32 %v332, %v899
      %901 = vmatmul.bf16.gmra.mxu0 %v387
      %v902 = vpop.f32.mrf.mxu0
      %v903 = vadd.f32 %v332, %v902
      %v904 = vpop.f32.mrf.mxu0
      %v905 = vadd.f32 %v332, %v904
      %906 = vmatmul.bf16.gmra.mxu0 %v388
      %v907 = vpop.f32.mrf.mxu0
      %v908 = vadd.f32 %v332, %v907
      %v909 = vpop.f32.mrf.mxu0
      %v910 = vadd.f32 %v332, %v909
      %911 = vmatmul.bf16.gmra.mxu0 %v389
      %v912 = vpop.f32.mrf.mxu0
      %v913 = vadd.f32 %v332, %v912
      %v914 = vpop.f32.mrf.mxu0
      %v915 = vadd.f32 %v332, %v914
      %916 = vmatmul.bf16.gmra.mxu0 %v390
      %v917 = vpop.f32.mrf.mxu0
      %v918 = vadd.f32 %v332, %v917
      %v919 = vpop.f32.mrf.mxu0
      %v920 = vadd.f32 %v332, %v919
      %921 = vmatmul.bf16.gmra.mxu0 %v391
      %v922 = vpop.f32.mrf.mxu0
      %v923 = vadd.f32 %v332, %v922
      %v924 = vpop.f32.mrf.mxu0
      %v925 = vadd.f32 %v332, %v924
      %926 = vmatmul.bf16.gmra.mxu0 %v392
      %v927 = vpop.f32.mrf.mxu0
      %v928 = vadd.f32 %v332, %v927
      %v929 = vpop.f32.mrf.mxu0
      %v930 = vadd.f32 %v332, %v929
      %931 = vdwg.mxu0
      %932 = vmatpush.bf16.msra.mxu0 %v692
      %933 = vmatpush.bf16.msra.mxu0 %v683
      %934 = vmatpush.bf16.msra.mxu0 %v674
      %935 = vmatpush.bf16.msra.mxu0 %v665
      %936 = vmatpush.bf16.msra.mxu0 %v656
      %937 = vmatpush.bf16.msra.mxu0 %v647
      %938 = vmatpush.bf16.msra.mxu0 %v638
      %939 = vmatpush.bf16.msra.mxu0 %v629
      %940 = vmatmul.bf16.gmra.mxu0 %v384
      %v941 = vpop.f32.mrf.mxu0
      %v942 = vadd.f32 %v333, %v941
      %v943 = vpop.f32.mrf.mxu0
      %v944 = vadd.f32 %v333, %v943
      %945 = vmatmul.bf16.gmra.mxu0 %v385
      %v946 = vpop.f32.mrf.mxu0
      %v947 = vadd.f32 %v333, %v946
      %v948 = vpop.f32.mrf.mxu0
      %v949 = vadd.f32 %v333, %v948
      %950 = vmatmul.bf16.gmra.mxu0 %v386
      %v951 = vpop.f32.mrf.mxu0
      %v952 = vadd.f32 %v333, %v951
      %v953 = vpop.f32.mrf.mxu0
      %v954 = vadd.f32 %v333, %v953
      %955 = vmatmul.bf16.gmra.mxu0 %v387
      %v956 = vpop.f32.mrf.mxu0
      %v957 = vadd.f32 %v333, %v956
      %v958 = vpop.f32.mrf.mxu0
      %v959 = vadd.f32 %v333, %v958
      %960 = vmatmul.bf16.gmra.mxu0 %v388
      %v961 = vpop.f32.mrf.mxu0
      %v962 = vadd.f32 %v333, %v961
      %v963 = vpop.f32.mrf.mxu0
      %v964 = vadd.f32 %v333, %v963
      %965 = vmatmul.bf16.gmra.mxu0 %v389
      %v966 = vpop.f32.mrf.mxu0
      %v967 = vadd.f32 %v333, %v966
      %v968 = vpop.f32.mrf.mxu0
      %v969 = vadd.f32 %v333, %v968
      %970 = vmatmul.bf16.gmra.mxu0 %v390
      %v971 = vpop.f32.mrf.mxu0
      %v972 = vadd.f32 %v333, %v971
      %v973 = vpop.f32.mrf.mxu0
      %v974 = vadd.f32 %v333, %v973
      %975 = vmatmul.bf16.gmra.mxu0 %v391
      %v976 = vpop.f32.mrf.mxu0
      %v977 = vadd.f32 %v333, %v976
      %v978 = vpop.f32.mrf.mxu0
      %v979 = vadd.f32 %v333, %v978
      %980 = vmatmul.bf16.gmra.mxu0 %v392
      %v981 = vpop.f32.mrf.mxu0
      %v982 = vadd.f32 %v333, %v981
      %v983 = vpop.f32.mrf.mxu0
      %v984 = vadd.f32 %v333, %v983
      %985 = vdwg.mxu0
      %986 = vmatpush.bf16.msra.mxu0 %v693
      %987 = vmatpush.bf16.msra.mxu0 %v684
      %988 = vmatpush.bf16.msra.mxu0 %v675
      %989 = vmatpush.bf16.msra.mxu0 %v666
      %990 = vmatpush.bf16.msra.mxu0 %v657
      %991 = vmatpush.bf16.msra.mxu0 %v648
      %992 = vmatpush.bf16.msra.mxu0 %v639
      %993 = vmatpush.bf16.msra.mxu0 %v630
      %994 = vmatmul.bf16.gmra.mxu0 %v384
      %v995 = vpop.f32.mrf.mxu0
      %v996 = vadd.f32 %v334, %v995
      %v997 = vpop.f32.mrf.mxu0
      %v998 = vadd.f32 %v334, %v997
      %999 = vmatmul.bf16.gmra.mxu0 %v385
      %v1000 = vpop.f32.mrf.mxu0
      %v1001 = vadd.f32 %v334, %v1000
      %v1002 = vpop.f32.mrf.mxu0
      %v1003 = vadd.f32 %v334, %v1002
      %1004 = vmatmul.bf16.gmra.mxu0 %v386
      %v1005 = vpop.f32.mrf.mxu0
      %v1006 = vadd.f32 %v334, %v1005
      %v1007 = vpop.f32.mrf.mxu0
      %v1008 = vadd.f32 %v334, %v1007
      %1009 = vmatmul.bf16.gmra.mxu0 %v387
      %v1010 = vpop.f32.mrf.mxu0
      %v1011 = vadd.f32 %v334, %v1010
      %v1012 = vpop.f32.mrf.mxu0
      %v1013 = vadd.f32 %v334, %v1012
      %1014 = vmatmul.bf16.gmra.mxu0 %v388
      %v1015 = vpop.f32.mrf.mxu0
      %v1016 = vadd.f32 %v334, %v1015
      %v1017 = vpop.f32.mrf.mxu0
      %v1018 = vadd.f32 %v334, %v1017
      %1019 = vmatmul.bf16.gmra.mxu0 %v389
      %v1020 = vpop.f32.mrf.mxu0
      %v1021 = vadd.f32 %v334, %v1020
      %v1022 = vpop.f32.mrf.mxu0
      %v1023 = vadd.f32 %v334, %v1022
      %1024 = vmatmul.bf16.gmra.mxu0 %v390
      %v1025 = vpop.f32.mrf.mxu0
      %v1026 = vadd.f32 %v334, %v1025
      %v1027 = vpop.f32.mrf.mxu0
      %v1028 = vadd.f32 %v334, %v1027
      %1029 = vmatmul.bf16.gmra.mxu0 %v391
      %v1030 = vpop.f32.mrf.mxu0
      %v1031 = vadd.f32 %v334, %v1030
      %v1032 = vpop.f32.mrf.mxu0
      %v1033 = vadd.f32 %v334, %v1032
      %1034 = vmatmul.bf16.gmra.mxu0 %v392
      %v1035 = vpop.f32.mrf.mxu0
      %v1036 = vadd.f32 %v334, %v1035
      %v1037 = vpop.f32.mrf.mxu0
      %v1038 = vadd.f32 %v334, %v1037
      %1039 = vdwg.mxu0
      %1040 = vmatpush.bf16.msra.mxu0 %v694
      %1041 = vmatpush.bf16.msra.mxu0 %v685
      %1042 = vmatpush.bf16.msra.mxu0 %v676
      %1043 = vmatpush.bf16.msra.mxu0 %v667
      %1044 = vmatpush.bf16.msra.mxu0 %v658
      %1045 = vmatpush.bf16.msra.mxu0 %v649
      %1046 = vmatpush.bf16.msra.mxu0 %v640
      %1047 = vmatpush.bf16.msra.mxu0 %v631
      %1048 = vmatmul.bf16.gmra.mxu0 %v384
      %v1049 = vpop.f32.mrf.mxu0
      %v1050 = vadd.f32 %v335, %v1049
      %v1051 = vpop.f32.mrf.mxu0
      %v1052 = vadd.f32 %v335, %v1051
      %1053 = vmatmul.bf16.gmra.mxu0 %v385
      %v1054 = vpop.f32.mrf.mxu0
      %v1055 = vadd.f32 %v335, %v1054
      %v1056 = vpop.f32.mrf.mxu0
      %v1057 = vadd.f32 %v335, %v1056
      %1058 = vmatmul.bf16.gmra.mxu0 %v386
      %v1059 = vpop.f32.mrf.mxu0
      %v1060 = vadd.f32 %v335, %v1059
      %v1061 = vpop.f32.mrf.mxu0
      %v1062 = vadd.f32 %v335, %v1061
      %1063 = vmatmul.bf16.gmra.mxu0 %v387
      %v1064 = vpop.f32.mrf.mxu0
      %v1065 = vadd.f32 %v335, %v1064
      %v1066 = vpop.f32.mrf.mxu0
      %v1067 = vadd.f32 %v335, %v1066
      %1068 = vmatmul.bf16.gmra.mxu0 %v388
      %v1069 = vpop.f32.mrf.mxu0
      %v1070 = vadd.f32 %v335, %v1069
      %v1071 = vpop.f32.mrf.mxu0
      %v1072 = vadd.f32 %v335, %v1071
      %1073 = vmatmul.bf16.gmra.mxu0 %v389
      %v1074 = vpop.f32.mrf.mxu0
      %v1075 = vadd.f32 %v335, %v1074
      %v1076 = vpop.f32.mrf.mxu0
      %v1077 = vadd.f32 %v335, %v1076
      %1078 = vmatmul.bf16.gmra.mxu0 %v390
      %v1079 = vpop.f32.mrf.mxu0
      %v1080 = vadd.f32 %v335, %v1079
      %v1081 = vpop.f32.mrf.mxu0
      %v1082 = vadd.f32 %v335, %v1081
      %1083 = vmatmul.bf16.gmra.mxu0 %v391
      %v1084 = vpop.f32.mrf.mxu0
      %v1085 = vadd.f32 %v335, %v1084
      %v1086 = vpop.f32.mrf.mxu0
      %v1087 = vadd.f32 %v335, %v1086
      %1088 = vmatmul.bf16.gmra.mxu0 %v392
      %v1089 = vpop.f32.mrf.mxu0
      %v1090 = vadd.f32 %v335, %v1089
      %v1091 = vpop.f32.mrf.mxu0
      %v1092 = vadd.f32 %v335, %v1091
      %1093 = vdwg.mxu0
      %1094 = vmatpush.bf16.msra.mxu0 %v695
      %1095 = vmatpush.bf16.msra.mxu0 %v686
      %1096 = vmatpush.bf16.msra.mxu0 %v677
      %1097 = vmatpush.bf16.msra.mxu0 %v668
      %1098 = vmatpush.bf16.msra.mxu0 %v659
      %1099 = vmatpush.bf16.msra.mxu0 %v650
      %1100 = vmatpush.bf16.msra.mxu0 %v641
      %1101 = vmatpush.bf16.msra.mxu0 %v632
      %1102 = vmatmul.bf16.gmra.mxu0 %v384
      %v1103 = vpop.f32.mrf.mxu0
      %v1104 = vadd.f32 %v336, %v1103
      %v1105 = vpop.f32.mrf.mxu0
      %v1106 = vadd.f32 %v336, %v1105
      %1107 = vmatmul.bf16.gmra.mxu0 %v385
      %v1108 = vpop.f32.mrf.mxu0
      %v1109 = vadd.f32 %v336, %v1108
      %v1110 = vpop.f32.mrf.mxu0
      %v1111 = vadd.f32 %v336, %v1110
      %1112 = vmatmul.bf16.gmra.mxu0 %v386
      %v1113 = vpop.f32.mrf.mxu0
      %v1114 = vadd.f32 %v336, %v1113
      %v1115 = vpop.f32.mrf.mxu0
      %v1116 = vadd.f32 %v336, %v1115
      %1117 = vmatmul.bf16.gmra.mxu0 %v387
      %v1118 = vpop.f32.mrf.mxu0
      %v1119 = vadd.f32 %v336, %v1118
      %v1120 = vpop.f32.mrf.mxu0
      %v1121 = vadd.f32 %v336, %v1120
      %1122 = vmatmul.bf16.gmra.mxu0 %v388
      %v1123 = vpop.f32.mrf.mxu0
      %v1124 = vadd.f32 %v336, %v1123
      %v1125 = vpop.f32.mrf.mxu0
      %v1126 = vadd.f32 %v336, %v1125
      %1127 = vmatmul.bf16.gmra.mxu0 %v389
      %v1128 = vpop.f32.mrf.mxu0
      %v1129 = vadd.f32 %v336, %v1128
      %v1130 = vpop.f32.mrf.mxu0
      %v1131 = vadd.f32 %v336, %v1130
      %1132 = vmatmul.bf16.gmra.mxu0 %v390
      %v1133 = vpop.f32.mrf.mxu0
      %v1134 = vadd.f32 %v336, %v1133
      %v1135 = vpop.f32.mrf.mxu0
      %v1136 = vadd.f32 %v336, %v1135
      %1137 = vmatmul.bf16.gmra.mxu0 %v391
      %v1138 = vpop.f32.mrf.mxu0
      %v1139 = vadd.f32 %v336, %v1138
      %v1140 = vpop.f32.mrf.mxu0
      %v1141 = vadd.f32 %v336, %v1140
      %1142 = vmatmul.bf16.gmra.mxu0 %v392
      %v1143 = vpop.f32.mrf.mxu0
      %v1144 = vadd.f32 %v336, %v1143
      %v1145 = vpop.f32.mrf.mxu0
      %v1146 = vadd.f32 %v336, %v1145
      %1147 = vdwg.mxu0
      %1148 = vmatpush.bf16.msra.mxu0 %v696
      %1149 = vmatpush.bf16.msra.mxu0 %v687
      %1150 = vmatpush.bf16.msra.mxu0 %v678
      %1151 = vmatpush.bf16.msra.mxu0 %v669
      %1152 = vmatpush.bf16.msra.mxu0 %v660
      %1153 = vmatpush.bf16.msra.mxu0 %v651
      %1154 = vmatpush.bf16.msra.mxu0 %v642
      %1155 = vmatpush.bf16.msra.mxu0 %v633
      %1156 = vmatmul.bf16.gmra.mxu0 %v384
      %v1157 = vpop.f32.mrf.mxu0
      %v1158 = vadd.f32 %v337, %v1157
      %v1159 = vpop.f32.mrf.mxu0
      %v1160 = vadd.f32 %v337, %v1159
      %1161 = vmatmul.bf16.gmra.mxu0 %v385
      %v1162 = vpop.f32.mrf.mxu0
      %v1163 = vadd.f32 %v337, %v1162
      %v1164 = vpop.f32.mrf.mxu0
      %v1165 = vadd.f32 %v337, %v1164
      %1166 = vmatmul.bf16.gmra.mxu0 %v386
      %v1167 = vpop.f32.mrf.mxu0
      %v1168 = vadd.f32 %v337, %v1167
      %v1169 = vpop.f32.mrf.mxu0
      %v1170 = vadd.f32 %v337, %v1169
      %1171 = vmatmul.bf16.gmra.mxu0 %v387
      %v1172 = vpop.f32.mrf.mxu0
      %v1173 = vadd.f32 %v337, %v1172
      %v1174 = vpop.f32.mrf.mxu0
      %v1175 = vadd.f32 %v337, %v1174
      %1176 = vmatmul.bf16.gmra.mxu0 %v388
      %v1177 = vpop.f32.mrf.mxu0
      %v1178 = vadd.f32 %v337, %v1177
      %v1179 = vpop.f32.mrf.mxu0
      %v1180 = vadd.f32 %v337, %v1179
      %1181 = vmatmul.bf16.gmra.mxu0 %v389
      %v1182 = vpop.f32.mrf.mxu0
      %v1183 = vadd.f32 %v337, %v1182
      %v1184 = vpop.f32.mrf.mxu0
      %v1185 = vadd.f32 %v337, %v1184
      %1186 = vmatmul.bf16.gmra.mxu0 %v390
      %v1187 = vpop.f32.mrf.mxu0
      %v1188 = vadd.f32 %v337, %v1187
      %v1189 = vpop.f32.mrf.mxu0
      %v1190 = vadd.f32 %v337, %v1189
      %1191 = vmatmul.bf16.gmra.mxu0 %v391
      %v1192 = vpop.f32.mrf.mxu0
      %v1193 = vadd.f32 %v337, %v1192
      %v1194 = vpop.f32.mrf.mxu0
      %v1195 = vadd.f32 %v337, %v1194
      %1196 = vmatmul.bf16.gmra.mxu0 %v392
      %v1197 = vpop.f32.mrf.mxu0
      %v1198 = vadd.f32 %v337, %v1197
      %v1199 = vpop.f32.mrf.mxu0
      %v1200 = vadd.f32 %v337, %v1199
      %1201 = vdwg.mxu0
      %1202 = vmatpush.bf16.msra.mxu0 %v697
      %1203 = vmatpush.bf16.msra.mxu0 %v688
      %1204 = vmatpush.bf16.msra.mxu0 %v679
      %1205 = vmatpush.bf16.msra.mxu0 %v670
      %1206 = vmatpush.bf16.msra.mxu0 %v661
      %1207 = vmatpush.bf16.msra.mxu0 %v652
      %1208 = vmatpush.bf16.msra.mxu0 %v643
      %1209 = vmatpush.bf16.msra.mxu0 %v634
      %1210 = vmatmul.bf16.gmra.mxu0 %v384
      %v1211 = vpop.f32.mrf.mxu0
      %v1212 = vadd.f32 %v338, %v1211
      %v1213 = vpop.f32.mrf.mxu0
      %v1214 = vadd.f32 %v338, %v1213
      %1215 = vmatmul.bf16.gmra.mxu0 %v385
      %v1216 = vpop.f32.mrf.mxu0
      %v1217 = vadd.f32 %v338, %v1216
      %v1218 = vpop.f32.mrf.mxu0
      %v1219 = vadd.f32 %v338, %v1218
      %1220 = vmatmul.bf16.gmra.mxu0 %v386
      %v1221 = vpop.f32.mrf.mxu0
      %v1222 = vadd.f32 %v338, %v1221
      %v1223 = vpop.f32.mrf.mxu0
      %v1224 = vadd.f32 %v338, %v1223
      %1225 = vmatmul.bf16.gmra.mxu0 %v387
      %v1226 = vpop.f32.mrf.mxu0
      %v1227 = vadd.f32 %v338, %v1226
      %v1228 = vpop.f32.mrf.mxu0
      %v1229 = vadd.f32 %v338, %v1228
      %1230 = vmatmul.bf16.gmra.mxu0 %v388
      %v1231 = vpop.f32.mrf.mxu0
      %v1232 = vadd.f32 %v338, %v1231
      %v1233 = vpop.f32.mrf.mxu0
      %v1234 = vadd.f32 %v338, %v1233
      %1235 = vmatmul.bf16.gmra.mxu0 %v389
      %v1236 = vpop.f32.mrf.mxu0
      %v1237 = vadd.f32 %v338, %v1236
      %v1238 = vpop.f32.mrf.mxu0
      %v1239 = vadd.f32 %v338, %v1238
      %1240 = vmatmul.bf16.gmra.mxu0 %v390
      %v1241 = vpop.f32.mrf.mxu0
      %v1242 = vadd.f32 %v338, %v1241
      %v1243 = vpop.f32.mrf.mxu0
      %v1244 = vadd.f32 %v338, %v1243
      %1245 = vmatmul.bf16.gmra.mxu0 %v391
      %v1246 = vpop.f32.mrf.mxu0
      %v1247 = vadd.f32 %v338, %v1246
      %v1248 = vpop.f32.mrf.mxu0
      %v1249 = vadd.f32 %v338, %v1248
      %1250 = vmatmul.bf16.gmra.mxu0 %v392
      %v1251 = vpop.f32.mrf.mxu0
      %v1252 = vadd.f32 %v338, %v1251
      %v1253 = vpop.f32.mrf.mxu0
      %v1254 = vadd.f32 %v338, %v1253
      %1255 = vdwg.mxu0
      %v1256 = vmax.f32 %v780, 0.0
      %v1257 = vmax.f32 %v834, 0.0
      %v1258 = vmax.f32 %v888, 0.0
      %v1259 = vmax.f32 %v942, 0.0
      %v1260 = vmax.f32 %v996, 0.0
      %v1261 = vmax.f32 %v1050, 0.0
      %v1262 = vmax.f32 %v1104, 0.0
      %v1263 = vmax.f32 %v1158, 0.0
      %v1264 = vmax.f32 %v1212, 0.0
      %v1265 = vmax.f32 %v782, 0.0
      %v1266 = vmax.f32 %v836, 0.0
      %v1267 = vmax.f32 %v890, 0.0
      %v1268 = vmax.f32 %v944, 0.0
      %v1269 = vmax.f32 %v998, 0.0
      %v1270 = vmax.f32 %v1052, 0.0
      %v1271 = vmax.f32 %v1106, 0.0
      %v1272 = vmax.f32 %v1160, 0.0
      %v1273 = vmax.f32 %v1214, 0.0
      %v1274 = vmax.f32 %v785, 0.0
      %v1275 = vmax.f32 %v839, 0.0
      %v1276 = vmax.f32 %v893, 0.0
      %v1277 = vmax.f32 %v947, 0.0
      %v1278 = vmax.f32 %v1001, 0.0
      %v1279 = vmax.f32 %v1055, 0.0
      %v1280 = vmax.f32 %v1109, 0.0
      %v1281 = vmax.f32 %v1163, 0.0
      %v1282 = vmax.f32 %v1217, 0.0
      %v1283 = vmax.f32 %v787, 0.0
      %v1284 = vmax.f32 %v841, 0.0
      %v1285 = vmax.f32 %v895, 0.0
      %v1286 = vmax.f32 %v949, 0.0
      %v1287 = vmax.f32 %v1003, 0.0
      %v1288 = vmax.f32 %v1057, 0.0
      %v1289 = vmax.f32 %v1111, 0.0
      %v1290 = vmax.f32 %v1165, 0.0
      %v1291 = vmax.f32 %v1219, 0.0
      %v1292 = vmax.f32 %v790, 0.0
      %v1293 = vmax.f32 %v844, 0.0
      %v1294 = vmax.f32 %v898, 0.0
      %v1295 = vmax.f32 %v952, 0.0
      %v1296 = vmax.f32 %v1006, 0.0
      %v1297 = vmax.f32 %v1060, 0.0
      %v1298 = vmax.f32 %v1114, 0.0
      %v1299 = vmax.f32 %v1168, 0.0
      %v1300 = vmax.f32 %v1222, 0.0
      %v1301 = vmax.f32 %v792, 0.0
      %v1302 = vmax.f32 %v846, 0.0
      %v1303 = vmax.f32 %v900, 0.0
      %v1304 = vmax.f32 %v954, 0.0
      %v1305 = vmax.f32 %v1008, 0.0
      %v1306 = vmax.f32 %v1062, 0.0
      %v1307 = vmax.f32 %v1116, 0.0
      %v1308 = vmax.f32 %v1170, 0.0
      %v1309 = vmax.f32 %v1224, 0.0
      %v1310 = vmax.f32 %v795, 0.0
      %v1311 = vmax.f32 %v849, 0.0
      %v1312 = vmax.f32 %v903, 0.0
      %v1313 = vmax.f32 %v957, 0.0
      %v1314 = vmax.f32 %v1011, 0.0
      %v1315 = vmax.f32 %v1065, 0.0
      %v1316 = vmax.f32 %v1119, 0.0
      %v1317 = vmax.f32 %v1173, 0.0
      %v1318 = vmax.f32 %v1227, 0.0
      %v1319 = vmax.f32 %v797, 0.0
      %v1320 = vmax.f32 %v851, 0.0
      %v1321 = vmax.f32 %v905, 0.0
      %v1322 = vmax.f32 %v959, 0.0
      %v1323 = vmax.f32 %v1013, 0.0
      %v1324 = vmax.f32 %v1067, 0.0
      %v1325 = vmax.f32 %v1121, 0.0
      %v1326 = vmax.f32 %v1175, 0.0
      %v1327 = vmax.f32 %v1229, 0.0
      %v1328 = vmax.f32 %v800, 0.0
      %v1329 = vmax.f32 %v854, 0.0
      %v1330 = vmax.f32 %v908, 0.0
      %v1331 = vmax.f32 %v962, 0.0
      %v1332 = vmax.f32 %v1016, 0.0
      %v1333 = vmax.f32 %v1070, 0.0
      %v1334 = vmax.f32 %v1124, 0.0
      %v1335 = vmax.f32 %v1178, 0.0
      %v1336 = vmax.f32 %v1232, 0.0
      %v1337 = vmax.f32 %v802, 0.0
      %v1338 = vmax.f32 %v856, 0.0
      %v1339 = vmax.f32 %v910, 0.0
      %v1340 = vmax.f32 %v964, 0.0
      %v1341 = vmax.f32 %v1018, 0.0
      %v1342 = vmax.f32 %v1072, 0.0
      %v1343 = vmax.f32 %v1126, 0.0
      %v1344 = vmax.f32 %v1180, 0.0
      %v1345 = vmax.f32 %v1234, 0.0
      %v1346 = vmax.f32 %v805, 0.0
      %v1347 = vmax.f32 %v859, 0.0
      %v1348 = vmax.f32 %v913, 0.0
      %v1349 = vmax.f32 %v967, 0.0
      %v1350 = vmax.f32 %v1021, 0.0
      %v1351 = vmax.f32 %v1075, 0.0
      %v1352 = vmax.f32 %v1129, 0.0
      %v1353 = vmax.f32 %v1183, 0.0
      %v1354 = vmax.f32 %v1237, 0.0
      %v1355 = vmax.f32 %v807, 0.0
      %v1356 = vmax.f32 %v861, 0.0
      %v1357 = vmax.f32 %v915, 0.0
      %v1358 = vmax.f32 %v969, 0.0
      %v1359 = vmax.f32 %v1023, 0.0
      %v1360 = vmax.f32 %v1077, 0.0
      %v1361 = vmax.f32 %v1131, 0.0
      %v1362 = vmax.f32 %v1185, 0.0
      %v1363 = vmax.f32 %v1239, 0.0
      %v1364 = vmax.f32 %v810, 0.0
      %v1365 = vmax.f32 %v864, 0.0
      %v1366 = vmax.f32 %v918, 0.0
      %v1367 = vmax.f32 %v972, 0.0
      %v1368 = vmax.f32 %v1026, 0.0
      %v1369 = vmax.f32 %v1080, 0.0
      %v1370 = vmax.f32 %v1134, 0.0
      %v1371 = vmax.f32 %v1188, 0.0
      %v1372 = vmax.f32 %v1242, 0.0
      %v1373 = vmax.f32 %v812, 0.0
      %v1374 = vmax.f32 %v866, 0.0
      %v1375 = vmax.f32 %v920, 0.0
      %v1376 = vmax.f32 %v974, 0.0
      %v1377 = vmax.f32 %v1028, 0.0
      %v1378 = vmax.f32 %v1082, 0.0
      %v1379 = vmax.f32 %v1136, 0.0
      %v1380 = vmax.f32 %v1190, 0.0
      %v1381 = vmax.f32 %v1244, 0.0
      %v1382 = vmax.f32 %v815, 0.0
      %v1383 = vmax.f32 %v869, 0.0
      %v1384 = vmax.f32 %v923, 0.0
      %v1385 = vmax.f32 %v977, 0.0
      %v1386 = vmax.f32 %v1031, 0.0
      %v1387 = vmax.f32 %v1085, 0.0
      %v1388 = vmax.f32 %v1139, 0.0
      %v1389 = vmax.f32 %v1193, 0.0
      %v1390 = vmax.f32 %v1247, 0.0
      %v1391 = vmax.f32 %v817, 0.0
      %v1392 = vmax.f32 %v871, 0.0
      %v1393 = vmax.f32 %v925, 0.0
      %v1394 = vmax.f32 %v979, 0.0
      %v1395 = vmax.f32 %v1033, 0.0
      %v1396 = vmax.f32 %v1087, 0.0
      %v1397 = vmax.f32 %v1141, 0.0
      %v1398 = vmax.f32 %v1195, 0.0
      %v1399 = vmax.f32 %v1249, 0.0
      %v1400 = vmax.f32 %v820, 0.0
      %v1401 = vmax.f32 %v874, 0.0
      %v1402 = vmax.f32 %v928, 0.0
      %v1403 = vmax.f32 %v982, 0.0
      %v1404 = vmax.f32 %v1036, 0.0
      %v1405 = vmax.f32 %v1090, 0.0
      %v1406 = vmax.f32 %v1144, 0.0
      %v1407 = vmax.f32 %v1198, 0.0
      %v1408 = vmax.f32 %v1252, 0.0
      %v1409 = vmax.f32 %v822, 0.0
      %v1410 = vmax.f32 %v876, 0.0
      %v1411 = vmax.f32 %v930, 0.0
      %v1412 = vmax.f32 %v984, 0.0
      %v1413 = vmax.f32 %v1038, 0.0
      %v1414 = vmax.f32 %v1092, 0.0
      %v1415 = vmax.f32 %v1146, 0.0
      %v1416 = vmax.f32 %v1200, 0.0
      %v1417 = vmax.f32 %v1254, 0.0
      %v1418 = vpack.c.bf16 %v1265, %v1256
      %v1419 = vpack.c.bf16 %v1266, %v1257
      %v1420 = vpack.c.bf16 %v1267, %v1258
      %v1421 = vpack.c.bf16 %v1268, %v1259
      %v1422 = vpack.c.bf16 %v1269, %v1260
      %v1423 = vpack.c.bf16 %v1270, %v1261
      %v1424 = vpack.c.bf16 %v1271, %v1262
      %v1425 = vpack.c.bf16 %v1272, %v1263
      %v1426 = vpack.c.bf16 %v1273, %v1264
      %v1427 = vpack.c.bf16 %v1283, %v1274
      %v1428 = vpack.c.bf16 %v1284, %v1275
      %v1429 = vpack.c.bf16 %v1285, %v1276
      %v1430 = vpack.c.bf16 %v1286, %v1277
      %v1431 = vpack.c.bf16 %v1287, %v1278
      %v1432 = vpack.c.bf16 %v1288, %v1279
      %v1433 = vpack.c.bf16 %v1289, %v1280
      %v1434 = vpack.c.bf16 %v1290, %v1281
      %v1435 = vpack.c.bf16 %v1291, %v1282
      %v1436 = vpack.c.bf16 %v1301, %v1292
      %v1437 = vpack.c.bf16 %v1302, %v1293
      %v1438 = vpack.c.bf16 %v1303, %v1294
      %v1439 = vpack.c.bf16 %v1304, %v1295
      %v1440 = vpack.c.bf16 %v1305, %v1296
      %v1441 = vpack.c.bf16 %v1306, %v1297
      %v1442 = vpack.c.bf16 %v1307, %v1298
      %v1443 = vpack.c.bf16 %v1308, %v1299
      %v1444 = vpack.c.bf16 %v1309, %v1300
      %v1445 = vpack.c.bf16 %v1319, %v1310
      %v1446 = vpack.c.bf16 %v1320, %v1311
      %v1447 = vpack.c.bf16 %v1321, %v1312
      %v1448 = vpack.c.bf16 %v1322, %v1313
      %v1449 = vpack.c.bf16 %v1323, %v1314
      %v1450 = vpack.c.bf16 %v1324, %v1315
      %v1451 = vpack.c.bf16 %v1325, %v1316
      %v1452 = vpack.c.bf16 %v1326, %v1317
      %v1453 = vpack.c.bf16 %v1327, %v1318
      %v1454 = vpack.c.bf16 %v1337, %v1328
      %v1455 = vpack.c.bf16 %v1338, %v1329
      %v1456 = vpack.c.bf16 %v1339, %v1330
      %v1457 = vpack.c.bf16 %v1340, %v1331
      %v1458 = vpack.c.bf16 %v1341, %v1332
      %v1459 = vpack.c.bf16 %v1342, %v1333
      %v1460 = vpack.c.bf16 %v1343, %v1334
      %v1461 = vpack.c.bf16 %v1344, %v1335
      %v1462 = vpack.c.bf16 %v1345, %v1336
      %v1463 = vpack.c.bf16 %v1355, %v1346
      %v1464 = vpack.c.bf16 %v1356, %v1347
      %v1465 = vpack.c.bf16 %v1357, %v1348
      %v1466 = vpack.c.bf16 %v1358, %v1349
      %v1467 = vpack.c.bf16 %v1359, %v1350
      %v1468 = vpack.c.bf16 %v1360, %v1351
      %v1469 = vpack.c.bf16 %v1361, %v1352
      %v1470 = vpack.c.bf16 %v1362, %v1353
      %v1471 = vpack.c.bf16 %v1363, %v1354
      %v1472 = vpack.c.bf16 %v1373, %v1364
      %v1473 = vpack.c.bf16 %v1374, %v1365
      %v1474 = vpack.c.bf16 %v1375, %v1366
      %v1475 = vpack.c.bf16 %v1376, %v1367
      %v1476 = vpack.c.bf16 %v1377, %v1368
      %v1477 = vpack.c.bf16 %v1378, %v1369
      %v1478 = vpack.c.bf16 %v1379, %v1370
      %v1479 = vpack.c.bf16 %v1380, %v1371
      %v1480 = vpack.c.bf16 %v1381, %v1372
      %v1481 = vpack.c.bf16 %v1391, %v1382
      %v1482 = vpack.c.bf16 %v1392, %v1383
      %v1483 = vpack.c.bf16 %v1393, %v1384
      %v1484 = vpack.c.bf16 %v1394, %v1385
      %v1485 = vpack.c.bf16 %v1395, %v1386
      %v1486 = vpack.c.bf16 %v1396, %v1387
      %v1487 = vpack.c.bf16 %v1397, %v1388
      %v1488 = vpack.c.bf16 %v1398, %v1389
      %v1489 = vpack.c.bf16 %v1399, %v1390
      %v1490 = vpack.c.bf16 %v1409, %v1400
      %v1491 = vpack.c.bf16 %v1410, %v1401
      %v1492 = vpack.c.bf16 %v1411, %v1402
      %v1493 = vpack.c.bf16 %v1412, %v1403
      %v1494 = vpack.c.bf16 %v1413, %v1404
      %v1495 = vpack.c.bf16 %v1414, %v1405
      %v1496 = vpack.c.bf16 %v1415, %v1406
      %v1497 = vpack.c.bf16 %v1416, %v1407
      %v1498 = vpack.c.bf16 %v1417, %v1408
      %v1499 = vld [vmem:[%s3] sm:$0xff]
      %v1500 = vld [vmem:[%s3 + $0x8] sm:$0xff]
      %v1501 = vld [vmem:[%s3 + $0x10] sm:$0xff]
      %v1502 = vld [vmem:[%s3 + $0x18] sm:$0xff]
      %v1503 = vld [vmem:[%s3 + $0x20] sm:$0xff]
      %v1504 = vld [vmem:[%s3 + $0x28] sm:$0xff]
      %v1505 = vld [vmem:[%s3 + $0x30] sm:$0xff]
      %v1506 = vld [vmem:[%s3 + $0x38] sm:$0xff]
      %v1507 = vld [vmem:[%s3 + $0x40] sm:$0xff]
      %v1508 = vld [vmem:[%s3 + $0x48] sm:$0xff]
      %v1509 = vld [vmem:[%s3 + $0x50] sm:$0xff]
      %v1510 = vld [vmem:[%s3 + $0x58] sm:$0xff]
      %v1511 = vld [vmem:[%s3 + $0x60] sm:$0xff]
      %v1512 = vld [vmem:[%s3 + $0x68] sm:$0xff]
      %v1513 = vld [vmem:[%s3 + $0x70] sm:$0xff]
      %v1514 = vld [vmem:[%s3 + $0x78] sm:$0xff]
      %v1515 = vld [vmem:[%s3 + $0x80] sm:$0xff]
      %v1516 = vld [vmem:[%s3 + $0x88] sm:$0xff]
      %v1517 = vld [vmem:[%s3 + $0x90] sm:$0xff]
      %v1518 = vld [vmem:[%s3 + $0x98] sm:$0xff]
      %v1519 = vld [vmem:[%s3 + $0xa0] sm:$0xff]
      %v1520 = vld [vmem:[%s3 + $0xa8] sm:$0xff]
      %v1521 = vld [vmem:[%s3 + $0xb0] sm:$0xff]
      %v1522 = vld [vmem:[%s3 + $0xb8] sm:$0xff]
      %v1523 = vld [vmem:[%s3 + $0xc0] sm:$0xff]
      %v1524 = vld [vmem:[%s3 + $0xc8] sm:$0xff]
      %v1525 = vld [vmem:[%s3 + $0xd0] sm:$0xff]
      %v1526 = vld [vmem:[%s3 + $0xd8] sm:$0xff]
      %v1527 = vld [vmem:[%s3 + $0xe0] sm:$0xff]
      %v1528 = vld [vmem:[%s3 + $0xe8] sm:$0xff]
      %v1529 = vld [vmem:[%s3 + $0xf0] sm:$0xff]
      %v1530 = vld [vmem:[%s3 + $0xf8] sm:$0xff]
      %v1531 = vld [vmem:[%s3 + $0x100] sm:$0xff]
      %v1532 = vld [vmem:[%s3 + $0x108] sm:$0xff]
      %v1533 = vld [vmem:[%s3 + $0x110] sm:$0xff]
      %v1534 = vld [vmem:[%s3 + $0x118] sm:$0xff]
      %v1535 = vld [vmem:[%s3 + $0x120] sm:$0xff]
      %v1536 = vld [vmem:[%s3 + $0x128] sm:$0xff]
      %v1537 = vld [vmem:[%s3 + $0x130] sm:$0xff]
      %v1538 = vld [vmem:[%s3 + $0x138] sm:$0xff]
      %v1539 = vld [vmem:[%s3 + $0x140] sm:$0xff]
      %v1540 = vld [vmem:[%s3 + $0x148] sm:$0xff]
      %v1541 = vld [vmem:[%s3 + $0x150] sm:$0xff]
      %v1542 = vld [vmem:[%s3 + $0x158] sm:$0xff]
      %v1543 = vld [vmem:[%s3 + $0x160] sm:$0xff]
      %v1544 = vld [vmem:[%s3 + $0x168] sm:$0xff]
      %v1545 = vld [vmem:[%s3 + $0x170] sm:$0xff]
      %v1546 = vld [vmem:[%s3 + $0x178] sm:$0xff]
      %v1547 = vld [vmem:[%s3 + $0x180] sm:$0xff]
      %v1548 = vld [vmem:[%s3 + $0x188] sm:$0xff]
      %v1549 = vld [vmem:[%s3 + $0x190] sm:$0xff]
      %v1550 = vld [vmem:[%s3 + $0x198] sm:$0xff]
      %v1551 = vld [vmem:[%s3 + $0x1a0] sm:$0xff]
      %v1552 = vld [vmem:[%s3 + $0x1a8] sm:$0xff]
      %v1553 = vld [vmem:[%s3 + $0x1b0] sm:$0xff]
      %v1554 = vld [vmem:[%s3 + $0x1b8] sm:$0xff]
      %v1555 = vld [vmem:[%s3 + $0x1c0] sm:$0xff]
      %v1556 = vld [vmem:[%s3 + $0x1c8] sm:$0xff]
      %v1557 = vld [vmem:[%s3 + $0x1d0] sm:$0xff]
      %v1558 = vld [vmem:[%s3 + $0x1d8] sm:$0xff]
      %v1559 = vld [vmem:[%s3 + $0x1e0] sm:$0xff]
      %v1560 = vld [vmem:[%s3 + $0x1e8] sm:$0xff]
      %v1561 = vld [vmem:[%s3 + $0x1f0] sm:$0xff]
      %v1562 = vld [vmem:[%s3 + $0x1f8] sm:$0xff]
      %v1563 = vld [vmem:[%s3 + $0x200] sm:$0xff]
      %v1564 = vld [vmem:[%s3 + $0x208] sm:$0xff]
      %v1565 = vld [vmem:[%s3 + $0x210] sm:$0xff]
      %v1566 = vld [vmem:[%s3 + $0x218] sm:$0xff]
      %v1567 = vld [vmem:[%s3 + $0x220] sm:$0xff]
      %v1568 = vld [vmem:[%s3 + $0x228] sm:$0xff]
      %v1569 = vld [vmem:[%s3 + $0x230] sm:$0xff]
      %v1570 = vld [vmem:[%s3 + $0x238] sm:$0xff]
      %v1571 = vld [vmem:[%s3 + $0x240] sm:$0xff]
      %v1572 = vld [vmem:[%s3 + $0x248] sm:$0xff]
      %v1573 = vld [vmem:[%s3 + $0x250] sm:$0xff]
      %v1574 = vld [vmem:[%s3 + $0x258] sm:$0xff]
      %v1575 = vld [vmem:[%s3 + $0x260] sm:$0xff]
      %v1576 = vld [vmem:[%s3 + $0x268] sm:$0xff]
      %v1577 = vld [vmem:[%s3 + $0x270] sm:$0xff]
      %v1578 = vld [vmem:[%s3 + $0x278] sm:$0xff]
      %v1579 = vld [vmem:[%s3 + $0x280] sm:$0xff]
      %v1580 = vld [vmem:[%s3 + $0x288] sm:$0xff]
      %v1581 = vld [vmem:[%s3 + $0x290] sm:$0xff]
      %v1582 = vld [vmem:[%s3 + $0x298] sm:$0xff]
      %v1583 = vld [vmem:[%s3 + $0x2a0] sm:$0xff]
      %v1584 = vld [vmem:[%s3 + $0x2a8] sm:$0xff]
      %v1585 = vld [vmem:[%s3 + $0x2b0] sm:$0xff]
      %v1586 = vld [vmem:[%s3 + $0x2b8] sm:$0xff]
      %v1587 = vld [vmem:[%s3 + $0x2c0] sm:$0xff]
      %v1588 = vld [vmem:[%s3 + $0x2c8] sm:$0xff]
      %v1589 = vld [vmem:[%s3 + $0x2d0] sm:$0xff]
      %v1590 = vld [vmem:[%s3 + $0x2d8] sm:$0xff]
      %v1591 = vld [vmem:[%s3 + $0x2e0] sm:$0xff]
      %v1592 = vld [vmem:[%s3 + $0x2e8] sm:$0xff]
      %v1593 = vld [vmem:[%s3 + $0x2f0] sm:$0xff]
      %v1594 = vld [vmem:[%s3 + $0x2f8] sm:$0xff]
      %v1595 = vld [vmem:[%s3 + $0x300] sm:$0xff]
      %v1596 = vld [vmem:[%s3 + $0x308] sm:$0xff]
      %v1597 = vld [vmem:[%s3 + $0x310] sm:$0xff]
      %v1598 = vld [vmem:[%s3 + $0x318] sm:$0xff]
      %v1599 = vld [vmem:[%s3 + $0x320] sm:$0xff]
      %v1600 = vld [vmem:[%s3 + $0x328] sm:$0xff]
      %v1601 = vld [vmem:[%s3 + $0x330] sm:$0xff]
      %v1602 = vld [vmem:[%s3 + $0x338] sm:$0xff]
      %v1603 = vld [vmem:[%s3 + $0x340] sm:$0xff]
      %v1604 = vld [vmem:[%s3 + $0x348] sm:$0xff]
      %v1605 = vld [vmem:[%s3 + $0x350] sm:$0xff]
      %v1606 = vld [vmem:[%s3 + $0x358] sm:$0xff]
      %v1607 = vld [vmem:[%s3 + $0x360] sm:$0xff]
      %v1608 = vld [vmem:[%s3 + $0x368] sm:$0xff]
      %v1609 = vld [vmem:[%s3 + $0x370] sm:$0xff]
      %v1610 = vld [vmem:[%s3 + $0x378] sm:$0xff]
      %v1611 = vld [vmem:[%s3 + $0x380] sm:$0xff]
      %v1612 = vld [vmem:[%s3 + $0x388] sm:$0xff]
      %v1613 = vld [vmem:[%s3 + $0x390] sm:$0xff]
      %v1614 = vld [vmem:[%s3 + $0x398] sm:$0xff]
      %v1615 = vld [vmem:[%s3 + $0x3a0] sm:$0xff]
      %v1616 = vld [vmem:[%s3 + $0x3a8] sm:$0xff]
      %v1617 = vld [vmem:[%s3 + $0x3b0] sm:$0xff]
      %v1618 = vld [vmem:[%s3 + $0x3b8] sm:$0xff]
      %v1619 = vld [vmem:[%s3 + $0x3c0] sm:$0xff]
      %v1620 = vld [vmem:[%s3 + $0x3c8] sm:$0xff]
      %v1621 = vld [vmem:[%s3 + $0x3d0] sm:$0xff]
      %v1622 = vld [vmem:[%s3 + $0x3d8] sm:$0xff]
      %v1623 = vld [vmem:[%s3 + $0x3e0] sm:$0xff]
      %v1624 = vld [vmem:[%s3 + $0x3e8] sm:$0xff]
      %v1625 = vld [vmem:[%s3 + $0x3f0] sm:$0xff]
      %v1626 = vld [vmem:[%s3 + $0x3f8] sm:$0xff]
      %v1627 = vld [vmem:[%s3 + $0x400] sm:$0xff]
      %v1628 = vld [vmem:[%s3 + $0x408] sm:$0xff]
      %v1629 = vld [vmem:[%s3 + $0x410] sm:$0xff]
      %v1630 = vld [vmem:[%s3 + $0x418] sm:$0xff]
      %v1631 = vld [vmem:[%s3 + $0x420] sm:$0xff]
      %v1632 = vld [vmem:[%s3 + $0x428] sm:$0xff]
      %v1633 = vld [vmem:[%s3 + $0x430] sm:$0xff]
      %v1634 = vld [vmem:[%s3 + $0x438] sm:$0xff]
      %v1635 = vld [vmem:[%s3 + $0x440] sm:$0xff]
      %v1636 = vld [vmem:[%s3 + $0x448] sm:$0xff]
      %v1637 = vld [vmem:[%s3 + $0x450] sm:$0xff]
      %v1638 = vld [vmem:[%s3 + $0x458] sm:$0xff]
      %v1639 = vld [vmem:[%s3 + $0x460] sm:$0xff]
      %v1640 = vld [vmem:[%s3 + $0x468] sm:$0xff]
      %v1641 = vld [vmem:[%s3 + $0x470] sm:$0xff]
      %v1642 = vld [vmem:[%s3 + $0x478] sm:$0xff]
      %v1787 = vunpack.c.l.b16 %v1499
      %v1788 = vunpack.c.h.b16 %v1499
      %v1789 = vunpack.c.l.b16 %v1500
      %v1790 = vunpack.c.h.b16 %v1500
      %v1791 = vunpack.c.l.b16 %v1501
      %v1792 = vunpack.c.h.b16 %v1501
      %v1793 = vunpack.c.l.b16 %v1502
      %v1794 = vunpack.c.h.b16 %v1502
      %v1795 = vunpack.c.l.b16 %v1503
      %v1796 = vunpack.c.h.b16 %v1503
      %v1797 = vunpack.c.l.b16 %v1504
      %v1798 = vunpack.c.h.b16 %v1504
      %v1799 = vunpack.c.l.b16 %v1505
      %v1800 = vunpack.c.h.b16 %v1505
      %v1801 = vunpack.c.l.b16 %v1506
      %v1802 = vunpack.c.h.b16 %v1506
      %v1803 = vunpack.c.l.b16 %v1507
      %v1804 = vunpack.c.h.b16 %v1507
      %v1805 = vunpack.c.l.b16 %v1508
      %v1806 = vunpack.c.h.b16 %v1508
      %v1807 = vunpack.c.l.b16 %v1509
      %v1808 = vunpack.c.h.b16 %v1509
      %v1809 = vunpack.c.l.b16 %v1510
      %v1810 = vunpack.c.h.b16 %v1510
      %v1811 = vunpack.c.l.b16 %v1511
      %v1812 = vunpack.c.h.b16 %v1511
      %v1813 = vunpack.c.l.b16 %v1512
      %v1814 = vunpack.c.h.b16 %v1512
      %v1815 = vunpack.c.l.b16 %v1513
      %v1816 = vunpack.c.h.b16 %v1513
      %v1817 = vunpack.c.l.b16 %v1514
      %v1818 = vunpack.c.h.b16 %v1514
      %v1819 = vunpack.c.l.b16 %v1515
      %v1820 = vunpack.c.h.b16 %v1515
      %v1821 = vunpack.c.l.b16 %v1516
      %v1822 = vunpack.c.h.b16 %v1516
      %v1823 = vunpack.c.l.b16 %v1517
      %v1824 = vunpack.c.h.b16 %v1517
      %v1825 = vunpack.c.l.b16 %v1518
      %v1826 = vunpack.c.h.b16 %v1518
      %v1827 = vunpack.c.l.b16 %v1519
      %v1828 = vunpack.c.h.b16 %v1519
      %v1829 = vunpack.c.l.b16 %v1520
      %v1830 = vunpack.c.h.b16 %v1520
      %v1831 = vunpack.c.l.b16 %v1521
      %v1832 = vunpack.c.h.b16 %v1521
      %v1833 = vunpack.c.l.b16 %v1522
      %v1834 = vunpack.c.h.b16 %v1522
      %v1835 = vunpack.c.l.b16 %v1523
      %v1836 = vunpack.c.h.b16 %v1523
      %v1837 = vunpack.c.l.b16 %v1524
      %v1838 = vunpack.c.h.b16 %v1524
      %v1839 = vunpack.c.l.b16 %v1525
      %v1840 = vunpack.c.h.b16 %v1525
      %v1841 = vunpack.c.l.b16 %v1526
      %v1842 = vunpack.c.h.b16 %v1526
      %v1843 = vunpack.c.l.b16 %v1527
      %v1844 = vunpack.c.h.b16 %v1527
      %v1845 = vunpack.c.l.b16 %v1528
      %v1846 = vunpack.c.h.b16 %v1528
      %v1847 = vunpack.c.l.b16 %v1529
      %v1848 = vunpack.c.h.b16 %v1529
      %v1849 = vunpack.c.l.b16 %v1530
      %v1850 = vunpack.c.h.b16 %v1530
      %v1851 = vunpack.c.l.b16 %v1531
      %v1852 = vunpack.c.h.b16 %v1531
      %v1853 = vunpack.c.l.b16 %v1532
      %v1854 = vunpack.c.h.b16 %v1532
      %v1855 = vunpack.c.l.b16 %v1533
      %v1856 = vunpack.c.h.b16 %v1533
      %v1857 = vunpack.c.l.b16 %v1534
      %v1858 = vunpack.c.h.b16 %v1534
      %v1859 = vunpack.c.l.b16 %v1535
      %v1860 = vunpack.c.h.b16 %v1535
      %v1861 = vunpack.c.l.b16 %v1536
      %v1862 = vunpack.c.h.b16 %v1536
      %v1863 = vunpack.c.l.b16 %v1537
      %v1864 = vunpack.c.h.b16 %v1537
      %v1865 = vunpack.c.l.b16 %v1538
      %v1866 = vunpack.c.h.b16 %v1538
      %v1867 = vunpack.c.l.b16 %v1539
      %v1868 = vunpack.c.h.b16 %v1539
      %v1869 = vunpack.c.l.b16 %v1540
      %v1870 = vunpack.c.h.b16 %v1540
      %v1871 = vunpack.c.l.b16 %v1541
      %v1872 = vunpack.c.h.b16 %v1541
      %v1873 = vunpack.c.l.b16 %v1542
      %v1874 = vunpack.c.h.b16 %v1542
      %v1875 = vunpack.c.l.b16 %v1543
      %v1876 = vunpack.c.h.b16 %v1543
      %v1877 = vunpack.c.l.b16 %v1544
      %v1878 = vunpack.c.h.b16 %v1544
      %v1879 = vunpack.c.l.b16 %v1545
      %v1880 = vunpack.c.h.b16 %v1545
      %v1881 = vunpack.c.l.b16 %v1546
      %v1882 = vunpack.c.h.b16 %v1546
      %v1883 = vunpack.c.l.b16 %v1547
      %v1884 = vunpack.c.h.b16 %v1547
      %v1885 = vunpack.c.l.b16 %v1548
      %v1886 = vunpack.c.h.b16 %v1548
      %v1887 = vunpack.c.l.b16 %v1549
      %v1888 = vunpack.c.h.b16 %v1549
      %v1889 = vunpack.c.l.b16 %v1550
      %v1890 = vunpack.c.h.b16 %v1550
      %v1891 = vunpack.c.l.b16 %v1551
      %v1892 = vunpack.c.h.b16 %v1551
      %v1893 = vunpack.c.l.b16 %v1552
      %v1894 = vunpack.c.h.b16 %v1552
      %v1895 = vunpack.c.l.b16 %v1553
      %v1896 = vunpack.c.h.b16 %v1553
      %v1897 = vunpack.c.l.b16 %v1554
      %v1898 = vunpack.c.h.b16 %v1554
      %v1899 = vunpack.c.l.b16 %v1555
      %v1900 = vunpack.c.h.b16 %v1555
      %v1901 = vunpack.c.l.b16 %v1556
      %v1902 = vunpack.c.h.b16 %v1556
      %v1903 = vunpack.c.l.b16 %v1557
      %v1904 = vunpack.c.h.b16 %v1557
      %v1905 = vunpack.c.l.b16 %v1558
      %v1906 = vunpack.c.h.b16 %v1558
      %v1907 = vunpack.c.l.b16 %v1559
      %v1908 = vunpack.c.h.b16 %v1559
      %v1909 = vunpack.c.l.b16 %v1560
      %v1910 = vunpack.c.h.b16 %v1560
      %v1911 = vunpack.c.l.b16 %v1561
      %v1912 = vunpack.c.h.b16 %v1561
      %v1913 = vunpack.c.l.b16 %v1562
      %v1914 = vunpack.c.h.b16 %v1562
      %v1915 = vunpack.c.l.b16 %v1563
      %v1916 = vunpack.c.h.b16 %v1563
      %v1917 = vunpack.c.l.b16 %v1564
      %v1918 = vunpack.c.h.b16 %v1564
      %v1919 = vunpack.c.l.b16 %v1565
      %v1920 = vunpack.c.h.b16 %v1565
      %v1921 = vunpack.c.l.b16 %v1566
      %v1922 = vunpack.c.h.b16 %v1566
      %v1923 = vunpack.c.l.b16 %v1567
      %v1924 = vunpack.c.h.b16 %v1567
      %v1925 = vunpack.c.l.b16 %v1568
      %v1926 = vunpack.c.h.b16 %v1568
      %v1927 = vunpack.c.l.b16 %v1569
      %v1928 = vunpack.c.h.b16 %v1569
      %v1929 = vunpack.c.l.b16 %v1570
      %v1930 = vunpack.c.h.b16 %v1570
      %v1931 = vunpack.c.l.b16 %v1571
      %v1932 = vunpack.c.h.b16 %v1571
      %v1933 = vunpack.c.l.b16 %v1572
      %v1934 = vunpack.c.h.b16 %v1572
      %v1935 = vunpack.c.l.b16 %v1573
      %v1936 = vunpack.c.h.b16 %v1573
      %v1937 = vunpack.c.l.b16 %v1574
      %v1938 = vunpack.c.h.b16 %v1574
      %v1939 = vunpack.c.l.b16 %v1575
      %v1940 = vunpack.c.h.b16 %v1575
      %v1941 = vunpack.c.l.b16 %v1576
      %v1942 = vunpack.c.h.b16 %v1576
      %v1943 = vunpack.c.l.b16 %v1577
      %v1944 = vunpack.c.h.b16 %v1577
      %v1945 = vunpack.c.l.b16 %v1578
      %v1946 = vunpack.c.h.b16 %v1578
      %v1947 = vunpack.c.l.b16 %v1579
      %v1948 = vunpack.c.h.b16 %v1579
      %v1949 = vunpack.c.l.b16 %v1580
      %v1950 = vunpack.c.h.b16 %v1580
      %v1951 = vunpack.c.l.b16 %v1581
      %v1952 = vunpack.c.h.b16 %v1581
      %v1953 = vunpack.c.l.b16 %v1582
      %v1954 = vunpack.c.h.b16 %v1582
      %v1955 = vunpack.c.l.b16 %v1583
      %v1956 = vunpack.c.h.b16 %v1583
      %v1957 = vunpack.c.l.b16 %v1584
      %v1958 = vunpack.c.h.b16 %v1584
      %v1959 = vunpack.c.l.b16 %v1585
      %v1960 = vunpack.c.h.b16 %v1585
      %v1961 = vunpack.c.l.b16 %v1586
      %v1962 = vunpack.c.h.b16 %v1586
      %v1963 = vunpack.c.l.b16 %v1587
      %v1964 = vunpack.c.h.b16 %v1587
      %v1965 = vunpack.c.l.b16 %v1588
      %v1966 = vunpack.c.h.b16 %v1588
      %v1967 = vunpack.c.l.b16 %v1589
      %v1968 = vunpack.c.h.b16 %v1589
      %v1969 = vunpack.c.l.b16 %v1590
      %v1970 = vunpack.c.h.b16 %v1590
      %v1971 = vunpack.c.l.b16 %v1591
      %v1972 = vunpack.c.h.b16 %v1591
      %v1973 = vunpack.c.l.b16 %v1592
      %v1974 = vunpack.c.h.b16 %v1592
      %v1975 = vunpack.c.l.b16 %v1593
      %v1976 = vunpack.c.h.b16 %v1593
      %v1977 = vunpack.c.l.b16 %v1594
      %v1978 = vunpack.c.h.b16 %v1594
      %v1979 = vunpack.c.l.b16 %v1595
      %v1980 = vunpack.c.h.b16 %v1595
      %v1981 = vunpack.c.l.b16 %v1596
      %v1982 = vunpack.c.h.b16 %v1596
      %v1983 = vunpack.c.l.b16 %v1597
      %v1984 = vunpack.c.h.b16 %v1597
      %v1985 = vunpack.c.l.b16 %v1598
      %v1986 = vunpack.c.h.b16 %v1598
      %v1987 = vunpack.c.l.b16 %v1599
      %v1988 = vunpack.c.h.b16 %v1599
      %v1989 = vunpack.c.l.b16 %v1600
      %v1990 = vunpack.c.h.b16 %v1600
      %v1991 = vunpack.c.l.b16 %v1601
      %v1992 = vunpack.c.h.b16 %v1601
      %v1993 = vunpack.c.l.b16 %v1602
      %v1994 = vunpack.c.h.b16 %v1602
      %v1995 = vunpack.c.l.b16 %v1603
      %v1996 = vunpack.c.h.b16 %v1603
      %v1997 = vunpack.c.l.b16 %v1604
      %v1998 = vunpack.c.h.b16 %v1604
      %v1999 = vunpack.c.l.b16 %v1605
      %v2000 = vunpack.c.h.b16 %v1605
      %v2001 = vunpack.c.l.b16 %v1606
      %v2002 = vunpack.c.h.b16 %v1606
      %v2003 = vunpack.c.l.b16 %v1607
      %v2004 = vunpack.c.h.b16 %v1607
      %v2005 = vunpack.c.l.b16 %v1608
      %v2006 = vunpack.c.h.b16 %v1608
      %v2007 = vunpack.c.l.b16 %v1609
      %v2008 = vunpack.c.h.b16 %v1609
      %v2009 = vunpack.c.l.b16 %v1610
      %v2010 = vunpack.c.h.b16 %v1610
      %v2011 = vunpack.c.l.b16 %v1611
      %v2012 = vunpack.c.h.b16 %v1611
      %v2013 = vunpack.c.l.b16 %v1612
      %v2014 = vunpack.c.h.b16 %v1612
      %v2015 = vunpack.c.l.b16 %v1613
      %v2016 = vunpack.c.h.b16 %v1613
      %v2017 = vunpack.c.l.b16 %v1614
      %v2018 = vunpack.c.h.b16 %v1614
      %v2019 = vunpack.c.l.b16 %v1615
      %v2020 = vunpack.c.h.b16 %v1615
      %v2021 = vunpack.c.l.b16 %v1616
      %v2022 = vunpack.c.h.b16 %v1616
      %v2023 = vunpack.c.l.b16 %v1617
      %v2024 = vunpack.c.h.b16 %v1617
      %v2025 = vunpack.c.l.b16 %v1618
      %v2026 = vunpack.c.h.b16 %v1618
      %v2027 = vunpack.c.l.b16 %v1619
      %v2028 = vunpack.c.h.b16 %v1619
      %v2029 = vunpack.c.l.b16 %v1620
      %v2030 = vunpack.c.h.b16 %v1620
      %v2031 = vunpack.c.l.b16 %v1621
      %v2032 = vunpack.c.h.b16 %v1621
      %v2033 = vunpack.c.l.b16 %v1622
      %v2034 = vunpack.c.h.b16 %v1622
      %v2035 = vunpack.c.l.b16 %v1623
      %v2036 = vunpack.c.h.b16 %v1623
      %v2037 = vunpack.c.l.b16 %v1624
      %v2038 = vunpack.c.h.b16 %v1624
      %v2039 = vunpack.c.l.b16 %v1625
      %v2040 = vunpack.c.h.b16 %v1625
      %v2041 = vunpack.c.l.b16 %v1626
      %v2042 = vunpack.c.h.b16 %v1626
      %v2043 = vunpack.c.l.b16 %v1627
      %v2044 = vunpack.c.h.b16 %v1627
      %v2045 = vunpack.c.l.b16 %v1628
      %v2046 = vunpack.c.h.b16 %v1628
      %v2047 = vunpack.c.l.b16 %v1629
      %v2048 = vunpack.c.h.b16 %v1629
      %v2049 = vunpack.c.l.b16 %v1630
      %v2050 = vunpack.c.h.b16 %v1630
      %v2051 = vunpack.c.l.b16 %v1631
      %v2052 = vunpack.c.h.b16 %v1631
      %v2053 = vunpack.c.l.b16 %v1632
      %v2054 = vunpack.c.h.b16 %v1632
      %v2055 = vunpack.c.l.b16 %v1633
      %v2056 = vunpack.c.h.b16 %v1633
      %v2057 = vunpack.c.l.b16 %v1634
      %v2058 = vunpack.c.h.b16 %v1634
      %v2059 = vunpack.c.l.b16 %v1635
      %v2060 = vunpack.c.h.b16 %v1635
      %v2061 = vunpack.c.l.b16 %v1636
      %v2062 = vunpack.c.h.b16 %v1636
      %v2063 = vunpack.c.l.b16 %v1637
      %v2064 = vunpack.c.h.b16 %v1637
      %v2065 = vunpack.c.l.b16 %v1638
      %v2066 = vunpack.c.h.b16 %v1638
      %v2067 = vunpack.c.l.b16 %v1639
      %v2068 = vunpack.c.h.b16 %v1639
      %v2069 = vunpack.c.l.b16 %v1640
      %v2070 = vunpack.c.h.b16 %v1640
      %v2071 = vunpack.c.l.b16 %v1641
      %v2072 = vunpack.c.h.b16 %v1641
      %v2073 = vunpack.c.l.b16 %v1642
      %v2074 = vunpack.c.h.b16 %v1642
      %v2075 = vpack.c.b16 %v1789, %v1787
      %v2076 = vpack.c.b16 %v1790, %v1788
      %v2077 = vpack.c.b16 %v1793, %v1791
      %v2078 = vpack.c.b16 %v1794, %v1792
      %v2079 = vpack.c.b16 %v1797, %v1795
      %v2080 = vpack.c.b16 %v1798, %v1796
      %v2081 = vpack.c.b16 %v1801, %v1799
      %v2082 = vpack.c.b16 %v1802, %v1800
      %v2083 = vpack.c.b16 %v1805, %v1803
      %v2084 = vpack.c.b16 %v1806, %v1804
      %v2085 = vpack.c.b16 %v1809, %v1807
      %v2086 = vpack.c.b16 %v1810, %v1808
      %v2087 = vpack.c.b16 %v1813, %v1811
      %v2088 = vpack.c.b16 %v1814, %v1812
      %v2089 = vpack.c.b16 %v1817, %v1815
      %v2090 = vpack.c.b16 %v1818, %v1816
      %v2091 = vpack.c.b16 %v1821, %v1819
      %v2092 = vpack.c.b16 %v1822, %v1820
      %v2093 = vpack.c.b16 %v1825, %v1823
      %v2094 = vpack.c.b16 %v1826, %v1824
      %v2095 = vpack.c.b16 %v1829, %v1827
      %v2096 = vpack.c.b16 %v1830, %v1828
      %v2097 = vpack.c.b16 %v1833, %v1831
      %v2098 = vpack.c.b16 %v1834, %v1832
      %v2099 = vpack.c.b16 %v1837, %v1835
      %v2100 = vpack.c.b16 %v1838, %v1836
      %v2101 = vpack.c.b16 %v1841, %v1839
      %v2102 = vpack.c.b16 %v1842, %v1840
      %v2103 = vpack.c.b16 %v1845, %v1843
      %v2104 = vpack.c.b16 %v1846, %v1844
      %v2105 = vpack.c.b16 %v1849, %v1847
      %v2106 = vpack.c.b16 %v1850, %v1848
      %v2107 = vpack.c.b16 %v1853, %v1851
      %v2108 = vpack.c.b16 %v1854, %v1852
      %v2109 = vpack.c.b16 %v1857, %v1855
      %v2110 = vpack.c.b16 %v1858, %v1856
      %v2111 = vpack.c.b16 %v1861, %v1859
      %v2112 = vpack.c.b16 %v1862, %v1860
      %v2113 = vpack.c.b16 %v1865, %v1863
      %v2114 = vpack.c.b16 %v1866, %v1864
      %v2115 = vpack.c.b16 %v1869, %v1867
      %v2116 = vpack.c.b16 %v1870, %v1868
      %v2117 = vpack.c.b16 %v1873, %v1871
      %v2118 = vpack.c.b16 %v1874, %v1872
      %v2119 = vpack.c.b16 %v1877, %v1875
      %v2120 = vpack.c.b16 %v1878, %v1876
      %v2121 = vpack.c.b16 %v1881, %v1879
      %v2122 = vpack.c.b16 %v1882, %v1880
      %v2123 = vpack.c.b16 %v1885, %v1883
      %v2124 = vpack.c.b16 %v1886, %v1884
      %v2125 = vpack.c.b16 %v1889, %v1887
      %v2126 = vpack.c.b16 %v1890, %v1888
      %v2127 = vpack.c.b16 %v1893, %v1891
      %v2128 = vpack.c.b16 %v1894, %v1892
      %v2129 = vpack.c.b16 %v1897, %v1895
      %v2130 = vpack.c.b16 %v1898, %v1896
      %v2131 = vpack.c.b16 %v1901, %v1899
      %v2132 = vpack.c.b16 %v1902, %v1900
      %v2133 = vpack.c.b16 %v1905, %v1903
      %v2134 = vpack.c.b16 %v1906, %v1904
      %v2135 = vpack.c.b16 %v1909, %v1907
      %v2136 = vpack.c.b16 %v1910, %v1908
      %v2137 = vpack.c.b16 %v1913, %v1911
      %v2138 = vpack.c.b16 %v1914, %v1912
      %v2139 = vpack.c.b16 %v1917, %v1915
      %v2140 = vpack.c.b16 %v1918, %v1916
      %v2141 = vpack.c.b16 %v1921, %v1919
      %v2142 = vpack.c.b16 %v1922, %v1920
      %v2143 = vpack.c.b16 %v1925, %v1923
      %v2144 = vpack.c.b16 %v1926, %v1924
      %v2145 = vpack.c.b16 %v1929, %v1927
      %v2146 = vpack.c.b16 %v1930, %v1928
      %v2147 = vpack.c.b16 %v1933, %v1931
      %v2148 = vpack.c.b16 %v1934, %v1932
      %v2149 = vpack.c.b16 %v1937, %v1935
      %v2150 = vpack.c.b16 %v1938, %v1936
      %v2151 = vpack.c.b16 %v1941, %v1939
      %v2152 = vpack.c.b16 %v1942, %v1940
      %v2153 = vpack.c.b16 %v1945, %v1943
      %v2154 = vpack.c.b16 %v1946, %v1944
      %v2155 = vpack.c.b16 %v1949, %v1947
      %v2156 = vpack.c.b16 %v1950, %v1948
      %v2157 = vpack.c.b16 %v1953, %v1951
      %v2158 = vpack.c.b16 %v1954, %v1952
      %v2159 = vpack.c.b16 %v1957, %v1955
      %v2160 = vpack.c.b16 %v1958, %v1956
      %v2161 = vpack.c.b16 %v1961, %v1959
      %v2162 = vpack.c.b16 %v1962, %v1960
      %v2163 = vpack.c.b16 %v1965, %v1963
      %v2164 = vpack.c.b16 %v1966, %v1964
      %v2165 = vpack.c.b16 %v1969, %v1967
      %v2166 = vpack.c.b16 %v1970, %v1968
      %v2167 = vpack.c.b16 %v1973, %v1971
      %v2168 = vpack.c.b16 %v1974, %v1972
      %v2169 = vpack.c.b16 %v1977, %v1975
      %v2170 = vpack.c.b16 %v1978, %v1976
      %v2171 = vpack.c.b16 %v1981, %v1979
      %v2172 = vpack.c.b16 %v1982, %v1980
      %v2173 = vpack.c.b16 %v1985, %v1983
      %v2174 = vpack.c.b16 %v1986, %v1984
      %v2175 = vpack.c.b16 %v1989, %v1987
      %v2176 = vpack.c.b16 %v1990, %v1988
      %v2177 = vpack.c.b16 %v1993, %v1991
      %v2178 = vpack.c.b16 %v1994, %v1992
      %v2179 = vpack.c.b16 %v1997, %v1995
      %v2180 = vpack.c.b16 %v1998, %v1996
      %v2181 = vpack.c.b16 %v2001, %v1999
      %v2182 = vpack.c.b16 %v2002, %v2000
      %v2183 = vpack.c.b16 %v2005, %v2003
      %v2184 = vpack.c.b16 %v2006, %v2004
      %v2185 = vpack.c.b16 %v2009, %v2007
      %v2186 = vpack.c.b16 %v2010, %v2008
      %v2187 = vpack.c.b16 %v2013, %v2011
      %v2188 = vpack.c.b16 %v2014, %v2012
      %v2189 = vpack.c.b16 %v2017, %v2015
      %v2190 = vpack.c.b16 %v2018, %v2016
      %v2191 = vpack.c.b16 %v2021, %v2019
      %v2192 = vpack.c.b16 %v2022, %v2020
      %v2193 = vpack.c.b16 %v2025, %v2023
      %v2194 = vpack.c.b16 %v2026, %v2024
      %v2195 = vpack.c.b16 %v2029, %v2027
      %v2196 = vpack.c.b16 %v2030, %v2028
      %v2197 = vpack.c.b16 %v2033, %v2031
      %v2198 = vpack.c.b16 %v2034, %v2032
      %v2199 = vpack.c.b16 %v2037, %v2035
      %v2200 = vpack.c.b16 %v2038, %v2036
      %v2201 = vpack.c.b16 %v2041, %v2039
      %v2202 = vpack.c.b16 %v2042, %v2040
      %v2203 = vpack.c.b16 %v2045, %v2043
      %v2204 = vpack.c.b16 %v2046, %v2044
      %v2205 = vpack.c.b16 %v2049, %v2047
      %v2206 = vpack.c.b16 %v2050, %v2048
      %v2207 = vpack.c.b16 %v2053, %v2051
      %v2208 = vpack.c.b16 %v2054, %v2052
      %v2209 = vpack.c.b16 %v2057, %v2055
      %v2210 = vpack.c.b16 %v2058, %v2056
      %v2211 = vpack.c.b16 %v2061, %v2059
      %v2212 = vpack.c.b16 %v2062, %v2060
      %v2213 = vpack.c.b16 %v2065, %v2063
      %v2214 = vpack.c.b16 %v2066, %v2064
      %v2215 = vpack.c.b16 %v2069, %v2067
      %v2216 = vpack.c.b16 %v2070, %v2068
      %v2217 = vpack.c.b16 %v2073, %v2071
      %v2218 = vpack.c.b16 %v2074, %v2072
      %2363 = vmatpush.bf16.msra.mxu0 %v2089
      %2364 = vmatpush.bf16.msra.mxu0 %v2087
      %2365 = vmatpush.bf16.msra.mxu0 %v2085
      %2366 = vmatpush.bf16.msra.mxu0 %v2083
      %2367 = vmatpush.bf16.msra.mxu0 %v2081
      %2368 = vmatpush.bf16.msra.mxu0 %v2079
      %2369 = vmatpush.bf16.msra.mxu0 %v2077
      %2370 = vmatpush.bf16.msra.mxu0 %v2075
      %2371 = vmatmul.bf16.gmra.mxu0 %v1418
      %v2372 = vpop.f32.mrf.mxu0
      %v2373 = vadd.f32 0.0, %v2372
      %v2374 = vpop.f32.mrf.mxu0
      %v2375 = vadd.f32 0.0, %v2374
      %2376 = vmatmul.bf16.gmra.mxu0 %v1427
      %v2377 = vpop.f32.mrf.mxu0
      %v2378 = vadd.f32 0.0, %v2377
      %v2379 = vpop.f32.mrf.mxu0
      %v2380 = vadd.f32 0.0, %v2379
      %2381 = vmatmul.bf16.gmra.mxu0 %v1436
      %v2382 = vpop.f32.mrf.mxu0
      %v2383 = vadd.f32 0.0, %v2382
      %v2384 = vpop.f32.mrf.mxu0
      %v2385 = vadd.f32 0.0, %v2384
      %2386 = vmatmul.bf16.gmra.mxu0 %v1445
      %v2387 = vpop.f32.mrf.mxu0
      %v2388 = vadd.f32 0.0, %v2387
      %v2389 = vpop.f32.mrf.mxu0
      %v2390 = vadd.f32 0.0, %v2389
      %2391 = vmatmul.bf16.gmra.mxu0 %v1454
      %v2392 = vpop.f32.mrf.mxu0
      %v2393 = vadd.f32 0.0, %v2392
      %v2394 = vpop.f32.mrf.mxu0
      %v2395 = vadd.f32 0.0, %v2394
      %2396 = vmatmul.bf16.gmra.mxu0 %v1463
      %v2397 = vpop.f32.mrf.mxu0
      %v2398 = vadd.f32 0.0, %v2397
      %v2399 = vpop.f32.mrf.mxu0
      %v2400 = vadd.f32 0.0, %v2399
      %2401 = vmatmul.bf16.gmra.mxu0 %v1472
      %v2402 = vpop.f32.mrf.mxu0
      %v2403 = vadd.f32 0.0, %v2402
      %v2404 = vpop.f32.mrf.mxu0
      %v2405 = vadd.f32 0.0, %v2404
      %2406 = vmatmul.bf16.gmra.mxu0 %v1481
      %v2407 = vpop.f32.mrf.mxu0
      %v2408 = vadd.f32 0.0, %v2407
      %v2409 = vpop.f32.mrf.mxu0
      %v2410 = vadd.f32 0.0, %v2409
      %2411 = vmatmul.bf16.gmra.mxu0 %v1490
      %v2412 = vpop.f32.mrf.mxu0
      %v2413 = vadd.f32 0.0, %v2412
      %v2414 = vpop.f32.mrf.mxu0
      %v2415 = vadd.f32 0.0, %v2414
      %2416 = vdwg.mxu0
      %2417 = vmatpush.bf16.msra.mxu0 %v2105
      %2418 = vmatpush.bf16.msra.mxu0 %v2103
      %2419 = vmatpush.bf16.msra.mxu0 %v2101
      %2420 = vmatpush.bf16.msra.mxu0 %v2099
      %2421 = vmatpush.bf16.msra.mxu0 %v2097
      %2422 = vmatpush.bf16.msra.mxu0 %v2095
      %2423 = vmatpush.bf16.msra.mxu0 %v2093
      %2424 = vmatpush.bf16.msra.mxu0 %v2091
      %2425 = vmatmul.bf16.gmra.mxu0 %v1419
      %v2426 = vpop.f32.mrf.mxu0
      %v2427 = vadd.f32 %v2373, %v2426
      %v2428 = vpop.f32.mrf.mxu0
      %v2429 = vadd.f32 %v2375, %v2428
      %2430 = vmatmul.bf16.gmra.mxu0 %v1428
      %v2431 = vpop.f32.mrf.mxu0
      %v2432 = vadd.f32 %v2378, %v2431
      %v2433 = vpop.f32.mrf.mxu0
      %v2434 = vadd.f32 %v2380, %v2433
      %2435 = vmatmul.bf16.gmra.mxu0 %v1437
      %v2436 = vpop.f32.mrf.mxu0
      %v2437 = vadd.f32 %v2383, %v2436
      %v2438 = vpop.f32.mrf.mxu0
      %v2439 = vadd.f32 %v2385, %v2438
      %2440 = vmatmul.bf16.gmra.mxu0 %v1446
      %v2441 = vpop.f32.mrf.mxu0
      %v2442 = vadd.f32 %v2388, %v2441
      %v2443 = vpop.f32.mrf.mxu0
      %v2444 = vadd.f32 %v2390, %v2443
      %2445 = vmatmul.bf16.gmra.mxu0 %v1455
      %v2446 = vpop.f32.mrf.mxu0
      %v2447 = vadd.f32 %v2393, %v2446
      %v2448 = vpop.f32.mrf.mxu0
      %v2449 = vadd.f32 %v2395, %v2448
      %2450 = vmatmul.bf16.gmra.mxu0 %v1464
      %v2451 = vpop.f32.mrf.mxu0
      %v2452 = vadd.f32 %v2398, %v2451
      %v2453 = vpop.f32.mrf.mxu0
      %v2454 = vadd.f32 %v2400, %v2453
      %2455 = vmatmul.bf16.gmra.mxu0 %v1473
      %v2456 = vpop.f32.mrf.mxu0
      %v2457 = vadd.f32 %v2403, %v2456
      %v2458 = vpop.f32.mrf.mxu0
      %v2459 = vadd.f32 %v2405, %v2458
      %2460 = vmatmul.bf16.gmra.mxu0 %v1482
      %v2461 = vpop.f32.mrf.mxu0
      %v2462 = vadd.f32 %v2408, %v2461
      %v2463 = vpop.f32.mrf.mxu0
      %v2464 = vadd.f32 %v2410, %v2463
      %2465 = vmatmul.bf16.gmra.mxu0 %v1491
      %v2466 = vpop.f32.mrf.mxu0
      %v2467 = vadd.f32 %v2413, %v2466
      %v2468 = vpop.f32.mrf.mxu0
      %v2469 = vadd.f32 %v2415, %v2468
      %2470 = vdwg.mxu0
      %2471 = vmatpush.bf16.msra.mxu0 %v2121
      %2472 = vmatpush.bf16.msra.mxu0 %v2119
      %2473 = vmatpush.bf16.msra.mxu0 %v2117
      %2474 = vmatpush.bf16.msra.mxu0 %v2115
      %2475 = vmatpush.bf16.msra.mxu0 %v2113
      %2476 = vmatpush.bf16.msra.mxu0 %v2111
      %2477 = vmatpush.bf16.msra.mxu0 %v2109
      %2478 = vmatpush.bf16.msra.mxu0 %v2107
      %2479 = vmatmul.bf16.gmra.mxu0 %v1420
      %v2480 = vpop.f32.mrf.mxu0
      %v2481 = vadd.f32 %v2427, %v2480
      %v2482 = vpop.f32.mrf.mxu0
      %v2483 = vadd.f32 %v2429, %v2482
      %2484 = vmatmul.bf16.gmra.mxu0 %v1429
      %v2485 = vpop.f32.mrf.mxu0
      %v2486 = vadd.f32 %v2432, %v2485
      %v2487 = vpop.f32.mrf.mxu0
      %v2488 = vadd.f32 %v2434, %v2487
      %2489 = vmatmul.bf16.gmra.mxu0 %v1438
      %v2490 = vpop.f32.mrf.mxu0
      %v2491 = vadd.f32 %v2437, %v2490
      %v2492 = vpop.f32.mrf.mxu0
      %v2493 = vadd.f32 %v2439, %v2492
      %2494 = vmatmul.bf16.gmra.mxu0 %v1447
      %v2495 = vpop.f32.mrf.mxu0
      %v2496 = vadd.f32 %v2442, %v2495
      %v2497 = vpop.f32.mrf.mxu0
      %v2498 = vadd.f32 %v2444, %v2497
      %2499 = vmatmul.bf16.gmra.mxu0 %v1456
      %v2500 = vpop.f32.mrf.mxu0
      %v2501 = vadd.f32 %v2447, %v2500
      %v2502 = vpop.f32.mrf.mxu0
      %v2503 = vadd.f32 %v2449, %v2502
      %2504 = vmatmul.bf16.gmra.mxu0 %v1465
      %v2505 = vpop.f32.mrf.mxu0
      %v2506 = vadd.f32 %v2452, %v2505
      %v2507 = vpop.f32.mrf.mxu0
      %v2508 = vadd.f32 %v2454, %v2507
      %2509 = vmatmul.bf16.gmra.mxu0 %v1474
      %v2510 = vpop.f32.mrf.mxu0
      %v2511 = vadd.f32 %v2457, %v2510
      %v2512 = vpop.f32.mrf.mxu0
      %v2513 = vadd.f32 %v2459, %v2512
      %2514 = vmatmul.bf16.gmra.mxu0 %v1483
      %v2515 = vpop.f32.mrf.mxu0
      %v2516 = vadd.f32 %v2462, %v2515
      %v2517 = vpop.f32.mrf.mxu0
      %v2518 = vadd.f32 %v2464, %v2517
      %2519 = vmatmul.bf16.gmra.mxu0 %v1492
      %v2520 = vpop.f32.mrf.mxu0
      %v2521 = vadd.f32 %v2467, %v2520
      %v2522 = vpop.f32.mrf.mxu0
      %v2523 = vadd.f32 %v2469, %v2522
      %2524 = vdwg.mxu0
      %2525 = vmatpush.bf16.msra.mxu0 %v2137
      %2526 = vmatpush.bf16.msra.mxu0 %v2135
      %2527 = vmatpush.bf16.msra.mxu0 %v2133
      %2528 = vmatpush.bf16.msra.mxu0 %v2131
      %2529 = vmatpush.bf16.msra.mxu0 %v2129
      %2530 = vmatpush.bf16.msra.mxu0 %v2127
      %2531 = vmatpush.bf16.msra.mxu0 %v2125
      %2532 = vmatpush.bf16.msra.mxu0 %v2123
      %2533 = vmatmul.bf16.gmra.mxu0 %v1421
      %v2534 = vpop.f32.mrf.mxu0
      %v2535 = vadd.f32 %v2481, %v2534
      %v2536 = vpop.f32.mrf.mxu0
      %v2537 = vadd.f32 %v2483, %v2536
      %2538 = vmatmul.bf16.gmra.mxu0 %v1430
      %v2539 = vpop.f32.mrf.mxu0
      %v2540 = vadd.f32 %v2486, %v2539
      %v2541 = vpop.f32.mrf.mxu0
      %v2542 = vadd.f32 %v2488, %v2541
      %2543 = vmatmul.bf16.gmra.mxu0 %v1439
      %v2544 = vpop.f32.mrf.mxu0
      %v2545 = vadd.f32 %v2491, %v2544
      %v2546 = vpop.f32.mrf.mxu0
      %v2547 = vadd.f32 %v2493, %v2546
      %2548 = vmatmul.bf16.gmra.mxu0 %v1448
      %v2549 = vpop.f32.mrf.mxu0
      %v2550 = vadd.f32 %v2496, %v2549
      %v2551 = vpop.f32.mrf.mxu0
      %v2552 = vadd.f32 %v2498, %v2551
      %2553 = vmatmul.bf16.gmra.mxu0 %v1457
      %v2554 = vpop.f32.mrf.mxu0
      %v2555 = vadd.f32 %v2501, %v2554
      %v2556 = vpop.f32.mrf.mxu0
      %v2557 = vadd.f32 %v2503, %v2556
      %2558 = vmatmul.bf16.gmra.mxu0 %v1466
      %v2559 = vpop.f32.mrf.mxu0
      %v2560 = vadd.f32 %v2506, %v2559
      %v2561 = vpop.f32.mrf.mxu0
      %v2562 = vadd.f32 %v2508, %v2561
      %2563 = vmatmul.bf16.gmra.mxu0 %v1475
      %v2564 = vpop.f32.mrf.mxu0
      %v2565 = vadd.f32 %v2511, %v2564
      %v2566 = vpop.f32.mrf.mxu0
      %v2567 = vadd.f32 %v2513, %v2566
      %2568 = vmatmul.bf16.gmra.mxu0 %v1484
      %v2569 = vpop.f32.mrf.mxu0
      %v2570 = vadd.f32 %v2516, %v2569
      %v2571 = vpop.f32.mrf.mxu0
      %v2572 = vadd.f32 %v2518, %v2571
      %2573 = vmatmul.bf16.gmra.mxu0 %v1493
      %v2574 = vpop.f32.mrf.mxu0
      %v2575 = vadd.f32 %v2521, %v2574
      %v2576 = vpop.f32.mrf.mxu0
      %v2577 = vadd.f32 %v2523, %v2576
      %2578 = vdwg.mxu0
      %2579 = vmatpush.bf16.msra.mxu0 %v2153
      %2580 = vmatpush.bf16.msra.mxu0 %v2151
      %2581 = vmatpush.bf16.msra.mxu0 %v2149
      %2582 = vmatpush.bf16.msra.mxu0 %v2147
      %2583 = vmatpush.bf16.msra.mxu0 %v2145
      %2584 = vmatpush.bf16.msra.mxu0 %v2143
      %2585 = vmatpush.bf16.msra.mxu0 %v2141
      %2586 = vmatpush.bf16.msra.mxu0 %v2139
      %2587 = vmatmul.bf16.gmra.mxu0 %v1422
      %v2588 = vpop.f32.mrf.mxu0
      %v2589 = vadd.f32 %v2535, %v2588
      %v2590 = vpop.f32.mrf.mxu0
      %v2591 = vadd.f32 %v2537, %v2590
      %2592 = vmatmul.bf16.gmra.mxu0 %v1431
      %v2593 = vpop.f32.mrf.mxu0
      %v2594 = vadd.f32 %v2540, %v2593
      %v2595 = vpop.f32.mrf.mxu0
      %v2596 = vadd.f32 %v2542, %v2595
      %2597 = vmatmul.bf16.gmra.mxu0 %v1440
      %v2598 = vpop.f32.mrf.mxu0
      %v2599 = vadd.f32 %v2545, %v2598
      %v2600 = vpop.f32.mrf.mxu0
      %v2601 = vadd.f32 %v2547, %v2600
      %2602 = vmatmul.bf16.gmra.mxu0 %v1449
      %v2603 = vpop.f32.mrf.mxu0
      %v2604 = vadd.f32 %v2550, %v2603
      %v2605 = vpop.f32.mrf.mxu0
      %v2606 = vadd.f32 %v2552, %v2605
      %2607 = vmatmul.bf16.gmra.mxu0 %v1458
      %v2608 = vpop.f32.mrf.mxu0
      %v2609 = vadd.f32 %v2555, %v2608
      %v2610 = vpop.f32.mrf.mxu0
      %v2611 = vadd.f32 %v2557, %v2610
      %2612 = vmatmul.bf16.gmra.mxu0 %v1467
      %v2613 = vpop.f32.mrf.mxu0
      %v2614 = vadd.f32 %v2560, %v2613
      %v2615 = vpop.f32.mrf.mxu0
      %v2616 = vadd.f32 %v2562, %v2615
      %2617 = vmatmul.bf16.gmra.mxu0 %v1476
      %v2618 = vpop.f32.mrf.mxu0
      %v2619 = vadd.f32 %v2565, %v2618
      %v2620 = vpop.f32.mrf.mxu0
      %v2621 = vadd.f32 %v2567, %v2620
      %2622 = vmatmul.bf16.gmra.mxu0 %v1485
      %v2623 = vpop.f32.mrf.mxu0
      %v2624 = vadd.f32 %v2570, %v2623
      %v2625 = vpop.f32.mrf.mxu0
      %v2626 = vadd.f32 %v2572, %v2625
      %2627 = vmatmul.bf16.gmra.mxu0 %v1494
      %v2628 = vpop.f32.mrf.mxu0
      %v2629 = vadd.f32 %v2575, %v2628
      %v2630 = vpop.f32.mrf.mxu0
      %v2631 = vadd.f32 %v2577, %v2630
      %2632 = vdwg.mxu0
      %2633 = vmatpush.bf16.msra.mxu0 %v2169
      %2634 = vmatpush.bf16.msra.mxu0 %v2167
      %2635 = vmatpush.bf16.msra.mxu0 %v2165
      %2636 = vmatpush.bf16.msra.mxu0 %v2163
      %2637 = vmatpush.bf16.msra.mxu0 %v2161
      %2638 = vmatpush.bf16.msra.mxu0 %v2159
      %2639 = vmatpush.bf16.msra.mxu0 %v2157
      %2640 = vmatpush.bf16.msra.mxu0 %v2155
      %2641 = vmatmul.bf16.gmra.mxu0 %v1423
      %v2642 = vpop.f32.mrf.mxu0
      %v2643 = vadd.f32 %v2589, %v2642
      %v2644 = vpop.f32.mrf.mxu0
      %v2645 = vadd.f32 %v2591, %v2644
      %2646 = vmatmul.bf16.gmra.mxu0 %v1432
      %v2647 = vpop.f32.mrf.mxu0
      %v2648 = vadd.f32 %v2594, %v2647
      %v2649 = vpop.f32.mrf.mxu0
      %v2650 = vadd.f32 %v2596, %v2649
      %2651 = vmatmul.bf16.gmra.mxu0 %v1441
      %v2652 = vpop.f32.mrf.mxu0
      %v2653 = vadd.f32 %v2599, %v2652
      %v2654 = vpop.f32.mrf.mxu0
      %v2655 = vadd.f32 %v2601, %v2654
      %2656 = vmatmul.bf16.gmra.mxu0 %v1450
      %v2657 = vpop.f32.mrf.mxu0
      %v2658 = vadd.f32 %v2604, %v2657
      %v2659 = vpop.f32.mrf.mxu0
      %v2660 = vadd.f32 %v2606, %v2659
      %2661 = vmatmul.bf16.gmra.mxu0 %v1459
      %v2662 = vpop.f32.mrf.mxu0
      %v2663 = vadd.f32 %v2609, %v2662
      %v2664 = vpop.f32.mrf.mxu0
      %v2665 = vadd.f32 %v2611, %v2664
      %2666 = vmatmul.bf16.gmra.mxu0 %v1468
      %v2667 = vpop.f32.mrf.mxu0
      %v2668 = vadd.f32 %v2614, %v2667
      %v2669 = vpop.f32.mrf.mxu0
      %v2670 = vadd.f32 %v2616, %v2669
      %2671 = vmatmul.bf16.gmra.mxu0 %v1477
      %v2672 = vpop.f32.mrf.mxu0
      %v2673 = vadd.f32 %v2619, %v2672
      %v2674 = vpop.f32.mrf.mxu0
      %v2675 = vadd.f32 %v2621, %v2674
      %2676 = vmatmul.bf16.gmra.mxu0 %v1486
      %v2677 = vpop.f32.mrf.mxu0
      %v2678 = vadd.f32 %v2624, %v2677
      %v2679 = vpop.f32.mrf.mxu0
      %v2680 = vadd.f32 %v2626, %v2679
      %2681 = vmatmul.bf16.gmra.mxu0 %v1495
      %v2682 = vpop.f32.mrf.mxu0
      %v2683 = vadd.f32 %v2629, %v2682
      %v2684 = vpop.f32.mrf.mxu0
      %v2685 = vadd.f32 %v2631, %v2684
      %2686 = vdwg.mxu0
      %2687 = vmatpush.bf16.msra.mxu0 %v2185
      %2688 = vmatpush.bf16.msra.mxu0 %v2183
      %2689 = vmatpush.bf16.msra.mxu0 %v2181
      %2690 = vmatpush.bf16.msra.mxu0 %v2179
      %2691 = vmatpush.bf16.msra.mxu0 %v2177
      %2692 = vmatpush.bf16.msra.mxu0 %v2175
      %2693 = vmatpush.bf16.msra.mxu0 %v2173
      %2694 = vmatpush.bf16.msra.mxu0 %v2171
      %2695 = vmatmul.bf16.gmra.mxu0 %v1424
      %v2696 = vpop.f32.mrf.mxu0
      %v2697 = vadd.f32 %v2643, %v2696
      %v2698 = vpop.f32.mrf.mxu0
      %v2699 = vadd.f32 %v2645, %v2698
      %2700 = vmatmul.bf16.gmra.mxu0 %v1433
      %v2701 = vpop.f32.mrf.mxu0
      %v2702 = vadd.f32 %v2648, %v2701
      %v2703 = vpop.f32.mrf.mxu0
      %v2704 = vadd.f32 %v2650, %v2703
      %2705 = vmatmul.bf16.gmra.mxu0 %v1442
      %v2706 = vpop.f32.mrf.mxu0
      %v2707 = vadd.f32 %v2653, %v2706
      %v2708 = vpop.f32.mrf.mxu0
      %v2709 = vadd.f32 %v2655, %v2708
      %2710 = vmatmul.bf16.gmra.mxu0 %v1451
      %v2711 = vpop.f32.mrf.mxu0
      %v2712 = vadd.f32 %v2658, %v2711
      %v2713 = vpop.f32.mrf.mxu0
      %v2714 = vadd.f32 %v2660, %v2713
      %2715 = vmatmul.bf16.gmra.mxu0 %v1460
      %v2716 = vpop.f32.mrf.mxu0
      %v2717 = vadd.f32 %v2663, %v2716
      %v2718 = vpop.f32.mrf.mxu0
      %v2719 = vadd.f32 %v2665, %v2718
      %2720 = vmatmul.bf16.gmra.mxu0 %v1469
      %v2721 = vpop.f32.mrf.mxu0
      %v2722 = vadd.f32 %v2668, %v2721
      %v2723 = vpop.f32.mrf.mxu0
      %v2724 = vadd.f32 %v2670, %v2723
      %2725 = vmatmul.bf16.gmra.mxu0 %v1478
      %v2726 = vpop.f32.mrf.mxu0
      %v2727 = vadd.f32 %v2673, %v2726
      %v2728 = vpop.f32.mrf.mxu0
      %v2729 = vadd.f32 %v2675, %v2728
      %2730 = vmatmul.bf16.gmra.mxu0 %v1487
      %v2731 = vpop.f32.mrf.mxu0
      %v2732 = vadd.f32 %v2678, %v2731
      %v2733 = vpop.f32.mrf.mxu0
      %v2734 = vadd.f32 %v2680, %v2733
      %2735 = vmatmul.bf16.gmra.mxu0 %v1496
      %v2736 = vpop.f32.mrf.mxu0
      %v2737 = vadd.f32 %v2683, %v2736
      %v2738 = vpop.f32.mrf.mxu0
      %v2739 = vadd.f32 %v2685, %v2738
      %2740 = vdwg.mxu0
      %2741 = vmatpush.bf16.msra.mxu0 %v2201
      %2742 = vmatpush.bf16.msra.mxu0 %v2199
      %2743 = vmatpush.bf16.msra.mxu0 %v2197
      %2744 = vmatpush.bf16.msra.mxu0 %v2195
      %2745 = vmatpush.bf16.msra.mxu0 %v2193
      %2746 = vmatpush.bf16.msra.mxu0 %v2191
      %2747 = vmatpush.bf16.msra.mxu0 %v2189
      %2748 = vmatpush.bf16.msra.mxu0 %v2187
      %2749 = vmatmul.bf16.gmra.mxu0 %v1425
      %v2750 = vpop.f32.mrf.mxu0
      %v2751 = vadd.f32 %v2697, %v2750
      %v2752 = vpop.f32.mrf.mxu0
      %v2753 = vadd.f32 %v2699, %v2752
      %2754 = vmatmul.bf16.gmra.mxu0 %v1434
      %v2755 = vpop.f32.mrf.mxu0
      %v2756 = vadd.f32 %v2702, %v2755
      %v2757 = vpop.f32.mrf.mxu0
      %v2758 = vadd.f32 %v2704, %v2757
      %2759 = vmatmul.bf16.gmra.mxu0 %v1443
      %v2760 = vpop.f32.mrf.mxu0
      %v2761 = vadd.f32 %v2707, %v2760
      %v2762 = vpop.f32.mrf.mxu0
      %v2763 = vadd.f32 %v2709, %v2762
      %2764 = vmatmul.bf16.gmra.mxu0 %v1452
      %v2765 = vpop.f32.mrf.mxu0
      %v2766 = vadd.f32 %v2712, %v2765
      %v2767 = vpop.f32.mrf.mxu0
      %v2768 = vadd.f32 %v2714, %v2767
      %2769 = vmatmul.bf16.gmra.mxu0 %v1461
      %v2770 = vpop.f32.mrf.mxu0
      %v2771 = vadd.f32 %v2717, %v2770
      %v2772 = vpop.f32.mrf.mxu0
      %v2773 = vadd.f32 %v2719, %v2772
      %2774 = vmatmul.bf16.gmra.mxu0 %v1470
      %v2775 = vpop.f32.mrf.mxu0
      %v2776 = vadd.f32 %v2722, %v2775
      %v2777 = vpop.f32.mrf.mxu0
      %v2778 = vadd.f32 %v2724, %v2777
      %2779 = vmatmul.bf16.gmra.mxu0 %v1479
      %v2780 = vpop.f32.mrf.mxu0
      %v2781 = vadd.f32 %v2727, %v2780
      %v2782 = vpop.f32.mrf.mxu0
      %v2783 = vadd.f32 %v2729, %v2782
      %2784 = vmatmul.bf16.gmra.mxu0 %v1488
      %v2785 = vpop.f32.mrf.mxu0
      %v2786 = vadd.f32 %v2732, %v2785
      %v2787 = vpop.f32.mrf.mxu0
      %v2788 = vadd.f32 %v2734, %v2787
      %2789 = vmatmul.bf16.gmra.mxu0 %v1497
      %v2790 = vpop.f32.mrf.mxu0
      %v2791 = vadd.f32 %v2737, %v2790
      %v2792 = vpop.f32.mrf.mxu0
      %v2793 = vadd.f32 %v2739, %v2792
      %2794 = vdwg.mxu0
      %2795 = vmatpush.bf16.msra.mxu0 %v2217
      %2796 = vmatpush.bf16.msra.mxu0 %v2215
      %2797 = vmatpush.bf16.msra.mxu0 %v2213
      %2798 = vmatpush.bf16.msra.mxu0 %v2211
      %2799 = vmatpush.bf16.msra.mxu0 %v2209
      %2800 = vmatpush.bf16.msra.mxu0 %v2207
      %2801 = vmatpush.bf16.msra.mxu0 %v2205
      %2802 = vmatpush.bf16.msra.mxu0 %v2203
      %2803 = vmatmul.bf16.gmra.mxu0 %v1426
      %v2804 = vpop.f32.mrf.mxu0
      %v2805 = vadd.f32 %v2751, %v2804
      %v2806 = vpop.f32.mrf.mxu0
      %v2807 = vadd.f32 %v2753, %v2806
      %2808 = vmatmul.bf16.gmra.mxu0 %v1435
      %v2809 = vpop.f32.mrf.mxu0
      %v2810 = vadd.f32 %v2756, %v2809
      %v2811 = vpop.f32.mrf.mxu0
      %v2812 = vadd.f32 %v2758, %v2811
      %2813 = vmatmul.bf16.gmra.mxu0 %v1444
      %v2814 = vpop.f32.mrf.mxu0
      %v2815 = vadd.f32 %v2761, %v2814
      %v2816 = vpop.f32.mrf.mxu0
      %v2817 = vadd.f32 %v2763, %v2816
      %2818 = vmatmul.bf16.gmra.mxu0 %v1453
      %v2819 = vpop.f32.mrf.mxu0
      %v2820 = vadd.f32 %v2766, %v2819
      %v2821 = vpop.f32.mrf.mxu0
      %v2822 = vadd.f32 %v2768, %v2821
      %2823 = vmatmul.bf16.gmra.mxu0 %v1462
      %v2824 = vpop.f32.mrf.mxu0
      %v2825 = vadd.f32 %v2771, %v2824
      %v2826 = vpop.f32.mrf.mxu0
      %v2827 = vadd.f32 %v2773, %v2826
      %2828 = vmatmul.bf16.gmra.mxu0 %v1471
      %v2829 = vpop.f32.mrf.mxu0
      %v2830 = vadd.f32 %v2776, %v2829
      %v2831 = vpop.f32.mrf.mxu0
      %v2832 = vadd.f32 %v2778, %v2831
      %2833 = vmatmul.bf16.gmra.mxu0 %v1480
      %v2834 = vpop.f32.mrf.mxu0
      %v2835 = vadd.f32 %v2781, %v2834
      %v2836 = vpop.f32.mrf.mxu0
      %v2837 = vadd.f32 %v2783, %v2836
      %2838 = vmatmul.bf16.gmra.mxu0 %v1489
      %v2839 = vpop.f32.mrf.mxu0
      %v2840 = vadd.f32 %v2786, %v2839
      %v2841 = vpop.f32.mrf.mxu0
      %v2842 = vadd.f32 %v2788, %v2841
      %2843 = vmatmul.bf16.gmra.mxu0 %v1498
      %v2844 = vpop.f32.mrf.mxu0
      %v2845 = vadd.f32 %v2791, %v2844
      %v2846 = vpop.f32.mrf.mxu0
      %v2847 = vadd.f32 %v2793, %v2846
      %2848 = vdwg.mxu0
      %2849 = vmatpush.bf16.msra.mxu0 %v2090
      %2850 = vmatpush.bf16.msra.mxu0 %v2088
      %2851 = vmatpush.bf16.msra.mxu0 %v2086
      %2852 = vmatpush.bf16.msra.mxu0 %v2084
      %2853 = vmatpush.bf16.msra.mxu0 %v2082
      %2854 = vmatpush.bf16.msra.mxu0 %v2080
      %2855 = vmatpush.bf16.msra.mxu0 %v2078
      %2856 = vmatpush.bf16.msra.mxu0 %v2076
      %2857 = vmatmul.bf16.gmra.mxu0 %v1418
      %v2858 = vpop.f32.mrf.mxu0
      %v2859 = vadd.f32 0.0, %v2858
      %v2860 = vpop.f32.mrf.mxu0
      %v2861 = vadd.f32 0.0, %v2860
      %2862 = vmatmul.bf16.gmra.mxu0 %v1427
      %v2863 = vpop.f32.mrf.mxu0
      %v2864 = vadd.f32 0.0, %v2863
      %v2865 = vpop.f32.mrf.mxu0
      %v2866 = vadd.f32 0.0, %v2865
      %2867 = vmatmul.bf16.gmra.mxu0 %v1436
      %v2868 = vpop.f32.mrf.mxu0
      %v2869 = vadd.f32 0.0, %v2868
      %v2870 = vpop.f32.mrf.mxu0
      %v2871 = vadd.f32 0.0, %v2870
      %2872 = vmatmul.bf16.gmra.mxu0 %v1445
      %v2873 = vpop.f32.mrf.mxu0
      %v2874 = vadd.f32 0.0, %v2873
      %v2875 = vpop.f32.mrf.mxu0
      %v2876 = vadd.f32 0.0, %v2875
      %2877 = vmatmul.bf16.gmra.mxu0 %v1454
      %v2878 = vpop.f32.mrf.mxu0
      %v2879 = vadd.f32 0.0, %v2878
      %v2880 = vpop.f32.mrf.mxu0
      %v2881 = vadd.f32 0.0, %v2880
      %2882 = vmatmul.bf16.gmra.mxu0 %v1463
      %v2883 = vpop.f32.mrf.mxu0
      %v2884 = vadd.f32 0.0, %v2883
      %v2885 = vpop.f32.mrf.mxu0
      %v2886 = vadd.f32 0.0, %v2885
      %2887 = vmatmul.bf16.gmra.mxu0 %v1472
      %v2888 = vpop.f32.mrf.mxu0
      %v2889 = vadd.f32 0.0, %v2888
      %v2890 = vpop.f32.mrf.mxu0
      %v2891 = vadd.f32 0.0, %v2890
      %2892 = vmatmul.bf16.gmra.mxu0 %v1481
      %v2893 = vpop.f32.mrf.mxu0
      %v2894 = vadd.f32 0.0, %v2893
      %v2895 = vpop.f32.mrf.mxu0
      %v2896 = vadd.f32 0.0, %v2895
      %2897 = vmatmul.bf16.gmra.mxu0 %v1490
      %v2898 = vpop.f32.mrf.mxu0
      %v2899 = vadd.f32 0.0, %v2898
      %v2900 = vpop.f32.mrf.mxu0
      %v2901 = vadd.f32 0.0, %v2900
      %2902 = vdwg.mxu0
      %2903 = vmatpush.bf16.msra.mxu0 %v2106
      %2904 = vmatpush.bf16.msra.mxu0 %v2104
      %2905 = vmatpush.bf16.msra.mxu0 %v2102
      %2906 = vmatpush.bf16.msra.mxu0 %v2100
      %2907 = vmatpush.bf16.msra.mxu0 %v2098
      %2908 = vmatpush.bf16.msra.mxu0 %v2096
      %2909 = vmatpush.bf16.msra.mxu0 %v2094
      %2910 = vmatpush.bf16.msra.mxu0 %v2092
      %2911 = vmatmul.bf16.gmra.mxu0 %v1419
      %v2912 = vpop.f32.mrf.mxu0
      %v2913 = vadd.f32 %v2859, %v2912
      %v2914 = vpop.f32.mrf.mxu0
      %v2915 = vadd.f32 %v2861, %v2914
      %2916 = vmatmul.bf16.gmra.mxu0 %v1428
      %v2917 = vpop.f32.mrf.mxu0
      %v2918 = vadd.f32 %v2864, %v2917
      %v2919 = vpop.f32.mrf.mxu0
      %v2920 = vadd.f32 %v2866, %v2919
      %2921 = vmatmul.bf16.gmra.mxu0 %v1437
      %v2922 = vpop.f32.mrf.mxu0
      %v2923 = vadd.f32 %v2869, %v2922
      %v2924 = vpop.f32.mrf.mxu0
      %v2925 = vadd.f32 %v2871, %v2924
      %2926 = vmatmul.bf16.gmra.mxu0 %v1446
      %v2927 = vpop.f32.mrf.mxu0
      %v2928 = vadd.f32 %v2874, %v2927
      %v2929 = vpop.f32.mrf.mxu0
      %v2930 = vadd.f32 %v2876, %v2929
      %2931 = vmatmul.bf16.gmra.mxu0 %v1455
      %v2932 = vpop.f32.mrf.mxu0
      %v2933 = vadd.f32 %v2879, %v2932
      %v2934 = vpop.f32.mrf.mxu0
      %v2935 = vadd.f32 %v2881, %v2934
      %2936 = vmatmul.bf16.gmra.mxu0 %v1464
      %v2937 = vpop.f32.mrf.mxu0
      %v2938 = vadd.f32 %v2884, %v2937
      %v2939 = vpop.f32.mrf.mxu0
      %v2940 = vadd.f32 %v2886, %v2939
      %2941 = vmatmul.bf16.gmra.mxu0 %v1473
      %v2942 = vpop.f32.mrf.mxu0
      %v2943 = vadd.f32 %v2889, %v2942
      %v2944 = vpop.f32.mrf.mxu0
      %v2945 = vadd.f32 %v2891, %v2944
      %2946 = vmatmul.bf16.gmra.mxu0 %v1482
      %v2947 = vpop.f32.mrf.mxu0
      %v2948 = vadd.f32 %v2894, %v2947
      %v2949 = vpop.f32.mrf.mxu0
      %v2950 = vadd.f32 %v2896, %v2949
      %2951 = vmatmul.bf16.gmra.mxu0 %v1491
      %v2952 = vpop.f32.mrf.mxu0
      %v2953 = vadd.f32 %v2899, %v2952
      %v2954 = vpop.f32.mrf.mxu0
      %v2955 = vadd.f32 %v2901, %v2954
      %2956 = vdwg.mxu0
      %2957 = vmatpush.bf16.msra.mxu0 %v2122
      %2958 = vmatpush.bf16.msra.mxu0 %v2120
      %2959 = vmatpush.bf16.msra.mxu0 %v2118
      %2960 = vmatpush.bf16.msra.mxu0 %v2116
      %2961 = vmatpush.bf16.msra.mxu0 %v2114
      %2962 = vmatpush.bf16.msra.mxu0 %v2112
      %2963 = vmatpush.bf16.msra.mxu0 %v2110
      %2964 = vmatpush.bf16.msra.mxu0 %v2108
      %2965 = vmatmul.bf16.gmra.mxu0 %v1420
      %v2966 = vpop.f32.mrf.mxu0
      %v2967 = vadd.f32 %v2913, %v2966
      %v2968 = vpop.f32.mrf.mxu0
      %v2969 = vadd.f32 %v2915, %v2968
      %2970 = vmatmul.bf16.gmra.mxu0 %v1429
      %v2971 = vpop.f32.mrf.mxu0
      %v2972 = vadd.f32 %v2918, %v2971
      %v2973 = vpop.f32.mrf.mxu0
      %v2974 = vadd.f32 %v2920, %v2973
      %2975 = vmatmul.bf16.gmra.mxu0 %v1438
      %v2976 = vpop.f32.mrf.mxu0
      %v2977 = vadd.f32 %v2923, %v2976
      %v2978 = vpop.f32.mrf.mxu0
      %v2979 = vadd.f32 %v2925, %v2978
      %2980 = vmatmul.bf16.gmra.mxu0 %v1447
      %v2981 = vpop.f32.mrf.mxu0
      %v2982 = vadd.f32 %v2928, %v2981
      %v2983 = vpop.f32.mrf.mxu0
      %v2984 = vadd.f32 %v2930, %v2983
      %2985 = vmatmul.bf16.gmra.mxu0 %v1456
      %v2986 = vpop.f32.mrf.mxu0
      %v2987 = vadd.f32 %v2933, %v2986
      %v2988 = vpop.f32.mrf.mxu0
      %v2989 = vadd.f32 %v2935, %v2988
      %2990 = vmatmul.bf16.gmra.mxu0 %v1465
      %v2991 = vpop.f32.mrf.mxu0
      %v2992 = vadd.f32 %v2938, %v2991
      %v2993 = vpop.f32.mrf.mxu0
      %v2994 = vadd.f32 %v2940, %v2993
      %2995 = vmatmul.bf16.gmra.mxu0 %v1474
      %v2996 = vpop.f32.mrf.mxu0
      %v2997 = vadd.f32 %v2943, %v2996
      %v2998 = vpop.f32.mrf.mxu0
      %v2999 = vadd.f32 %v2945, %v2998
      %3000 = vmatmul.bf16.gmra.mxu0 %v1483
      %v3001 = vpop.f32.mrf.mxu0
      %v3002 = vadd.f32 %v2948, %v3001
      %v3003 = vpop.f32.mrf.mxu0
      %v3004 = vadd.f32 %v2950, %v3003
      %3005 = vmatmul.bf16.gmra.mxu0 %v1492
      %v3006 = vpop.f32.mrf.mxu0
      %v3007 = vadd.f32 %v2953, %v3006
      %v3008 = vpop.f32.mrf.mxu0
      %v3009 = vadd.f32 %v2955, %v3008
      %3010 = vdwg.mxu0
      %3011 = vmatpush.bf16.msra.mxu0 %v2138
      %3012 = vmatpush.bf16.msra.mxu0 %v2136
      %3013 = vmatpush.bf16.msra.mxu0 %v2134
      %3014 = vmatpush.bf16.msra.mxu0 %v2132
      %3015 = vmatpush.bf16.msra.mxu0 %v2130
      %3016 = vmatpush.bf16.msra.mxu0 %v2128
      %3017 = vmatpush.bf16.msra.mxu0 %v2126
      %3018 = vmatpush.bf16.msra.mxu0 %v2124
      %3019 = vmatmul.bf16.gmra.mxu0 %v1421
      %v3020 = vpop.f32.mrf.mxu0
      %v3021 = vadd.f32 %v2967, %v3020
      %v3022 = vpop.f32.mrf.mxu0
      %v3023 = vadd.f32 %v2969, %v3022
      %3024 = vmatmul.bf16.gmra.mxu0 %v1430
      %v3025 = vpop.f32.mrf.mxu0
      %v3026 = vadd.f32 %v2972, %v3025
      %v3027 = vpop.f32.mrf.mxu0
      %v3028 = vadd.f32 %v2974, %v3027
      %3029 = vmatmul.bf16.gmra.mxu0 %v1439
      %v3030 = vpop.f32.mrf.mxu0
      %v3031 = vadd.f32 %v2977, %v3030
      %v3032 = vpop.f32.mrf.mxu0
      %v3033 = vadd.f32 %v2979, %v3032
      %3034 = vmatmul.bf16.gmra.mxu0 %v1448
      %v3035 = vpop.f32.mrf.mxu0
      %v3036 = vadd.f32 %v2982, %v3035
      %v3037 = vpop.f32.mrf.mxu0
      %v3038 = vadd.f32 %v2984, %v3037
      %3039 = vmatmul.bf16.gmra.mxu0 %v1457
      %v3040 = vpop.f32.mrf.mxu0
      %v3041 = vadd.f32 %v2987, %v3040
      %v3042 = vpop.f32.mrf.mxu0
      %v3043 = vadd.f32 %v2989, %v3042
      %3044 = vmatmul.bf16.gmra.mxu0 %v1466
      %v3045 = vpop.f32.mrf.mxu0
      %v3046 = vadd.f32 %v2992, %v3045
      %v3047 = vpop.f32.mrf.mxu0
      %v3048 = vadd.f32 %v2994, %v3047
      %3049 = vmatmul.bf16.gmra.mxu0 %v1475
      %v3050 = vpop.f32.mrf.mxu0
      %v3051 = vadd.f32 %v2997, %v3050
      %v3052 = vpop.f32.mrf.mxu0
      %v3053 = vadd.f32 %v2999, %v3052
      %3054 = vmatmul.bf16.gmra.mxu0 %v1484
      %v3055 = vpop.f32.mrf.mxu0
      %v3056 = vadd.f32 %v3002, %v3055
      %v3057 = vpop.f32.mrf.mxu0
      %v3058 = vadd.f32 %v3004, %v3057
      %3059 = vmatmul.bf16.gmra.mxu0 %v1493
      %v3060 = vpop.f32.mrf.mxu0
      %v3061 = vadd.f32 %v3007, %v3060
      %v3062 = vpop.f32.mrf.mxu0
      %v3063 = vadd.f32 %v3009, %v3062
      %3064 = vdwg.mxu0
      %3065 = vmatpush.bf16.msra.mxu0 %v2154
      %3066 = vmatpush.bf16.msra.mxu0 %v2152
      %3067 = vmatpush.bf16.msra.mxu0 %v2150
      %3068 = vmatpush.bf16.msra.mxu0 %v2148
      %3069 = vmatpush.bf16.msra.mxu0 %v2146
      %3070 = vmatpush.bf16.msra.mxu0 %v2144
      %3071 = vmatpush.bf16.msra.mxu0 %v2142
      %3072 = vmatpush.bf16.msra.mxu0 %v2140
      %3073 = vmatmul.bf16.gmra.mxu0 %v1422
      %v3074 = vpop.f32.mrf.mxu0
      %v3075 = vadd.f32 %v3021, %v3074
      %v3076 = vpop.f32.mrf.mxu0
      %v3077 = vadd.f32 %v3023, %v3076
      %3078 = vmatmul.bf16.gmra.mxu0 %v1431
      %v3079 = vpop.f32.mrf.mxu0
      %v3080 = vadd.f32 %v3026, %v3079
      %v3081 = vpop.f32.mrf.mxu0
      %v3082 = vadd.f32 %v3028, %v3081
      %3083 = vmatmul.bf16.gmra.mxu0 %v1440
      %v3084 = vpop.f32.mrf.mxu0
      %v3085 = vadd.f32 %v3031, %v3084
      %v3086 = vpop.f32.mrf.mxu0
      %v3087 = vadd.f32 %v3033, %v3086
      %3088 = vmatmul.bf16.gmra.mxu0 %v1449
      %v3089 = vpop.f32.mrf.mxu0
      %v3090 = vadd.f32 %v3036, %v3089
      %v3091 = vpop.f32.mrf.mxu0
      %v3092 = vadd.f32 %v3038, %v3091
      %3093 = vmatmul.bf16.gmra.mxu0 %v1458
      %v3094 = vpop.f32.mrf.mxu0
      %v3095 = vadd.f32 %v3041, %v3094
      %v3096 = vpop.f32.mrf.mxu0
      %v3097 = vadd.f32 %v3043, %v3096
      %3098 = vmatmul.bf16.gmra.mxu0 %v1467
      %v3099 = vpop.f32.mrf.mxu0
      %v3100 = vadd.f32 %v3046, %v3099
      %v3101 = vpop.f32.mrf.mxu0
      %v3102 = vadd.f32 %v3048, %v3101
      %3103 = vmatmul.bf16.gmra.mxu0 %v1476
      %v3104 = vpop.f32.mrf.mxu0
      %v3105 = vadd.f32 %v3051, %v3104
      %v3106 = vpop.f32.mrf.mxu0
      %v3107 = vadd.f32 %v3053, %v3106
      %3108 = vmatmul.bf16.gmra.mxu0 %v1485
      %v3109 = vpop.f32.mrf.mxu0
      %v3110 = vadd.f32 %v3056, %v3109
      %v3111 = vpop.f32.mrf.mxu0
      %v3112 = vadd.f32 %v3058, %v3111
      %3113 = vmatmul.bf16.gmra.mxu0 %v1494
      %v3114 = vpop.f32.mrf.mxu0
      %v3115 = vadd.f32 %v3061, %v3114
      %v3116 = vpop.f32.mrf.mxu0
      %v3117 = vadd.f32 %v3063, %v3116
      %3118 = vdwg.mxu0
      %3119 = vmatpush.bf16.msra.mxu0 %v2170
      %3120 = vmatpush.bf16.msra.mxu0 %v2168
      %3121 = vmatpush.bf16.msra.mxu0 %v2166
      %3122 = vmatpush.bf16.msra.mxu0 %v2164
      %3123 = vmatpush.bf16.msra.mxu0 %v2162
      %3124 = vmatpush.bf16.msra.mxu0 %v2160
      %3125 = vmatpush.bf16.msra.mxu0 %v2158
      %3126 = vmatpush.bf16.msra.mxu0 %v2156
      %3127 = vmatmul.bf16.gmra.mxu0 %v1423
      %v3128 = vpop.f32.mrf.mxu0
      %v3129 = vadd.f32 %v3075, %v3128
      %v3130 = vpop.f32.mrf.mxu0
      %v3131 = vadd.f32 %v3077, %v3130
      %3132 = vmatmul.bf16.gmra.mxu0 %v1432
      %v3133 = vpop.f32.mrf.mxu0
      %v3134 = vadd.f32 %v3080, %v3133
      %v3135 = vpop.f32.mrf.mxu0
      %v3136 = vadd.f32 %v3082, %v3135
      %3137 = vmatmul.bf16.gmra.mxu0 %v1441
      %v3138 = vpop.f32.mrf.mxu0
      %v3139 = vadd.f32 %v3085, %v3138
      %v3140 = vpop.f32.mrf.mxu0
      %v3141 = vadd.f32 %v3087, %v3140
      %3142 = vmatmul.bf16.gmra.mxu0 %v1450
      %v3143 = vpop.f32.mrf.mxu0
      %v3144 = vadd.f32 %v3090, %v3143
      %v3145 = vpop.f32.mrf.mxu0
      %v3146 = vadd.f32 %v3092, %v3145
      %3147 = vmatmul.bf16.gmra.mxu0 %v1459
      %v3148 = vpop.f32.mrf.mxu0
      %v3149 = vadd.f32 %v3095, %v3148
      %v3150 = vpop.f32.mrf.mxu0
      %v3151 = vadd.f32 %v3097, %v3150
      %3152 = vmatmul.bf16.gmra.mxu0 %v1468
      %v3153 = vpop.f32.mrf.mxu0
      %v3154 = vadd.f32 %v3100, %v3153
      %v3155 = vpop.f32.mrf.mxu0
      %v3156 = vadd.f32 %v3102, %v3155
      %3157 = vmatmul.bf16.gmra.mxu0 %v1477
      %v3158 = vpop.f32.mrf.mxu0
      %v3159 = vadd.f32 %v3105, %v3158
      %v3160 = vpop.f32.mrf.mxu0
      %v3161 = vadd.f32 %v3107, %v3160
      %3162 = vmatmul.bf16.gmra.mxu0 %v1486
      %v3163 = vpop.f32.mrf.mxu0
      %v3164 = vadd.f32 %v3110, %v3163
      %v3165 = vpop.f32.mrf.mxu0
      %v3166 = vadd.f32 %v3112, %v3165
      %3167 = vmatmul.bf16.gmra.mxu0 %v1495
      %v3168 = vpop.f32.mrf.mxu0
      %v3169 = vadd.f32 %v3115, %v3168
      %v3170 = vpop.f32.mrf.mxu0
      %v3171 = vadd.f32 %v3117, %v3170
      %3172 = vdwg.mxu0
      %3173 = vmatpush.bf16.msra.mxu0 %v2186
      %3174 = vmatpush.bf16.msra.mxu0 %v2184
      %3175 = vmatpush.bf16.msra.mxu0 %v2182
      %3176 = vmatpush.bf16.msra.mxu0 %v2180
      %3177 = vmatpush.bf16.msra.mxu0 %v2178
      %3178 = vmatpush.bf16.msra.mxu0 %v2176
      %3179 = vmatpush.bf16.msra.mxu0 %v2174
      %3180 = vmatpush.bf16.msra.mxu0 %v2172
      %3181 = vmatmul.bf16.gmra.mxu0 %v1424
      %v3182 = vpop.f32.mrf.mxu0
      %v3183 = vadd.f32 %v3129, %v3182
      %v3184 = vpop.f32.mrf.mxu0
      %v3185 = vadd.f32 %v3131, %v3184
      %3186 = vmatmul.bf16.gmra.mxu0 %v1433
      %v3187 = vpop.f32.mrf.mxu0
      %v3188 = vadd.f32 %v3134, %v3187
      %v3189 = vpop.f32.mrf.mxu0
      %v3190 = vadd.f32 %v3136, %v3189
      %3191 = vmatmul.bf16.gmra.mxu0 %v1442
      %v3192 = vpop.f32.mrf.mxu0
      %v3193 = vadd.f32 %v3139, %v3192
      %v3194 = vpop.f32.mrf.mxu0
      %v3195 = vadd.f32 %v3141, %v3194
      %3196 = vmatmul.bf16.gmra.mxu0 %v1451
      %v3197 = vpop.f32.mrf.mxu0
      %v3198 = vadd.f32 %v3144, %v3197
      %v3199 = vpop.f32.mrf.mxu0
      %v3200 = vadd.f32 %v3146, %v3199
      %3201 = vmatmul.bf16.gmra.mxu0 %v1460
      %v3202 = vpop.f32.mrf.mxu0
      %v3203 = vadd.f32 %v3149, %v3202
      %v3204 = vpop.f32.mrf.mxu0
      %v3205 = vadd.f32 %v3151, %v3204
      %3206 = vmatmul.bf16.gmra.mxu0 %v1469
      %v3207 = vpop.f32.mrf.mxu0
      %v3208 = vadd.f32 %v3154, %v3207
      %v3209 = vpop.f32.mrf.mxu0
      %v3210 = vadd.f32 %v3156, %v3209
      %3211 = vmatmul.bf16.gmra.mxu0 %v1478
      %v3212 = vpop.f32.mrf.mxu0
      %v3213 = vadd.f32 %v3159, %v3212
      %v3214 = vpop.f32.mrf.mxu0
      %v3215 = vadd.f32 %v3161, %v3214
      %3216 = vmatmul.bf16.gmra.mxu0 %v1487
      %v3217 = vpop.f32.mrf.mxu0
      %v3218 = vadd.f32 %v3164, %v3217
      %v3219 = vpop.f32.mrf.mxu0
      %v3220 = vadd.f32 %v3166, %v3219
      %3221 = vmatmul.bf16.gmra.mxu0 %v1496
      %v3222 = vpop.f32.mrf.mxu0
      %v3223 = vadd.f32 %v3169, %v3222
      %v3224 = vpop.f32.mrf.mxu0
      %v3225 = vadd.f32 %v3171, %v3224
      %3226 = vdwg.mxu0
      %3227 = vmatpush.bf16.msra.mxu0 %v2202
      %3228 = vmatpush.bf16.msra.mxu0 %v2200
      %3229 = vmatpush.bf16.msra.mxu0 %v2198
      %3230 = vmatpush.bf16.msra.mxu0 %v2196
      %3231 = vmatpush.bf16.msra.mxu0 %v2194
      %3232 = vmatpush.bf16.msra.mxu0 %v2192
      %3233 = vmatpush.bf16.msra.mxu0 %v2190
      %3234 = vmatpush.bf16.msra.mxu0 %v2188
      %3235 = vmatmul.bf16.gmra.mxu0 %v1425
      %v3236 = vpop.f32.mrf.mxu0
      %v3237 = vadd.f32 %v3183, %v3236
      %v3238 = vpop.f32.mrf.mxu0
      %v3239 = vadd.f32 %v3185, %v3238
      %3240 = vmatmul.bf16.gmra.mxu0 %v1434
      %v3241 = vpop.f32.mrf.mxu0
      %v3242 = vadd.f32 %v3188, %v3241
      %v3243 = vpop.f32.mrf.mxu0
      %v3244 = vadd.f32 %v3190, %v3243
      %3245 = vmatmul.bf16.gmra.mxu0 %v1443
      %v3246 = vpop.f32.mrf.mxu0
      %v3247 = vadd.f32 %v3193, %v3246
      %v3248 = vpop.f32.mrf.mxu0
      %v3249 = vadd.f32 %v3195, %v3248
      %3250 = vmatmul.bf16.gmra.mxu0 %v1452
      %v3251 = vpop.f32.mrf.mxu0
      %v3252 = vadd.f32 %v3198, %v3251
      %v3253 = vpop.f32.mrf.mxu0
      %v3254 = vadd.f32 %v3200, %v3253
      %3255 = vmatmul.bf16.gmra.mxu0 %v1461
      %v3256 = vpop.f32.mrf.mxu0
      %v3257 = vadd.f32 %v3203, %v3256
      %v3258 = vpop.f32.mrf.mxu0
      %v3259 = vadd.f32 %v3205, %v3258
      %3260 = vmatmul.bf16.gmra.mxu0 %v1470
      %v3261 = vpop.f32.mrf.mxu0
      %v3262 = vadd.f32 %v3208, %v3261
      %v3263 = vpop.f32.mrf.mxu0
      %v3264 = vadd.f32 %v3210, %v3263
      %3265 = vmatmul.bf16.gmra.mxu0 %v1479
      %v3266 = vpop.f32.mrf.mxu0
      %v3267 = vadd.f32 %v3213, %v3266
      %v3268 = vpop.f32.mrf.mxu0
      %v3269 = vadd.f32 %v3215, %v3268
      %3270 = vmatmul.bf16.gmra.mxu0 %v1488
      %v3271 = vpop.f32.mrf.mxu0
      %v3272 = vadd.f32 %v3218, %v3271
      %v3273 = vpop.f32.mrf.mxu0
      %v3274 = vadd.f32 %v3220, %v3273
      %3275 = vmatmul.bf16.gmra.mxu0 %v1497
      %v3276 = vpop.f32.mrf.mxu0
      %v3277 = vadd.f32 %v3223, %v3276
      %v3278 = vpop.f32.mrf.mxu0
      %v3279 = vadd.f32 %v3225, %v3278
      %3280 = vdwg.mxu0
      %3281 = vmatpush.bf16.msra.mxu0 %v2218
      %3282 = vmatpush.bf16.msra.mxu0 %v2216
      %3283 = vmatpush.bf16.msra.mxu0 %v2214
      %3284 = vmatpush.bf16.msra.mxu0 %v2212
      %3285 = vmatpush.bf16.msra.mxu0 %v2210
      %3286 = vmatpush.bf16.msra.mxu0 %v2208
      %3287 = vmatpush.bf16.msra.mxu0 %v2206
      %3288 = vmatpush.bf16.msra.mxu0 %v2204
      %3289 = vmatmul.bf16.gmra.mxu0 %v1426
      %v3290 = vpop.f32.mrf.mxu0
      %v3291 = vadd.f32 %v3237, %v3290
      %v3292 = vpop.f32.mrf.mxu0
      %v3293 = vadd.f32 %v3239, %v3292
      %3294 = vmatmul.bf16.gmra.mxu0 %v1435
      %v3295 = vpop.f32.mrf.mxu0
      %v3296 = vadd.f32 %v3242, %v3295
      %v3297 = vpop.f32.mrf.mxu0
      %v3298 = vadd.f32 %v3244, %v3297
      %3299 = vmatmul.bf16.gmra.mxu0 %v1444
      %v3300 = vpop.f32.mrf.mxu0
      %v3301 = vadd.f32 %v3247, %v3300
      %v3302 = vpop.f32.mrf.mxu0
      %v3303 = vadd.f32 %v3249, %v3302
      %3304 = vmatmul.bf16.gmra.mxu0 %v1453
      %v3305 = vpop.f32.mrf.mxu0
      %v3306 = vadd.f32 %v3252, %v3305
      %v3307 = vpop.f32.mrf.mxu0
      %v3308 = vadd.f32 %v3254, %v3307
      %3309 = vmatmul.bf16.gmra.mxu0 %v1462
      %v3310 = vpop.f32.mrf.mxu0
      %v3311 = vadd.f32 %v3257, %v3310
      %v3312 = vpop.f32.mrf.mxu0
      %v3313 = vadd.f32 %v3259, %v3312
      %3314 = vmatmul.bf16.gmra.mxu0 %v1471
      %v3315 = vpop.f32.mrf.mxu0
      %v3316 = vadd.f32 %v3262, %v3315
      %v3317 = vpop.f32.mrf.mxu0
      %v3318 = vadd.f32 %v3264, %v3317
      %3319 = vmatmul.bf16.gmra.mxu0 %v1480
      %v3320 = vpop.f32.mrf.mxu0
      %v3321 = vadd.f32 %v3267, %v3320
      %v3322 = vpop.f32.mrf.mxu0
      %v3323 = vadd.f32 %v3269, %v3322
      %3324 = vmatmul.bf16.gmra.mxu0 %v1489
      %v3325 = vpop.f32.mrf.mxu0
      %v3326 = vadd.f32 %v3272, %v3325
      %v3327 = vpop.f32.mrf.mxu0
      %v3328 = vadd.f32 %v3274, %v3327
      %3329 = vmatmul.bf16.gmra.mxu0 %v1498
      %v3330 = vpop.f32.mrf.mxu0
      %v3331 = vadd.f32 %v3277, %v3330
      %v3332 = vpop.f32.mrf.mxu0
      %v3333 = vadd.f32 %v3279, %v3332
      %3334 = vdwg.mxu0
      %v3335 = vmax.f32 %v2805, %v3291
      %v3336 = vmax.f32 %v2807, %v3293
      %v3337 = vmax.f32 %v2810, %v3296
      %v3338 = vmax.f32 %v2812, %v3298
      %v3339 = vmax.f32 %v2815, %v3301
      %v3340 = vmax.f32 %v2817, %v3303
      %v3341 = vmax.f32 %v2820, %v3306
      %v3342 = vmax.f32 %v2822, %v3308
      %v3343 = vmax.f32 %v2825, %v3311
      %v3344 = vmax.f32 %v2827, %v3313
      %v3345 = vmax.f32 %v2830, %v3316
      %v3346 = vmax.f32 %v2832, %v3318
      %v3347 = vmax.f32 %v2835, %v3321
      %v3348 = vmax.f32 %v2837, %v3323
      %v3349 = vmax.f32 %v2840, %v3326
      %v3350 = vmax.f32 %v2842, %v3328
      %v3351 = vmax.f32 %v2845, %v3331
      %v3352 = vmax.f32 %v2847, %v3333
      %3371 = vrot.lane.b32.xlu0 %v3335, 64
      %v3372 = vpop.permute.xlu0 %3371
      %3373 = vrot.lane.b32.xlu0 %v3336, 64
      %v3374 = vpop.permute.xlu0 %3373
      %3375 = vrot.lane.b32.xlu0 %v3337, 64
      %v3376 = vpop.permute.xlu0 %3375
      %3377 = vrot.lane.b32.xlu0 %v3338, 64
      %v3378 = vpop.permute.xlu0 %3377
      %3379 = vrot.lane.b32.xlu0 %v3339, 64
      %v3380 = vpop.permute.xlu0 %3379
      %3381 = vrot.lane.b32.xlu0 %v3340, 64
      %v3382 = vpop.permute.xlu0 %3381
      %3383 = vrot.lane.b32.xlu0 %v3341, 64
      %v3384 = vpop.permute.xlu0 %3383
      %3385 = vrot.lane.b32.xlu0 %v3342, 64
      %v3386 = vpop.permute.xlu0 %3385
      %3387 = vrot.lane.b32.xlu0 %v3343, 64
      %v3388 = vpop.permute.xlu0 %3387
      %3389 = vrot.lane.b32.xlu0 %v3344, 64
      %v3390 = vpop.permute.xlu0 %3389
      %3391 = vrot.lane.b32.xlu0 %v3345, 64
      %v3392 = vpop.permute.xlu0 %3391
      %3393 = vrot.lane.b32.xlu0 %v3346, 64
      %v3394 = vpop.permute.xlu0 %3393
      %3395 = vrot.lane.b32.xlu0 %v3347, 64
      %v3396 = vpop.permute.xlu0 %3395
      %3397 = vrot.lane.b32.xlu0 %v3348, 64
      %v3398 = vpop.permute.xlu0 %3397
      %3399 = vrot.lane.b32.xlu0 %v3349, 64
      %v3400 = vpop.permute.xlu0 %3399
      %3401 = vrot.lane.b32.xlu0 %v3350, 64
      %v3402 = vpop.permute.xlu0 %3401
      %3403 = vrot.lane.b32.xlu0 %v3351, 64
      %v3404 = vpop.permute.xlu0 %3403
      %3405 = vrot.lane.b32.xlu0 %v3352, 64
      %v3406 = vpop.permute.xlu0 %3405
      %v3425 = vmax.f32 %v3335, %v3372
      %v3426 = vmax.f32 %v3336, %v3374
      %v3427 = vmax.f32 %v3337, %v3376
      %v3428 = vmax.f32 %v3338, %v3378
      %v3429 = vmax.f32 %v3339, %v3380
      %v3430 = vmax.f32 %v3340, %v3382
      %v3431 = vmax.f32 %v3341, %v3384
      %v3432 = vmax.f32 %v3342, %v3386
      %v3433 = vmax.f32 %v3343, %v3388
      %v3434 = vmax.f32 %v3344, %v3390
      %v3435 = vmax.f32 %v3345, %v3392
      %v3436 = vmax.f32 %v3346, %v3394
      %v3437 = vmax.f32 %v3347, %v3396
      %v3438 = vmax.f32 %v3348, %v3398
      %v3439 = vmax.f32 %v3349, %v3400
      %v3440 = vmax.f32 %v3350, %v3402
      %v3441 = vmax.f32 %v3351, %v3404
      %v3442 = vmax.f32 %v3352, %v3406
      %v3443 = vld [vmem:[%s4] sm:$0x1]
      %v3445 = vperm.slane %v3443, 0
      %v3447 = vadd.f32 %v3425, %v3445
      %v3448 = vadd.f32 %v3426, %v3445
      %v3449 = vadd.f32 %v3427, %v3445
      %v3450 = vadd.f32 %v3428, %v3445
      %v3451 = vadd.f32 %v3429, %v3445
      %v3452 = vadd.f32 %v3430, %v3445
      %v3453 = vadd.f32 %v3431, %v3445
      %v3454 = vadd.f32 %v3432, %v3445
      %v3455 = vadd.f32 %v3433, %v3445
      %v3456 = vadd.f32 %v3434, %v3445
      %v3457 = vadd.f32 %v3435, %v3445
      %v3458 = vadd.f32 %v3436, %v3445
      %v3459 = vadd.f32 %v3437, %v3445
      %v3460 = vadd.f32 %v3438, %v3445
      %v3461 = vadd.f32 %v3439, %v3445
      %v3462 = vadd.f32 %v3440, %v3445
      %v3463 = vadd.f32 %v3441, %v3445
      %v3464 = vadd.f32 %v3442, %v3445
      %v3465 = vmax.f32 %v3447, 0.0
      %v3466 = vmax.f32 %v3448, 0.0
      %v3467 = vmax.f32 %v3449, 0.0
      %v3468 = vmax.f32 %v3450, 0.0
      %v3469 = vmax.f32 %v3451, 0.0
      %v3470 = vmax.f32 %v3452, 0.0
      %v3471 = vmax.f32 %v3453, 0.0
      %v3472 = vmax.f32 %v3454, 0.0
      %v3473 = vmax.f32 %v3455, 0.0
      %v3474 = vmax.f32 %v3456, 0.0
      %v3475 = vmax.f32 %v3457, 0.0
      %v3476 = vmax.f32 %v3458, 0.0
      %v3477 = vmax.f32 %v3459, 0.0
      %v3478 = vmax.f32 %v3460, 0.0
      %v3479 = vmax.f32 %v3461, 0.0
      %v3480 = vmax.f32 %v3462, 0.0
      %v3481 = vmax.f32 %v3463, 0.0
      %v3482 = vmax.f32 %v3464, 0.0
      %v3483 = vpack.c.bf16 %v3465, %v3465
      %v3484 = vpack.c.bf16 %v3466, %v3466
      %v3485 = vpack.c.bf16 %v3467, %v3467
      %v3486 = vpack.c.bf16 %v3468, %v3468
      %v3487 = vpack.c.bf16 %v3469, %v3469
      %v3488 = vpack.c.bf16 %v3470, %v3470
      %v3489 = vpack.c.bf16 %v3471, %v3471
      %v3490 = vpack.c.bf16 %v3472, %v3472
      %v3491 = vpack.c.bf16 %v3473, %v3473
      %v3492 = vpack.c.bf16 %v3474, %v3474
      %v3493 = vpack.c.bf16 %v3475, %v3475
      %v3494 = vpack.c.bf16 %v3476, %v3476
      %v3495 = vpack.c.bf16 %v3477, %v3477
      %v3496 = vpack.c.bf16 %v3478, %v3478
      %v3497 = vpack.c.bf16 %v3479, %v3479
      %v3498 = vpack.c.bf16 %v3480, %v3480
      %v3499 = vpack.c.bf16 %v3481, %v3481
      %v3500 = vpack.c.bf16 %v3482, %v3482
      %vm3501 = vcmask 519168
      %3502 = vst.msk [vmem:[%s226] sm:$0xf] %vm3501, %v3483
      %3503 = vst.msk [vmem:[%s226 + $0x4] sm:$0xf] %vm3501, %v3484
      %3504 = vst.msk [vmem:[%s226 + $0x8] sm:$0xf] %vm3501, %v3485
      %3505 = vst.msk [vmem:[%s226 + $0xc] sm:$0xf] %vm3501, %v3486
      %3506 = vst.msk [vmem:[%s226 + $0x10] sm:$0xf] %vm3501, %v3487
      %3507 = vst.msk [vmem:[%s226 + $0x14] sm:$0xf] %vm3501, %v3488
      %3508 = vst.msk [vmem:[%s226 + $0x18] sm:$0xf] %vm3501, %v3489
      %3509 = vst.msk [vmem:[%s226 + $0x1c] sm:$0xf] %vm3501, %v3490
      %3510 = vst.msk [vmem:[%s226 + $0x20] sm:$0xf] %vm3501, %v3491
      %3511 = vst.msk [vmem:[%s226 + $0x24] sm:$0xf] %vm3501, %v3492
      %3512 = vst.msk [vmem:[%s226 + $0x28] sm:$0xf] %vm3501, %v3493
      %3513 = vst.msk [vmem:[%s226 + $0x2c] sm:$0xf] %vm3501, %v3494
      %3514 = vst.msk [vmem:[%s226 + $0x30] sm:$0xf] %vm3501, %v3495
      %3515 = vst.msk [vmem:[%s226 + $0x34] sm:$0xf] %vm3501, %v3496
      %3516 = vst.msk [vmem:[%s226 + $0x38] sm:$0xf] %vm3501, %v3497
      %3517 = vst.msk [vmem:[%s226 + $0x3c] sm:$0xf] %vm3501, %v3498
      %3518 = vst.msk [vmem:[%s226 + $0x40] sm:$0xf] %vm3501, %v3499
      %3519 = vst.msk [vmem:[%s226 + $0x44] sm:$0xf] %vm3501, %v3500
      %s3520 = smul.u32 18, %s16
      %p3521 = scmp.lt.s32.totalorder %s3520, 35
      %s3522 = scalar_select %p3521, %s3520, 35
      %s3523 = smul.addr %s3522, 4
      %s3524 = scalar_lea.vmem %s5, %s3523
      // Predicated region
      $region41: #{cnn_dropout_forward.2} parent=39 // pred_check
        %p3525 = pneg %p144
      $region42: #{cnn_dropout_forward.2} parent=39 // pred_check_branch
        %3527 = sbr.rel (%p3525) target = $region44
      $region43: #{cnn_dropout_forward.2} parent=39 // pred_region
        %s3528 = smul.u32 18, %s16
      $region44: #{cnn_dropout_forward.2} parent=39 // pred_fallthru
        _
    $region40: #{cnn_dropout_forward.2} parent=5 // pred_fallthru
      _
    %p3529 = scmp.le.s32.totalorder 2, %s11
    // Predicated region
    $region45: #{cnn_dropout_forward.2} parent=5 // pred_check
      %p3530 = pneg %p3529
    $region46: #{cnn_dropout_forward.2} parent=5 // pred_check_branch
      %3532 = sbr.rel (%p3530) target = $region48
    $region47: #{cnn_dropout_forward.2} parent=5 // pred_region
      %s3533 = ssub.s32 %s11, 2
      // Predicated region
      $region49: #{cnn_dropout_forward.2} parent=47 // pred_check
        %p3534 = pneg %p150
      $region50: #{cnn_dropout_forward.2} parent=47 // pred_check_branch
        %3536 = sbr.rel (%p3534) target = $region52
      $region51: #{cnn_dropout_forward.2} parent=47 // pred_region
        %s3537 = smul.u32 18, %s17
        %p3538 = scmp.lt.s32.totalorder %s3537, 35
        %s3539 = scalar_select %p3538, %s3537, 35
        %s3540 = smul.addr %s3539, 4
        %s3541 = scalar_lea.vmem %s5, %s3540
      $region52: #{cnn_dropout_forward.2} parent=47 // pred_fallthru
        _
    $region48: #{cnn_dropout_forward.2} parent=5 // pred_fallthru
      _
  $region6: #{cnn_dropout_forward.2} parent=0 // loop_footer
    %s15 = sadd.s32 1, %s11
  $region7: #{cnn_dropout_forward.2} parent=0 // loop_footer_branch
    %10 = sbr.rel target = $region3
  $region8: #{cnn_dropout_forward.2} parent=0 // loop_exit
    _

// kernel: cnn_dropout_forward.3
$region0: #{cnn_dropout_forward.3}
  #allocation0 [shape = 'u32[]', space=smem, size = 0x4, offset = 0x4, fixed_abs, tag = 'smem constant byte address 0x4 - core index']
  #allocation1 [shape = 'u32[72,128]{1,0:T(1,128)}', space=vmem, size = 0x9000, scoped, tag = 'internal scratch']
  %s0 = inlined_call_operand.vmem [shape: bf16[8,9216], index: 0, kind: input, shape index: {}]
  %s1 = inlined_call_operand.vmem [shape: bf16[9216,128], index: 1, kind: input, shape index: {}]
  %s2 = inlined_call_operand.vmem [shape: f32[1,128], index: 2, kind: input, shape index: {}]
  %s3 = inlined_call_operand.vmem [shape: bf16[128,128], index: 3, kind: input, shape index: {}]
  %s4 = inlined_call_operand.vmem [shape: f32[1,128], index: 4, kind: input, shape index: {}]
  %s5 = inlined_call_operand.vmem [shape: f32[8,128], index: 5, kind: output, shape index: {}]
  %s6 = sld [smem:[#allocation0]]
  $region30: #{cnn_dropout_forward.3} parent=0
    _
  %s8 = ssub.s32 1, %s6
  %s9 = scalar_select 0, %s8, %s6
  // Predicated region
  $region2: #{cnn_dropout_forward.3} parent=0 // pred_check
    _
  $region3: #{cnn_dropout_forward.3} parent=0 // pred_check_branch
    %11 = sbr.rel (0) target = $region5
  $region4: #{cnn_dropout_forward.3} parent=0 // pred_region
    _
  $region5: #{cnn_dropout_forward.3} parent=0 // pred_fallthru
    _
  // Predicated region
  $region6: #{cnn_dropout_forward.3} parent=0 // pred_check
    _
  $region7: #{cnn_dropout_forward.3} parent=0 // pred_check_branch
    %13 = sbr.rel (0) target = $region9
  $region8: #{cnn_dropout_forward.3} parent=0 // pred_region
    _
  $region9: #{cnn_dropout_forward.3} parent=0 // pred_fallthru
    _
  // Predicated region
  $region10: #{cnn_dropout_forward.3} parent=0 // pred_check
    _
  $region11: #{cnn_dropout_forward.3} parent=0 // pred_check_branch
    %15 = sbr.rel (0) target = $region13
  $region12: #{cnn_dropout_forward.3} parent=0 // pred_region
    _
  $region13: #{cnn_dropout_forward.3} parent=0 // pred_fallthru
    _
  // Predicated region
  $region14: #{cnn_dropout_forward.3} parent=0 // pred_check
    _
  $region15: #{cnn_dropout_forward.3} parent=0 // pred_check_branch
    %17 = sbr.rel (0) target = $region17
  $region16: #{cnn_dropout_forward.3} parent=0 // pred_region
    _
  $region17: #{cnn_dropout_forward.3} parent=0 // pred_fallthru
    _
  // Predicated region
  $region18: #{cnn_dropout_forward.3} parent=0 // pred_check
    _
  $region19: #{cnn_dropout_forward.3} parent=0 // pred_check_branch
    %19 = sbr.rel (0) target = $region21
  $region20: #{cnn_dropout_forward.3} parent=0 // pred_region
    _
  $region21: #{cnn_dropout_forward.3} parent=0 // pred_fallthru
    _
  %v20 = vld [vmem:[%s0] sm:$0xff]
  %v21 = vld [vmem:[%s0 + $0x8] sm:$0xff]
  %v22 = vld [vmem:[%s0 + $0x10] sm:$0xff]
  %v23 = vld [vmem:[%s0 + $0x18] sm:$0xff]
  %v24 = vld [vmem:[%s0 + $0x20] sm:$0xff]
  %v25 = vld [vmem:[%s0 + $0x28] sm:$0xff]
  %v26 = vld [vmem:[%s0 + $0x30] sm:$0xff]
  %v27 = vld [vmem:[%s0 + $0x38] sm:$0xff]
  %v28 = vld [vmem:[%s0 + $0x40] sm:$0xff]
  %v29 = vld [vmem:[%s0 + $0x48] sm:$0xff]
  %v30 = vld [vmem:[%s0 + $0x50] sm:$0xff]
  %v31 = vld [vmem:[%s0 + $0x58] sm:$0xff]
  %v32 = vld [vmem:[%s0 + $0x60] sm:$0xff]
  %v33 = vld [vmem:[%s0 + $0x68] sm:$0xff]
  %v34 = vld [vmem:[%s0 + $0x70] sm:$0xff]
  %v35 = vld [vmem:[%s0 + $0x78] sm:$0xff]
  %v36 = vld [vmem:[%s0 + $0x80] sm:$0xff]
  %v37 = vld [vmem:[%s0 + $0x88] sm:$0xff]
  %v38 = vld [vmem:[%s0 + $0x90] sm:$0xff]
  %v39 = vld [vmem:[%s0 + $0x98] sm:$0xff]
  %v40 = vld [vmem:[%s0 + $0xa0] sm:$0xff]
  %v41 = vld [vmem:[%s0 + $0xa8] sm:$0xff]
  %v42 = vld [vmem:[%s0 + $0xb0] sm:$0xff]
  %v43 = vld [vmem:[%s0 + $0xb8] sm:$0xff]
  %v44 = vld [vmem:[%s0 + $0xc0] sm:$0xff]
  %v45 = vld [vmem:[%s0 + $0xc8] sm:$0xff]
  %v46 = vld [vmem:[%s0 + $0xd0] sm:$0xff]
  %v47 = vld [vmem:[%s0 + $0xd8] sm:$0xff]
  %v48 = vld [vmem:[%s0 + $0xe0] sm:$0xff]
  %v49 = vld [vmem:[%s0 + $0xe8] sm:$0xff]
  %v50 = vld [vmem:[%s0 + $0xf0] sm:$0xff]
  %v51 = vld [vmem:[%s0 + $0xf8] sm:$0xff]
  %v52 = vld [vmem:[%s0 + $0x100] sm:$0xff]
  %v53 = vld [vmem:[%s0 + $0x108] sm:$0xff]
  %v54 = vld [vmem:[%s0 + $0x110] sm:$0xff]
  %v55 = vld [vmem:[%s0 + $0x118] sm:$0xff]
  %v56 = vld [vmem:[%s1] sm:$0xf]
  %v57 = vld [vmem:[%s1 + $0x4] sm:$0xf]
  %v58 = vld [vmem:[%s1 + $0x8] sm:$0xf]
  %v59 = vld [vmem:[%s1 + $0xc] sm:$0xf]
  %v60 = vld [vmem:[%s1 + $0x10] sm:$0xf]
  %v61 = vld [vmem:[%s1 + $0x14] sm:$0xf]
  %v62 = vld [vmem:[%s1 + $0x18] sm:$0xf]
  %v63 = vld [vmem:[%s1 + $0x1c] sm:$0xf]
  %v64 = vld [vmem:[%s1 + $0x20] sm:$0xf]
  %v65 = vld [vmem:[%s1 + $0x24] sm:$0xf]
  %v66 = vld [vmem:[%s1 + $0x28] sm:$0xf]
  %v67 = vld [vmem:[%s1 + $0x2c] sm:$0xf]
  %v68 = vld [vmem:[%s1 + $0x30] sm:$0xf]
  %v69 = vld [vmem:[%s1 + $0x34] sm:$0xf]
  %v70 = vld [vmem:[%s1 + $0x38] sm:$0xf]
  %v71 = vld [vmem:[%s1 + $0x3c] sm:$0xf]
  %v72 = vld [vmem:[%s1 + $0x40] sm:$0xf]
  %v73 = vld [vmem:[%s1 + $0x44] sm:$0xf]
  %v74 = vld [vmem:[%s1 + $0x48] sm:$0xf]
  %v75 = vld [vmem:[%s1 + $0x4c] sm:$0xf]
  %v76 = vld [vmem:[%s1 + $0x50] sm:$0xf]
  %v77 = vld [vmem:[%s1 + $0x54] sm:$0xf]
  %v78 = vld [vmem:[%s1 + $0x58] sm:$0xf]
  %v79 = vld [vmem:[%s1 + $0x5c] sm:$0xf]
  %v80 = vld [vmem:[%s1 + $0x60] sm:$0xf]
  %v81 = vld [vmem:[%s1 + $0x64] sm:$0xf]
  %v82 = vld [vmem:[%s1 + $0x68] sm:$0xf]
  %v83 = vld [vmem:[%s1 + $0x6c] sm:$0xf]
  %v84 = vld [vmem:[%s1 + $0x70] sm:$0xf]
  %v85 = vld [vmem:[%s1 + $0x74] sm:$0xf]
  %v86 = vld [vmem:[%s1 + $0x78] sm:$0xf]
  %v87 = vld [vmem:[%s1 + $0x7c] sm:$0xf]
  %v88 = vld [vmem:[%s1 + $0x80] sm:$0xf]
  %v89 = vld [vmem:[%s1 + $0x84] sm:$0xf]
  %v90 = vld [vmem:[%s1 + $0x88] sm:$0xf]
  %v91 = vld [vmem:[%s1 + $0x8c] sm:$0xf]
  %v92 = vld [vmem:[%s1 + $0x90] sm:$0xf]
  %v93 = vld [vmem:[%s1 + $0x94] sm:$0xf]
  %v94 = vld [vmem:[%s1 + $0x98] sm:$0xf]
  %v95 = vld [vmem:[%s1 + $0x9c] sm:$0xf]
  %v96 = vld [vmem:[%s1 + $0xa0] sm:$0xf]
  %v97 = vld [vmem:[%s1 + $0xa4] sm:$0xf]
  %v98 = vld [vmem:[%s1 + $0xa8] sm:$0xf]
  %v99 = vld [vmem:[%s1 + $0xac] sm:$0xf]
  %v100 = vld [vmem:[%s1 + $0xb0] sm:$0xf]
  %v101 = vld [vmem:[%s1 + $0xb4] sm:$0xf]
  %v102 = vld [vmem:[%s1 + $0xb8] sm:$0xf]
  %v103 = vld [vmem:[%s1 + $0xbc] sm:$0xf]
  %v104 = vld [vmem:[%s1 + $0xc0] sm:$0xf]
  %v105 = vld [vmem:[%s1 + $0xc4] sm:$0xf]
  %v106 = vld [vmem:[%s1 + $0xc8] sm:$0xf]
  %v107 = vld [vmem:[%s1 + $0xcc] sm:$0xf]
  %v108 = vld [vmem:[%s1 + $0xd0] sm:$0xf]
  %v109 = vld [vmem:[%s1 + $0xd4] sm:$0xf]
  %v110 = vld [vmem:[%s1 + $0xd8] sm:$0xf]
  %v111 = vld [vmem:[%s1 + $0xdc] sm:$0xf]
  %v112 = vld [vmem:[%s1 + $0xe0] sm:$0xf]
  %v113 = vld [vmem:[%s1 + $0xe4] sm:$0xf]
  %v114 = vld [vmem:[%s1 + $0xe8] sm:$0xf]
  %v115 = vld [vmem:[%s1 + $0xec] sm:$0xf]
  %v116 = vld [vmem:[%s1 + $0xf0] sm:$0xf]
  %v117 = vld [vmem:[%s1 + $0xf4] sm:$0xf]
  %v118 = vld [vmem:[%s1 + $0xf8] sm:$0xf]
  %v119 = vld [vmem:[%s1 + $0xfc] sm:$0xf]
  %v120 = vld [vmem:[%s1 + $0x100] sm:$0xf]
  %v121 = vld [vmem:[%s1 + $0x104] sm:$0xf]
  %v122 = vld [vmem:[%s1 + $0x108] sm:$0xf]
  %v123 = vld [vmem:[%s1 + $0x10c] sm:$0xf]
  %v124 = vld [vmem:[%s1 + $0x110] sm:$0xf]
  %v125 = vld [vmem:[%s1 + $0x114] sm:$0xf]
  %v126 = vld [vmem:[%s1 + $0x118] sm:$0xf]
  %v127 = vld [vmem:[%s1 + $0x11c] sm:$0xf]
  %v128 = vld [vmem:[%s1 + $0x120] sm:$0xf]
  %v129 = vld [vmem:[%s1 + $0x124] sm:$0xf]
  %v130 = vld [vmem:[%s1 + $0x128] sm:$0xf]
  %v131 = vld [vmem:[%s1 + $0x12c] sm:$0xf]
  %v132 = vld [vmem:[%s1 + $0x130] sm:$0xf]
  %v133 = vld [vmem:[%s1 + $0x134] sm:$0xf]
  %v134 = vld [vmem:[%s1 + $0x138] sm:$0xf]
  %v135 = vld [vmem:[%s1 + $0x13c] sm:$0xf]
  %v136 = vld [vmem:[%s1 + $0x140] sm:$0xf]
  %v137 = vld [vmem:[%s1 + $0x144] sm:$0xf]
  %v138 = vld [vmem:[%s1 + $0x148] sm:$0xf]
  %v139 = vld [vmem:[%s1 + $0x14c] sm:$0xf]
  %v140 = vld [vmem:[%s1 + $0x150] sm:$0xf]
  %v141 = vld [vmem:[%s1 + $0x154] sm:$0xf]
  %v142 = vld [vmem:[%s1 + $0x158] sm:$0xf]
  %v143 = vld [vmem:[%s1 + $0x15c] sm:$0xf]
  %v144 = vld [vmem:[%s1 + $0x160] sm:$0xf]
  %v145 = vld [vmem:[%s1 + $0x164] sm:$0xf]
  %v146 = vld [vmem:[%s1 + $0x168] sm:$0xf]
  %v147 = vld [vmem:[%s1 + $0x16c] sm:$0xf]
  %v148 = vld [vmem:[%s1 + $0x170] sm:$0xf]
  %v149 = vld [vmem:[%s1 + $0x174] sm:$0xf]
  %v150 = vld [vmem:[%s1 + $0x178] sm:$0xf]
  %v151 = vld [vmem:[%s1 + $0x17c] sm:$0xf]
  %v152 = vld [vmem:[%s1 + $0x180] sm:$0xf]
  %v153 = vld [vmem:[%s1 + $0x184] sm:$0xf]
  %v154 = vld [vmem:[%s1 + $0x188] sm:$0xf]
  %v155 = vld [vmem:[%s1 + $0x18c] sm:$0xf]
  %v156 = vld [vmem:[%s1 + $0x190] sm:$0xf]
  %v157 = vld [vmem:[%s1 + $0x194] sm:$0xf]
  %v158 = vld [vmem:[%s1 + $0x198] sm:$0xf]
  %v159 = vld [vmem:[%s1 + $0x19c] sm:$0xf]
  %v160 = vld [vmem:[%s1 + $0x1a0] sm:$0xf]
  %v161 = vld [vmem:[%s1 + $0x1a4] sm:$0xf]
  %v162 = vld [vmem:[%s1 + $0x1a8] sm:$0xf]
  %v163 = vld [vmem:[%s1 + $0x1ac] sm:$0xf]
  %v164 = vld [vmem:[%s1 + $0x1b0] sm:$0xf]
  %v165 = vld [vmem:[%s1 + $0x1b4] sm:$0xf]
  %v166 = vld [vmem:[%s1 + $0x1b8] sm:$0xf]
  %v167 = vld [vmem:[%s1 + $0x1bc] sm:$0xf]
  %v168 = vld [vmem:[%s1 + $0x1c0] sm:$0xf]
  %v169 = vld [vmem:[%s1 + $0x1c4] sm:$0xf]
  %v170 = vld [vmem:[%s1 + $0x1c8] sm:$0xf]
  %v171 = vld [vmem:[%s1 + $0x1cc] sm:$0xf]
  %v172 = vld [vmem:[%s1 + $0x1d0] sm:$0xf]
  %v173 = vld [vmem:[%s1 + $0x1d4] sm:$0xf]
  %v174 = vld [vmem:[%s1 + $0x1d8] sm:$0xf]
  %v175 = vld [vmem:[%s1 + $0x1dc] sm:$0xf]
  %v176 = vld [vmem:[%s1 + $0x1e0] sm:$0xf]
  %v177 = vld [vmem:[%s1 + $0x1e4] sm:$0xf]
  %v178 = vld [vmem:[%s1 + $0x1e8] sm:$0xf]
  %v179 = vld [vmem:[%s1 + $0x1ec] sm:$0xf]
  %v180 = vld [vmem:[%s1 + $0x1f0] sm:$0xf]
  %v181 = vld [vmem:[%s1 + $0x1f4] sm:$0xf]
  %v182 = vld [vmem:[%s1 + $0x1f8] sm:$0xf]
  %v183 = vld [vmem:[%s1 + $0x1fc] sm:$0xf]
  %v184 = vld [vmem:[%s1 + $0x200] sm:$0xf]
  %v185 = vld [vmem:[%s1 + $0x204] sm:$0xf]
  %v186 = vld [vmem:[%s1 + $0x208] sm:$0xf]
  %v187 = vld [vmem:[%s1 + $0x20c] sm:$0xf]
  %v188 = vld [vmem:[%s1 + $0x210] sm:$0xf]
  %v189 = vld [vmem:[%s1 + $0x214] sm:$0xf]
  %v190 = vld [vmem:[%s1 + $0x218] sm:$0xf]
  %v191 = vld [vmem:[%s1 + $0x21c] sm:$0xf]
  %v192 = vld [vmem:[%s1 + $0x220] sm:$0xf]
  %v193 = vld [vmem:[%s1 + $0x224] sm:$0xf]
  %v194 = vld [vmem:[%s1 + $0x228] sm:$0xf]
  %v195 = vld [vmem:[%s1 + $0x22c] sm:$0xf]
  %v196 = vld [vmem:[%s1 + $0x230] sm:$0xf]
  %v197 = vld [vmem:[%s1 + $0x234] sm:$0xf]
  %v198 = vld [vmem:[%s1 + $0x238] sm:$0xf]
  %v199 = vld [vmem:[%s1 + $0x23c] sm:$0xf]
  %v200 = vld [vmem:[%s1 + $0x240] sm:$0xf]
  %v201 = vld [vmem:[%s1 + $0x244] sm:$0xf]
  %v202 = vld [vmem:[%s1 + $0x248] sm:$0xf]
  %v203 = vld [vmem:[%s1 + $0x24c] sm:$0xf]
  %v204 = vld [vmem:[%s1 + $0x250] sm:$0xf]
  %v205 = vld [vmem:[%s1 + $0x254] sm:$0xf]
  %v206 = vld [vmem:[%s1 + $0x258] sm:$0xf]
  %v207 = vld [vmem:[%s1 + $0x25c] sm:$0xf]
  %v208 = vld [vmem:[%s1 + $0x260] sm:$0xf]
  %v209 = vld [vmem:[%s1 + $0x264] sm:$0xf]
  %v210 = vld [vmem:[%s1 + $0x268] sm:$0xf]
  %v211 = vld [vmem:[%s1 + $0x26c] sm:$0xf]
  %v212 = vld [vmem:[%s1 + $0x270] sm:$0xf]
  %v213 = vld [vmem:[%s1 + $0x274] sm:$0xf]
  %v214 = vld [vmem:[%s1 + $0x278] sm:$0xf]
  %v215 = vld [vmem:[%s1 + $0x27c] sm:$0xf]
  %v216 = vld [vmem:[%s1 + $0x280] sm:$0xf]
  %v217 = vld [vmem:[%s1 + $0x284] sm:$0xf]
  %v218 = vld [vmem:[%s1 + $0x288] sm:$0xf]
  %v219 = vld [vmem:[%s1 + $0x28c] sm:$0xf]
  %v220 = vld [vmem:[%s1 + $0x290] sm:$0xf]
  %v221 = vld [vmem:[%s1 + $0x294] sm:$0xf]
  %v222 = vld [vmem:[%s1 + $0x298] sm:$0xf]
  %v223 = vld [vmem:[%s1 + $0x29c] sm:$0xf]
  %v224 = vld [vmem:[%s1 + $0x2a0] sm:$0xf]
  %v225 = vld [vmem:[%s1 + $0x2a4] sm:$0xf]
  %v226 = vld [vmem:[%s1 + $0x2a8] sm:$0xf]
  %v227 = vld [vmem:[%s1 + $0x2ac] sm:$0xf]
  %v228 = vld [vmem:[%s1 + $0x2b0] sm:$0xf]
  %v229 = vld [vmem:[%s1 + $0x2b4] sm:$0xf]
  %v230 = vld [vmem:[%s1 + $0x2b8] sm:$0xf]
  %v231 = vld [vmem:[%s1 + $0x2bc] sm:$0xf]
  %v232 = vld [vmem:[%s1 + $0x2c0] sm:$0xf]
  %v233 = vld [vmem:[%s1 + $0x2c4] sm:$0xf]
  %v234 = vld [vmem:[%s1 + $0x2c8] sm:$0xf]
  %v235 = vld [vmem:[%s1 + $0x2cc] sm:$0xf]
  %v236 = vld [vmem:[%s1 + $0x2d0] sm:$0xf]
  %v237 = vld [vmem:[%s1 + $0x2d4] sm:$0xf]
  %v238 = vld [vmem:[%s1 + $0x2d8] sm:$0xf]
  %v239 = vld [vmem:[%s1 + $0x2dc] sm:$0xf]
  %v240 = vld [vmem:[%s1 + $0x2e0] sm:$0xf]
  %v241 = vld [vmem:[%s1 + $0x2e4] sm:$0xf]
  %v242 = vld [vmem:[%s1 + $0x2e8] sm:$0xf]
  %v243 = vld [vmem:[%s1 + $0x2ec] sm:$0xf]
  %v244 = vld [vmem:[%s1 + $0x2f0] sm:$0xf]
  %v245 = vld [vmem:[%s1 + $0x2f4] sm:$0xf]
  %v246 = vld [vmem:[%s1 + $0x2f8] sm:$0xf]
  %v247 = vld [vmem:[%s1 + $0x2fc] sm:$0xf]
  %v248 = vld [vmem:[%s1 + $0x300] sm:$0xf]
  %v249 = vld [vmem:[%s1 + $0x304] sm:$0xf]
  %v250 = vld [vmem:[%s1 + $0x308] sm:$0xf]
  %v251 = vld [vmem:[%s1 + $0x30c] sm:$0xf]
  %v252 = vld [vmem:[%s1 + $0x310] sm:$0xf]
  %v253 = vld [vmem:[%s1 + $0x314] sm:$0xf]
  %v254 = vld [vmem:[%s1 + $0x318] sm:$0xf]
  %v255 = vld [vmem:[%s1 + $0x31c] sm:$0xf]
  %v256 = vld [vmem:[%s1 + $0x320] sm:$0xf]
  %v257 = vld [vmem:[%s1 + $0x324] sm:$0xf]
  %v258 = vld [vmem:[%s1 + $0x328] sm:$0xf]
  %v259 = vld [vmem:[%s1 + $0x32c] sm:$0xf]
  %v260 = vld [vmem:[%s1 + $0x330] sm:$0xf]
  %v261 = vld [vmem:[%s1 + $0x334] sm:$0xf]
  %v262 = vld [vmem:[%s1 + $0x338] sm:$0xf]
  %v263 = vld [vmem:[%s1 + $0x33c] sm:$0xf]
  %v264 = vld [vmem:[%s1 + $0x340] sm:$0xf]
  %v265 = vld [vmem:[%s1 + $0x344] sm:$0xf]
  %v266 = vld [vmem:[%s1 + $0x348] sm:$0xf]
  %v267 = vld [vmem:[%s1 + $0x34c] sm:$0xf]
  %v268 = vld [vmem:[%s1 + $0x350] sm:$0xf]
  %v269 = vld [vmem:[%s1 + $0x354] sm:$0xf]
  %v270 = vld [vmem:[%s1 + $0x358] sm:$0xf]
  %v271 = vld [vmem:[%s1 + $0x35c] sm:$0xf]
  %v272 = vld [vmem:[%s1 + $0x360] sm:$0xf]
  %v273 = vld [vmem:[%s1 + $0x364] sm:$0xf]
  %v274 = vld [vmem:[%s1 + $0x368] sm:$0xf]
  %v275 = vld [vmem:[%s1 + $0x36c] sm:$0xf]
  %v276 = vld [vmem:[%s1 + $0x370] sm:$0xf]
  %v277 = vld [vmem:[%s1 + $0x374] sm:$0xf]
  %v278 = vld [vmem:[%s1 + $0x378] sm:$0xf]
  %v279 = vld [vmem:[%s1 + $0x37c] sm:$0xf]
  %v280 = vld [vmem:[%s1 + $0x380] sm:$0xf]
  %v281 = vld [vmem:[%s1 + $0x384] sm:$0xf]
  %v282 = vld [vmem:[%s1 + $0x388] sm:$0xf]
  %v283 = vld [vmem:[%s1 + $0x38c] sm:$0xf]
  %v284 = vld [vmem:[%s1 + $0x390] sm:$0xf]
  %v285 = vld [vmem:[%s1 + $0x394] sm:$0xf]
  %v286 = vld [vmem:[%s1 + $0x398] sm:$0xf]
  %v287 = vld [vmem:[%s1 + $0x39c] sm:$0xf]
  %v288 = vld [vmem:[%s1 + $0x3a0] sm:$0xf]
  %v289 = vld [vmem:[%s1 + $0x3a4] sm:$0xf]
  %v290 = vld [vmem:[%s1 + $0x3a8] sm:$0xf]
  %v291 = vld [vmem:[%s1 + $0x3ac] sm:$0xf]
  %v292 = vld [vmem:[%s1 + $0x3b0] sm:$0xf]
  %v293 = vld [vmem:[%s1 + $0x3b4] sm:$0xf]
  %v294 = vld [vmem:[%s1 + $0x3b8] sm:$0xf]
  %v295 = vld [vmem:[%s1 + $0x3bc] sm:$0xf]
  %v296 = vld [vmem:[%s1 + $0x3c0] sm:$0xf]
  %v297 = vld [vmem:[%s1 + $0x3c4] sm:$0xf]
  %v298 = vld [vmem:[%s1 + $0x3c8] sm:$0xf]
  %v299 = vld [vmem:[%s1 + $0x3cc] sm:$0xf]
  %v300 = vld [vmem:[%s1 + $0x3d0] sm:$0xf]
  %v301 = vld [vmem:[%s1 + $0x3d4] sm:$0xf]
  %v302 = vld [vmem:[%s1 + $0x3d8] sm:$0xf]
  %v303 = vld [vmem:[%s1 + $0x3dc] sm:$0xf]
  %v304 = vld [vmem:[%s1 + $0x3e0] sm:$0xf]
  %v305 = vld [vmem:[%s1 + $0x3e4] sm:$0xf]
  %v306 = vld [vmem:[%s1 + $0x3e8] sm:$0xf]
  %v307 = vld [vmem:[%s1 + $0x3ec] sm:$0xf]
  %v308 = vld [vmem:[%s1 + $0x3f0] sm:$0xf]
  %v309 = vld [vmem:[%s1 + $0x3f4] sm:$0xf]
  %v310 = vld [vmem:[%s1 + $0x3f8] sm:$0xf]
  %v311 = vld [vmem:[%s1 + $0x3fc] sm:$0xf]
  %v312 = vld [vmem:[%s1 + $0x400] sm:$0xf]
  %v313 = vld [vmem:[%s1 + $0x404] sm:$0xf]
  %v314 = vld [vmem:[%s1 + $0x408] sm:$0xf]
  %v315 = vld [vmem:[%s1 + $0x40c] sm:$0xf]
  %v316 = vld [vmem:[%s1 + $0x410] sm:$0xf]
  %v317 = vld [vmem:[%s1 + $0x414] sm:$0xf]
  %v318 = vld [vmem:[%s1 + $0x418] sm:$0xf]
  %v319 = vld [vmem:[%s1 + $0x41c] sm:$0xf]
  %v320 = vld [vmem:[%s1 + $0x420] sm:$0xf]
  %v321 = vld [vmem:[%s1 + $0x424] sm:$0xf]
  %v322 = vld [vmem:[%s1 + $0x428] sm:$0xf]
  %v323 = vld [vmem:[%s1 + $0x42c] sm:$0xf]
  %v324 = vld [vmem:[%s1 + $0x430] sm:$0xf]
  %v325 = vld [vmem:[%s1 + $0x434] sm:$0xf]
  %v326 = vld [vmem:[%s1 + $0x438] sm:$0xf]
  %v327 = vld [vmem:[%s1 + $0x43c] sm:$0xf]
  %v328 = vld [vmem:[%s1 + $0x440] sm:$0xf]
  %v329 = vld [vmem:[%s1 + $0x444] sm:$0xf]
  %v330 = vld [vmem:[%s1 + $0x448] sm:$0xf]
  %v331 = vld [vmem:[%s1 + $0x44c] sm:$0xf]
  %v332 = vld [vmem:[%s1 + $0x450] sm:$0xf]
  %v333 = vld [vmem:[%s1 + $0x454] sm:$0xf]
  %v334 = vld [vmem:[%s1 + $0x458] sm:$0xf]
  %v335 = vld [vmem:[%s1 + $0x45c] sm:$0xf]
  %v336 = vld [vmem:[%s1 + $0x460] sm:$0xf]
  %v337 = vld [vmem:[%s1 + $0x464] sm:$0xf]
  %v338 = vld [vmem:[%s1 + $0x468] sm:$0xf]
  %v339 = vld [vmem:[%s1 + $0x46c] sm:$0xf]
  %v340 = vld [vmem:[%s1 + $0x470] sm:$0xf]
  %v341 = vld [vmem:[%s1 + $0x474] sm:$0xf]
  %v342 = vld [vmem:[%s1 + $0x478] sm:$0xf]
  %v343 = vld [vmem:[%s1 + $0x47c] sm:$0xf]
  %v344 = vld [vmem:[%s1 + $0x480] sm:$0xf]
  %v345 = vld [vmem:[%s1 + $0x484] sm:$0xf]
  %v346 = vld [vmem:[%s1 + $0x488] sm:$0xf]
  %v347 = vld [vmem:[%s1 + $0x48c] sm:$0xf]
  %v348 = vld [vmem:[%s1 + $0x490] sm:$0xf]
  %v349 = vld [vmem:[%s1 + $0x494] sm:$0xf]
  %v350 = vld [vmem:[%s1 + $0x498] sm:$0xf]
  %v351 = vld [vmem:[%s1 + $0x49c] sm:$0xf]
  %v352 = vld [vmem:[%s1 + $0x4a0] sm:$0xf]
  %v353 = vld [vmem:[%s1 + $0x4a4] sm:$0xf]
  %v354 = vld [vmem:[%s1 + $0x4a8] sm:$0xf]
  %v355 = vld [vmem:[%s1 + $0x4ac] sm:$0xf]
  %v356 = vld [vmem:[%s1 + $0x4b0] sm:$0xf]
  %v357 = vld [vmem:[%s1 + $0x4b4] sm:$0xf]
  %v358 = vld [vmem:[%s1 + $0x4b8] sm:$0xf]
  %v359 = vld [vmem:[%s1 + $0x4bc] sm:$0xf]
  %v360 = vld [vmem:[%s1 + $0x4c0] sm:$0xf]
  %v361 = vld [vmem:[%s1 + $0x4c4] sm:$0xf]
  %v362 = vld [vmem:[%s1 + $0x4c8] sm:$0xf]
  %v363 = vld [vmem:[%s1 + $0x4cc] sm:$0xf]
  %v364 = vld [vmem:[%s1 + $0x4d0] sm:$0xf]
  %v365 = vld [vmem:[%s1 + $0x4d4] sm:$0xf]
  %v366 = vld [vmem:[%s1 + $0x4d8] sm:$0xf]
  %v367 = vld [vmem:[%s1 + $0x4dc] sm:$0xf]
  %v368 = vld [vmem:[%s1 + $0x4e0] sm:$0xf]
  %v369 = vld [vmem:[%s1 + $0x4e4] sm:$0xf]
  %v370 = vld [vmem:[%s1 + $0x4e8] sm:$0xf]
  %v371 = vld [vmem:[%s1 + $0x4ec] sm:$0xf]
  %v372 = vld [vmem:[%s1 + $0x4f0] sm:$0xf]
  %v373 = vld [vmem:[%s1 + $0x4f4] sm:$0xf]
  %v374 = vld [vmem:[%s1 + $0x4f8] sm:$0xf]
  %v375 = vld [vmem:[%s1 + $0x4fc] sm:$0xf]
  %v376 = vld [vmem:[%s1 + $0x500] sm:$0xf]
  %v377 = vld [vmem:[%s1 + $0x504] sm:$0xf]
  %v378 = vld [vmem:[%s1 + $0x508] sm:$0xf]
  %v379 = vld [vmem:[%s1 + $0x50c] sm:$0xf]
  %v380 = vld [vmem:[%s1 + $0x510] sm:$0xf]
  %v381 = vld [vmem:[%s1 + $0x514] sm:$0xf]
  %v382 = vld [vmem:[%s1 + $0x518] sm:$0xf]
  %v383 = vld [vmem:[%s1 + $0x51c] sm:$0xf]
  %v384 = vld [vmem:[%s1 + $0x520] sm:$0xf]
  %v385 = vld [vmem:[%s1 + $0x524] sm:$0xf]
  %v386 = vld [vmem:[%s1 + $0x528] sm:$0xf]
  %v387 = vld [vmem:[%s1 + $0x52c] sm:$0xf]
  %v388 = vld [vmem:[%s1 + $0x530] sm:$0xf]
  %v389 = vld [vmem:[%s1 + $0x534] sm:$0xf]
  %v390 = vld [vmem:[%s1 + $0x538] sm:$0xf]
  %v391 = vld [vmem:[%s1 + $0x53c] sm:$0xf]
  %v392 = vld [vmem:[%s1 + $0x540] sm:$0xf]
  %v393 = vld [vmem:[%s1 + $0x544] sm:$0xf]
  %v394 = vld [vmem:[%s1 + $0x548] sm:$0xf]
  %v395 = vld [vmem:[%s1 + $0x54c] sm:$0xf]
  %v396 = vld [vmem:[%s1 + $0x550] sm:$0xf]
  %v397 = vld [vmem:[%s1 + $0x554] sm:$0xf]
  %v398 = vld [vmem:[%s1 + $0x558] sm:$0xf]
  %v399 = vld [vmem:[%s1 + $0x55c] sm:$0xf]
  %v400 = vld [vmem:[%s1 + $0x560] sm:$0xf]
  %v401 = vld [vmem:[%s1 + $0x564] sm:$0xf]
  %v402 = vld [vmem:[%s1 + $0x568] sm:$0xf]
  %v403 = vld [vmem:[%s1 + $0x56c] sm:$0xf]
  %v404 = vld [vmem:[%s1 + $0x570] sm:$0xf]
  %v405 = vld [vmem:[%s1 + $0x574] sm:$0xf]
  %v406 = vld [vmem:[%s1 + $0x578] sm:$0xf]
  %v407 = vld [vmem:[%s1 + $0x57c] sm:$0xf]
  %v408 = vld [vmem:[%s1 + $0x580] sm:$0xf]
  %v409 = vld [vmem:[%s1 + $0x584] sm:$0xf]
  %v410 = vld [vmem:[%s1 + $0x588] sm:$0xf]
  %v411 = vld [vmem:[%s1 + $0x58c] sm:$0xf]
  %v412 = vld [vmem:[%s1 + $0x590] sm:$0xf]
  %v413 = vld [vmem:[%s1 + $0x594] sm:$0xf]
  %v414 = vld [vmem:[%s1 + $0x598] sm:$0xf]
  %v415 = vld [vmem:[%s1 + $0x59c] sm:$0xf]
  %v416 = vld [vmem:[%s1 + $0x5a0] sm:$0xf]
  %v417 = vld [vmem:[%s1 + $0x5a4] sm:$0xf]
  %v418 = vld [vmem:[%s1 + $0x5a8] sm:$0xf]
  %v419 = vld [vmem:[%s1 + $0x5ac] sm:$0xf]
  %v420 = vld [vmem:[%s1 + $0x5b0] sm:$0xf]
  %v421 = vld [vmem:[%s1 + $0x5b4] sm:$0xf]
  %v422 = vld [vmem:[%s1 + $0x5b8] sm:$0xf]
  %v423 = vld [vmem:[%s1 + $0x5bc] sm:$0xf]
  %v424 = vld [vmem:[%s1 + $0x5c0] sm:$0xf]
  %v425 = vld [vmem:[%s1 + $0x5c4] sm:$0xf]
  %v426 = vld [vmem:[%s1 + $0x5c8] sm:$0xf]
  %v427 = vld [vmem:[%s1 + $0x5cc] sm:$0xf]
  %v428 = vld [vmem:[%s1 + $0x5d0] sm:$0xf]
  %v429 = vld [vmem:[%s1 + $0x5d4] sm:$0xf]
  %v430 = vld [vmem:[%s1 + $0x5d8] sm:$0xf]
  %v431 = vld [vmem:[%s1 + $0x5dc] sm:$0xf]
  %v432 = vld [vmem:[%s1 + $0x5e0] sm:$0xf]
  %v433 = vld [vmem:[%s1 + $0x5e4] sm:$0xf]
  %v434 = vld [vmem:[%s1 + $0x5e8] sm:$0xf]
  %v435 = vld [vmem:[%s1 + $0x5ec] sm:$0xf]
  %v436 = vld [vmem:[%s1 + $0x5f0] sm:$0xf]
  %v437 = vld [vmem:[%s1 + $0x5f4] sm:$0xf]
  %v438 = vld [vmem:[%s1 + $0x5f8] sm:$0xf]
  %v439 = vld [vmem:[%s1 + $0x5fc] sm:$0xf]
  %v440 = vld [vmem:[%s1 + $0x600] sm:$0xf]
  %v441 = vld [vmem:[%s1 + $0x604] sm:$0xf]
  %v442 = vld [vmem:[%s1 + $0x608] sm:$0xf]
  %v443 = vld [vmem:[%s1 + $0x60c] sm:$0xf]
  %v444 = vld [vmem:[%s1 + $0x610] sm:$0xf]
  %v445 = vld [vmem:[%s1 + $0x614] sm:$0xf]
  %v446 = vld [vmem:[%s1 + $0x618] sm:$0xf]
  %v447 = vld [vmem:[%s1 + $0x61c] sm:$0xf]
  %v448 = vld [vmem:[%s1 + $0x620] sm:$0xf]
  %v449 = vld [vmem:[%s1 + $0x624] sm:$0xf]
  %v450 = vld [vmem:[%s1 + $0x628] sm:$0xf]
  %v451 = vld [vmem:[%s1 + $0x62c] sm:$0xf]
  %v452 = vld [vmem:[%s1 + $0x630] sm:$0xf]
  %v453 = vld [vmem:[%s1 + $0x634] sm:$0xf]
  %v454 = vld [vmem:[%s1 + $0x638] sm:$0xf]
  %v455 = vld [vmem:[%s1 + $0x63c] sm:$0xf]
  %v456 = vld [vmem:[%s1 + $0x640] sm:$0xf]
  %v457 = vld [vmem:[%s1 + $0x644] sm:$0xf]
  %v458 = vld [vmem:[%s1 + $0x648] sm:$0xf]
  %v459 = vld [vmem:[%s1 + $0x64c] sm:$0xf]
  %v460 = vld [vmem:[%s1 + $0x650] sm:$0xf]
  %v461 = vld [vmem:[%s1 + $0x654] sm:$0xf]
  %v462 = vld [vmem:[%s1 + $0x658] sm:$0xf]
  %v463 = vld [vmem:[%s1 + $0x65c] sm:$0xf]
  %v464 = vld [vmem:[%s1 + $0x660] sm:$0xf]
  %v465 = vld [vmem:[%s1 + $0x664] sm:$0xf]
  %v466 = vld [vmem:[%s1 + $0x668] sm:$0xf]
  %v467 = vld [vmem:[%s1 + $0x66c] sm:$0xf]
  %v468 = vld [vmem:[%s1 + $0x670] sm:$0xf]
  %v469 = vld [vmem:[%s1 + $0x674] sm:$0xf]
  %v470 = vld [vmem:[%s1 + $0x678] sm:$0xf]
  %v471 = vld [vmem:[%s1 + $0x67c] sm:$0xf]
  %v472 = vld [vmem:[%s1 + $0x680] sm:$0xf]
  %v473 = vld [vmem:[%s1 + $0x684] sm:$0xf]
  %v474 = vld [vmem:[%s1 + $0x688] sm:$0xf]
  %v475 = vld [vmem:[%s1 + $0x68c] sm:$0xf]
  %v476 = vld [vmem:[%s1 + $0x690] sm:$0xf]
  %v477 = vld [vmem:[%s1 + $0x694] sm:$0xf]
  %v478 = vld [vmem:[%s1 + $0x698] sm:$0xf]
  %v479 = vld [vmem:[%s1 + $0x69c] sm:$0xf]
  %v480 = vld [vmem:[%s1 + $0x6a0] sm:$0xf]
  %v481 = vld [vmem:[%s1 + $0x6a4] sm:$0xf]
  %v482 = vld [vmem:[%s1 + $0x6a8] sm:$0xf]
  %v483 = vld [vmem:[%s1 + $0x6ac] sm:$0xf]
  %v484 = vld [vmem:[%s1 + $0x6b0] sm:$0xf]
  %v485 = vld [vmem:[%s1 + $0x6b4] sm:$0xf]
  %v486 = vld [vmem:[%s1 + $0x6b8] sm:$0xf]
  %v487 = vld [vmem:[%s1 + $0x6bc] sm:$0xf]
  %v488 = vld [vmem:[%s1 + $0x6c0] sm:$0xf]
  %v489 = vld [vmem:[%s1 + $0x6c4] sm:$0xf]
  %v490 = vld [vmem:[%s1 + $0x6c8] sm:$0xf]
  %v491 = vld [vmem:[%s1 + $0x6cc] sm:$0xf]
  %v492 = vld [vmem:[%s1 + $0x6d0] sm:$0xf]
  %v493 = vld [vmem:[%s1 + $0x6d4] sm:$0xf]
  %v494 = vld [vmem:[%s1 + $0x6d8] sm:$0xf]
  %v495 = vld [vmem:[%s1 + $0x6dc] sm:$0xf]
  %v496 = vld [vmem:[%s1 + $0x6e0] sm:$0xf]
  %v497 = vld [vmem:[%s1 + $0x6e4] sm:$0xf]
  %v498 = vld [vmem:[%s1 + $0x6e8] sm:$0xf]
  %v499 = vld [vmem:[%s1 + $0x6ec] sm:$0xf]
  %v500 = vld [vmem:[%s1 + $0x6f0] sm:$0xf]
  %v501 = vld [vmem:[%s1 + $0x6f4] sm:$0xf]
  %v502 = vld [vmem:[%s1 + $0x6f8] sm:$0xf]
  %v503 = vld [vmem:[%s1 + $0x6fc] sm:$0xf]
  %v504 = vld [vmem:[%s1 + $0x700] sm:$0xf]
  %v505 = vld [vmem:[%s1 + $0x704] sm:$0xf]
  %v506 = vld [vmem:[%s1 + $0x708] sm:$0xf]
  %v507 = vld [vmem:[%s1 + $0x70c] sm:$0xf]
  %v508 = vld [vmem:[%s1 + $0x710] sm:$0xf]
  %v509 = vld [vmem:[%s1 + $0x714] sm:$0xf]
  %v510 = vld [vmem:[%s1 + $0x718] sm:$0xf]
  %v511 = vld [vmem:[%s1 + $0x71c] sm:$0xf]
  %v512 = vld [vmem:[%s1 + $0x720] sm:$0xf]
  %v513 = vld [vmem:[%s1 + $0x724] sm:$0xf]
  %v514 = vld [vmem:[%s1 + $0x728] sm:$0xf]
  %v515 = vld [vmem:[%s1 + $0x72c] sm:$0xf]
  %v516 = vld [vmem:[%s1 + $0x730] sm:$0xf]
  %v517 = vld [vmem:[%s1 + $0x734] sm:$0xf]
  %v518 = vld [vmem:[%s1 + $0x738] sm:$0xf]
  %v519 = vld [vmem:[%s1 + $0x73c] sm:$0xf]
  %v520 = vld [vmem:[%s1 + $0x740] sm:$0xf]
  %v521 = vld [vmem:[%s1 + $0x744] sm:$0xf]
  %v522 = vld [vmem:[%s1 + $0x748] sm:$0xf]
  %v523 = vld [vmem:[%s1 + $0x74c] sm:$0xf]
  %v524 = vld [vmem:[%s1 + $0x750] sm:$0xf]
  %v525 = vld [vmem:[%s1 + $0x754] sm:$0xf]
  %v526 = vld [vmem:[%s1 + $0x758] sm:$0xf]
  %v527 = vld [vmem:[%s1 + $0x75c] sm:$0xf]
  %v528 = vld [vmem:[%s1 + $0x760] sm:$0xf]
  %v529 = vld [vmem:[%s1 + $0x764] sm:$0xf]
  %v530 = vld [vmem:[%s1 + $0x768] sm:$0xf]
  %v531 = vld [vmem:[%s1 + $0x76c] sm:$0xf]
  %v532 = vld [vmem:[%s1 + $0x770] sm:$0xf]
  %v533 = vld [vmem:[%s1 + $0x774] sm:$0xf]
  %v534 = vld [vmem:[%s1 + $0x778] sm:$0xf]
  %v535 = vld [vmem:[%s1 + $0x77c] sm:$0xf]
  %v536 = vld [vmem:[%s1 + $0x780] sm:$0xf]
  %v537 = vld [vmem:[%s1 + $0x784] sm:$0xf]
  %v538 = vld [vmem:[%s1 + $0x788] sm:$0xf]
  %v539 = vld [vmem:[%s1 + $0x78c] sm:$0xf]
  %v540 = vld [vmem:[%s1 + $0x790] sm:$0xf]
  %v541 = vld [vmem:[%s1 + $0x794] sm:$0xf]
  %v542 = vld [vmem:[%s1 + $0x798] sm:$0xf]
  %v543 = vld [vmem:[%s1 + $0x79c] sm:$0xf]
  %v544 = vld [vmem:[%s1 + $0x7a0] sm:$0xf]
  %v545 = vld [vmem:[%s1 + $0x7a4] sm:$0xf]
  %v546 = vld [vmem:[%s1 + $0x7a8] sm:$0xf]
  %v547 = vld [vmem:[%s1 + $0x7ac] sm:$0xf]
  %v548 = vld [vmem:[%s1 + $0x7b0] sm:$0xf]
  %v549 = vld [vmem:[%s1 + $0x7b4] sm:$0xf]
  %v550 = vld [vmem:[%s1 + $0x7b8] sm:$0xf]
  %v551 = vld [vmem:[%s1 + $0x7bc] sm:$0xf]
  %v552 = vld [vmem:[%s1 + $0x7c0] sm:$0xf]
  %v553 = vld [vmem:[%s1 + $0x7c4] sm:$0xf]
  %v554 = vld [vmem:[%s1 + $0x7c8] sm:$0xf]
  %v555 = vld [vmem:[%s1 + $0x7cc] sm:$0xf]
  %v556 = vld [vmem:[%s1 + $0x7d0] sm:$0xf]
  %v557 = vld [vmem:[%s1 + $0x7d4] sm:$0xf]
  %v558 = vld [vmem:[%s1 + $0x7d8] sm:$0xf]
  %v559 = vld [vmem:[%s1 + $0x7dc] sm:$0xf]
  %v560 = vld [vmem:[%s1 + $0x7e0] sm:$0xf]
  %v561 = vld [vmem:[%s1 + $0x7e4] sm:$0xf]
  %v562 = vld [vmem:[%s1 + $0x7e8] sm:$0xf]
  %v563 = vld [vmem:[%s1 + $0x7ec] sm:$0xf]
  %v564 = vld [vmem:[%s1 + $0x7f0] sm:$0xf]
  %v565 = vld [vmem:[%s1 + $0x7f4] sm:$0xf]
  %v566 = vld [vmem:[%s1 + $0x7f8] sm:$0xf]
  %v567 = vld [vmem:[%s1 + $0x7fc] sm:$0xf]
  %v568 = vld [vmem:[%s1 + $0x800] sm:$0xf]
  %v569 = vld [vmem:[%s1 + $0x804] sm:$0xf]
  %v570 = vld [vmem:[%s1 + $0x808] sm:$0xf]
  %v571 = vld [vmem:[%s1 + $0x80c] sm:$0xf]
  %v572 = vld [vmem:[%s1 + $0x810] sm:$0xf]
  %v573 = vld [vmem:[%s1 + $0x814] sm:$0xf]
  %v574 = vld [vmem:[%s1 + $0x818] sm:$0xf]
  %v575 = vld [vmem:[%s1 + $0x81c] sm:$0xf]
  %v576 = vld [vmem:[%s1 + $0x820] sm:$0xf]
  %v577 = vld [vmem:[%s1 + $0x824] sm:$0xf]
  %v578 = vld [vmem:[%s1 + $0x828] sm:$0xf]
  %v579 = vld [vmem:[%s1 + $0x82c] sm:$0xf]
  %v580 = vld [vmem:[%s1 + $0x830] sm:$0xf]
  %v581 = vld [vmem:[%s1 + $0x834] sm:$0xf]
  %v582 = vld [vmem:[%s1 + $0x838] sm:$0xf]
  %v583 = vld [vmem:[%s1 + $0x83c] sm:$0xf]
  %v584 = vld [vmem:[%s1 + $0x840] sm:$0xf]
  %v585 = vld [vmem:[%s1 + $0x844] sm:$0xf]
  %v586 = vld [vmem:[%s1 + $0x848] sm:$0xf]
  %v587 = vld [vmem:[%s1 + $0x84c] sm:$0xf]
  %v588 = vld [vmem:[%s1 + $0x850] sm:$0xf]
  %v589 = vld [vmem:[%s1 + $0x854] sm:$0xf]
  %v590 = vld [vmem:[%s1 + $0x858] sm:$0xf]
  %v591 = vld [vmem:[%s1 + $0x85c] sm:$0xf]
  %v592 = vld [vmem:[%s1 + $0x860] sm:$0xf]
  %v593 = vld [vmem:[%s1 + $0x864] sm:$0xf]
  %v594 = vld [vmem:[%s1 + $0x868] sm:$0xf]
  %v595 = vld [vmem:[%s1 + $0x86c] sm:$0xf]
  %v596 = vld [vmem:[%s1 + $0x870] sm:$0xf]
  %v597 = vld [vmem:[%s1 + $0x874] sm:$0xf]
  %v598 = vld [vmem:[%s1 + $0x878] sm:$0xf]
  %v599 = vld [vmem:[%s1 + $0x87c] sm:$0xf]
  %v600 = vld [vmem:[%s1 + $0x880] sm:$0xf]
  %v601 = vld [vmem:[%s1 + $0x884] sm:$0xf]
  %v602 = vld [vmem:[%s1 + $0x888] sm:$0xf]
  %v603 = vld [vmem:[%s1 + $0x88c] sm:$0xf]
  %v604 = vld [vmem:[%s1 + $0x890] sm:$0xf]
  %v605 = vld [vmem:[%s1 + $0x894] sm:$0xf]
  %v606 = vld [vmem:[%s1 + $0x898] sm:$0xf]
  %v607 = vld [vmem:[%s1 + $0x89c] sm:$0xf]
  %v608 = vld [vmem:[%s1 + $0x8a0] sm:$0xf]
  %v609 = vld [vmem:[%s1 + $0x8a4] sm:$0xf]
  %v610 = vld [vmem:[%s1 + $0x8a8] sm:$0xf]
  %v611 = vld [vmem:[%s1 + $0x8ac] sm:$0xf]
  %v612 = vld [vmem:[%s1 + $0x8b0] sm:$0xf]
  %v613 = vld [vmem:[%s1 + $0x8b4] sm:$0xf]
  %v614 = vld [vmem:[%s1 + $0x8b8] sm:$0xf]
  %v615 = vld [vmem:[%s1 + $0x8bc] sm:$0xf]
  %v616 = vld [vmem:[%s1 + $0x8c0] sm:$0xf]
  %v617 = vld [vmem:[%s1 + $0x8c4] sm:$0xf]
  %v618 = vld [vmem:[%s1 + $0x8c8] sm:$0xf]
  %v619 = vld [vmem:[%s1 + $0x8cc] sm:$0xf]
  %v620 = vld [vmem:[%s1 + $0x8d0] sm:$0xf]
  %v621 = vld [vmem:[%s1 + $0x8d4] sm:$0xf]
  %v622 = vld [vmem:[%s1 + $0x8d8] sm:$0xf]
  %v623 = vld [vmem:[%s1 + $0x8dc] sm:$0xf]
  %v624 = vld [vmem:[%s1 + $0x8e0] sm:$0xf]
  %v625 = vld [vmem:[%s1 + $0x8e4] sm:$0xf]
  %v626 = vld [vmem:[%s1 + $0x8e8] sm:$0xf]
  %v627 = vld [vmem:[%s1 + $0x8ec] sm:$0xf]
  %v628 = vld [vmem:[%s1 + $0x8f0] sm:$0xf]
  %v629 = vld [vmem:[%s1 + $0x8f4] sm:$0xf]
  %v630 = vld [vmem:[%s1 + $0x8f8] sm:$0xf]
  %v631 = vld [vmem:[%s1 + $0x8fc] sm:$0xf]
  %v632 = vld [vmem:[%s1 + $0x900] sm:$0xf]
  %v633 = vld [vmem:[%s1 + $0x904] sm:$0xf]
  %v634 = vld [vmem:[%s1 + $0x908] sm:$0xf]
  %v635 = vld [vmem:[%s1 + $0x90c] sm:$0xf]
  %v636 = vld [vmem:[%s1 + $0x910] sm:$0xf]
  %v637 = vld [vmem:[%s1 + $0x914] sm:$0xf]
  %v638 = vld [vmem:[%s1 + $0x918] sm:$0xf]
  %v639 = vld [vmem:[%s1 + $0x91c] sm:$0xf]
  %v640 = vld [vmem:[%s1 + $0x920] sm:$0xf]
  %v641 = vld [vmem:[%s1 + $0x924] sm:$0xf]
  %v642 = vld [vmem:[%s1 + $0x928] sm:$0xf]
  %v643 = vld [vmem:[%s1 + $0x92c] sm:$0xf]
  %v644 = vld [vmem:[%s1 + $0x930] sm:$0xf]
  %v645 = vld [vmem:[%s1 + $0x934] sm:$0xf]
  %v646 = vld [vmem:[%s1 + $0x938] sm:$0xf]
  %v647 = vld [vmem:[%s1 + $0x93c] sm:$0xf]
  %v648 = vld [vmem:[%s1 + $0x940] sm:$0xf]
  %v649 = vld [vmem:[%s1 + $0x944] sm:$0xf]
  %v650 = vld [vmem:[%s1 + $0x948] sm:$0xf]
  %v651 = vld [vmem:[%s1 + $0x94c] sm:$0xf]
  %v652 = vld [vmem:[%s1 + $0x950] sm:$0xf]
  %v653 = vld [vmem:[%s1 + $0x954] sm:$0xf]
  %v654 = vld [vmem:[%s1 + $0x958] sm:$0xf]
  %v655 = vld [vmem:[%s1 + $0x95c] sm:$0xf]
  %v656 = vld [vmem:[%s1 + $0x960] sm:$0xf]
  %v657 = vld [vmem:[%s1 + $0x964] sm:$0xf]
  %v658 = vld [vmem:[%s1 + $0x968] sm:$0xf]
  %v659 = vld [vmem:[%s1 + $0x96c] sm:$0xf]
  %v660 = vld [vmem:[%s1 + $0x970] sm:$0xf]
  %v661 = vld [vmem:[%s1 + $0x974] sm:$0xf]
  %v662 = vld [vmem:[%s1 + $0x978] sm:$0xf]
  %v663 = vld [vmem:[%s1 + $0x97c] sm:$0xf]
  %v664 = vld [vmem:[%s1 + $0x980] sm:$0xf]
  %v665 = vld [vmem:[%s1 + $0x984] sm:$0xf]
  %v666 = vld [vmem:[%s1 + $0x988] sm:$0xf]
  %v667 = vld [vmem:[%s1 + $0x98c] sm:$0xf]
  %v668 = vld [vmem:[%s1 + $0x990] sm:$0xf]
  %v669 = vld [vmem:[%s1 + $0x994] sm:$0xf]
  %v670 = vld [vmem:[%s1 + $0x998] sm:$0xf]
  %v671 = vld [vmem:[%s1 + $0x99c] sm:$0xf]
  %v672 = vld [vmem:[%s1 + $0x9a0] sm:$0xf]
  %v673 = vld [vmem:[%s1 + $0x9a4] sm:$0xf]
  %v674 = vld [vmem:[%s1 + $0x9a8] sm:$0xf]
  %v675 = vld [vmem:[%s1 + $0x9ac] sm:$0xf]
  %v676 = vld [vmem:[%s1 + $0x9b0] sm:$0xf]
  %v677 = vld [vmem:[%s1 + $0x9b4] sm:$0xf]
  %v678 = vld [vmem:[%s1 + $0x9b8] sm:$0xf]
  %v679 = vld [vmem:[%s1 + $0x9bc] sm:$0xf]
  %v680 = vld [vmem:[%s1 + $0x9c0] sm:$0xf]
  %v681 = vld [vmem:[%s1 + $0x9c4] sm:$0xf]
  %v682 = vld [vmem:[%s1 + $0x9c8] sm:$0xf]
  %v683 = vld [vmem:[%s1 + $0x9cc] sm:$0xf]
  %v684 = vld [vmem:[%s1 + $0x9d0] sm:$0xf]
  %v685 = vld [vmem:[%s1 + $0x9d4] sm:$0xf]
  %v686 = vld [vmem:[%s1 + $0x9d8] sm:$0xf]
  %v687 = vld [vmem:[%s1 + $0x9dc] sm:$0xf]
  %v688 = vld [vmem:[%s1 + $0x9e0] sm:$0xf]
  %v689 = vld [vmem:[%s1 + $0x9e4] sm:$0xf]
  %v690 = vld [vmem:[%s1 + $0x9e8] sm:$0xf]
  %v691 = vld [vmem:[%s1 + $0x9ec] sm:$0xf]
  %v692 = vld [vmem:[%s1 + $0x9f0] sm:$0xf]
  %v693 = vld [vmem:[%s1 + $0x9f4] sm:$0xf]
  %v694 = vld [vmem:[%s1 + $0x9f8] sm:$0xf]
  %v695 = vld [vmem:[%s1 + $0x9fc] sm:$0xf]
  %v696 = vld [vmem:[%s1 + $0xa00] sm:$0xf]
  %v697 = vld [vmem:[%s1 + $0xa04] sm:$0xf]
  %v698 = vld [vmem:[%s1 + $0xa08] sm:$0xf]
  %v699 = vld [vmem:[%s1 + $0xa0c] sm:$0xf]
  %v700 = vld [vmem:[%s1 + $0xa10] sm:$0xf]
  %v701 = vld [vmem:[%s1 + $0xa14] sm:$0xf]
  %v702 = vld [vmem:[%s1 + $0xa18] sm:$0xf]
  %v703 = vld [vmem:[%s1 + $0xa1c] sm:$0xf]
  %v704 = vld [vmem:[%s1 + $0xa20] sm:$0xf]
  %v705 = vld [vmem:[%s1 + $0xa24] sm:$0xf]
  %v706 = vld [vmem:[%s1 + $0xa28] sm:$0xf]
  %v707 = vld [vmem:[%s1 + $0xa2c] sm:$0xf]
  %v708 = vld [vmem:[%s1 + $0xa30] sm:$0xf]
  %v709 = vld [vmem:[%s1 + $0xa34] sm:$0xf]
  %v710 = vld [vmem:[%s1 + $0xa38] sm:$0xf]
  %v711 = vld [vmem:[%s1 + $0xa3c] sm:$0xf]
  %v712 = vld [vmem:[%s1 + $0xa40] sm:$0xf]
  %v713 = vld [vmem:[%s1 + $0xa44] sm:$0xf]
  %v714 = vld [vmem:[%s1 + $0xa48] sm:$0xf]
  %v715 = vld [vmem:[%s1 + $0xa4c] sm:$0xf]
  %v716 = vld [vmem:[%s1 + $0xa50] sm:$0xf]
  %v717 = vld [vmem:[%s1 + $0xa54] sm:$0xf]
  %v718 = vld [vmem:[%s1 + $0xa58] sm:$0xf]
  %v719 = vld [vmem:[%s1 + $0xa5c] sm:$0xf]
  %v720 = vld [vmem:[%s1 + $0xa60] sm:$0xf]
  %v721 = vld [vmem:[%s1 + $0xa64] sm:$0xf]
  %v722 = vld [vmem:[%s1 + $0xa68] sm:$0xf]
  %v723 = vld [vmem:[%s1 + $0xa6c] sm:$0xf]
  %v724 = vld [vmem:[%s1 + $0xa70] sm:$0xf]
  %v725 = vld [vmem:[%s1 + $0xa74] sm:$0xf]
  %v726 = vld [vmem:[%s1 + $0xa78] sm:$0xf]
  %v727 = vld [vmem:[%s1 + $0xa7c] sm:$0xf]
  %v728 = vld [vmem:[%s1 + $0xa80] sm:$0xf]
  %v729 = vld [vmem:[%s1 + $0xa84] sm:$0xf]
  %v730 = vld [vmem:[%s1 + $0xa88] sm:$0xf]
  %v731 = vld [vmem:[%s1 + $0xa8c] sm:$0xf]
  %v732 = vld [vmem:[%s1 + $0xa90] sm:$0xf]
  %v733 = vld [vmem:[%s1 + $0xa94] sm:$0xf]
  %v734 = vld [vmem:[%s1 + $0xa98] sm:$0xf]
  %v735 = vld [vmem:[%s1 + $0xa9c] sm:$0xf]
  %v736 = vld [vmem:[%s1 + $0xaa0] sm:$0xf]
  %v737 = vld [vmem:[%s1 + $0xaa4] sm:$0xf]
  %v738 = vld [vmem:[%s1 + $0xaa8] sm:$0xf]
  %v739 = vld [vmem:[%s1 + $0xaac] sm:$0xf]
  %v740 = vld [vmem:[%s1 + $0xab0] sm:$0xf]
  %v741 = vld [vmem:[%s1 + $0xab4] sm:$0xf]
  %v742 = vld [vmem:[%s1 + $0xab8] sm:$0xf]
  %v743 = vld [vmem:[%s1 + $0xabc] sm:$0xf]
  %v744 = vld [vmem:[%s1 + $0xac0] sm:$0xf]
  %v745 = vld [vmem:[%s1 + $0xac4] sm:$0xf]
  %v746 = vld [vmem:[%s1 + $0xac8] sm:$0xf]
  %v747 = vld [vmem:[%s1 + $0xacc] sm:$0xf]
  %v748 = vld [vmem:[%s1 + $0xad0] sm:$0xf]
  %v749 = vld [vmem:[%s1 + $0xad4] sm:$0xf]
  %v750 = vld [vmem:[%s1 + $0xad8] sm:$0xf]
  %v751 = vld [vmem:[%s1 + $0xadc] sm:$0xf]
  %v752 = vld [vmem:[%s1 + $0xae0] sm:$0xf]
  %v753 = vld [vmem:[%s1 + $0xae4] sm:$0xf]
  %v754 = vld [vmem:[%s1 + $0xae8] sm:$0xf]
  %v755 = vld [vmem:[%s1 + $0xaec] sm:$0xf]
  %v756 = vld [vmem:[%s1 + $0xaf0] sm:$0xf]
  %v757 = vld [vmem:[%s1 + $0xaf4] sm:$0xf]
  %v758 = vld [vmem:[%s1 + $0xaf8] sm:$0xf]
  %v759 = vld [vmem:[%s1 + $0xafc] sm:$0xf]
  %v760 = vld [vmem:[%s1 + $0xb00] sm:$0xf]
  %v761 = vld [vmem:[%s1 + $0xb04] sm:$0xf]
  %v762 = vld [vmem:[%s1 + $0xb08] sm:$0xf]
  %v763 = vld [vmem:[%s1 + $0xb0c] sm:$0xf]
  %v764 = vld [vmem:[%s1 + $0xb10] sm:$0xf]
  %v765 = vld [vmem:[%s1 + $0xb14] sm:$0xf]
  %v766 = vld [vmem:[%s1 + $0xb18] sm:$0xf]
  %v767 = vld [vmem:[%s1 + $0xb1c] sm:$0xf]
  %v768 = vld [vmem:[%s1 + $0xb20] sm:$0xf]
  %v769 = vld [vmem:[%s1 + $0xb24] sm:$0xf]
  %v770 = vld [vmem:[%s1 + $0xb28] sm:$0xf]
  %v771 = vld [vmem:[%s1 + $0xb2c] sm:$0xf]
  %v772 = vld [vmem:[%s1 + $0xb30] sm:$0xf]
  %v773 = vld [vmem:[%s1 + $0xb34] sm:$0xf]
  %v774 = vld [vmem:[%s1 + $0xb38] sm:$0xf]
  %v775 = vld [vmem:[%s1 + $0xb3c] sm:$0xf]
  %v776 = vld [vmem:[%s1 + $0xb40] sm:$0xf]
  %v777 = vld [vmem:[%s1 + $0xb44] sm:$0xf]
  %v778 = vld [vmem:[%s1 + $0xb48] sm:$0xf]
  %v779 = vld [vmem:[%s1 + $0xb4c] sm:$0xf]
  %v780 = vld [vmem:[%s1 + $0xb50] sm:$0xf]
  %v781 = vld [vmem:[%s1 + $0xb54] sm:$0xf]
  %v782 = vld [vmem:[%s1 + $0xb58] sm:$0xf]
  %v783 = vld [vmem:[%s1 + $0xb5c] sm:$0xf]
  %v784 = vld [vmem:[%s1 + $0xb60] sm:$0xf]
  %v785 = vld [vmem:[%s1 + $0xb64] sm:$0xf]
  %v786 = vld [vmem:[%s1 + $0xb68] sm:$0xf]
  %v787 = vld [vmem:[%s1 + $0xb6c] sm:$0xf]
  %v788 = vld [vmem:[%s1 + $0xb70] sm:$0xf]
  %v789 = vld [vmem:[%s1 + $0xb74] sm:$0xf]
  %v790 = vld [vmem:[%s1 + $0xb78] sm:$0xf]
  %v791 = vld [vmem:[%s1 + $0xb7c] sm:$0xf]
  %v792 = vld [vmem:[%s1 + $0xb80] sm:$0xf]
  %v793 = vld [vmem:[%s1 + $0xb84] sm:$0xf]
  %v794 = vld [vmem:[%s1 + $0xb88] sm:$0xf]
  %v795 = vld [vmem:[%s1 + $0xb8c] sm:$0xf]
  %v796 = vld [vmem:[%s1 + $0xb90] sm:$0xf]
  %v797 = vld [vmem:[%s1 + $0xb94] sm:$0xf]
  %v798 = vld [vmem:[%s1 + $0xb98] sm:$0xf]
  %v799 = vld [vmem:[%s1 + $0xb9c] sm:$0xf]
  %v800 = vld [vmem:[%s1 + $0xba0] sm:$0xf]
  %v801 = vld [vmem:[%s1 + $0xba4] sm:$0xf]
  %v802 = vld [vmem:[%s1 + $0xba8] sm:$0xf]
  %v803 = vld [vmem:[%s1 + $0xbac] sm:$0xf]
  %v804 = vld [vmem:[%s1 + $0xbb0] sm:$0xf]
  %v805 = vld [vmem:[%s1 + $0xbb4] sm:$0xf]
  %v806 = vld [vmem:[%s1 + $0xbb8] sm:$0xf]
  %v807 = vld [vmem:[%s1 + $0xbbc] sm:$0xf]
  %v808 = vld [vmem:[%s1 + $0xbc0] sm:$0xf]
  %v809 = vld [vmem:[%s1 + $0xbc4] sm:$0xf]
  %v810 = vld [vmem:[%s1 + $0xbc8] sm:$0xf]
  %v811 = vld [vmem:[%s1 + $0xbcc] sm:$0xf]
  %v812 = vld [vmem:[%s1 + $0xbd0] sm:$0xf]
  %v813 = vld [vmem:[%s1 + $0xbd4] sm:$0xf]
  %v814 = vld [vmem:[%s1 + $0xbd8] sm:$0xf]
  %v815 = vld [vmem:[%s1 + $0xbdc] sm:$0xf]
  %v816 = vld [vmem:[%s1 + $0xbe0] sm:$0xf]
  %v817 = vld [vmem:[%s1 + $0xbe4] sm:$0xf]
  %v818 = vld [vmem:[%s1 + $0xbe8] sm:$0xf]
  %v819 = vld [vmem:[%s1 + $0xbec] sm:$0xf]
  %v820 = vld [vmem:[%s1 + $0xbf0] sm:$0xf]
  %v821 = vld [vmem:[%s1 + $0xbf4] sm:$0xf]
  %v822 = vld [vmem:[%s1 + $0xbf8] sm:$0xf]
  %v823 = vld [vmem:[%s1 + $0xbfc] sm:$0xf]
  %v824 = vld [vmem:[%s1 + $0xc00] sm:$0xf]
  %v825 = vld [vmem:[%s1 + $0xc04] sm:$0xf]
  %v826 = vld [vmem:[%s1 + $0xc08] sm:$0xf]
  %v827 = vld [vmem:[%s1 + $0xc0c] sm:$0xf]
  %v828 = vld [vmem:[%s1 + $0xc10] sm:$0xf]
  %v829 = vld [vmem:[%s1 + $0xc14] sm:$0xf]
  %v830 = vld [vmem:[%s1 + $0xc18] sm:$0xf]
  %v831 = vld [vmem:[%s1 + $0xc1c] sm:$0xf]
  %v832 = vld [vmem:[%s1 + $0xc20] sm:$0xf]
  %v833 = vld [vmem:[%s1 + $0xc24] sm:$0xf]
  %v834 = vld [vmem:[%s1 + $0xc28] sm:$0xf]
  %v835 = vld [vmem:[%s1 + $0xc2c] sm:$0xf]
  %v836 = vld [vmem:[%s1 + $0xc30] sm:$0xf]
  %v837 = vld [vmem:[%s1 + $0xc34] sm:$0xf]
  %v838 = vld [vmem:[%s1 + $0xc38] sm:$0xf]
  %v839 = vld [vmem:[%s1 + $0xc3c] sm:$0xf]
  %v840 = vld [vmem:[%s1 + $0xc40] sm:$0xf]
  %v841 = vld [vmem:[%s1 + $0xc44] sm:$0xf]
  %v842 = vld [vmem:[%s1 + $0xc48] sm:$0xf]
  %v843 = vld [vmem:[%s1 + $0xc4c] sm:$0xf]
  %v844 = vld [vmem:[%s1 + $0xc50] sm:$0xf]
  %v845 = vld [vmem:[%s1 + $0xc54] sm:$0xf]
  %v846 = vld [vmem:[%s1 + $0xc58] sm:$0xf]
  %v847 = vld [vmem:[%s1 + $0xc5c] sm:$0xf]
  %v848 = vld [vmem:[%s1 + $0xc60] sm:$0xf]
  %v849 = vld [vmem:[%s1 + $0xc64] sm:$0xf]
  %v850 = vld [vmem:[%s1 + $0xc68] sm:$0xf]
  %v851 = vld [vmem:[%s1 + $0xc6c] sm:$0xf]
  %v852 = vld [vmem:[%s1 + $0xc70] sm:$0xf]
  %v853 = vld [vmem:[%s1 + $0xc74] sm:$0xf]
  %v854 = vld [vmem:[%s1 + $0xc78] sm:$0xf]
  %v855 = vld [vmem:[%s1 + $0xc7c] sm:$0xf]
  %v856 = vld [vmem:[%s1 + $0xc80] sm:$0xf]
  %v857 = vld [vmem:[%s1 + $0xc84] sm:$0xf]
  %v858 = vld [vmem:[%s1 + $0xc88] sm:$0xf]
  %v859 = vld [vmem:[%s1 + $0xc8c] sm:$0xf]
  %v860 = vld [vmem:[%s1 + $0xc90] sm:$0xf]
  %v861 = vld [vmem:[%s1 + $0xc94] sm:$0xf]
  %v862 = vld [vmem:[%s1 + $0xc98] sm:$0xf]
  %v863 = vld [vmem:[%s1 + $0xc9c] sm:$0xf]
  %v864 = vld [vmem:[%s1 + $0xca0] sm:$0xf]
  %v865 = vld [vmem:[%s1 + $0xca4] sm:$0xf]
  %v866 = vld [vmem:[%s1 + $0xca8] sm:$0xf]
  %v867 = vld [vmem:[%s1 + $0xcac] sm:$0xf]
  %v868 = vld [vmem:[%s1 + $0xcb0] sm:$0xf]
  %v869 = vld [vmem:[%s1 + $0xcb4] sm:$0xf]
  %v870 = vld [vmem:[%s1 + $0xcb8] sm:$0xf]
  %v871 = vld [vmem:[%s1 + $0xcbc] sm:$0xf]
  %v872 = vld [vmem:[%s1 + $0xcc0] sm:$0xf]
  %v873 = vld [vmem:[%s1 + $0xcc4] sm:$0xf]
  %v874 = vld [vmem:[%s1 + $0xcc8] sm:$0xf]
  %v875 = vld [vmem:[%s1 + $0xccc] sm:$0xf]
  %v876 = vld [vmem:[%s1 + $0xcd0] sm:$0xf]
  %v877 = vld [vmem:[%s1 + $0xcd4] sm:$0xf]
  %v878 = vld [vmem:[%s1 + $0xcd8] sm:$0xf]
  %v879 = vld [vmem:[%s1 + $0xcdc] sm:$0xf]
  %v880 = vld [vmem:[%s1 + $0xce0] sm:$0xf]
  %v881 = vld [vmem:[%s1 + $0xce4] sm:$0xf]
  %v882 = vld [vmem:[%s1 + $0xce8] sm:$0xf]
  %v883 = vld [vmem:[%s1 + $0xcec] sm:$0xf]
  %v884 = vld [vmem:[%s1 + $0xcf0] sm:$0xf]
  %v885 = vld [vmem:[%s1 + $0xcf4] sm:$0xf]
  %v886 = vld [vmem:[%s1 + $0xcf8] sm:$0xf]
  %v887 = vld [vmem:[%s1 + $0xcfc] sm:$0xf]
  %v888 = vld [vmem:[%s1 + $0xd00] sm:$0xf]
  %v889 = vld [vmem:[%s1 + $0xd04] sm:$0xf]
  %v890 = vld [vmem:[%s1 + $0xd08] sm:$0xf]
  %v891 = vld [vmem:[%s1 + $0xd0c] sm:$0xf]
  %v892 = vld [vmem:[%s1 + $0xd10] sm:$0xf]
  %v893 = vld [vmem:[%s1 + $0xd14] sm:$0xf]
  %v894 = vld [vmem:[%s1 + $0xd18] sm:$0xf]
  %v895 = vld [vmem:[%s1 + $0xd1c] sm:$0xf]
  %v896 = vld [vmem:[%s1 + $0xd20] sm:$0xf]
  %v897 = vld [vmem:[%s1 + $0xd24] sm:$0xf]
  %v898 = vld [vmem:[%s1 + $0xd28] sm:$0xf]
  %v899 = vld [vmem:[%s1 + $0xd2c] sm:$0xf]
  %v900 = vld [vmem:[%s1 + $0xd30] sm:$0xf]
  %v901 = vld [vmem:[%s1 + $0xd34] sm:$0xf]
  %v902 = vld [vmem:[%s1 + $0xd38] sm:$0xf]
  %v903 = vld [vmem:[%s1 + $0xd3c] sm:$0xf]
  %v904 = vld [vmem:[%s1 + $0xd40] sm:$0xf]
  %v905 = vld [vmem:[%s1 + $0xd44] sm:$0xf]
  %v906 = vld [vmem:[%s1 + $0xd48] sm:$0xf]
  %v907 = vld [vmem:[%s1 + $0xd4c] sm:$0xf]
  %v908 = vld [vmem:[%s1 + $0xd50] sm:$0xf]
  %v909 = vld [vmem:[%s1 + $0xd54] sm:$0xf]
  %v910 = vld [vmem:[%s1 + $0xd58] sm:$0xf]
  %v911 = vld [vmem:[%s1 + $0xd5c] sm:$0xf]
  %v912 = vld [vmem:[%s1 + $0xd60] sm:$0xf]
  %v913 = vld [vmem:[%s1 + $0xd64] sm:$0xf]
  %v914 = vld [vmem:[%s1 + $0xd68] sm:$0xf]
  %v915 = vld [vmem:[%s1 + $0xd6c] sm:$0xf]
  %v916 = vld [vmem:[%s1 + $0xd70] sm:$0xf]
  %v917 = vld [vmem:[%s1 + $0xd74] sm:$0xf]
  %v918 = vld [vmem:[%s1 + $0xd78] sm:$0xf]
  %v919 = vld [vmem:[%s1 + $0xd7c] sm:$0xf]
  %v920 = vld [vmem:[%s1 + $0xd80] sm:$0xf]
  %v921 = vld [vmem:[%s1 + $0xd84] sm:$0xf]
  %v922 = vld [vmem:[%s1 + $0xd88] sm:$0xf]
  %v923 = vld [vmem:[%s1 + $0xd8c] sm:$0xf]
  %v924 = vld [vmem:[%s1 + $0xd90] sm:$0xf]
  %v925 = vld [vmem:[%s1 + $0xd94] sm:$0xf]
  %v926 = vld [vmem:[%s1 + $0xd98] sm:$0xf]
  %v927 = vld [vmem:[%s1 + $0xd9c] sm:$0xf]
  %v928 = vld [vmem:[%s1 + $0xda0] sm:$0xf]
  %v929 = vld [vmem:[%s1 + $0xda4] sm:$0xf]
  %v930 = vld [vmem:[%s1 + $0xda8] sm:$0xf]
  %v931 = vld [vmem:[%s1 + $0xdac] sm:$0xf]
  %v932 = vld [vmem:[%s1 + $0xdb0] sm:$0xf]
  %v933 = vld [vmem:[%s1 + $0xdb4] sm:$0xf]
  %v934 = vld [vmem:[%s1 + $0xdb8] sm:$0xf]
  %v935 = vld [vmem:[%s1 + $0xdbc] sm:$0xf]
  %v936 = vld [vmem:[%s1 + $0xdc0] sm:$0xf]
  %v937 = vld [vmem:[%s1 + $0xdc4] sm:$0xf]
  %v938 = vld [vmem:[%s1 + $0xdc8] sm:$0xf]
  %v939 = vld [vmem:[%s1 + $0xdcc] sm:$0xf]
  %v940 = vld [vmem:[%s1 + $0xdd0] sm:$0xf]
  %v941 = vld [vmem:[%s1 + $0xdd4] sm:$0xf]
  %v942 = vld [vmem:[%s1 + $0xdd8] sm:$0xf]
  %v943 = vld [vmem:[%s1 + $0xddc] sm:$0xf]
  %v944 = vld [vmem:[%s1 + $0xde0] sm:$0xf]
  %v945 = vld [vmem:[%s1 + $0xde4] sm:$0xf]
  %v946 = vld [vmem:[%s1 + $0xde8] sm:$0xf]
  %v947 = vld [vmem:[%s1 + $0xdec] sm:$0xf]
  %v948 = vld [vmem:[%s1 + $0xdf0] sm:$0xf]
  %v949 = vld [vmem:[%s1 + $0xdf4] sm:$0xf]
  %v950 = vld [vmem:[%s1 + $0xdf8] sm:$0xf]
  %v951 = vld [vmem:[%s1 + $0xdfc] sm:$0xf]
  %v952 = vld [vmem:[%s1 + $0xe00] sm:$0xf]
  %v953 = vld [vmem:[%s1 + $0xe04] sm:$0xf]
  %v954 = vld [vmem:[%s1 + $0xe08] sm:$0xf]
  %v955 = vld [vmem:[%s1 + $0xe0c] sm:$0xf]
  %v956 = vld [vmem:[%s1 + $0xe10] sm:$0xf]
  %v957 = vld [vmem:[%s1 + $0xe14] sm:$0xf]
  %v958 = vld [vmem:[%s1 + $0xe18] sm:$0xf]
  %v959 = vld [vmem:[%s1 + $0xe1c] sm:$0xf]
  %v960 = vld [vmem:[%s1 + $0xe20] sm:$0xf]
  %v961 = vld [vmem:[%s1 + $0xe24] sm:$0xf]
  %v962 = vld [vmem:[%s1 + $0xe28] sm:$0xf]
  %v963 = vld [vmem:[%s1 + $0xe2c] sm:$0xf]
  %v964 = vld [vmem:[%s1 + $0xe30] sm:$0xf]
  %v965 = vld [vmem:[%s1 + $0xe34] sm:$0xf]
  %v966 = vld [vmem:[%s1 + $0xe38] sm:$0xf]
  %v967 = vld [vmem:[%s1 + $0xe3c] sm:$0xf]
  %v968 = vld [vmem:[%s1 + $0xe40] sm:$0xf]
  %v969 = vld [vmem:[%s1 + $0xe44] sm:$0xf]
  %v970 = vld [vmem:[%s1 + $0xe48] sm:$0xf]
  %v971 = vld [vmem:[%s1 + $0xe4c] sm:$0xf]
  %v972 = vld [vmem:[%s1 + $0xe50] sm:$0xf]
  %v973 = vld [vmem:[%s1 + $0xe54] sm:$0xf]
  %v974 = vld [vmem:[%s1 + $0xe58] sm:$0xf]
  %v975 = vld [vmem:[%s1 + $0xe5c] sm:$0xf]
  %v976 = vld [vmem:[%s1 + $0xe60] sm:$0xf]
  %v977 = vld [vmem:[%s1 + $0xe64] sm:$0xf]
  %v978 = vld [vmem:[%s1 + $0xe68] sm:$0xf]
  %v979 = vld [vmem:[%s1 + $0xe6c] sm:$0xf]
  %v980 = vld [vmem:[%s1 + $0xe70] sm:$0xf]
  %v981 = vld [vmem:[%s1 + $0xe74] sm:$0xf]
  %v982 = vld [vmem:[%s1 + $0xe78] sm:$0xf]
  %v983 = vld [vmem:[%s1 + $0xe7c] sm:$0xf]
  %v984 = vld [vmem:[%s1 + $0xe80] sm:$0xf]
  %v985 = vld [vmem:[%s1 + $0xe84] sm:$0xf]
  %v986 = vld [vmem:[%s1 + $0xe88] sm:$0xf]
  %v987 = vld [vmem:[%s1 + $0xe8c] sm:$0xf]
  %v988 = vld [vmem:[%s1 + $0xe90] sm:$0xf]
  %v989 = vld [vmem:[%s1 + $0xe94] sm:$0xf]
  %v990 = vld [vmem:[%s1 + $0xe98] sm:$0xf]
  %v991 = vld [vmem:[%s1 + $0xe9c] sm:$0xf]
  %v992 = vld [vmem:[%s1 + $0xea0] sm:$0xf]
  %v993 = vld [vmem:[%s1 + $0xea4] sm:$0xf]
  %v994 = vld [vmem:[%s1 + $0xea8] sm:$0xf]
  %v995 = vld [vmem:[%s1 + $0xeac] sm:$0xf]
  %v996 = vld [vmem:[%s1 + $0xeb0] sm:$0xf]
  %v997 = vld [vmem:[%s1 + $0xeb4] sm:$0xf]
  %v998 = vld [vmem:[%s1 + $0xeb8] sm:$0xf]
  %v999 = vld [vmem:[%s1 + $0xebc] sm:$0xf]
  %v1000 = vld [vmem:[%s1 + $0xec0] sm:$0xf]
  %v1001 = vld [vmem:[%s1 + $0xec4] sm:$0xf]
  %v1002 = vld [vmem:[%s1 + $0xec8] sm:$0xf]
  %v1003 = vld [vmem:[%s1 + $0xecc] sm:$0xf]
  %v1004 = vld [vmem:[%s1 + $0xed0] sm:$0xf]
  %v1005 = vld [vmem:[%s1 + $0xed4] sm:$0xf]
  %v1006 = vld [vmem:[%s1 + $0xed8] sm:$0xf]
  %v1007 = vld [vmem:[%s1 + $0xedc] sm:$0xf]
  %v1008 = vld [vmem:[%s1 + $0xee0] sm:$0xf]
  %v1009 = vld [vmem:[%s1 + $0xee4] sm:$0xf]
  %v1010 = vld [vmem:[%s1 + $0xee8] sm:$0xf]
  %v1011 = vld [vmem:[%s1 + $0xeec] sm:$0xf]
  %v1012 = vld [vmem:[%s1 + $0xef0] sm:$0xf]
  %v1013 = vld [vmem:[%s1 + $0xef4] sm:$0xf]
  %v1014 = vld [vmem:[%s1 + $0xef8] sm:$0xf]
  %v1015 = vld [vmem:[%s1 + $0xefc] sm:$0xf]
  %v1016 = vld [vmem:[%s1 + $0xf00] sm:$0xf]
  %v1017 = vld [vmem:[%s1 + $0xf04] sm:$0xf]
  %v1018 = vld [vmem:[%s1 + $0xf08] sm:$0xf]
  %v1019 = vld [vmem:[%s1 + $0xf0c] sm:$0xf]
  %v1020 = vld [vmem:[%s1 + $0xf10] sm:$0xf]
  %v1021 = vld [vmem:[%s1 + $0xf14] sm:$0xf]
  %v1022 = vld [vmem:[%s1 + $0xf18] sm:$0xf]
  %v1023 = vld [vmem:[%s1 + $0xf1c] sm:$0xf]
  %v1024 = vld [vmem:[%s1 + $0xf20] sm:$0xf]
  %v1025 = vld [vmem:[%s1 + $0xf24] sm:$0xf]
  %v1026 = vld [vmem:[%s1 + $0xf28] sm:$0xf]
  %v1027 = vld [vmem:[%s1 + $0xf2c] sm:$0xf]
  %v1028 = vld [vmem:[%s1 + $0xf30] sm:$0xf]
  %v1029 = vld [vmem:[%s1 + $0xf34] sm:$0xf]
  %v1030 = vld [vmem:[%s1 + $0xf38] sm:$0xf]
  %v1031 = vld [vmem:[%s1 + $0xf3c] sm:$0xf]
  %v1032 = vld [vmem:[%s1 + $0xf40] sm:$0xf]
  %v1033 = vld [vmem:[%s1 + $0xf44] sm:$0xf]
  %v1034 = vld [vmem:[%s1 + $0xf48] sm:$0xf]
  %v1035 = vld [vmem:[%s1 + $0xf4c] sm:$0xf]
  %v1036 = vld [vmem:[%s1 + $0xf50] sm:$0xf]
  %v1037 = vld [vmem:[%s1 + $0xf54] sm:$0xf]
  %v1038 = vld [vmem:[%s1 + $0xf58] sm:$0xf]
  %v1039 = vld [vmem:[%s1 + $0xf5c] sm:$0xf]
  %v1040 = vld [vmem:[%s1 + $0xf60] sm:$0xf]
  %v1041 = vld [vmem:[%s1 + $0xf64] sm:$0xf]
  %v1042 = vld [vmem:[%s1 + $0xf68] sm:$0xf]
  %v1043 = vld [vmem:[%s1 + $0xf6c] sm:$0xf]
  %v1044 = vld [vmem:[%s1 + $0xf70] sm:$0xf]
  %v1045 = vld [vmem:[%s1 + $0xf74] sm:$0xf]
  %v1046 = vld [vmem:[%s1 + $0xf78] sm:$0xf]
  %v1047 = vld [vmem:[%s1 + $0xf7c] sm:$0xf]
  %v1048 = vld [vmem:[%s1 + $0xf80] sm:$0xf]
  %v1049 = vld [vmem:[%s1 + $0xf84] sm:$0xf]
  %v1050 = vld [vmem:[%s1 + $0xf88] sm:$0xf]
  %v1051 = vld [vmem:[%s1 + $0xf8c] sm:$0xf]
  %v1052 = vld [vmem:[%s1 + $0xf90] sm:$0xf]
  %v1053 = vld [vmem:[%s1 + $0xf94] sm:$0xf]
  %v1054 = vld [vmem:[%s1 + $0xf98] sm:$0xf]
  %v1055 = vld [vmem:[%s1 + $0xf9c] sm:$0xf]
  %v1056 = vld [vmem:[%s1 + $0xfa0] sm:$0xf]
  %v1057 = vld [vmem:[%s1 + $0xfa4] sm:$0xf]
  %v1058 = vld [vmem:[%s1 + $0xfa8] sm:$0xf]
  %v1059 = vld [vmem:[%s1 + $0xfac] sm:$0xf]
  %v1060 = vld [vmem:[%s1 + $0xfb0] sm:$0xf]
  %v1061 = vld [vmem:[%s1 + $0xfb4] sm:$0xf]
  %v1062 = vld [vmem:[%s1 + $0xfb8] sm:$0xf]
  %v1063 = vld [vmem:[%s1 + $0xfbc] sm:$0xf]
  %v1064 = vld [vmem:[%s1 + $0xfc0] sm:$0xf]
  %v1065 = vld [vmem:[%s1 + $0xfc4] sm:$0xf]
  %v1066 = vld [vmem:[%s1 + $0xfc8] sm:$0xf]
  %v1067 = vld [vmem:[%s1 + $0xfcc] sm:$0xf]
  %v1068 = vld [vmem:[%s1 + $0xfd0] sm:$0xf]
  %v1069 = vld [vmem:[%s1 + $0xfd4] sm:$0xf]
  %v1070 = vld [vmem:[%s1 + $0xfd8] sm:$0xf]
  %v1071 = vld [vmem:[%s1 + $0xfdc] sm:$0xf]
  %v1072 = vld [vmem:[%s1 + $0xfe0] sm:$0xf]
  %v1073 = vld [vmem:[%s1 + $0xfe4] sm:$0xf]
  %v1074 = vld [vmem:[%s1 + $0xfe8] sm:$0xf]
  %v1075 = vld [vmem:[%s1 + $0xfec] sm:$0xf]
  %v1076 = vld [vmem:[%s1 + $0xff0] sm:$0xf]
  %v1077 = vld [vmem:[%s1 + $0xff4] sm:$0xf]
  %v1078 = vld [vmem:[%s1 + $0xff8] sm:$0xf]
  %v1079 = vld [vmem:[%s1 + $0xffc] sm:$0xf]
  %v1080 = vld [vmem:[%s1 + $0x1000] sm:$0xf]
  %v1081 = vld [vmem:[%s1 + $0x1004] sm:$0xf]
  %v1082 = vld [vmem:[%s1 + $0x1008] sm:$0xf]
  %v1083 = vld [vmem:[%s1 + $0x100c] sm:$0xf]
  %v1084 = vld [vmem:[%s1 + $0x1010] sm:$0xf]
  %v1085 = vld [vmem:[%s1 + $0x1014] sm:$0xf]
  %v1086 = vld [vmem:[%s1 + $0x1018] sm:$0xf]
  %v1087 = vld [vmem:[%s1 + $0x101c] sm:$0xf]
  %v1088 = vld [vmem:[%s1 + $0x1020] sm:$0xf]
  %v1089 = vld [vmem:[%s1 + $0x1024] sm:$0xf]
  %v1090 = vld [vmem:[%s1 + $0x1028] sm:$0xf]
  %v1091 = vld [vmem:[%s1 + $0x102c] sm:$0xf]
  %v1092 = vld [vmem:[%s1 + $0x1030] sm:$0xf]
  %v1093 = vld [vmem:[%s1 + $0x1034] sm:$0xf]
  %v1094 = vld [vmem:[%s1 + $0x1038] sm:$0xf]
  %v1095 = vld [vmem:[%s1 + $0x103c] sm:$0xf]
  %v1096 = vld [vmem:[%s1 + $0x1040] sm:$0xf]
  %v1097 = vld [vmem:[%s1 + $0x1044] sm:$0xf]
  %v1098 = vld [vmem:[%s1 + $0x1048] sm:$0xf]
  %v1099 = vld [vmem:[%s1 + $0x104c] sm:$0xf]
  %v1100 = vld [vmem:[%s1 + $0x1050] sm:$0xf]
  %v1101 = vld [vmem:[%s1 + $0x1054] sm:$0xf]
  %v1102 = vld [vmem:[%s1 + $0x1058] sm:$0xf]
  %v1103 = vld [vmem:[%s1 + $0x105c] sm:$0xf]
  %v1104 = vld [vmem:[%s1 + $0x1060] sm:$0xf]
  %v1105 = vld [vmem:[%s1 + $0x1064] sm:$0xf]
  %v1106 = vld [vmem:[%s1 + $0x1068] sm:$0xf]
  %v1107 = vld [vmem:[%s1 + $0x106c] sm:$0xf]
  %v1108 = vld [vmem:[%s1 + $0x1070] sm:$0xf]
  %v1109 = vld [vmem:[%s1 + $0x1074] sm:$0xf]
  %v1110 = vld [vmem:[%s1 + $0x1078] sm:$0xf]
  %v1111 = vld [vmem:[%s1 + $0x107c] sm:$0xf]
  %v1112 = vld [vmem:[%s1 + $0x1080] sm:$0xf]
  %v1113 = vld [vmem:[%s1 + $0x1084] sm:$0xf]
  %v1114 = vld [vmem:[%s1 + $0x1088] sm:$0xf]
  %v1115 = vld [vmem:[%s1 + $0x108c] sm:$0xf]
  %v1116 = vld [vmem:[%s1 + $0x1090] sm:$0xf]
  %v1117 = vld [vmem:[%s1 + $0x1094] sm:$0xf]
  %v1118 = vld [vmem:[%s1 + $0x1098] sm:$0xf]
  %v1119 = vld [vmem:[%s1 + $0x109c] sm:$0xf]
  %v1120 = vld [vmem:[%s1 + $0x10a0] sm:$0xf]
  %v1121 = vld [vmem:[%s1 + $0x10a4] sm:$0xf]
  %v1122 = vld [vmem:[%s1 + $0x10a8] sm:$0xf]
  %v1123 = vld [vmem:[%s1 + $0x10ac] sm:$0xf]
  %v1124 = vld [vmem:[%s1 + $0x10b0] sm:$0xf]
  %v1125 = vld [vmem:[%s1 + $0x10b4] sm:$0xf]
  %v1126 = vld [vmem:[%s1 + $0x10b8] sm:$0xf]
  %v1127 = vld [vmem:[%s1 + $0x10bc] sm:$0xf]
  %v1128 = vld [vmem:[%s1 + $0x10c0] sm:$0xf]
  %v1129 = vld [vmem:[%s1 + $0x10c4] sm:$0xf]
  %v1130 = vld [vmem:[%s1 + $0x10c8] sm:$0xf]
  %v1131 = vld [vmem:[%s1 + $0x10cc] sm:$0xf]
  %v1132 = vld [vmem:[%s1 + $0x10d0] sm:$0xf]
  %v1133 = vld [vmem:[%s1 + $0x10d4] sm:$0xf]
  %v1134 = vld [vmem:[%s1 + $0x10d8] sm:$0xf]
  %v1135 = vld [vmem:[%s1 + $0x10dc] sm:$0xf]
  %v1136 = vld [vmem:[%s1 + $0x10e0] sm:$0xf]
  %v1137 = vld [vmem:[%s1 + $0x10e4] sm:$0xf]
  %v1138 = vld [vmem:[%s1 + $0x10e8] sm:$0xf]
  %v1139 = vld [vmem:[%s1 + $0x10ec] sm:$0xf]
  %v1140 = vld [vmem:[%s1 + $0x10f0] sm:$0xf]
  %v1141 = vld [vmem:[%s1 + $0x10f4] sm:$0xf]
  %v1142 = vld [vmem:[%s1 + $0x10f8] sm:$0xf]
  %v1143 = vld [vmem:[%s1 + $0x10fc] sm:$0xf]
  %v1144 = vld [vmem:[%s1 + $0x1100] sm:$0xf]
  %v1145 = vld [vmem:[%s1 + $0x1104] sm:$0xf]
  %v1146 = vld [vmem:[%s1 + $0x1108] sm:$0xf]
  %v1147 = vld [vmem:[%s1 + $0x110c] sm:$0xf]
  %v1148 = vld [vmem:[%s1 + $0x1110] sm:$0xf]
  %v1149 = vld [vmem:[%s1 + $0x1114] sm:$0xf]
  %v1150 = vld [vmem:[%s1 + $0x1118] sm:$0xf]
  %v1151 = vld [vmem:[%s1 + $0x111c] sm:$0xf]
  %v1152 = vld [vmem:[%s1 + $0x1120] sm:$0xf]
  %v1153 = vld [vmem:[%s1 + $0x1124] sm:$0xf]
  %v1154 = vld [vmem:[%s1 + $0x1128] sm:$0xf]
  %v1155 = vld [vmem:[%s1 + $0x112c] sm:$0xf]
  %v1156 = vld [vmem:[%s1 + $0x1130] sm:$0xf]
  %v1157 = vld [vmem:[%s1 + $0x1134] sm:$0xf]
  %v1158 = vld [vmem:[%s1 + $0x1138] sm:$0xf]
  %v1159 = vld [vmem:[%s1 + $0x113c] sm:$0xf]
  %v1160 = vld [vmem:[%s1 + $0x1140] sm:$0xf]
  %v1161 = vld [vmem:[%s1 + $0x1144] sm:$0xf]
  %v1162 = vld [vmem:[%s1 + $0x1148] sm:$0xf]
  %v1163 = vld [vmem:[%s1 + $0x114c] sm:$0xf]
  %v1164 = vld [vmem:[%s1 + $0x1150] sm:$0xf]
  %v1165 = vld [vmem:[%s1 + $0x1154] sm:$0xf]
  %v1166 = vld [vmem:[%s1 + $0x1158] sm:$0xf]
  %v1167 = vld [vmem:[%s1 + $0x115c] sm:$0xf]
  %v1168 = vld [vmem:[%s1 + $0x1160] sm:$0xf]
  %v1169 = vld [vmem:[%s1 + $0x1164] sm:$0xf]
  %v1170 = vld [vmem:[%s1 + $0x1168] sm:$0xf]
  %v1171 = vld [vmem:[%s1 + $0x116c] sm:$0xf]
  %v1172 = vld [vmem:[%s1 + $0x1170] sm:$0xf]
  %v1173 = vld [vmem:[%s1 + $0x1174] sm:$0xf]
  %v1174 = vld [vmem:[%s1 + $0x1178] sm:$0xf]
  %v1175 = vld [vmem:[%s1 + $0x117c] sm:$0xf]
  %v1176 = vld [vmem:[%s1 + $0x1180] sm:$0xf]
  %v1177 = vld [vmem:[%s1 + $0x1184] sm:$0xf]
  %v1178 = vld [vmem:[%s1 + $0x1188] sm:$0xf]
  %v1179 = vld [vmem:[%s1 + $0x118c] sm:$0xf]
  %v1180 = vld [vmem:[%s1 + $0x1190] sm:$0xf]
  %v1181 = vld [vmem:[%s1 + $0x1194] sm:$0xf]
  %v1182 = vld [vmem:[%s1 + $0x1198] sm:$0xf]
  %v1183 = vld [vmem:[%s1 + $0x119c] sm:$0xf]
  %v1184 = vld [vmem:[%s1 + $0x11a0] sm:$0xf]
  %v1185 = vld [vmem:[%s1 + $0x11a4] sm:$0xf]
  %v1186 = vld [vmem:[%s1 + $0x11a8] sm:$0xf]
  %v1187 = vld [vmem:[%s1 + $0x11ac] sm:$0xf]
  %v1188 = vld [vmem:[%s1 + $0x11b0] sm:$0xf]
  %v1189 = vld [vmem:[%s1 + $0x11b4] sm:$0xf]
  %v1190 = vld [vmem:[%s1 + $0x11b8] sm:$0xf]
  %v1191 = vld [vmem:[%s1 + $0x11bc] sm:$0xf]
  %v1192 = vld [vmem:[%s1 + $0x11c0] sm:$0xf]
  %v1193 = vld [vmem:[%s1 + $0x11c4] sm:$0xf]
  %v1194 = vld [vmem:[%s1 + $0x11c8] sm:$0xf]
  %v1195 = vld [vmem:[%s1 + $0x11cc] sm:$0xf]
  %v1196 = vld [vmem:[%s1 + $0x11d0] sm:$0xf]
  %v1197 = vld [vmem:[%s1 + $0x11d4] sm:$0xf]
  %v1198 = vld [vmem:[%s1 + $0x11d8] sm:$0xf]
  %v1199 = vld [vmem:[%s1 + $0x11dc] sm:$0xf]
  %v1200 = vld [vmem:[%s1 + $0x11e0] sm:$0xf]
  %v1201 = vld [vmem:[%s1 + $0x11e4] sm:$0xf]
  %v1202 = vld [vmem:[%s1 + $0x11e8] sm:$0xf]
  %v1203 = vld [vmem:[%s1 + $0x11ec] sm:$0xf]
  %v1204 = vld [vmem:[%s1 + $0x11f0] sm:$0xf]
  %v1205 = vld [vmem:[%s1 + $0x11f4] sm:$0xf]
  %v1206 = vld [vmem:[%s1 + $0x11f8] sm:$0xf]
  %v1207 = vld [vmem:[%s1 + $0x11fc] sm:$0xf]
  %v1208 = vld [vmem:[%s2] sm:$0x1]
  %v1210 = vperm.slane %v1208, 0
  %v1248 = vunpack.c.l.b16 %v20
  %v1249 = vunpack.c.h.b16 %v20
  %v1250 = vunpack.c.l.b16 %v21
  %v1251 = vunpack.c.h.b16 %v21
  %v1252 = vunpack.c.l.b16 %v22
  %v1253 = vunpack.c.h.b16 %v22
  %v1254 = vunpack.c.l.b16 %v23
  %v1255 = vunpack.c.h.b16 %v23
  %v1256 = vunpack.c.l.b16 %v24
  %v1257 = vunpack.c.h.b16 %v24
  %v1258 = vunpack.c.l.b16 %v25
  %v1259 = vunpack.c.h.b16 %v25
  %v1260 = vunpack.c.l.b16 %v26
  %v1261 = vunpack.c.h.b16 %v26
  %v1262 = vunpack.c.l.b16 %v27
  %v1263 = vunpack.c.h.b16 %v27
  %v1264 = vunpack.c.l.b16 %v28
  %v1265 = vunpack.c.h.b16 %v28
  %v1266 = vunpack.c.l.b16 %v29
  %v1267 = vunpack.c.h.b16 %v29
  %v1268 = vunpack.c.l.b16 %v30
  %v1269 = vunpack.c.h.b16 %v30
  %v1270 = vunpack.c.l.b16 %v31
  %v1271 = vunpack.c.h.b16 %v31
  %v1272 = vunpack.c.l.b16 %v32
  %v1273 = vunpack.c.h.b16 %v32
  %v1274 = vunpack.c.l.b16 %v33
  %v1275 = vunpack.c.h.b16 %v33
  %v1276 = vunpack.c.l.b16 %v34
  %v1277 = vunpack.c.h.b16 %v34
  %v1278 = vunpack.c.l.b16 %v35
  %v1279 = vunpack.c.h.b16 %v35
  %v1280 = vunpack.c.l.b16 %v36
  %v1281 = vunpack.c.h.b16 %v36
  %v1282 = vunpack.c.l.b16 %v37
  %v1283 = vunpack.c.h.b16 %v37
  %v1284 = vunpack.c.l.b16 %v38
  %v1285 = vunpack.c.h.b16 %v38
  %v1286 = vunpack.c.l.b16 %v39
  %v1287 = vunpack.c.h.b16 %v39
  %v1288 = vunpack.c.l.b16 %v40
  %v1289 = vunpack.c.h.b16 %v40
  %v1290 = vunpack.c.l.b16 %v41
  %v1291 = vunpack.c.h.b16 %v41
  %v1292 = vunpack.c.l.b16 %v42
  %v1293 = vunpack.c.h.b16 %v42
  %v1294 = vunpack.c.l.b16 %v43
  %v1295 = vunpack.c.h.b16 %v43
  %v1296 = vunpack.c.l.b16 %v44
  %v1297 = vunpack.c.h.b16 %v44
  %v1298 = vunpack.c.l.b16 %v45
  %v1299 = vunpack.c.h.b16 %v45
  %v1300 = vunpack.c.l.b16 %v46
  %v1301 = vunpack.c.h.b16 %v46
  %v1302 = vunpack.c.l.b16 %v47
  %v1303 = vunpack.c.h.b16 %v47
  %v1304 = vunpack.c.l.b16 %v48
  %v1305 = vunpack.c.h.b16 %v48
  %v1306 = vunpack.c.l.b16 %v49
  %v1307 = vunpack.c.h.b16 %v49
  %v1308 = vunpack.c.l.b16 %v50
  %v1309 = vunpack.c.h.b16 %v50
  %v1310 = vunpack.c.l.b16 %v51
  %v1311 = vunpack.c.h.b16 %v51
  %v1312 = vunpack.c.l.b16 %v52
  %v1313 = vunpack.c.h.b16 %v52
  %v1314 = vunpack.c.l.b16 %v53
  %v1315 = vunpack.c.h.b16 %v53
  %v1316 = vunpack.c.l.b16 %v54
  %v1317 = vunpack.c.h.b16 %v54
  %v1318 = vunpack.c.l.b16 %v55
  %v1319 = vunpack.c.h.b16 %v55
  %v1320 = vpack.c.b16 %v1248, %v1248
  %v1321 = vpack.c.b16 %v1249, %v1249
  %v1322 = vpack.c.b16 %v1250, %v1250
  %v1323 = vpack.c.b16 %v1251, %v1251
  %v1324 = vpack.c.b16 %v1252, %v1252
  %v1325 = vpack.c.b16 %v1253, %v1253
  %v1326 = vpack.c.b16 %v1254, %v1254
  %v1327 = vpack.c.b16 %v1255, %v1255
  %v1328 = vpack.c.b16 %v1256, %v1256
  %v1329 = vpack.c.b16 %v1257, %v1257
  %v1330 = vpack.c.b16 %v1258, %v1258
  %v1331 = vpack.c.b16 %v1259, %v1259
  %v1332 = vpack.c.b16 %v1260, %v1260
  %v1333 = vpack.c.b16 %v1261, %v1261
  %v1334 = vpack.c.b16 %v1262, %v1262
  %v1335 = vpack.c.b16 %v1263, %v1263
  %v1336 = vpack.c.b16 %v1264, %v1264
  %v1337 = vpack.c.b16 %v1265, %v1265
  %v1338 = vpack.c.b16 %v1266, %v1266
  %v1339 = vpack.c.b16 %v1267, %v1267
  %v1340 = vpack.c.b16 %v1268, %v1268
  %v1341 = vpack.c.b16 %v1269, %v1269
  %v1342 = vpack.c.b16 %v1270, %v1270
  %v1343 = vpack.c.b16 %v1271, %v1271
  %v1344 = vpack.c.b16 %v1272, %v1272
  %v1345 = vpack.c.b16 %v1273, %v1273
  %v1346 = vpack.c.b16 %v1274, %v1274
  %v1347 = vpack.c.b16 %v1275, %v1275
  %v1348 = vpack.c.b16 %v1276, %v1276
  %v1349 = vpack.c.b16 %v1277, %v1277
  %v1350 = vpack.c.b16 %v1278, %v1278
  %v1351 = vpack.c.b16 %v1279, %v1279
  %v1352 = vpack.c.b16 %v1280, %v1280
  %v1353 = vpack.c.b16 %v1281, %v1281
  %v1354 = vpack.c.b16 %v1282, %v1282
  %v1355 = vpack.c.b16 %v1283, %v1283
  %v1356 = vpack.c.b16 %v1284, %v1284
  %v1357 = vpack.c.b16 %v1285, %v1285
  %v1358 = vpack.c.b16 %v1286, %v1286
  %v1359 = vpack.c.b16 %v1287, %v1287
  %v1360 = vpack.c.b16 %v1288, %v1288
  %v1361 = vpack.c.b16 %v1289, %v1289
  %v1362 = vpack.c.b16 %v1290, %v1290
  %v1363 = vpack.c.b16 %v1291, %v1291
  %v1364 = vpack.c.b16 %v1292, %v1292
  %v1365 = vpack.c.b16 %v1293, %v1293
  %v1366 = vpack.c.b16 %v1294, %v1294
  %v1367 = vpack.c.b16 %v1295, %v1295
  %v1368 = vpack.c.b16 %v1296, %v1296
  %v1369 = vpack.c.b16 %v1297, %v1297
  %v1370 = vpack.c.b16 %v1298, %v1298
  %v1371 = vpack.c.b16 %v1299, %v1299
  %v1372 = vpack.c.b16 %v1300, %v1300
  %v1373 = vpack.c.b16 %v1301, %v1301
  %v1374 = vpack.c.b16 %v1302, %v1302
  %v1375 = vpack.c.b16 %v1303, %v1303
  %v1376 = vpack.c.b16 %v1304, %v1304
  %v1377 = vpack.c.b16 %v1305, %v1305
  %v1378 = vpack.c.b16 %v1306, %v1306
  %v1379 = vpack.c.b16 %v1307, %v1307
  %v1380 = vpack.c.b16 %v1308, %v1308
  %v1381 = vpack.c.b16 %v1309, %v1309
  %v1382 = vpack.c.b16 %v1310, %v1310
  %v1383 = vpack.c.b16 %v1311, %v1311
  %v1384 = vpack.c.b16 %v1312, %v1312
  %v1385 = vpack.c.b16 %v1313, %v1313
  %v1386 = vpack.c.b16 %v1314, %v1314
  %v1387 = vpack.c.b16 %v1315, %v1315
  %v1388 = vpack.c.b16 %v1316, %v1316
  %v1389 = vpack.c.b16 %v1317, %v1317
  %v1390 = vpack.c.b16 %v1318, %v1318
  %v1391 = vpack.c.b16 %v1319, %v1319
  %v2616 = vunpack.c.l.b16 %v56
  %v2617 = vunpack.c.l.b16 %v57
  %v2618 = vunpack.c.l.b16 %v58
  %v2619 = vunpack.c.l.b16 %v59
  %v2620 = vunpack.c.l.b16 %v60
  %v2621 = vunpack.c.l.b16 %v61
  %v2622 = vunpack.c.l.b16 %v62
  %v2623 = vunpack.c.l.b16 %v63
  %v2624 = vunpack.c.l.b16 %v64
  %v2625 = vunpack.c.l.b16 %v65
  %v2626 = vunpack.c.l.b16 %v66
  %v2627 = vunpack.c.l.b16 %v67
  %v2628 = vunpack.c.l.b16 %v68
  %v2629 = vunpack.c.l.b16 %v69
  %v2630 = vunpack.c.l.b16 %v70
  %v2631 = vunpack.c.l.b16 %v71
  %v2632 = vunpack.c.l.b16 %v72
  %v2633 = vunpack.c.l.b16 %v73
  %v2634 = vunpack.c.l.b16 %v74
  %v2635 = vunpack.c.l.b16 %v75
  %v2636 = vunpack.c.l.b16 %v76
  %v2637 = vunpack.c.l.b16 %v77
  %v2638 = vunpack.c.l.b16 %v78
  %v2639 = vunpack.c.l.b16 %v79
  %v2640 = vunpack.c.l.b16 %v80
  %v2641 = vunpack.c.l.b16 %v81
  %v2642 = vunpack.c.l.b16 %v82
  %v2643 = vunpack.c.l.b16 %v83
  %v2644 = vunpack.c.l.b16 %v84
  %v2645 = vunpack.c.l.b16 %v85
  %v2646 = vunpack.c.l.b16 %v86
  %v2647 = vunpack.c.l.b16 %v87
  %v2648 = vunpack.c.l.b16 %v88
  %v2649 = vunpack.c.l.b16 %v89
  %v2650 = vunpack.c.l.b16 %v90
  %v2651 = vunpack.c.l.b16 %v91
  %v2652 = vunpack.c.l.b16 %v92
  %v2653 = vunpack.c.l.b16 %v93
  %v2654 = vunpack.c.l.b16 %v94
  %v2655 = vunpack.c.l.b16 %v95
  %v2656 = vunpack.c.l.b16 %v96
  %v2657 = vunpack.c.l.b16 %v97
  %v2658 = vunpack.c.l.b16 %v98
  %v2659 = vunpack.c.l.b16 %v99
  %v2660 = vunpack.c.l.b16 %v100
  %v2661 = vunpack.c.l.b16 %v101
  %v2662 = vunpack.c.l.b16 %v102
  %v2663 = vunpack.c.l.b16 %v103
  %v2664 = vunpack.c.l.b16 %v104
  %v2665 = vunpack.c.l.b16 %v105
  %v2666 = vunpack.c.l.b16 %v106
  %v2667 = vunpack.c.l.b16 %v107
  %v2668 = vunpack.c.l.b16 %v108
  %v2669 = vunpack.c.l.b16 %v109
  %v2670 = vunpack.c.l.b16 %v110
  %v2671 = vunpack.c.l.b16 %v111
  %v2672 = vunpack.c.l.b16 %v112
  %v2673 = vunpack.c.l.b16 %v113
  %v2674 = vunpack.c.l.b16 %v114
  %v2675 = vunpack.c.l.b16 %v115
  %v2676 = vunpack.c.l.b16 %v116
  %v2677 = vunpack.c.l.b16 %v117
  %v2678 = vunpack.c.l.b16 %v118
  %v2679 = vunpack.c.l.b16 %v119
  %v2680 = vunpack.c.l.b16 %v120
  %v2681 = vunpack.c.l.b16 %v121
  %v2682 = vunpack.c.l.b16 %v122
  %v2683 = vunpack.c.l.b16 %v123
  %v2684 = vunpack.c.l.b16 %v124
  %v2685 = vunpack.c.l.b16 %v125
  %v2686 = vunpack.c.l.b16 %v126
  %v2687 = vunpack.c.l.b16 %v127
  %v2688 = vunpack.c.l.b16 %v128
  %v2689 = vunpack.c.l.b16 %v129
  %v2690 = vunpack.c.l.b16 %v130
  %v2691 = vunpack.c.l.b16 %v131
  %v2692 = vunpack.c.l.b16 %v132
  %v2693 = vunpack.c.l.b16 %v133
  %v2694 = vunpack.c.l.b16 %v134
  %v2695 = vunpack.c.l.b16 %v135
  %v2696 = vunpack.c.l.b16 %v136
  %v2697 = vunpack.c.l.b16 %v137
  %v2698 = vunpack.c.l.b16 %v138
  %v2699 = vunpack.c.l.b16 %v139
  %v2700 = vunpack.c.l.b16 %v140
  %v2701 = vunpack.c.l.b16 %v141
  %v2702 = vunpack.c.l.b16 %v142
  %v2703 = vunpack.c.l.b16 %v143
  %v2704 = vunpack.c.l.b16 %v144
  %v2705 = vunpack.c.l.b16 %v145
  %v2706 = vunpack.c.l.b16 %v146
  %v2707 = vunpack.c.l.b16 %v147
  %v2708 = vunpack.c.l.b16 %v148
  %v2709 = vunpack.c.l.b16 %v149
  %v2710 = vunpack.c.l.b16 %v150
  %v2711 = vunpack.c.l.b16 %v151
  %v2712 = vunpack.c.l.b16 %v152
  %v2713 = vunpack.c.l.b16 %v153
  %v2714 = vunpack.c.l.b16 %v154
  %v2715 = vunpack.c.l.b16 %v155
  %v2716 = vunpack.c.l.b16 %v156
  %v2717 = vunpack.c.l.b16 %v157
  %v2718 = vunpack.c.l.b16 %v158
  %v2719 = vunpack.c.l.b16 %v159
  %v2720 = vunpack.c.l.b16 %v160
  %v2721 = vunpack.c.l.b16 %v161
  %v2722 = vunpack.c.l.b16 %v162
  %v2723 = vunpack.c.l.b16 %v163
  %v2724 = vunpack.c.l.b16 %v164
  %v2725 = vunpack.c.l.b16 %v165
  %v2726 = vunpack.c.l.b16 %v166
  %v2727 = vunpack.c.l.b16 %v167
  %v2728 = vunpack.c.l.b16 %v168
  %v2729 = vunpack.c.l.b16 %v169
  %v2730 = vunpack.c.l.b16 %v170
  %v2731 = vunpack.c.l.b16 %v171
  %v2732 = vunpack.c.l.b16 %v172
  %v2733 = vunpack.c.l.b16 %v173
  %v2734 = vunpack.c.l.b16 %v174
  %v2735 = vunpack.c.l.b16 %v175
  %v2736 = vunpack.c.l.b16 %v176
  %v2737 = vunpack.c.l.b16 %v177
  %v2738 = vunpack.c.l.b16 %v178
  %v2739 = vunpack.c.l.b16 %v179
  %v2740 = vunpack.c.l.b16 %v180
  %v2741 = vunpack.c.l.b16 %v181
  %v2742 = vunpack.c.l.b16 %v182
  %v2743 = vunpack.c.l.b16 %v183
  %v2744 = vunpack.c.l.b16 %v184
  %v2745 = vunpack.c.l.b16 %v185
  %v2746 = vunpack.c.l.b16 %v186
  %v2747 = vunpack.c.l.b16 %v187
  %v2748 = vunpack.c.l.b16 %v188
  %v2749 = vunpack.c.l.b16 %v189
  %v2750 = vunpack.c.l.b16 %v190
  %v2751 = vunpack.c.l.b16 %v191
  %v2752 = vunpack.c.l.b16 %v192
  %v2753 = vunpack.c.l.b16 %v193
  %v2754 = vunpack.c.l.b16 %v194
  %v2755 = vunpack.c.l.b16 %v195
  %v2756 = vunpack.c.l.b16 %v196
  %v2757 = vunpack.c.l.b16 %v197
  %v2758 = vunpack.c.l.b16 %v198
  %v2759 = vunpack.c.l.b16 %v199
  %v2760 = vunpack.c.l.b16 %v200
  %v2761 = vunpack.c.l.b16 %v201
  %v2762 = vunpack.c.l.b16 %v202
  %v2763 = vunpack.c.l.b16 %v203
  %v2764 = vunpack.c.l.b16 %v204
  %v2765 = vunpack.c.l.b16 %v205
  %v2766 = vunpack.c.l.b16 %v206
  %v2767 = vunpack.c.l.b16 %v207
  %v2768 = vunpack.c.l.b16 %v208
  %v2769 = vunpack.c.l.b16 %v209
  %v2770 = vunpack.c.l.b16 %v210
  %v2771 = vunpack.c.l.b16 %v211
  %v2772 = vunpack.c.l.b16 %v212
  %v2773 = vunpack.c.l.b16 %v213
  %v2774 = vunpack.c.l.b16 %v214
  %v2775 = vunpack.c.l.b16 %v215
  %v2776 = vunpack.c.l.b16 %v216
  %v2777 = vunpack.c.l.b16 %v217
  %v2778 = vunpack.c.l.b16 %v218
  %v2779 = vunpack.c.l.b16 %v219
  %v2780 = vunpack.c.l.b16 %v220
  %v2781 = vunpack.c.l.b16 %v221
  %v2782 = vunpack.c.l.b16 %v222
  %v2783 = vunpack.c.l.b16 %v223
  %v2784 = vunpack.c.l.b16 %v224
  %v2785 = vunpack.c.l.b16 %v225
  %v2786 = vunpack.c.l.b16 %v226
  %v2787 = vunpack.c.l.b16 %v227
  %v2788 = vunpack.c.l.b16 %v228
  %v2789 = vunpack.c.l.b16 %v229
  %v2790 = vunpack.c.l.b16 %v230
  %v2791 = vunpack.c.l.b16 %v231
  %v2792 = vunpack.c.l.b16 %v232
  %v2793 = vunpack.c.l.b16 %v233
  %v2794 = vunpack.c.l.b16 %v234
  %v2795 = vunpack.c.l.b16 %v235
  %v2796 = vunpack.c.l.b16 %v236
  %v2797 = vunpack.c.l.b16 %v237
  %v2798 = vunpack.c.l.b16 %v238
  %v2799 = vunpack.c.l.b16 %v239
  %v2800 = vunpack.c.l.b16 %v240
  %v2801 = vunpack.c.l.b16 %v241
  %v2802 = vunpack.c.l.b16 %v242
  %v2803 = vunpack.c.l.b16 %v243
  %v2804 = vunpack.c.l.b16 %v244
  %v2805 = vunpack.c.l.b16 %v245
  %v2806 = vunpack.c.l.b16 %v246
  %v2807 = vunpack.c.l.b16 %v247
  %v2808 = vunpack.c.l.b16 %v248
  %v2809 = vunpack.c.l.b16 %v249
  %v2810 = vunpack.c.l.b16 %v250
  %v2811 = vunpack.c.l.b16 %v251
  %v2812 = vunpack.c.l.b16 %v252
  %v2813 = vunpack.c.l.b16 %v253
  %v2814 = vunpack.c.l.b16 %v254
  %v2815 = vunpack.c.l.b16 %v255
  %v2816 = vunpack.c.l.b16 %v256
  %v2817 = vunpack.c.l.b16 %v257
  %v2818 = vunpack.c.l.b16 %v258
  %v2819 = vunpack.c.l.b16 %v259
  %v2820 = vunpack.c.l.b16 %v260
  %v2821 = vunpack.c.l.b16 %v261
  %v2822 = vunpack.c.l.b16 %v262
  %v2823 = vunpack.c.l.b16 %v263
  %v2824 = vunpack.c.l.b16 %v264
  %v2825 = vunpack.c.l.b16 %v265
  %v2826 = vunpack.c.l.b16 %v266
  %v2827 = vunpack.c.l.b16 %v267
  %v2828 = vunpack.c.l.b16 %v268
  %v2829 = vunpack.c.l.b16 %v269
  %v2830 = vunpack.c.l.b16 %v270
  %v2831 = vunpack.c.l.b16 %v271
  %v2832 = vunpack.c.l.b16 %v272
  %v2833 = vunpack.c.l.b16 %v273
  %v2834 = vunpack.c.l.b16 %v274
  %v2835 = vunpack.c.l.b16 %v275
  %v2836 = vunpack.c.l.b16 %v276
  %v2837 = vunpack.c.l.b16 %v277
  %v2838 = vunpack.c.l.b16 %v278
  %v2839 = vunpack.c.l.b16 %v279
  %v2840 = vunpack.c.l.b16 %v280
  %v2841 = vunpack.c.l.b16 %v281
  %v2842 = vunpack.c.l.b16 %v282
  %v2843 = vunpack.c.l.b16 %v283
  %v2844 = vunpack.c.l.b16 %v284
  %v2845 = vunpack.c.l.b16 %v285
  %v2846 = vunpack.c.l.b16 %v286
  %v2847 = vunpack.c.l.b16 %v287
  %v2848 = vunpack.c.l.b16 %v288
  %v2849 = vunpack.c.l.b16 %v289
  %v2850 = vunpack.c.l.b16 %v290
  %v2851 = vunpack.c.l.b16 %v291
  %v2852 = vunpack.c.l.b16 %v292
  %v2853 = vunpack.c.l.b16 %v293
  %v2854 = vunpack.c.l.b16 %v294
  %v2855 = vunpack.c.l.b16 %v295
  %v2856 = vunpack.c.l.b16 %v296
  %v2857 = vunpack.c.l.b16 %v297
  %v2858 = vunpack.c.l.b16 %v298
  %v2859 = vunpack.c.l.b16 %v299
  %v2860 = vunpack.c.l.b16 %v300
  %v2861 = vunpack.c.l.b16 %v301
  %v2862 = vunpack.c.l.b16 %v302
  %v2863 = vunpack.c.l.b16 %v303
  %v2864 = vunpack.c.l.b16 %v304
  %v2865 = vunpack.c.l.b16 %v305
  %v2866 = vunpack.c.l.b16 %v306
  %v2867 = vunpack.c.l.b16 %v307
  %v2868 = vunpack.c.l.b16 %v308
  %v2869 = vunpack.c.l.b16 %v309
  %v2870 = vunpack.c.l.b16 %v310
  %v2871 = vunpack.c.l.b16 %v311
  %v2872 = vunpack.c.l.b16 %v312
  %v2873 = vunpack.c.l.b16 %v313
  %v2874 = vunpack.c.l.b16 %v314
  %v2875 = vunpack.c.l.b16 %v315
  %v2876 = vunpack.c.l.b16 %v316
  %v2877 = vunpack.c.l.b16 %v317
  %v2878 = vunpack.c.l.b16 %v318
  %v2879 = vunpack.c.l.b16 %v319
  %v2880 = vunpack.c.l.b16 %v320
  %v2881 = vunpack.c.l.b16 %v321
  %v2882 = vunpack.c.l.b16 %v322
  %v2883 = vunpack.c.l.b16 %v323
  %v2884 = vunpack.c.l.b16 %v324
  %v2885 = vunpack.c.l.b16 %v325
  %v2886 = vunpack.c.l.b16 %v326
  %v2887 = vunpack.c.l.b16 %v327
  %v2888 = vunpack.c.l.b16 %v328
  %v2889 = vunpack.c.l.b16 %v329
  %v2890 = vunpack.c.l.b16 %v330
  %v2891 = vunpack.c.l.b16 %v331
  %v2892 = vunpack.c.l.b16 %v332
  %v2893 = vunpack.c.l.b16 %v333
  %v2894 = vunpack.c.l.b16 %v334
  %v2895 = vunpack.c.l.b16 %v335
  %v2896 = vunpack.c.l.b16 %v336
  %v2897 = vunpack.c.l.b16 %v337
  %v2898 = vunpack.c.l.b16 %v338
  %v2899 = vunpack.c.l.b16 %v339
  %v2900 = vunpack.c.l.b16 %v340
  %v2901 = vunpack.c.l.b16 %v341
  %v2902 = vunpack.c.l.b16 %v342
  %v2903 = vunpack.c.l.b16 %v343
  %v2904 = vunpack.c.l.b16 %v344
  %v2905 = vunpack.c.l.b16 %v345
  %v2906 = vunpack.c.l.b16 %v346
  %v2907 = vunpack.c.l.b16 %v347
  %v2908 = vunpack.c.l.b16 %v348
  %v2909 = vunpack.c.l.b16 %v349
  %v2910 = vunpack.c.l.b16 %v350
  %v2911 = vunpack.c.l.b16 %v351
  %v2912 = vunpack.c.l.b16 %v352
  %v2913 = vunpack.c.l.b16 %v353
  %v2914 = vunpack.c.l.b16 %v354
  %v2915 = vunpack.c.l.b16 %v355
  %v2916 = vunpack.c.l.b16 %v356
  %v2917 = vunpack.c.l.b16 %v357
  %v2918 = vunpack.c.l.b16 %v358
  %v2919 = vunpack.c.l.b16 %v359
  %v2920 = vunpack.c.l.b16 %v360
  %v2921 = vunpack.c.l.b16 %v361
  %v2922 = vunpack.c.l.b16 %v362
  %v2923 = vunpack.c.l.b16 %v363
  %v2924 = vunpack.c.l.b16 %v364
  %v2925 = vunpack.c.l.b16 %v365
  %v2926 = vunpack.c.l.b16 %v366
  %v2927 = vunpack.c.l.b16 %v367
  %v2928 = vunpack.c.l.b16 %v368
  %v2929 = vunpack.c.l.b16 %v369
  %v2930 = vunpack.c.l.b16 %v370
  %v2931 = vunpack.c.l.b16 %v371
  %v2932 = vunpack.c.l.b16 %v372
  %v2933 = vunpack.c.l.b16 %v373
  %v2934 = vunpack.c.l.b16 %v374
  %v2935 = vunpack.c.l.b16 %v375
  %v2936 = vunpack.c.l.b16 %v376
  %v2937 = vunpack.c.l.b16 %v377
  %v2938 = vunpack.c.l.b16 %v378
  %v2939 = vunpack.c.l.b16 %v379
  %v2940 = vunpack.c.l.b16 %v380
  %v2941 = vunpack.c.l.b16 %v381
  %v2942 = vunpack.c.l.b16 %v382
  %v2943 = vunpack.c.l.b16 %v383
  %v2944 = vunpack.c.l.b16 %v384
  %v2945 = vunpack.c.l.b16 %v385
  %v2946 = vunpack.c.l.b16 %v386
  %v2947 = vunpack.c.l.b16 %v387
  %v2948 = vunpack.c.l.b16 %v388
  %v2949 = vunpack.c.l.b16 %v389
  %v2950 = vunpack.c.l.b16 %v390
  %v2951 = vunpack.c.l.b16 %v391
  %v2952 = vunpack.c.l.b16 %v392
  %v2953 = vunpack.c.l.b16 %v393
  %v2954 = vunpack.c.l.b16 %v394
  %v2955 = vunpack.c.l.b16 %v395
  %v2956 = vunpack.c.l.b16 %v396
  %v2957 = vunpack.c.l.b16 %v397
  %v2958 = vunpack.c.l.b16 %v398
  %v2959 = vunpack.c.l.b16 %v399
  %v2960 = vunpack.c.l.b16 %v400
  %v2961 = vunpack.c.l.b16 %v401
  %v2962 = vunpack.c.l.b16 %v402
  %v2963 = vunpack.c.l.b16 %v403
  %v2964 = vunpack.c.l.b16 %v404
  %v2965 = vunpack.c.l.b16 %v405
  %v2966 = vunpack.c.l.b16 %v406
  %v2967 = vunpack.c.l.b16 %v407
  %v2968 = vunpack.c.l.b16 %v408
  %v2969 = vunpack.c.l.b16 %v409
  %v2970 = vunpack.c.l.b16 %v410
  %v2971 = vunpack.c.l.b16 %v411
  %v2972 = vunpack.c.l.b16 %v412
  %v2973 = vunpack.c.l.b16 %v413
  %v2974 = vunpack.c.l.b16 %v414
  %v2975 = vunpack.c.l.b16 %v415
  %v2976 = vunpack.c.l.b16 %v416
  %v2977 = vunpack.c.l.b16 %v417
  %v2978 = vunpack.c.l.b16 %v418
  %v2979 = vunpack.c.l.b16 %v419
  %v2980 = vunpack.c.l.b16 %v420
  %v2981 = vunpack.c.l.b16 %v421
  %v2982 = vunpack.c.l.b16 %v422
  %v2983 = vunpack.c.l.b16 %v423
  %v2984 = vunpack.c.l.b16 %v424
  %v2985 = vunpack.c.l.b16 %v425
  %v2986 = vunpack.c.l.b16 %v426
  %v2987 = vunpack.c.l.b16 %v427
  %v2988 = vunpack.c.l.b16 %v428
  %v2989 = vunpack.c.l.b16 %v429
  %v2990 = vunpack.c.l.b16 %v430
  %v2991 = vunpack.c.l.b16 %v431
  %v2992 = vunpack.c.l.b16 %v432
  %v2993 = vunpack.c.l.b16 %v433
  %v2994 = vunpack.c.l.b16 %v434
  %v2995 = vunpack.c.l.b16 %v435
  %v2996 = vunpack.c.l.b16 %v436
  %v2997 = vunpack.c.l.b16 %v437
  %v2998 = vunpack.c.l.b16 %v438
  %v2999 = vunpack.c.l.b16 %v439
  %v3000 = vunpack.c.l.b16 %v440
  %v3001 = vunpack.c.l.b16 %v441
  %v3002 = vunpack.c.l.b16 %v442
  %v3003 = vunpack.c.l.b16 %v443
  %v3004 = vunpack.c.l.b16 %v444
  %v3005 = vunpack.c.l.b16 %v445
  %v3006 = vunpack.c.l.b16 %v446
  %v3007 = vunpack.c.l.b16 %v447
  %v3008 = vunpack.c.l.b16 %v448
  %v3009 = vunpack.c.l.b16 %v449
  %v3010 = vunpack.c.l.b16 %v450
  %v3011 = vunpack.c.l.b16 %v451
  %v3012 = vunpack.c.l.b16 %v452
  %v3013 = vunpack.c.l.b16 %v453
  %v3014 = vunpack.c.l.b16 %v454
  %v3015 = vunpack.c.l.b16 %v455
  %v3016 = vunpack.c.l.b16 %v456
  %v3017 = vunpack.c.l.b16 %v457
  %v3018 = vunpack.c.l.b16 %v458
  %v3019 = vunpack.c.l.b16 %v459
  %v3020 = vunpack.c.l.b16 %v460
  %v3021 = vunpack.c.l.b16 %v461
  %v3022 = vunpack.c.l.b16 %v462
  %v3023 = vunpack.c.l.b16 %v463
  %v3024 = vunpack.c.l.b16 %v464
  %v3025 = vunpack.c.l.b16 %v465
  %v3026 = vunpack.c.l.b16 %v466
  %v3027 = vunpack.c.l.b16 %v467
  %v3028 = vunpack.c.l.b16 %v468
  %v3029 = vunpack.c.l.b16 %v469
  %v3030 = vunpack.c.l.b16 %v470
  %v3031 = vunpack.c.l.b16 %v471
  %v3032 = vunpack.c.l.b16 %v472
  %v3033 = vunpack.c.l.b16 %v473
  %v3034 = vunpack.c.l.b16 %v474
  %v3035 = vunpack.c.l.b16 %v475
  %v3036 = vunpack.c.l.b16 %v476
  %v3037 = vunpack.c.l.b16 %v477
  %v3038 = vunpack.c.l.b16 %v478
  %v3039 = vunpack.c.l.b16 %v479
  %v3040 = vunpack.c.l.b16 %v480
  %v3041 = vunpack.c.l.b16 %v481
  %v3042 = vunpack.c.l.b16 %v482
  %v3043 = vunpack.c.l.b16 %v483
  %v3044 = vunpack.c.l.b16 %v484
  %v3045 = vunpack.c.l.b16 %v485
  %v3046 = vunpack.c.l.b16 %v486
  %v3047 = vunpack.c.l.b16 %v487
  %v3048 = vunpack.c.l.b16 %v488
  %v3049 = vunpack.c.l.b16 %v489
  %v3050 = vunpack.c.l.b16 %v490
  %v3051 = vunpack.c.l.b16 %v491
  %v3052 = vunpack.c.l.b16 %v492
  %v3053 = vunpack.c.l.b16 %v493
  %v3054 = vunpack.c.l.b16 %v494
  %v3055 = vunpack.c.l.b16 %v495
  %v3056 = vunpack.c.l.b16 %v496
  %v3057 = vunpack.c.l.b16 %v497
  %v3058 = vunpack.c.l.b16 %v498
  %v3059 = vunpack.c.l.b16 %v499
  %v3060 = vunpack.c.l.b16 %v500
  %v3061 = vunpack.c.l.b16 %v501
  %v3062 = vunpack.c.l.b16 %v502
  %v3063 = vunpack.c.l.b16 %v503
  %v3064 = vunpack.c.l.b16 %v504
  %v3065 = vunpack.c.l.b16 %v505
  %v3066 = vunpack.c.l.b16 %v506
  %v3067 = vunpack.c.l.b16 %v507
  %v3068 = vunpack.c.l.b16 %v508
  %v3069 = vunpack.c.l.b16 %v509
  %v3070 = vunpack.c.l.b16 %v510
  %v3071 = vunpack.c.l.b16 %v511
  %v3072 = vunpack.c.l.b16 %v512
  %v3073 = vunpack.c.l.b16 %v513
  %v3074 = vunpack.c.l.b16 %v514
  %v3075 = vunpack.c.l.b16 %v515
  %v3076 = vunpack.c.l.b16 %v516
  %v3077 = vunpack.c.l.b16 %v517
  %v3078 = vunpack.c.l.b16 %v518
  %v3079 = vunpack.c.l.b16 %v519
  %v3080 = vunpack.c.l.b16 %v520
  %v3081 = vunpack.c.l.b16 %v521
  %v3082 = vunpack.c.l.b16 %v522
  %v3083 = vunpack.c.l.b16 %v523
  %v3084 = vunpack.c.l.b16 %v524
  %v3085 = vunpack.c.l.b16 %v525
  %v3086 = vunpack.c.l.b16 %v526
  %v3087 = vunpack.c.l.b16 %v527
  %v3088 = vunpack.c.l.b16 %v528
  %v3089 = vunpack.c.l.b16 %v529
  %v3090 = vunpack.c.l.b16 %v530
  %v3091 = vunpack.c.l.b16 %v531
  %v3092 = vunpack.c.l.b16 %v532
  %v3093 = vunpack.c.l.b16 %v533
  %v3094 = vunpack.c.l.b16 %v534
  %v3095 = vunpack.c.l.b16 %v535
  %v3096 = vunpack.c.l.b16 %v536
  %v3097 = vunpack.c.l.b16 %v537
  %v3098 = vunpack.c.l.b16 %v538
  %v3099 = vunpack.c.l.b16 %v539
  %v3100 = vunpack.c.l.b16 %v540
  %v3101 = vunpack.c.l.b16 %v541
  %v3102 = vunpack.c.l.b16 %v542
  %v3103 = vunpack.c.l.b16 %v543
  %v3104 = vunpack.c.l.b16 %v544
  %v3105 = vunpack.c.l.b16 %v545
  %v3106 = vunpack.c.l.b16 %v546
  %v3107 = vunpack.c.l.b16 %v547
  %v3108 = vunpack.c.l.b16 %v548
  %v3109 = vunpack.c.l.b16 %v549
  %v3110 = vunpack.c.l.b16 %v550
  %v3111 = vunpack.c.l.b16 %v551
  %v3112 = vunpack.c.l.b16 %v552
  %v3113 = vunpack.c.l.b16 %v553
  %v3114 = vunpack.c.l.b16 %v554
  %v3115 = vunpack.c.l.b16 %v555
  %v3116 = vunpack.c.l.b16 %v556
  %v3117 = vunpack.c.l.b16 %v557
  %v3118 = vunpack.c.l.b16 %v558
  %v3119 = vunpack.c.l.b16 %v559
  %v3120 = vunpack.c.l.b16 %v560
  %v3121 = vunpack.c.l.b16 %v561
  %v3122 = vunpack.c.l.b16 %v562
  %v3123 = vunpack.c.l.b16 %v563
  %v3124 = vunpack.c.l.b16 %v564
  %v3125 = vunpack.c.l.b16 %v565
  %v3126 = vunpack.c.l.b16 %v566
  %v3127 = vunpack.c.l.b16 %v567
  %v3128 = vunpack.c.l.b16 %v568
  %v3129 = vunpack.c.l.b16 %v569
  %v3130 = vunpack.c.l.b16 %v570
  %v3131 = vunpack.c.l.b16 %v571
  %v3132 = vunpack.c.l.b16 %v572
  %v3133 = vunpack.c.l.b16 %v573
  %v3134 = vunpack.c.l.b16 %v574
  %v3135 = vunpack.c.l.b16 %v575
  %v3136 = vunpack.c.l.b16 %v576
  %v3137 = vunpack.c.l.b16 %v577
  %v3138 = vunpack.c.l.b16 %v578
  %v3139 = vunpack.c.l.b16 %v579
  %v3140 = vunpack.c.l.b16 %v580
  %v3141 = vunpack.c.l.b16 %v581
  %v3142 = vunpack.c.l.b16 %v582
  %v3143 = vunpack.c.l.b16 %v583
  %v3144 = vunpack.c.l.b16 %v584
  %v3145 = vunpack.c.l.b16 %v585
  %v3146 = vunpack.c.l.b16 %v586
  %v3147 = vunpack.c.l.b16 %v587
  %v3148 = vunpack.c.l.b16 %v588
  %v3149 = vunpack.c.l.b16 %v589
  %v3150 = vunpack.c.l.b16 %v590
  %v3151 = vunpack.c.l.b16 %v591
  %v3152 = vunpack.c.l.b16 %v592
  %v3153 = vunpack.c.l.b16 %v593
  %v3154 = vunpack.c.l.b16 %v594
  %v3155 = vunpack.c.l.b16 %v595
  %v3156 = vunpack.c.l.b16 %v596
  %v3157 = vunpack.c.l.b16 %v597
  %v3158 = vunpack.c.l.b16 %v598
  %v3159 = vunpack.c.l.b16 %v599
  %v3160 = vunpack.c.l.b16 %v600
  %v3161 = vunpack.c.l.b16 %v601
  %v3162 = vunpack.c.l.b16 %v602
  %v3163 = vunpack.c.l.b16 %v603
  %v3164 = vunpack.c.l.b16 %v604
  %v3165 = vunpack.c.l.b16 %v605
  %v3166 = vunpack.c.l.b16 %v606
  %v3167 = vunpack.c.l.b16 %v607
  %v3168 = vunpack.c.l.b16 %v608
  %v3169 = vunpack.c.l.b16 %v609
  %v3170 = vunpack.c.l.b16 %v610
  %v3171 = vunpack.c.l.b16 %v611
  %v3172 = vunpack.c.l.b16 %v612
  %v3173 = vunpack.c.l.b16 %v613
  %v3174 = vunpack.c.l.b16 %v614
  %v3175 = vunpack.c.l.b16 %v615
  %v3176 = vunpack.c.l.b16 %v616
  %v3177 = vunpack.c.l.b16 %v617
  %v3178 = vunpack.c.l.b16 %v618
  %v3179 = vunpack.c.l.b16 %v619
  %v3180 = vunpack.c.l.b16 %v620
  %v3181 = vunpack.c.l.b16 %v621
  %v3182 = vunpack.c.l.b16 %v622
  %v3183 = vunpack.c.l.b16 %v623
  %v3184 = vunpack.c.l.b16 %v624
  %v3185 = vunpack.c.l.b16 %v625
  %v3186 = vunpack.c.l.b16 %v626
  %v3187 = vunpack.c.l.b16 %v627
  %v3188 = vunpack.c.l.b16 %v628
  %v3189 = vunpack.c.l.b16 %v629
  %v3190 = vunpack.c.l.b16 %v630
  %v3191 = vunpack.c.l.b16 %v631
  %v3192 = vunpack.c.l.b16 %v632
  %v3193 = vunpack.c.l.b16 %v633
  %v3194 = vunpack.c.l.b16 %v634
  %v3195 = vunpack.c.l.b16 %v635
  %v3196 = vunpack.c.l.b16 %v636
  %v3197 = vunpack.c.l.b16 %v637
  %v3198 = vunpack.c.l.b16 %v638
  %v3199 = vunpack.c.l.b16 %v639
  %v3200 = vunpack.c.l.b16 %v640
  %v3201 = vunpack.c.l.b16 %v641
  %v3202 = vunpack.c.l.b16 %v642
  %v3203 = vunpack.c.l.b16 %v643
  %v3204 = vunpack.c.l.b16 %v644
  %v3205 = vunpack.c.l.b16 %v645
  %v3206 = vunpack.c.l.b16 %v646
  %v3207 = vunpack.c.l.b16 %v647
  %v3208 = vunpack.c.l.b16 %v648
  %v3209 = vunpack.c.l.b16 %v649
  %v3210 = vunpack.c.l.b16 %v650
  %v3211 = vunpack.c.l.b16 %v651
  %v3212 = vunpack.c.l.b16 %v652
  %v3213 = vunpack.c.l.b16 %v653
  %v3214 = vunpack.c.l.b16 %v654
  %v3215 = vunpack.c.l.b16 %v655
  %v3216 = vunpack.c.l.b16 %v656
  %v3217 = vunpack.c.l.b16 %v657
  %v3218 = vunpack.c.l.b16 %v658
  %v3219 = vunpack.c.l.b16 %v659
  %v3220 = vunpack.c.l.b16 %v660
  %v3221 = vunpack.c.l.b16 %v661
  %v3222 = vunpack.c.l.b16 %v662
  %v3223 = vunpack.c.l.b16 %v663
  %v3224 = vunpack.c.l.b16 %v664
  %v3225 = vunpack.c.l.b16 %v665
  %v3226 = vunpack.c.l.b16 %v666
  %v3227 = vunpack.c.l.b16 %v667
  %v3228 = vunpack.c.l.b16 %v668
  %v3229 = vunpack.c.l.b16 %v669
  %v3230 = vunpack.c.l.b16 %v670
  %v3231 = vunpack.c.l.b16 %v671
  %v3232 = vunpack.c.l.b16 %v672
  %v3233 = vunpack.c.l.b16 %v673
  %v3234 = vunpack.c.l.b16 %v674
  %v3235 = vunpack.c.l.b16 %v675
  %v3236 = vunpack.c.l.b16 %v676
  %v3237 = vunpack.c.l.b16 %v677
  %v3238 = vunpack.c.l.b16 %v678
  %v3239 = vunpack.c.l.b16 %v679
  %v3240 = vunpack.c.l.b16 %v680
  %v3241 = vunpack.c.l.b16 %v681
  %v3242 = vunpack.c.l.b16 %v682
  %v3243 = vunpack.c.l.b16 %v683
  %v3244 = vunpack.c.l.b16 %v684
  %v3245 = vunpack.c.l.b16 %v685
  %v3246 = vunpack.c.l.b16 %v686
  %v3247 = vunpack.c.l.b16 %v687
  %v3248 = vunpack.c.l.b16 %v688
  %v3249 = vunpack.c.l.b16 %v689
  %v3250 = vunpack.c.l.b16 %v690
  %v3251 = vunpack.c.l.b16 %v691
  %v3252 = vunpack.c.l.b16 %v692
  %v3253 = vunpack.c.l.b16 %v693
  %v3254 = vunpack.c.l.b16 %v694
  %v3255 = vunpack.c.l.b16 %v695
  %v3256 = vunpack.c.l.b16 %v696
  %v3257 = vunpack.c.l.b16 %v697
  %v3258 = vunpack.c.l.b16 %v698
  %v3259 = vunpack.c.l.b16 %v699
  %v3260 = vunpack.c.l.b16 %v700
  %v3261 = vunpack.c.l.b16 %v701
  %v3262 = vunpack.c.l.b16 %v702
  %v3263 = vunpack.c.l.b16 %v703
  %v3264 = vunpack.c.l.b16 %v704
  %v3265 = vunpack.c.l.b16 %v705
  %v3266 = vunpack.c.l.b16 %v706
  %v3267 = vunpack.c.l.b16 %v707
  %v3268 = vunpack.c.l.b16 %v708
  %v3269 = vunpack.c.l.b16 %v709
  %v3270 = vunpack.c.l.b16 %v710
  %v3271 = vunpack.c.l.b16 %v711
  %v3272 = vunpack.c.l.b16 %v712
  %v3273 = vunpack.c.l.b16 %v713
  %v3274 = vunpack.c.l.b16 %v714
  %v3275 = vunpack.c.l.b16 %v715
  %v3276 = vunpack.c.l.b16 %v716
  %v3277 = vunpack.c.l.b16 %v717
  %v3278 = vunpack.c.l.b16 %v718
  %v3279 = vunpack.c.l.b16 %v719
  %v3280 = vunpack.c.l.b16 %v720
  %v3281 = vunpack.c.l.b16 %v721
  %v3282 = vunpack.c.l.b16 %v722
  %v3283 = vunpack.c.l.b16 %v723
  %v3284 = vunpack.c.l.b16 %v724
  %v3285 = vunpack.c.l.b16 %v725
  %v3286 = vunpack.c.l.b16 %v726
  %v3287 = vunpack.c.l.b16 %v727
  %v3288 = vunpack.c.l.b16 %v728
  %v3289 = vunpack.c.l.b16 %v729
  %v3290 = vunpack.c.l.b16 %v730
  %v3291 = vunpack.c.l.b16 %v731
  %v3292 = vunpack.c.l.b16 %v732
  %v3293 = vunpack.c.l.b16 %v733
  %v3294 = vunpack.c.l.b16 %v734
  %v3295 = vunpack.c.l.b16 %v735
  %v3296 = vunpack.c.l.b16 %v736
  %v3297 = vunpack.c.l.b16 %v737
  %v3298 = vunpack.c.l.b16 %v738
  %v3299 = vunpack.c.l.b16 %v739
  %v3300 = vunpack.c.l.b16 %v740
  %v3301 = vunpack.c.l.b16 %v741
  %v3302 = vunpack.c.l.b16 %v742
  %v3303 = vunpack.c.l.b16 %v743
  %v3304 = vunpack.c.l.b16 %v744
  %v3305 = vunpack.c.l.b16 %v745
  %v3306 = vunpack.c.l.b16 %v746
  %v3307 = vunpack.c.l.b16 %v747
  %v3308 = vunpack.c.l.b16 %v748
  %v3309 = vunpack.c.l.b16 %v749
  %v3310 = vunpack.c.l.b16 %v750
  %v3311 = vunpack.c.l.b16 %v751
  %v3312 = vunpack.c.l.b16 %v752
  %v3313 = vunpack.c.l.b16 %v753
  %v3314 = vunpack.c.l.b16 %v754
  %v3315 = vunpack.c.l.b16 %v755
  %v3316 = vunpack.c.l.b16 %v756
  %v3317 = vunpack.c.l.b16 %v757
  %v3318 = vunpack.c.l.b16 %v758
  %v3319 = vunpack.c.l.b16 %v759
  %v3320 = vunpack.c.l.b16 %v760
  %v3321 = vunpack.c.l.b16 %v761
  %v3322 = vunpack.c.l.b16 %v762
  %v3323 = vunpack.c.l.b16 %v763
  %v3324 = vunpack.c.l.b16 %v764
  %v3325 = vunpack.c.l.b16 %v765
  %v3326 = vunpack.c.l.b16 %v766
  %v3327 = vunpack.c.l.b16 %v767
  %v3328 = vunpack.c.l.b16 %v768
  %v3329 = vunpack.c.l.b16 %v769
  %v3330 = vunpack.c.l.b16 %v770
  %v3331 = vunpack.c.l.b16 %v771
  %v3332 = vunpack.c.l.b16 %v772
  %v3333 = vunpack.c.l.b16 %v773
  %v3334 = vunpack.c.l.b16 %v774
  %v3335 = vunpack.c.l.b16 %v775
  %v3336 = vunpack.c.l.b16 %v776
  %v3337 = vunpack.c.l.b16 %v777
  %v3338 = vunpack.c.l.b16 %v778
  %v3339 = vunpack.c.l.b16 %v779
  %v3340 = vunpack.c.l.b16 %v780
  %v3341 = vunpack.c.l.b16 %v781
  %v3342 = vunpack.c.l.b16 %v782
  %v3343 = vunpack.c.l.b16 %v783
  %v3344 = vunpack.c.l.b16 %v784
  %v3345 = vunpack.c.l.b16 %v785
  %v3346 = vunpack.c.l.b16 %v786
  %v3347 = vunpack.c.l.b16 %v787
  %v3348 = vunpack.c.l.b16 %v788
  %v3349 = vunpack.c.l.b16 %v789
  %v3350 = vunpack.c.l.b16 %v790
  %v3351 = vunpack.c.l.b16 %v791
  %v3352 = vunpack.c.l.b16 %v792
  %v3353 = vunpack.c.l.b16 %v793
  %v3354 = vunpack.c.l.b16 %v794
  %v3355 = vunpack.c.l.b16 %v795
  %v3356 = vunpack.c.l.b16 %v796
  %v3357 = vunpack.c.l.b16 %v797
  %v3358 = vunpack.c.l.b16 %v798
  %v3359 = vunpack.c.l.b16 %v799
  %v3360 = vunpack.c.l.b16 %v800
  %v3361 = vunpack.c.l.b16 %v801
  %v3362 = vunpack.c.l.b16 %v802
  %v3363 = vunpack.c.l.b16 %v803
  %v3364 = vunpack.c.l.b16 %v804
  %v3365 = vunpack.c.l.b16 %v805
  %v3366 = vunpack.c.l.b16 %v806
  %v3367 = vunpack.c.l.b16 %v807
  %v3368 = vunpack.c.l.b16 %v808
  %v3369 = vunpack.c.l.b16 %v809
  %v3370 = vunpack.c.l.b16 %v810
  %v3371 = vunpack.c.l.b16 %v811
  %v3372 = vunpack.c.l.b16 %v812
  %v3373 = vunpack.c.l.b16 %v813
  %v3374 = vunpack.c.l.b16 %v814
  %v3375 = vunpack.c.l.b16 %v815
  %v3376 = vunpack.c.l.b16 %v816
  %v3377 = vunpack.c.l.b16 %v817
  %v3378 = vunpack.c.l.b16 %v818
  %v3379 = vunpack.c.l.b16 %v819
  %v3380 = vunpack.c.l.b16 %v820
  %v3381 = vunpack.c.l.b16 %v821
  %v3382 = vunpack.c.l.b16 %v822
  %v3383 = vunpack.c.l.b16 %v823
  %v3384 = vunpack.c.l.b16 %v824
  %v3385 = vunpack.c.l.b16 %v825
  %v3386 = vunpack.c.l.b16 %v826
  %v3387 = vunpack.c.l.b16 %v827
  %v3388 = vunpack.c.l.b16 %v828
  %v3389 = vunpack.c.l.b16 %v829
  %v3390 = vunpack.c.l.b16 %v830
  %v3391 = vunpack.c.l.b16 %v831
  %v3392 = vunpack.c.l.b16 %v832
  %v3393 = vunpack.c.l.b16 %v833
  %v3394 = vunpack.c.l.b16 %v834
  %v3395 = vunpack.c.l.b16 %v835
  %v3396 = vunpack.c.l.b16 %v836
  %v3397 = vunpack.c.l.b16 %v837
  %v3398 = vunpack.c.l.b16 %v838
  %v3399 = vunpack.c.l.b16 %v839
  %v3400 = vunpack.c.l.b16 %v840
  %v3401 = vunpack.c.l.b16 %v841
  %v3402 = vunpack.c.l.b16 %v842
  %v3403 = vunpack.c.l.b16 %v843
  %v3404 = vunpack.c.l.b16 %v844
  %v3405 = vunpack.c.l.b16 %v845
  %v3406 = vunpack.c.l.b16 %v846
  %v3407 = vunpack.c.l.b16 %v847
  %v3408 = vunpack.c.l.b16 %v848
  %v3409 = vunpack.c.l.b16 %v849
  %v3410 = vunpack.c.l.b16 %v850
  %v3411 = vunpack.c.l.b16 %v851
  %v3412 = vunpack.c.l.b16 %v852
  %v3413 = vunpack.c.l.b16 %v853
  %v3414 = vunpack.c.l.b16 %v854
  %v3415 = vunpack.c.l.b16 %v855
  %v3416 = vunpack.c.l.b16 %v856
  %v3417 = vunpack.c.l.b16 %v857
  %v3418 = vunpack.c.l.b16 %v858
  %v3419 = vunpack.c.l.b16 %v859
  %v3420 = vunpack.c.l.b16 %v860
  %v3421 = vunpack.c.l.b16 %v861
  %v3422 = vunpack.c.l.b16 %v862
  %v3423 = vunpack.c.l.b16 %v863
  %v3424 = vunpack.c.l.b16 %v864
  %v3425 = vunpack.c.l.b16 %v865
  %v3426 = vunpack.c.l.b16 %v866
  %v3427 = vunpack.c.l.b16 %v867
  %v3428 = vunpack.c.l.b16 %v868
  %v3429 = vunpack.c.l.b16 %v869
  %v3430 = vunpack.c.l.b16 %v870
  %v3431 = vunpack.c.l.b16 %v871
  %v3432 = vunpack.c.l.b16 %v872
  %v3433 = vunpack.c.l.b16 %v873
  %v3434 = vunpack.c.l.b16 %v874
  %v3435 = vunpack.c.l.b16 %v875
  %v3436 = vunpack.c.l.b16 %v876
  %v3437 = vunpack.c.l.b16 %v877
  %v3438 = vunpack.c.l.b16 %v878
  %v3439 = vunpack.c.l.b16 %v879
  %v3440 = vunpack.c.l.b16 %v880
  %v3441 = vunpack.c.l.b16 %v881
  %v3442 = vunpack.c.l.b16 %v882
  %v3443 = vunpack.c.l.b16 %v883
  %v3444 = vunpack.c.l.b16 %v884
  %v3445 = vunpack.c.l.b16 %v885
  %v3446 = vunpack.c.l.b16 %v886
  %v3447 = vunpack.c.l.b16 %v887
  %v3448 = vunpack.c.l.b16 %v888
  %v3449 = vunpack.c.l.b16 %v889
  %v3450 = vunpack.c.l.b16 %v890
  %v3451 = vunpack.c.l.b16 %v891
  %v3452 = vunpack.c.l.b16 %v892
  %v3453 = vunpack.c.l.b16 %v893
  %v3454 = vunpack.c.l.b16 %v894
  %v3455 = vunpack.c.l.b16 %v895
  %v3456 = vunpack.c.l.b16 %v896
  %v3457 = vunpack.c.l.b16 %v897
  %v3458 = vunpack.c.l.b16 %v898
  %v3459 = vunpack.c.l.b16 %v899
  %v3460 = vunpack.c.l.b16 %v900
  %v3461 = vunpack.c.l.b16 %v901
  %v3462 = vunpack.c.l.b16 %v902
  %v3463 = vunpack.c.l.b16 %v903
  %v3464 = vunpack.c.l.b16 %v904
  %v3465 = vunpack.c.l.b16 %v905
  %v3466 = vunpack.c.l.b16 %v906
  %v3467 = vunpack.c.l.b16 %v907
  %v3468 = vunpack.c.l.b16 %v908
  %v3469 = vunpack.c.l.b16 %v909
  %v3470 = vunpack.c.l.b16 %v910
  %v3471 = vunpack.c.l.b16 %v911
  %v3472 = vunpack.c.l.b16 %v912
  %v3473 = vunpack.c.l.b16 %v913
  %v3474 = vunpack.c.l.b16 %v914
  %v3475 = vunpack.c.l.b16 %v915
  %v3476 = vunpack.c.l.b16 %v916
  %v3477 = vunpack.c.l.b16 %v917
  %v3478 = vunpack.c.l.b16 %v918
  %v3479 = vunpack.c.l.b16 %v919
  %v3480 = vunpack.c.l.b16 %v920
  %v3481 = vunpack.c.l.b16 %v921
  %v3482 = vunpack.c.l.b16 %v922
  %v3483 = vunpack.c.l.b16 %v923
  %v3484 = vunpack.c.l.b16 %v924
  %v3485 = vunpack.c.l.b16 %v925
  %v3486 = vunpack.c.l.b16 %v926
  %v3487 = vunpack.c.l.b16 %v927
  %v3488 = vunpack.c.l.b16 %v928
  %v3489 = vunpack.c.l.b16 %v929
  %v3490 = vunpack.c.l.b16 %v930
  %v3491 = vunpack.c.l.b16 %v931
  %v3492 = vunpack.c.l.b16 %v932
  %v3493 = vunpack.c.l.b16 %v933
  %v3494 = vunpack.c.l.b16 %v934
  %v3495 = vunpack.c.l.b16 %v935
  %v3496 = vunpack.c.l.b16 %v936
  %v3497 = vunpack.c.l.b16 %v937
  %v3498 = vunpack.c.l.b16 %v938
  %v3499 = vunpack.c.l.b16 %v939
  %v3500 = vunpack.c.l.b16 %v940
  %v3501 = vunpack.c.l.b16 %v941
  %v3502 = vunpack.c.l.b16 %v942
  %v3503 = vunpack.c.l.b16 %v943
  %v3504 = vunpack.c.l.b16 %v944
  %v3505 = vunpack.c.l.b16 %v945
  %v3506 = vunpack.c.l.b16 %v946
  %v3507 = vunpack.c.l.b16 %v947
  %v3508 = vunpack.c.l.b16 %v948
  %v3509 = vunpack.c.l.b16 %v949
  %v3510 = vunpack.c.l.b16 %v950
  %v3511 = vunpack.c.l.b16 %v951
  %v3512 = vunpack.c.l.b16 %v952
  %v3513 = vunpack.c.l.b16 %v953
  %v3514 = vunpack.c.l.b16 %v954
  %v3515 = vunpack.c.l.b16 %v955
  %v3516 = vunpack.c.l.b16 %v956
  %v3517 = vunpack.c.l.b16 %v957
  %v3518 = vunpack.c.l.b16 %v958
  %v3519 = vunpack.c.l.b16 %v959
  %v3520 = vunpack.c.l.b16 %v960
  %v3521 = vunpack.c.l.b16 %v961
  %v3522 = vunpack.c.l.b16 %v962
  %v3523 = vunpack.c.l.b16 %v963
  %v3524 = vunpack.c.l.b16 %v964
  %v3525 = vunpack.c.l.b16 %v965
  %v3526 = vunpack.c.l.b16 %v966
  %v3527 = vunpack.c.l.b16 %v967
  %v3528 = vunpack.c.l.b16 %v968
  %v3529 = vunpack.c.l.b16 %v969
  %v3530 = vunpack.c.l.b16 %v970
  %v3531 = vunpack.c.l.b16 %v971
  %v3532 = vunpack.c.l.b16 %v972
  %v3533 = vunpack.c.l.b16 %v973
  %v3534 = vunpack.c.l.b16 %v974
  %v3535 = vunpack.c.l.b16 %v975
  %v3536 = vunpack.c.l.b16 %v976
  %v3537 = vunpack.c.l.b16 %v977
  %v3538 = vunpack.c.l.b16 %v978
  %v3539 = vunpack.c.l.b16 %v979
  %v3540 = vunpack.c.l.b16 %v980
  %v3541 = vunpack.c.l.b16 %v981
  %v3542 = vunpack.c.l.b16 %v982
  %v3543 = vunpack.c.l.b16 %v983
  %v3544 = vunpack.c.l.b16 %v984
  %v3545 = vunpack.c.l.b16 %v985
  %v3546 = vunpack.c.l.b16 %v986
  %v3547 = vunpack.c.l.b16 %v987
  %v3548 = vunpack.c.l.b16 %v988
  %v3549 = vunpack.c.l.b16 %v989
  %v3550 = vunpack.c.l.b16 %v990
  %v3551 = vunpack.c.l.b16 %v991
  %v3552 = vunpack.c.l.b16 %v992
  %v3553 = vunpack.c.l.b16 %v993
  %v3554 = vunpack.c.l.b16 %v994
  %v3555 = vunpack.c.l.b16 %v995
  %v3556 = vunpack.c.l.b16 %v996
  %v3557 = vunpack.c.l.b16 %v997
  %v3558 = vunpack.c.l.b16 %v998
  %v3559 = vunpack.c.l.b16 %v999
  %v3560 = vunpack.c.l.b16 %v1000
  %v3561 = vunpack.c.l.b16 %v1001
  %v3562 = vunpack.c.l.b16 %v1002
  %v3563 = vunpack.c.l.b16 %v1003
  %v3564 = vunpack.c.l.b16 %v1004
  %v3565 = vunpack.c.l.b16 %v1005
  %v3566 = vunpack.c.l.b16 %v1006
  %v3567 = vunpack.c.l.b16 %v1007
  %v3568 = vunpack.c.l.b16 %v1008
  %v3569 = vunpack.c.l.b16 %v1009
  %v3570 = vunpack.c.l.b16 %v1010
  %v3571 = vunpack.c.l.b16 %v1011
  %v3572 = vunpack.c.l.b16 %v1012
  %v3573 = vunpack.c.l.b16 %v1013
  %v3574 = vunpack.c.l.b16 %v1014
  %v3575 = vunpack.c.l.b16 %v1015
  %v3576 = vunpack.c.l.b16 %v1016
  %v3577 = vunpack.c.l.b16 %v1017
  %v3578 = vunpack.c.l.b16 %v1018
  %v3579 = vunpack.c.l.b16 %v1019
  %v3580 = vunpack.c.l.b16 %v1020
  %v3581 = vunpack.c.l.b16 %v1021
  %v3582 = vunpack.c.l.b16 %v1022
  %v3583 = vunpack.c.l.b16 %v1023
  %v3584 = vunpack.c.l.b16 %v1024
  %v3585 = vunpack.c.l.b16 %v1025
  %v3586 = vunpack.c.l.b16 %v1026
  %v3587 = vunpack.c.l.b16 %v1027
  %v3588 = vunpack.c.l.b16 %v1028
  %v3589 = vunpack.c.l.b16 %v1029
  %v3590 = vunpack.c.l.b16 %v1030
  %v3591 = vunpack.c.l.b16 %v1031
  %v3592 = vunpack.c.l.b16 %v1032
  %v3593 = vunpack.c.l.b16 %v1033
  %v3594 = vunpack.c.l.b16 %v1034
  %v3595 = vunpack.c.l.b16 %v1035
  %v3596 = vunpack.c.l.b16 %v1036
  %v3597 = vunpack.c.l.b16 %v1037
  %v3598 = vunpack.c.l.b16 %v1038
  %v3599 = vunpack.c.l.b16 %v1039
  %v3600 = vunpack.c.l.b16 %v1040
  %v3601 = vunpack.c.l.b16 %v1041
  %v3602 = vunpack.c.l.b16 %v1042
  %v3603 = vunpack.c.l.b16 %v1043
  %v3604 = vunpack.c.l.b16 %v1044
  %v3605 = vunpack.c.l.b16 %v1045
  %v3606 = vunpack.c.l.b16 %v1046
  %v3607 = vunpack.c.l.b16 %v1047
  %v3608 = vunpack.c.l.b16 %v1048
  %v3609 = vunpack.c.l.b16 %v1049
  %v3610 = vunpack.c.l.b16 %v1050
  %v3611 = vunpack.c.l.b16 %v1051
  %v3612 = vunpack.c.l.b16 %v1052
  %v3613 = vunpack.c.l.b16 %v1053
  %v3614 = vunpack.c.l.b16 %v1054
  %v3615 = vunpack.c.l.b16 %v1055
  %v3616 = vunpack.c.l.b16 %v1056
  %v3617 = vunpack.c.l.b16 %v1057
  %v3618 = vunpack.c.l.b16 %v1058
  %v3619 = vunpack.c.l.b16 %v1059
  %v3620 = vunpack.c.l.b16 %v1060
  %v3621 = vunpack.c.l.b16 %v1061
  %v3622 = vunpack.c.l.b16 %v1062
  %v3623 = vunpack.c.l.b16 %v1063
  %v3624 = vunpack.c.l.b16 %v1064
  %v3625 = vunpack.c.l.b16 %v1065
  %v3626 = vunpack.c.l.b16 %v1066
  %v3627 = vunpack.c.l.b16 %v1067
  %v3628 = vunpack.c.l.b16 %v1068
  %v3629 = vunpack.c.l.b16 %v1069
  %v3630 = vunpack.c.l.b16 %v1070
  %v3631 = vunpack.c.l.b16 %v1071
  %v3632 = vunpack.c.l.b16 %v1072
  %v3633 = vunpack.c.l.b16 %v1073
  %v3634 = vunpack.c.l.b16 %v1074
  %v3635 = vunpack.c.l.b16 %v1075
  %v3636 = vunpack.c.l.b16 %v1076
  %v3637 = vunpack.c.l.b16 %v1077
  %v3638 = vunpack.c.l.b16 %v1078
  %v3639 = vunpack.c.l.b16 %v1079
  %v3640 = vunpack.c.l.b16 %v1080
  %v3641 = vunpack.c.l.b16 %v1081
  %v3642 = vunpack.c.l.b16 %v1082
  %v3643 = vunpack.c.l.b16 %v1083
  %v3644 = vunpack.c.l.b16 %v1084
  %v3645 = vunpack.c.l.b16 %v1085
  %v3646 = vunpack.c.l.b16 %v1086
  %v3647 = vunpack.c.l.b16 %v1087
  %v3648 = vunpack.c.l.b16 %v1088
  %v3649 = vunpack.c.l.b16 %v1089
  %v3650 = vunpack.c.l.b16 %v1090
  %v3651 = vunpack.c.l.b16 %v1091
  %v3652 = vunpack.c.l.b16 %v1092
  %v3653 = vunpack.c.l.b16 %v1093
  %v3654 = vunpack.c.l.b16 %v1094
  %v3655 = vunpack.c.l.b16 %v1095
  %v3656 = vunpack.c.l.b16 %v1096
  %v3657 = vunpack.c.l.b16 %v1097
  %v3658 = vunpack.c.l.b16 %v1098
  %v3659 = vunpack.c.l.b16 %v1099
  %v3660 = vunpack.c.l.b16 %v1100
  %v3661 = vunpack.c.l.b16 %v1101
  %v3662 = vunpack.c.l.b16 %v1102
  %v3663 = vunpack.c.l.b16 %v1103
  %v3664 = vunpack.c.l.b16 %v1104
  %v3665 = vunpack.c.l.b16 %v1105
  %v3666 = vunpack.c.l.b16 %v1106
  %v3667 = vunpack.c.l.b16 %v1107
  %v3668 = vunpack.c.l.b16 %v1108
  %v3669 = vunpack.c.l.b16 %v1109
  %v3670 = vunpack.c.l.b16 %v1110
  %v3671 = vunpack.c.l.b16 %v1111
  %v3672 = vunpack.c.l.b16 %v1112
  %v3673 = vunpack.c.l.b16 %v1113
  %v3674 = vunpack.c.l.b16 %v1114
  %v3675 = vunpack.c.l.b16 %v1115
  %v3676 = vunpack.c.l.b16 %v1116
  %v3677 = vunpack.c.l.b16 %v1117
  %v3678 = vunpack.c.l.b16 %v1118
  %v3679 = vunpack.c.l.b16 %v1119
  %v3680 = vunpack.c.l.b16 %v1120
  %v3681 = vunpack.c.l.b16 %v1121
  %v3682 = vunpack.c.l.b16 %v1122
  %v3683 = vunpack.c.l.b16 %v1123
  %v3684 = vunpack.c.l.b16 %v1124
  %v3685 = vunpack.c.l.b16 %v1125
  %v3686 = vunpack.c.l.b16 %v1126
  %v3687 = vunpack.c.l.b16 %v1127
  %v3688 = vunpack.c.l.b16 %v1128
  %v3689 = vunpack.c.l.b16 %v1129
  %v3690 = vunpack.c.l.b16 %v1130
  %v3691 = vunpack.c.l.b16 %v1131
  %v3692 = vunpack.c.l.b16 %v1132
  %v3693 = vunpack.c.l.b16 %v1133
  %v3694 = vunpack.c.l.b16 %v1134
  %v3695 = vunpack.c.l.b16 %v1135
  %v3696 = vunpack.c.l.b16 %v1136
  %v3697 = vunpack.c.l.b16 %v1137
  %v3698 = vunpack.c.l.b16 %v1138
  %v3699 = vunpack.c.l.b16 %v1139
  %v3700 = vunpack.c.l.b16 %v1140
  %v3701 = vunpack.c.l.b16 %v1141
  %v3702 = vunpack.c.l.b16 %v1142
  %v3703 = vunpack.c.l.b16 %v1143
  %v3704 = vunpack.c.l.b16 %v1144
  %v3705 = vunpack.c.l.b16 %v1145
  %v3706 = vunpack.c.l.b16 %v1146
  %v3707 = vunpack.c.l.b16 %v1147
  %v3708 = vunpack.c.l.b16 %v1148
  %v3709 = vunpack.c.l.b16 %v1149
  %v3710 = vunpack.c.l.b16 %v1150
  %v3711 = vunpack.c.l.b16 %v1151
  %v3712 = vunpack.c.l.b16 %v1152
  %v3713 = vunpack.c.l.b16 %v1153
  %v3714 = vunpack.c.l.b16 %v1154
  %v3715 = vunpack.c.l.b16 %v1155
  %v3716 = vunpack.c.l.b16 %v1156
  %v3717 = vunpack.c.l.b16 %v1157
  %v3718 = vunpack.c.l.b16 %v1158
  %v3719 = vunpack.c.l.b16 %v1159
  %v3720 = vunpack.c.l.b16 %v1160
  %v3721 = vunpack.c.l.b16 %v1161
  %v3722 = vunpack.c.l.b16 %v1162
  %v3723 = vunpack.c.l.b16 %v1163
  %v3724 = vunpack.c.l.b16 %v1164
  %v3725 = vunpack.c.l.b16 %v1165
  %v3726 = vunpack.c.l.b16 %v1166
  %v3727 = vunpack.c.l.b16 %v1167
  %v3728 = vunpack.c.l.b16 %v1168
  %v3729 = vunpack.c.l.b16 %v1169
  %v3730 = vunpack.c.l.b16 %v1170
  %v3731 = vunpack.c.l.b16 %v1171
  %v3732 = vunpack.c.l.b16 %v1172
  %v3733 = vunpack.c.l.b16 %v1173
  %v3734 = vunpack.c.l.b16 %v1174
  %v3735 = vunpack.c.l.b16 %v1175
  %v3736 = vunpack.c.l.b16 %v1176
  %v3737 = vunpack.c.l.b16 %v1177
  %v3738 = vunpack.c.l.b16 %v1178
  %v3739 = vunpack.c.l.b16 %v1179
  %v3740 = vunpack.c.l.b16 %v1180
  %v3741 = vunpack.c.l.b16 %v1181
  %v3742 = vunpack.c.l.b16 %v1182
  %v3743 = vunpack.c.l.b16 %v1183
  %v3744 = vunpack.c.l.b16 %v1184
  %v3745 = vunpack.c.l.b16 %v1185
  %v3746 = vunpack.c.l.b16 %v1186
  %v3747 = vunpack.c.l.b16 %v1187
  %v3748 = vunpack.c.l.b16 %v1188
  %v3749 = vunpack.c.l.b16 %v1189
  %v3750 = vunpack.c.l.b16 %v1190
  %v3751 = vunpack.c.l.b16 %v1191
  %v3752 = vunpack.c.l.b16 %v1192
  %v3753 = vunpack.c.l.b16 %v1193
  %v3754 = vunpack.c.l.b16 %v1194
  %v3755 = vunpack.c.l.b16 %v1195
  %v3756 = vunpack.c.l.b16 %v1196
  %v3757 = vunpack.c.l.b16 %v1197
  %v3758 = vunpack.c.l.b16 %v1198
  %v3759 = vunpack.c.l.b16 %v1199
  %v3760 = vunpack.c.l.b16 %v1200
  %v3761 = vunpack.c.l.b16 %v1201
  %v3762 = vunpack.c.l.b16 %v1202
  %v3763 = vunpack.c.l.b16 %v1203
  %v3764 = vunpack.c.l.b16 %v1204
  %v3765 = vunpack.c.l.b16 %v1205
  %v3766 = vunpack.c.l.b16 %v1206
  %v3767 = vunpack.c.l.b16 %v1207
  %v3768 = vpack.c.b16 %v2617, %v2616
  %v3769 = vpack.c.b16 %v2619, %v2618
  %v3770 = vpack.c.b16 %v2621, %v2620
  %v3771 = vpack.c.b16 %v2623, %v2622
  %v3772 = vpack.c.b16 %v2625, %v2624
  %v3773 = vpack.c.b16 %v2627, %v2626
  %v3774 = vpack.c.b16 %v2629, %v2628
  %v3775 = vpack.c.b16 %v2631, %v2630
  %v3776 = vpack.c.b16 %v2633, %v2632
  %v3777 = vpack.c.b16 %v2635, %v2634
  %v3778 = vpack.c.b16 %v2637, %v2636
  %v3779 = vpack.c.b16 %v2639, %v2638
  %v3780 = vpack.c.b16 %v2641, %v2640
  %v3781 = vpack.c.b16 %v2643, %v2642
  %v3782 = vpack.c.b16 %v2645, %v2644
  %v3783 = vpack.c.b16 %v2647, %v2646
  %v3784 = vpack.c.b16 %v2649, %v2648
  %v3785 = vpack.c.b16 %v2651, %v2650
  %v3786 = vpack.c.b16 %v2653, %v2652
  %v3787 = vpack.c.b16 %v2655, %v2654
  %v3788 = vpack.c.b16 %v2657, %v2656
  %v3789 = vpack.c.b16 %v2659, %v2658
  %v3790 = vpack.c.b16 %v2661, %v2660
  %v3791 = vpack.c.b16 %v2663, %v2662
  %v3792 = vpack.c.b16 %v2665, %v2664
  %v3793 = vpack.c.b16 %v2667, %v2666
  %v3794 = vpack.c.b16 %v2669, %v2668
  %v3795 = vpack.c.b16 %v2671, %v2670
  %v3796 = vpack.c.b16 %v2673, %v2672
  %v3797 = vpack.c.b16 %v2675, %v2674
  %v3798 = vpack.c.b16 %v2677, %v2676
  %v3799 = vpack.c.b16 %v2679, %v2678
  %v3800 = vpack.c.b16 %v2681, %v2680
  %v3801 = vpack.c.b16 %v2683, %v2682
  %v3802 = vpack.c.b16 %v2685, %v2684
  %v3803 = vpack.c.b16 %v2687, %v2686
  %v3804 = vpack.c.b16 %v2689, %v2688
  %v3805 = vpack.c.b16 %v2691, %v2690
  %v3806 = vpack.c.b16 %v2693, %v2692
  %v3807 = vpack.c.b16 %v2695, %v2694
  %v3808 = vpack.c.b16 %v2697, %v2696
  %v3809 = vpack.c.b16 %v2699, %v2698
  %v3810 = vpack.c.b16 %v2701, %v2700
  %v3811 = vpack.c.b16 %v2703, %v2702
  %v3812 = vpack.c.b16 %v2705, %v2704
  %v3813 = vpack.c.b16 %v2707, %v2706
  %v3814 = vpack.c.b16 %v2709, %v2708
  %v3815 = vpack.c.b16 %v2711, %v2710
  %v3816 = vpack.c.b16 %v2713, %v2712
  %v3817 = vpack.c.b16 %v2715, %v2714
  %v3818 = vpack.c.b16 %v2717, %v2716
  %v3819 = vpack.c.b16 %v2719, %v2718
  %v3820 = vpack.c.b16 %v2721, %v2720
  %v3821 = vpack.c.b16 %v2723, %v2722
  %v3822 = vpack.c.b16 %v2725, %v2724
  %v3823 = vpack.c.b16 %v2727, %v2726
  %v3824 = vpack.c.b16 %v2729, %v2728
  %v3825 = vpack.c.b16 %v2731, %v2730
  %v3826 = vpack.c.b16 %v2733, %v2732
  %v3827 = vpack.c.b16 %v2735, %v2734
  %v3828 = vpack.c.b16 %v2737, %v2736
  %v3829 = vpack.c.b16 %v2739, %v2738
  %v3830 = vpack.c.b16 %v2741, %v2740
  %v3831 = vpack.c.b16 %v2743, %v2742
  %v3832 = vpack.c.b16 %v2745, %v2744
  %v3833 = vpack.c.b16 %v2747, %v2746
  %v3834 = vpack.c.b16 %v2749, %v2748
  %v3835 = vpack.c.b16 %v2751, %v2750
  %v3836 = vpack.c.b16 %v2753, %v2752
  %v3837 = vpack.c.b16 %v2755, %v2754
  %v3838 = vpack.c.b16 %v2757, %v2756
  %v3839 = vpack.c.b16 %v2759, %v2758
  %v3840 = vpack.c.b16 %v2761, %v2760
  %v3841 = vpack.c.b16 %v2763, %v2762
  %v3842 = vpack.c.b16 %v2765, %v2764
  %v3843 = vpack.c.b16 %v2767, %v2766
  %v3844 = vpack.c.b16 %v2769, %v2768
  %v3845 = vpack.c.b16 %v2771, %v2770
  %v3846 = vpack.c.b16 %v2773, %v2772
  %v3847 = vpack.c.b16 %v2775, %v2774
  %v3848 = vpack.c.b16 %v2777, %v2776
  %v3849 = vpack.c.b16 %v2779, %v2778
  %v3850 = vpack.c.b16 %v2781, %v2780
  %v3851 = vpack.c.b16 %v2783, %v2782
  %v3852 = vpack.c.b16 %v2785, %v2784
  %v3853 = vpack.c.b16 %v2787, %v2786
  %v3854 = vpack.c.b16 %v2789, %v2788
  %v3855 = vpack.c.b16 %v2791, %v2790
  %v3856 = vpack.c.b16 %v2793, %v2792
  %v3857 = vpack.c.b16 %v2795, %v2794
  %v3858 = vpack.c.b16 %v2797, %v2796
  %v3859 = vpack.c.b16 %v2799, %v2798
  %v3860 = vpack.c.b16 %v2801, %v2800
  %v3861 = vpack.c.b16 %v2803, %v2802
  %v3862 = vpack.c.b16 %v2805, %v2804
  %v3863 = vpack.c.b16 %v2807, %v2806
  %v3864 = vpack.c.b16 %v2809, %v2808
  %v3865 = vpack.c.b16 %v2811, %v2810
  %v3866 = vpack.c.b16 %v2813, %v2812
  %v3867 = vpack.c.b16 %v2815, %v2814
  %v3868 = vpack.c.b16 %v2817, %v2816
  %v3869 = vpack.c.b16 %v2819, %v2818
  %v3870 = vpack.c.b16 %v2821, %v2820
  %v3871 = vpack.c.b16 %v2823, %v2822
  %v3872 = vpack.c.b16 %v2825, %v2824
  %v3873 = vpack.c.b16 %v2827, %v2826
  %v3874 = vpack.c.b16 %v2829, %v2828
  %v3875 = vpack.c.b16 %v2831, %v2830
  %v3876 = vpack.c.b16 %v2833, %v2832
  %v3877 = vpack.c.b16 %v2835, %v2834
  %v3878 = vpack.c.b16 %v2837, %v2836
  %v3879 = vpack.c.b16 %v2839, %v2838
  %v3880 = vpack.c.b16 %v2841, %v2840
  %v3881 = vpack.c.b16 %v2843, %v2842
  %v3882 = vpack.c.b16 %v2845, %v2844
  %v3883 = vpack.c.b16 %v2847, %v2846
  %v3884 = vpack.c.b16 %v2849, %v2848
  %v3885 = vpack.c.b16 %v2851, %v2850
  %v3886 = vpack.c.b16 %v2853, %v2852
  %v3887 = vpack.c.b16 %v2855, %v2854
  %v3888 = vpack.c.b16 %v2857, %v2856
  %v3889 = vpack.c.b16 %v2859, %v2858
  %v3890 = vpack.c.b16 %v2861, %v2860
  %v3891 = vpack.c.b16 %v2863, %v2862
  %v3892 = vpack.c.b16 %v2865, %v2864
  %v3893 = vpack.c.b16 %v2867, %v2866
  %v3894 = vpack.c.b16 %v2869, %v2868
  %v3895 = vpack.c.b16 %v2871, %v2870
  %v3896 = vpack.c.b16 %v2873, %v2872
  %v3897 = vpack.c.b16 %v2875, %v2874
  %v3898 = vpack.c.b16 %v2877, %v2876
  %v3899 = vpack.c.b16 %v2879, %v2878
  %v3900 = vpack.c.b16 %v2881, %v2880
  %v3901 = vpack.c.b16 %v2883, %v2882
  %v3902 = vpack.c.b16 %v2885, %v2884
  %v3903 = vpack.c.b16 %v2887, %v2886
  %v3904 = vpack.c.b16 %v2889, %v2888
  %v3905 = vpack.c.b16 %v2891, %v2890
  %v3906 = vpack.c.b16 %v2893, %v2892
  %v3907 = vpack.c.b16 %v2895, %v2894
  %v3908 = vpack.c.b16 %v2897, %v2896
  %v3909 = vpack.c.b16 %v2899, %v2898
  %v3910 = vpack.c.b16 %v2901, %v2900
  %v3911 = vpack.c.b16 %v2903, %v2902
  %v3912 = vpack.c.b16 %v2905, %v2904
  %v3913 = vpack.c.b16 %v2907, %v2906
  %v3914 = vpack.c.b16 %v2909, %v2908
  %v3915 = vpack.c.b16 %v2911, %v2910
  %v3916 = vpack.c.b16 %v2913, %v2912
  %v3917 = vpack.c.b16 %v2915, %v2914
  %v3918 = vpack.c.b16 %v2917, %v2916
  %v3919 = vpack.c.b16 %v2919, %v2918
  %v3920 = vpack.c.b16 %v2921, %v2920
  %v3921 = vpack.c.b16 %v2923, %v2922
  %v3922 = vpack.c.b16 %v2925, %v2924
  %v3923 = vpack.c.b16 %v2927, %v2926
  %v3924 = vpack.c.b16 %v2929, %v2928
  %v3925 = vpack.c.b16 %v2931, %v2930
  %v3926 = vpack.c.b16 %v2933, %v2932
  %v3927 = vpack.c.b16 %v2935, %v2934
  %v3928 = vpack.c.b16 %v2937, %v2936
  %v3929 = vpack.c.b16 %v2939, %v2938
  %v3930 = vpack.c.b16 %v2941, %v2940
  %v3931 = vpack.c.b16 %v2943, %v2942
  %v3932 = vpack.c.b16 %v2945, %v2944
  %v3933 = vpack.c.b16 %v2947, %v2946
  %v3934 = vpack.c.b16 %v2949, %v2948
  %v3935 = vpack.c.b16 %v2951, %v2950
  %v3936 = vpack.c.b16 %v2953, %v2952
  %v3937 = vpack.c.b16 %v2955, %v2954
  %v3938 = vpack.c.b16 %v2957, %v2956
  %v3939 = vpack.c.b16 %v2959, %v2958
  %v3940 = vpack.c.b16 %v2961, %v2960
  %v3941 = vpack.c.b16 %v2963, %v2962
  %v3942 = vpack.c.b16 %v2965, %v2964
  %v3943 = vpack.c.b16 %v2967, %v2966
  %v3944 = vpack.c.b16 %v2969, %v2968
  %v3945 = vpack.c.b16 %v2971, %v2970
  %v3946 = vpack.c.b16 %v2973, %v2972
  %v3947 = vpack.c.b16 %v2975, %v2974
  %v3948 = vpack.c.b16 %v2977, %v2976
  %v3949 = vpack.c.b16 %v2979, %v2978
  %v3950 = vpack.c.b16 %v2981, %v2980
  %v3951 = vpack.c.b16 %v2983, %v2982
  %v3952 = vpack.c.b16 %v2985, %v2984
  %v3953 = vpack.c.b16 %v2987, %v2986
  %v3954 = vpack.c.b16 %v2989, %v2988
  %v3955 = vpack.c.b16 %v2991, %v2990
  %v3956 = vpack.c.b16 %v2993, %v2992
  %v3957 = vpack.c.b16 %v2995, %v2994
  %v3958 = vpack.c.b16 %v2997, %v2996
  %v3959 = vpack.c.b16 %v2999, %v2998
  %v3960 = vpack.c.b16 %v3001, %v3000
  %v3961 = vpack.c.b16 %v3003, %v3002
  %v3962 = vpack.c.b16 %v3005, %v3004
  %v3963 = vpack.c.b16 %v3007, %v3006
  %v3964 = vpack.c.b16 %v3009, %v3008
  %v3965 = vpack.c.b16 %v3011, %v3010
  %v3966 = vpack.c.b16 %v3013, %v3012
  %v3967 = vpack.c.b16 %v3015, %v3014
  %v3968 = vpack.c.b16 %v3017, %v3016
  %v3969 = vpack.c.b16 %v3019, %v3018
  %v3970 = vpack.c.b16 %v3021, %v3020
  %v3971 = vpack.c.b16 %v3023, %v3022
  %v3972 = vpack.c.b16 %v3025, %v3024
  %v3973 = vpack.c.b16 %v3027, %v3026
  %v3974 = vpack.c.b16 %v3029, %v3028
  %v3975 = vpack.c.b16 %v3031, %v3030
  %v3976 = vpack.c.b16 %v3033, %v3032
  %v3977 = vpack.c.b16 %v3035, %v3034
  %v3978 = vpack.c.b16 %v3037, %v3036
  %v3979 = vpack.c.b16 %v3039, %v3038
  %v3980 = vpack.c.b16 %v3041, %v3040
  %v3981 = vpack.c.b16 %v3043, %v3042
  %v3982 = vpack.c.b16 %v3045, %v3044
  %v3983 = vpack.c.b16 %v3047, %v3046
  %v3984 = vpack.c.b16 %v3049, %v3048
  %v3985 = vpack.c.b16 %v3051, %v3050
  %v3986 = vpack.c.b16 %v3053, %v3052
  %v3987 = vpack.c.b16 %v3055, %v3054
  %v3988 = vpack.c.b16 %v3057, %v3056
  %v3989 = vpack.c.b16 %v3059, %v3058
  %v3990 = vpack.c.b16 %v3061, %v3060
  %v3991 = vpack.c.b16 %v3063, %v3062
  %v3992 = vpack.c.b16 %v3065, %v3064
  %v3993 = vpack.c.b16 %v3067, %v3066
  %v3994 = vpack.c.b16 %v3069, %v3068
  %v3995 = vpack.c.b16 %v3071, %v3070
  %v3996 = vpack.c.b16 %v3073, %v3072
  %v3997 = vpack.c.b16 %v3075, %v3074
  %v3998 = vpack.c.b16 %v3077, %v3076
  %v3999 = vpack.c.b16 %v3079, %v3078
  %v4000 = vpack.c.b16 %v3081, %v3080
  %v4001 = vpack.c.b16 %v3083, %v3082
  %v4002 = vpack.c.b16 %v3085, %v3084
  %v4003 = vpack.c.b16 %v3087, %v3086
  %v4004 = vpack.c.b16 %v3089, %v3088
  %v4005 = vpack.c.b16 %v3091, %v3090
  %v4006 = vpack.c.b16 %v3093, %v3092
  %v4007 = vpack.c.b16 %v3095, %v3094
  %v4008 = vpack.c.b16 %v3097, %v3096
  %v4009 = vpack.c.b16 %v3099, %v3098
  %v4010 = vpack.c.b16 %v3101, %v3100
  %v4011 = vpack.c.b16 %v3103, %v3102
  %v4012 = vpack.c.b16 %v3105, %v3104
  %v4013 = vpack.c.b16 %v3107, %v3106
  %v4014 = vpack.c.b16 %v3109, %v3108
  %v4015 = vpack.c.b16 %v3111, %v3110
  %v4016 = vpack.c.b16 %v3113, %v3112
  %v4017 = vpack.c.b16 %v3115, %v3114
  %v4018 = vpack.c.b16 %v3117, %v3116
  %v4019 = vpack.c.b16 %v3119, %v3118
  %v4020 = vpack.c.b16 %v3121, %v3120
  %v4021 = vpack.c.b16 %v3123, %v3122
  %v4022 = vpack.c.b16 %v3125, %v3124
  %v4023 = vpack.c.b16 %v3127, %v3126
  %v4024 = vpack.c.b16 %v3129, %v3128
  %v4025 = vpack.c.b16 %v3131, %v3130
  %v4026 = vpack.c.b16 %v3133, %v3132
  %v4027 = vpack.c.b16 %v3135, %v3134
  %v4028 = vpack.c.b16 %v3137, %v3136
  %v4029 = vpack.c.b16 %v3139, %v3138
  %v4030 = vpack.c.b16 %v3141, %v3140
  %v4031 = vpack.c.b16 %v3143, %v3142
  %v4032 = vpack.c.b16 %v3145, %v3144
  %v4033 = vpack.c.b16 %v3147, %v3146
  %v4034 = vpack.c.b16 %v3149, %v3148
  %v4035 = vpack.c.b16 %v3151, %v3150
  %v4036 = vpack.c.b16 %v3153, %v3152
  %v4037 = vpack.c.b16 %v3155, %v3154
  %v4038 = vpack.c.b16 %v3157, %v3156
  %v4039 = vpack.c.b16 %v3159, %v3158
  %v4040 = vpack.c.b16 %v3161, %v3160
  %v4041 = vpack.c.b16 %v3163, %v3162
  %v4042 = vpack.c.b16 %v3165, %v3164
  %v4043 = vpack.c.b16 %v3167, %v3166
  %v4044 = vpack.c.b16 %v3169, %v3168
  %v4045 = vpack.c.b16 %v3171, %v3170
  %v4046 = vpack.c.b16 %v3173, %v3172
  %v4047 = vpack.c.b16 %v3175, %v3174
  %v4048 = vpack.c.b16 %v3177, %v3176
  %v4049 = vpack.c.b16 %v3179, %v3178
  %v4050 = vpack.c.b16 %v3181, %v3180
  %v4051 = vpack.c.b16 %v3183, %v3182
  %v4052 = vpack.c.b16 %v3185, %v3184
  %v4053 = vpack.c.b16 %v3187, %v3186
  %v4054 = vpack.c.b16 %v3189, %v3188
  %v4055 = vpack.c.b16 %v3191, %v3190
  %v4056 = vpack.c.b16 %v3193, %v3192
  %v4057 = vpack.c.b16 %v3195, %v3194
  %v4058 = vpack.c.b16 %v3197, %v3196
  %v4059 = vpack.c.b16 %v3199, %v3198
  %v4060 = vpack.c.b16 %v3201, %v3200
  %v4061 = vpack.c.b16 %v3203, %v3202
  %v4062 = vpack.c.b16 %v3205, %v3204
  %v4063 = vpack.c.b16 %v3207, %v3206
  %v4064 = vpack.c.b16 %v3209, %v3208
  %v4065 = vpack.c.b16 %v3211, %v3210
  %v4066 = vpack.c.b16 %v3213, %v3212
  %v4067 = vpack.c.b16 %v3215, %v3214
  %v4068 = vpack.c.b16 %v3217, %v3216
  %v4069 = vpack.c.b16 %v3219, %v3218
  %v4070 = vpack.c.b16 %v3221, %v3220
  %v4071 = vpack.c.b16 %v3223, %v3222
  %v4072 = vpack.c.b16 %v3225, %v3224
  %v4073 = vpack.c.b16 %v3227, %v3226
  %v4074 = vpack.c.b16 %v3229, %v3228
  %v4075 = vpack.c.b16 %v3231, %v3230
  %v4076 = vpack.c.b16 %v3233, %v3232
  %v4077 = vpack.c.b16 %v3235, %v3234
  %v4078 = vpack.c.b16 %v3237, %v3236
  %v4079 = vpack.c.b16 %v3239, %v3238
  %v4080 = vpack.c.b16 %v3241, %v3240
  %v4081 = vpack.c.b16 %v3243, %v3242
  %v4082 = vpack.c.b16 %v3245, %v3244
  %v4083 = vpack.c.b16 %v3247, %v3246
  %v4084 = vpack.c.b16 %v3249, %v3248
  %v4085 = vpack.c.b16 %v3251, %v3250
  %v4086 = vpack.c.b16 %v3253, %v3252
  %v4087 = vpack.c.b16 %v3255, %v3254
  %v4088 = vpack.c.b16 %v3257, %v3256
  %v4089 = vpack.c.b16 %v3259, %v3258
  %v4090 = vpack.c.b16 %v3261, %v3260
  %v4091 = vpack.c.b16 %v3263, %v3262
  %v4092 = vpack.c.b16 %v3265, %v3264
  %v4093 = vpack.c.b16 %v3267, %v3266
  %v4094 = vpack.c.b16 %v3269, %v3268
  %v4095 = vpack.c.b16 %v3271, %v3270
  %v4096 = vpack.c.b16 %v3273, %v3272
  %v4097 = vpack.c.b16 %v3275, %v3274
  %v4098 = vpack.c.b16 %v3277, %v3276
  %v4099 = vpack.c.b16 %v3279, %v3278
  %v4100 = vpack.c.b16 %v3281, %v3280
  %v4101 = vpack.c.b16 %v3283, %v3282
  %v4102 = vpack.c.b16 %v3285, %v3284
  %v4103 = vpack.c.b16 %v3287, %v3286
  %v4104 = vpack.c.b16 %v3289, %v3288
  %v4105 = vpack.c.b16 %v3291, %v3290
  %v4106 = vpack.c.b16 %v3293, %v3292
  %v4107 = vpack.c.b16 %v3295, %v3294
  %v4108 = vpack.c.b16 %v3297, %v3296
  %v4109 = vpack.c.b16 %v3299, %v3298
  %v4110 = vpack.c.b16 %v3301, %v3300
  %v4111 = vpack.c.b16 %v3303, %v3302
  %v4112 = vpack.c.b16 %v3305, %v3304
  %v4113 = vpack.c.b16 %v3307, %v3306
  %v4114 = vpack.c.b16 %v3309, %v3308
  %v4115 = vpack.c.b16 %v3311, %v3310
  %v4116 = vpack.c.b16 %v3313, %v3312
  %v4117 = vpack.c.b16 %v3315, %v3314
  %v4118 = vpack.c.b16 %v3317, %v3316
  %v4119 = vpack.c.b16 %v3319, %v3318
  %v4120 = vpack.c.b16 %v3321, %v3320
  %v4121 = vpack.c.b16 %v3323, %v3322
  %v4122 = vpack.c.b16 %v3325, %v3324
  %v4123 = vpack.c.b16 %v3327, %v3326
  %v4124 = vpack.c.b16 %v3329, %v3328
  %v4125 = vpack.c.b16 %v3331, %v3330
  %v4126 = vpack.c.b16 %v3333, %v3332
  %v4127 = vpack.c.b16 %v3335, %v3334
  %v4128 = vpack.c.b16 %v3337, %v3336
  %v4129 = vpack.c.b16 %v3339, %v3338
  %v4130 = vpack.c.b16 %v3341, %v3340
  %v4131 = vpack.c.b16 %v3343, %v3342
  %v4132 = vpack.c.b16 %v3345, %v3344
  %v4133 = vpack.c.b16 %v3347, %v3346
  %v4134 = vpack.c.b16 %v3349, %v3348
  %v4135 = vpack.c.b16 %v3351, %v3350
  %v4136 = vpack.c.b16 %v3353, %v3352
  %v4137 = vpack.c.b16 %v3355, %v3354
  %v4138 = vpack.c.b16 %v3357, %v3356
  %v4139 = vpack.c.b16 %v3359, %v3358
  %v4140 = vpack.c.b16 %v3361, %v3360
  %v4141 = vpack.c.b16 %v3363, %v3362
  %v4142 = vpack.c.b16 %v3365, %v3364
  %v4143 = vpack.c.b16 %v3367, %v3366
  %v4144 = vpack.c.b16 %v3369, %v3368
  %v4145 = vpack.c.b16 %v3371, %v3370
  %v4146 = vpack.c.b16 %v3373, %v3372
  %v4147 = vpack.c.b16 %v3375, %v3374
  %v4148 = vpack.c.b16 %v3377, %v3376
  %v4149 = vpack.c.b16 %v3379, %v3378
  %v4150 = vpack.c.b16 %v3381, %v3380
  %v4151 = vpack.c.b16 %v3383, %v3382
  %v4152 = vpack.c.b16 %v3385, %v3384
  %v4153 = vpack.c.b16 %v3387, %v3386
  %v4154 = vpack.c.b16 %v3389, %v3388
  %v4155 = vpack.c.b16 %v3391, %v3390
  %v4156 = vpack.c.b16 %v3393, %v3392
  %v4157 = vpack.c.b16 %v3395, %v3394
  %v4158 = vpack.c.b16 %v3397, %v3396
  %v4159 = vpack.c.b16 %v3399, %v3398
  %v4160 = vpack.c.b16 %v3401, %v3400
  %v4161 = vpack.c.b16 %v3403, %v3402
  %v4162 = vpack.c.b16 %v3405, %v3404
  %v4163 = vpack.c.b16 %v3407, %v3406
  %v4164 = vpack.c.b16 %v3409, %v3408
  %v4165 = vpack.c.b16 %v3411, %v3410
  %v4166 = vpack.c.b16 %v3413, %v3412
  %v4167 = vpack.c.b16 %v3415, %v3414
  %v4168 = vpack.c.b16 %v3417, %v3416
  %v4169 = vpack.c.b16 %v3419, %v3418
  %v4170 = vpack.c.b16 %v3421, %v3420
  %v4171 = vpack.c.b16 %v3423, %v3422
  %v4172 = vpack.c.b16 %v3425, %v3424
  %v4173 = vpack.c.b16 %v3427, %v3426
  %v4174 = vpack.c.b16 %v3429, %v3428
  %v4175 = vpack.c.b16 %v3431, %v3430
  %v4176 = vpack.c.b16 %v3433, %v3432
  %v4177 = vpack.c.b16 %v3435, %v3434
  %v4178 = vpack.c.b16 %v3437, %v3436
  %v4179 = vpack.c.b16 %v3439, %v3438
  %v4180 = vpack.c.b16 %v3441, %v3440
  %v4181 = vpack.c.b16 %v3443, %v3442
  %v4182 = vpack.c.b16 %v3445, %v3444
  %v4183 = vpack.c.b16 %v3447, %v3446
  %v4184 = vpack.c.b16 %v3449, %v3448
  %v4185 = vpack.c.b16 %v3451, %v3450
  %v4186 = vpack.c.b16 %v3453, %v3452
  %v4187 = vpack.c.b16 %v3455, %v3454
  %v4188 = vpack.c.b16 %v3457, %v3456
  %v4189 = vpack.c.b16 %v3459, %v3458
  %v4190 = vpack.c.b16 %v3461, %v3460
  %v4191 = vpack.c.b16 %v3463, %v3462
  %v4192 = vpack.c.b16 %v3465, %v3464
  %v4193 = vpack.c.b16 %v3467, %v3466
  %v4194 = vpack.c.b16 %v3469, %v3468
  %v4195 = vpack.c.b16 %v3471, %v3470
  %v4196 = vpack.c.b16 %v3473, %v3472
  %v4197 = vpack.c.b16 %v3475, %v3474
  %v4198 = vpack.c.b16 %v3477, %v3476
  %v4199 = vpack.c.b16 %v3479, %v3478
  %v4200 = vpack.c.b16 %v3481, %v3480
  %v4201 = vpack.c.b16 %v3483, %v3482
  %v4202 = vpack.c.b16 %v3485, %v3484
  %v4203 = vpack.c.b16 %v3487, %v3486
  %v4204 = vpack.c.b16 %v3489, %v3488
  %v4205 = vpack.c.b16 %v3491, %v3490
  %v4206 = vpack.c.b16 %v3493, %v3492
  %v4207 = vpack.c.b16 %v3495, %v3494
  %v4208 = vpack.c.b16 %v3497, %v3496
  %v4209 = vpack.c.b16 %v3499, %v3498
  %v4210 = vpack.c.b16 %v3501, %v3500
  %v4211 = vpack.c.b16 %v3503, %v3502
  %v4212 = vpack.c.b16 %v3505, %v3504
  %v4213 = vpack.c.b16 %v3507, %v3506
  %v4214 = vpack.c.b16 %v3509, %v3508
  %v4215 = vpack.c.b16 %v3511, %v3510
  %v4216 = vpack.c.b16 %v3513, %v3512
  %v4217 = vpack.c.b16 %v3515, %v3514
  %v4218 = vpack.c.b16 %v3517, %v3516
  %v4219 = vpack.c.b16 %v3519, %v3518
  %v4220 = vpack.c.b16 %v3521, %v3520
  %v4221 = vpack.c.b16 %v3523, %v3522
  %v4222 = vpack.c.b16 %v3525, %v3524
  %v4223 = vpack.c.b16 %v3527, %v3526
  %v4224 = vpack.c.b16 %v3529, %v3528
  %v4225 = vpack.c.b16 %v3531, %v3530
  %v4226 = vpack.c.b16 %v3533, %v3532
  %v4227 = vpack.c.b16 %v3535, %v3534
  %v4228 = vpack.c.b16 %v3537, %v3536
  %v4229 = vpack.c.b16 %v3539, %v3538
  %v4230 = vpack.c.b16 %v3541, %v3540
  %v4231 = vpack.c.b16 %v3543, %v3542
  %v4232 = vpack.c.b16 %v3545, %v3544
  %v4233 = vpack.c.b16 %v3547, %v3546
  %v4234 = vpack.c.b16 %v3549, %v3548
  %v4235 = vpack.c.b16 %v3551, %v3550
  %v4236 = vpack.c.b16 %v3553, %v3552
  %v4237 = vpack.c.b16 %v3555, %v3554
  %v4238 = vpack.c.b16 %v3557, %v3556
  %v4239 = vpack.c.b16 %v3559, %v3558
  %v4240 = vpack.c.b16 %v3561, %v3560
  %v4241 = vpack.c.b16 %v3563, %v3562
  %v4242 = vpack.c.b16 %v3565, %v3564
  %v4243 = vpack.c.b16 %v3567, %v3566
  %v4244 = vpack.c.b16 %v3569, %v3568
  %v4245 = vpack.c.b16 %v3571, %v3570
  %v4246 = vpack.c.b16 %v3573, %v3572
  %v4247 = vpack.c.b16 %v3575, %v3574
  %v4248 = vpack.c.b16 %v3577, %v3576
  %v4249 = vpack.c.b16 %v3579, %v3578
  %v4250 = vpack.c.b16 %v3581, %v3580
  %v4251 = vpack.c.b16 %v3583, %v3582
  %v4252 = vpack.c.b16 %v3585, %v3584
  %v4253 = vpack.c.b16 %v3587, %v3586
  %v4254 = vpack.c.b16 %v3589, %v3588
  %v4255 = vpack.c.b16 %v3591, %v3590
  %v4256 = vpack.c.b16 %v3593, %v3592
  %v4257 = vpack.c.b16 %v3595, %v3594
  %v4258 = vpack.c.b16 %v3597, %v3596
  %v4259 = vpack.c.b16 %v3599, %v3598
  %v4260 = vpack.c.b16 %v3601, %v3600
  %v4261 = vpack.c.b16 %v3603, %v3602
  %v4262 = vpack.c.b16 %v3605, %v3604
  %v4263 = vpack.c.b16 %v3607, %v3606
  %v4264 = vpack.c.b16 %v3609, %v3608
  %v4265 = vpack.c.b16 %v3611, %v3610
  %v4266 = vpack.c.b16 %v3613, %v3612
  %v4267 = vpack.c.b16 %v3615, %v3614
  %v4268 = vpack.c.b16 %v3617, %v3616
  %v4269 = vpack.c.b16 %v3619, %v3618
  %v4270 = vpack.c.b16 %v3621, %v3620
  %v4271 = vpack.c.b16 %v3623, %v3622
  %v4272 = vpack.c.b16 %v3625, %v3624
  %v4273 = vpack.c.b16 %v3627, %v3626
  %v4274 = vpack.c.b16 %v3629, %v3628
  %v4275 = vpack.c.b16 %v3631, %v3630
  %v4276 = vpack.c.b16 %v3633, %v3632
  %v4277 = vpack.c.b16 %v3635, %v3634
  %v4278 = vpack.c.b16 %v3637, %v3636
  %v4279 = vpack.c.b16 %v3639, %v3638
  %v4280 = vpack.c.b16 %v3641, %v3640
  %v4281 = vpack.c.b16 %v3643, %v3642
  %v4282 = vpack.c.b16 %v3645, %v3644
  %v4283 = vpack.c.b16 %v3647, %v3646
  %v4284 = vpack.c.b16 %v3649, %v3648
  %v4285 = vpack.c.b16 %v3651, %v3650
  %v4286 = vpack.c.b16 %v3653, %v3652
  %v4287 = vpack.c.b16 %v3655, %v3654
  %v4288 = vpack.c.b16 %v3657, %v3656
  %v4289 = vpack.c.b16 %v3659, %v3658
  %v4290 = vpack.c.b16 %v3661, %v3660
  %v4291 = vpack.c.b16 %v3663, %v3662
  %v4292 = vpack.c.b16 %v3665, %v3664
  %v4293 = vpack.c.b16 %v3667, %v3666
  %v4294 = vpack.c.b16 %v3669, %v3668
  %v4295 = vpack.c.b16 %v3671, %v3670
  %v4296 = vpack.c.b16 %v3673, %v3672
  %v4297 = vpack.c.b16 %v3675, %v3674
  %v4298 = vpack.c.b16 %v3677, %v3676
  %v4299 = vpack.c.b16 %v3679, %v3678
  %v4300 = vpack.c.b16 %v3681, %v3680
  %v4301 = vpack.c.b16 %v3683, %v3682
  %v4302 = vpack.c.b16 %v3685, %v3684
  %v4303 = vpack.c.b16 %v3687, %v3686
  %v4304 = vpack.c.b16 %v3689, %v3688
  %v4305 = vpack.c.b16 %v3691, %v3690
  %v4306 = vpack.c.b16 %v3693, %v3692
  %v4307 = vpack.c.b16 %v3695, %v3694
  %v4308 = vpack.c.b16 %v3697, %v3696
  %v4309 = vpack.c.b16 %v3699, %v3698
  %v4310 = vpack.c.b16 %v3701, %v3700
  %v4311 = vpack.c.b16 %v3703, %v3702
  %v4312 = vpack.c.b16 %v3705, %v3704
  %v4313 = vpack.c.b16 %v3707, %v3706
  %v4314 = vpack.c.b16 %v3709, %v3708
  %v4315 = vpack.c.b16 %v3711, %v3710
  %v4316 = vpack.c.b16 %v3713, %v3712
  %v4317 = vpack.c.b16 %v3715, %v3714
  %v4318 = vpack.c.b16 %v3717, %v3716
  %v4319 = vpack.c.b16 %v3719, %v3718
  %v4320 = vpack.c.b16 %v3721, %v3720
  %v4321 = vpack.c.b16 %v3723, %v3722
  %v4322 = vpack.c.b16 %v3725, %v3724
  %v4323 = vpack.c.b16 %v3727, %v3726
  %v4324 = vpack.c.b16 %v3729, %v3728
  %v4325 = vpack.c.b16 %v3731, %v3730
  %v4326 = vpack.c.b16 %v3733, %v3732
  %v4327 = vpack.c.b16 %v3735, %v3734
  %v4328 = vpack.c.b16 %v3737, %v3736
  %v4329 = vpack.c.b16 %v3739, %v3738
  %v4330 = vpack.c.b16 %v3741, %v3740
  %v4331 = vpack.c.b16 %v3743, %v3742
  %v4332 = vpack.c.b16 %v3745, %v3744
  %v4333 = vpack.c.b16 %v3747, %v3746
  %v4334 = vpack.c.b16 %v3749, %v3748
  %v4335 = vpack.c.b16 %v3751, %v3750
  %v4336 = vpack.c.b16 %v3753, %v3752
  %v4337 = vpack.c.b16 %v3755, %v3754
  %v4338 = vpack.c.b16 %v3757, %v3756
  %v4339 = vpack.c.b16 %v3759, %v3758
  %v4340 = vpack.c.b16 %v3761, %v3760
  %v4341 = vpack.c.b16 %v3763, %v3762
  %v4342 = vpack.c.b16 %v3765, %v3764
  %v4343 = vpack.c.b16 %v3767, %v3766
  %4920 = vmatpush.bf16.msra.mxu0 %v3775
  %4921 = vmatpush.bf16.msra.mxu0 %v3774
  %4922 = vmatpush.bf16.msra.mxu0 %v3773
  %4923 = vmatpush.bf16.msra.mxu0 %v3772
  %4924 = vmatpush.bf16.msra.mxu0 %v3771
  %4925 = vmatpush.bf16.msra.mxu0 %v3770
  %4926 = vmatpush.bf16.msra.mxu0 %v3769
  %4927 = vmatpush.bf16.msra.mxu0 %v3768
  %4928 = vmatmul.bf16.gmra.mxu0 %v1320
  %v4929 = vpop.f32.mrf.mxu0
  %v4930 = vadd.f32 %v1210, %v4929
  %v4931 = vpop.f32.mrf.mxu0
  %4932 = vdwg.mxu0
  %4933 = vmatpush.bf16.msra.mxu0 %v3783
  %4934 = vmatpush.bf16.msra.mxu0 %v3782
  %4935 = vmatpush.bf16.msra.mxu0 %v3781
  %4936 = vmatpush.bf16.msra.mxu0 %v3780
  %4937 = vmatpush.bf16.msra.mxu0 %v3779
  %4938 = vmatpush.bf16.msra.mxu0 %v3778
  %4939 = vmatpush.bf16.msra.mxu0 %v3777
  %4940 = vmatpush.bf16.msra.mxu0 %v3776
  %4941 = vmatmul.bf16.gmra.mxu0 %v1321
  %v4942 = vpop.f32.mrf.mxu0
  %v4943 = vadd.f32 %v4930, %v4942
  %v4944 = vpop.f32.mrf.mxu0
  %4945 = vdwg.mxu0
  %4946 = vmatpush.bf16.msra.mxu0 %v3791
  %4947 = vmatpush.bf16.msra.mxu0 %v3790
  %4948 = vmatpush.bf16.msra.mxu0 %v3789
  %4949 = vmatpush.bf16.msra.mxu0 %v3788
  %4950 = vmatpush.bf16.msra.mxu0 %v3787
  %4951 = vmatpush.bf16.msra.mxu0 %v3786
  %4952 = vmatpush.bf16.msra.mxu0 %v3785
  %4953 = vmatpush.bf16.msra.mxu0 %v3784
  %4954 = vmatmul.bf16.gmra.mxu0 %v1322
  %v4955 = vpop.f32.mrf.mxu0
  %v4956 = vadd.f32 %v4943, %v4955
  %v4957 = vpop.f32.mrf.mxu0
  %4958 = vdwg.mxu0
  %4959 = vmatpush.bf16.msra.mxu0 %v3799
  %4960 = vmatpush.bf16.msra.mxu0 %v3798
  %4961 = vmatpush.bf16.msra.mxu0 %v3797
  %4962 = vmatpush.bf16.msra.mxu0 %v3796
  %4963 = vmatpush.bf16.msra.mxu0 %v3795
  %4964 = vmatpush.bf16.msra.mxu0 %v3794
  %4965 = vmatpush.bf16.msra.mxu0 %v3793
  %4966 = vmatpush.bf16.msra.mxu0 %v3792
  %4967 = vmatmul.bf16.gmra.mxu0 %v1323
  %v4968 = vpop.f32.mrf.mxu0
  %v4969 = vadd.f32 %v4956, %v4968
  %v4970 = vpop.f32.mrf.mxu0
  %4971 = vdwg.mxu0
  %4972 = vmatpush.bf16.msra.mxu0 %v3807
  %4973 = vmatpush.bf16.msra.mxu0 %v3806
  %4974 = vmatpush.bf16.msra.mxu0 %v3805
  %4975 = vmatpush.bf16.msra.mxu0 %v3804
  %4976 = vmatpush.bf16.msra.mxu0 %v3803
  %4977 = vmatpush.bf16.msra.mxu0 %v3802
  %4978 = vmatpush.bf16.msra.mxu0 %v3801
  %4979 = vmatpush.bf16.msra.mxu0 %v3800
  %4980 = vmatmul.bf16.gmra.mxu0 %v1324
  %v4981 = vpop.f32.mrf.mxu0
  %v4982 = vadd.f32 %v4969, %v4981
  %v4983 = vpop.f32.mrf.mxu0
  %4984 = vdwg.mxu0
  %4985 = vmatpush.bf16.msra.mxu0 %v3815
  %4986 = vmatpush.bf16.msra.mxu0 %v3814
  %4987 = vmatpush.bf16.msra.mxu0 %v3813
  %4988 = vmatpush.bf16.msra.mxu0 %v3812
  %4989 = vmatpush.bf16.msra.mxu0 %v3811
  %4990 = vmatpush.bf16.msra.mxu0 %v3810
  %4991 = vmatpush.bf16.msra.mxu0 %v3809
  %4992 = vmatpush.bf16.msra.mxu0 %v3808
  %4993 = vmatmul.bf16.gmra.mxu0 %v1325
  %v4994 = vpop.f32.mrf.mxu0
  %v4995 = vadd.f32 %v4982, %v4994
  %v4996 = vpop.f32.mrf.mxu0
  %4997 = vdwg.mxu0
  %4998 = vmatpush.bf16.msra.mxu0 %v3823
  %4999 = vmatpush.bf16.msra.mxu0 %v3822
  %5000 = vmatpush.bf16.msra.mxu0 %v3821
  %5001 = vmatpush.bf16.msra.mxu0 %v3820
  %5002 = vmatpush.bf16.msra.mxu0 %v3819
  %5003 = vmatpush.bf16.msra.mxu0 %v3818
  %5004 = vmatpush.bf16.msra.mxu0 %v3817
  %5005 = vmatpush.bf16.msra.mxu0 %v3816
  %5006 = vmatmul.bf16.gmra.mxu0 %v1326
  %v5007 = vpop.f32.mrf.mxu0
  %v5008 = vadd.f32 %v4995, %v5007
  %v5009 = vpop.f32.mrf.mxu0
  %5010 = vdwg.mxu0
  %5011 = vmatpush.bf16.msra.mxu0 %v3831
  %5012 = vmatpush.bf16.msra.mxu0 %v3830
  %5013 = vmatpush.bf16.msra.mxu0 %v3829
  %5014 = vmatpush.bf16.msra.mxu0 %v3828
  %5015 = vmatpush.bf16.msra.mxu0 %v3827
  %5016 = vmatpush.bf16.msra.mxu0 %v3826
  %5017 = vmatpush.bf16.msra.mxu0 %v3825
  %5018 = vmatpush.bf16.msra.mxu0 %v3824
  %5019 = vmatmul.bf16.gmra.mxu0 %v1327
  %v5020 = vpop.f32.mrf.mxu0
  %v5021 = vadd.f32 %v5008, %v5020
  %v5022 = vpop.f32.mrf.mxu0
  %5023 = vdwg.mxu0
  %5024 = vmatpush.bf16.msra.mxu0 %v3839
  %5025 = vmatpush.bf16.msra.mxu0 %v3838
  %5026 = vmatpush.bf16.msra.mxu0 %v3837
  %5027 = vmatpush.bf16.msra.mxu0 %v3836
  %5028 = vmatpush.bf16.msra.mxu0 %v3835
  %5029 = vmatpush.bf16.msra.mxu0 %v3834
  %5030 = vmatpush.bf16.msra.mxu0 %v3833
  %5031 = vmatpush.bf16.msra.mxu0 %v3832
  %5032 = vmatmul.bf16.gmra.mxu0 %v1328
  %v5033 = vpop.f32.mrf.mxu0
  %v5034 = vadd.f32 %v5021, %v5033
  %v5035 = vpop.f32.mrf.mxu0
  %5036 = vdwg.mxu0
  %5037 = vmatpush.bf16.msra.mxu0 %v3847
  %5038 = vmatpush.bf16.msra.mxu0 %v3846
  %5039 = vmatpush.bf16.msra.mxu0 %v3845
  %5040 = vmatpush.bf16.msra.mxu0 %v3844
  %5041 = vmatpush.bf16.msra.mxu0 %v3843
  %5042 = vmatpush.bf16.msra.mxu0 %v3842
  %5043 = vmatpush.bf16.msra.mxu0 %v3841
  %5044 = vmatpush.bf16.msra.mxu0 %v3840
  %5045 = vmatmul.bf16.gmra.mxu0 %v1329
  %v5046 = vpop.f32.mrf.mxu0
  %v5047 = vadd.f32 %v5034, %v5046
  %v5048 = vpop.f32.mrf.mxu0
  %5049 = vdwg.mxu0
  %5050 = vmatpush.bf16.msra.mxu0 %v3855
  %5051 = vmatpush.bf16.msra.mxu0 %v3854
  %5052 = vmatpush.bf16.msra.mxu0 %v3853
  %5053 = vmatpush.bf16.msra.mxu0 %v3852
  %5054 = vmatpush.bf16.msra.mxu0 %v3851
  %5055 = vmatpush.bf16.msra.mxu0 %v3850
  %5056 = vmatpush.bf16.msra.mxu0 %v3849
  %5057 = vmatpush.bf16.msra.mxu0 %v3848
  %5058 = vmatmul.bf16.gmra.mxu0 %v1330
  %v5059 = vpop.f32.mrf.mxu0
  %v5060 = vadd.f32 %v5047, %v5059
  %v5061 = vpop.f32.mrf.mxu0
  %5062 = vdwg.mxu0
  %5063 = vmatpush.bf16.msra.mxu0 %v3863
  %5064 = vmatpush.bf16.msra.mxu0 %v3862
  %5065 = vmatpush.bf16.msra.mxu0 %v3861
  %5066 = vmatpush.bf16.msra.mxu0 %v3860
  %5067 = vmatpush.bf16.msra.mxu0 %v3859
  %5068 = vmatpush.bf16.msra.mxu0 %v3858
  %5069 = vmatpush.bf16.msra.mxu0 %v3857
  %5070 = vmatpush.bf16.msra.mxu0 %v3856
  %5071 = vmatmul.bf16.gmra.mxu0 %v1331
  %v5072 = vpop.f32.mrf.mxu0
  %v5073 = vadd.f32 %v5060, %v5072
  %v5074 = vpop.f32.mrf.mxu0
  %5075 = vdwg.mxu0
  %5076 = vmatpush.bf16.msra.mxu0 %v3871
  %5077 = vmatpush.bf16.msra.mxu0 %v3870
  %5078 = vmatpush.bf16.msra.mxu0 %v3869
  %5079 = vmatpush.bf16.msra.mxu0 %v3868
  %5080 = vmatpush.bf16.msra.mxu0 %v3867
  %5081 = vmatpush.bf16.msra.mxu0 %v3866
  %5082 = vmatpush.bf16.msra.mxu0 %v3865
  %5083 = vmatpush.bf16.msra.mxu0 %v3864
  %5084 = vmatmul.bf16.gmra.mxu0 %v1332
  %v5085 = vpop.f32.mrf.mxu0
  %v5086 = vadd.f32 %v5073, %v5085
  %v5087 = vpop.f32.mrf.mxu0
  %5088 = vdwg.mxu0
  %5089 = vmatpush.bf16.msra.mxu0 %v3879
  %5090 = vmatpush.bf16.msra.mxu0 %v3878
  %5091 = vmatpush.bf16.msra.mxu0 %v3877
  %5092 = vmatpush.bf16.msra.mxu0 %v3876
  %5093 = vmatpush.bf16.msra.mxu0 %v3875
  %5094 = vmatpush.bf16.msra.mxu0 %v3874
  %5095 = vmatpush.bf16.msra.mxu0 %v3873
  %5096 = vmatpush.bf16.msra.mxu0 %v3872
  %5097 = vmatmul.bf16.gmra.mxu0 %v1333
  %v5098 = vpop.f32.mrf.mxu0
  %v5099 = vadd.f32 %v5086, %v5098
  %v5100 = vpop.f32.mrf.mxu0
  %5101 = vdwg.mxu0
  %5102 = vmatpush.bf16.msra.mxu0 %v3887
  %5103 = vmatpush.bf16.msra.mxu0 %v3886
  %5104 = vmatpush.bf16.msra.mxu0 %v3885
  %5105 = vmatpush.bf16.msra.mxu0 %v3884
  %5106 = vmatpush.bf16.msra.mxu0 %v3883
  %5107 = vmatpush.bf16.msra.mxu0 %v3882
  %5108 = vmatpush.bf16.msra.mxu0 %v3881
  %5109 = vmatpush.bf16.msra.mxu0 %v3880
  %5110 = vmatmul.bf16.gmra.mxu0 %v1334
  %v5111 = vpop.f32.mrf.mxu0
  %v5112 = vadd.f32 %v5099, %v5111
  %v5113 = vpop.f32.mrf.mxu0
  %5114 = vdwg.mxu0
  %5115 = vmatpush.bf16.msra.mxu0 %v3895
  %5116 = vmatpush.bf16.msra.mxu0 %v3894
  %5117 = vmatpush.bf16.msra.mxu0 %v3893
  %5118 = vmatpush.bf16.msra.mxu0 %v3892
  %5119 = vmatpush.bf16.msra.mxu0 %v3891
  %5120 = vmatpush.bf16.msra.mxu0 %v3890
  %5121 = vmatpush.bf16.msra.mxu0 %v3889
  %5122 = vmatpush.bf16.msra.mxu0 %v3888
  %5123 = vmatmul.bf16.gmra.mxu0 %v1335
  %v5124 = vpop.f32.mrf.mxu0
  %v5125 = vadd.f32 %v5112, %v5124
  %v5126 = vpop.f32.mrf.mxu0
  %5127 = vdwg.mxu0
  %5128 = vmatpush.bf16.msra.mxu0 %v3903
  %5129 = vmatpush.bf16.msra.mxu0 %v3902
  %5130 = vmatpush.bf16.msra.mxu0 %v3901
  %5131 = vmatpush.bf16.msra.mxu0 %v3900
  %5132 = vmatpush.bf16.msra.mxu0 %v3899
  %5133 = vmatpush.bf16.msra.mxu0 %v3898
  %5134 = vmatpush.bf16.msra.mxu0 %v3897
  %5135 = vmatpush.bf16.msra.mxu0 %v3896
  %5136 = vmatmul.bf16.gmra.mxu0 %v1336
  %v5137 = vpop.f32.mrf.mxu0
  %v5138 = vadd.f32 %v5125, %v5137
  %v5139 = vpop.f32.mrf.mxu0
  %5140 = vdwg.mxu0
  %5141 = vmatpush.bf16.msra.mxu0 %v3911
  %5142 = vmatpush.bf16.msra.mxu0 %v3910
  %5143 = vmatpush.bf16.msra.mxu0 %v3909
  %5144 = vmatpush.bf16.msra.mxu0 %v3908
  %5145 = vmatpush.bf16.msra.mxu0 %v3907
  %5146 = vmatpush.bf16.msra.mxu0 %v3906
  %5147 = vmatpush.bf16.msra.mxu0 %v3905
  %5148 = vmatpush.bf16.msra.mxu0 %v3904
  %5149 = vmatmul.bf16.gmra.mxu0 %v1337
  %v5150 = vpop.f32.mrf.mxu0
  %v5151 = vadd.f32 %v5138, %v5150
  %v5152 = vpop.f32.mrf.mxu0
  %5153 = vdwg.mxu0
  %5154 = vmatpush.bf16.msra.mxu0 %v3919
  %5155 = vmatpush.bf16.msra.mxu0 %v3918
  %5156 = vmatpush.bf16.msra.mxu0 %v3917
  %5157 = vmatpush.bf16.msra.mxu0 %v3916
  %5158 = vmatpush.bf16.msra.mxu0 %v3915
  %5159 = vmatpush.bf16.msra.mxu0 %v3914
  %5160 = vmatpush.bf16.msra.mxu0 %v3913
  %5161 = vmatpush.bf16.msra.mxu0 %v3912
  %5162 = vmatmul.bf16.gmra.mxu0 %v1338
  %v5163 = vpop.f32.mrf.mxu0
  %v5164 = vadd.f32 %v5151, %v5163
  %v5165 = vpop.f32.mrf.mxu0
  %5166 = vdwg.mxu0
  %5167 = vmatpush.bf16.msra.mxu0 %v3927
  %5168 = vmatpush.bf16.msra.mxu0 %v3926
  %5169 = vmatpush.bf16.msra.mxu0 %v3925
  %5170 = vmatpush.bf16.msra.mxu0 %v3924
  %5171 = vmatpush.bf16.msra.mxu0 %v3923
  %5172 = vmatpush.bf16.msra.mxu0 %v3922
  %5173 = vmatpush.bf16.msra.mxu0 %v3921
  %5174 = vmatpush.bf16.msra.mxu0 %v3920
  %5175 = vmatmul.bf16.gmra.mxu0 %v1339
  %v5176 = vpop.f32.mrf.mxu0
  %v5177 = vadd.f32 %v5164, %v5176
  %v5178 = vpop.f32.mrf.mxu0
  %5179 = vdwg.mxu0
  %5180 = vmatpush.bf16.msra.mxu0 %v3935
  %5181 = vmatpush.bf16.msra.mxu0 %v3934
  %5182 = vmatpush.bf16.msra.mxu0 %v3933
  %5183 = vmatpush.bf16.msra.mxu0 %v3932
  %5184 = vmatpush.bf16.msra.mxu0 %v3931
  %5185 = vmatpush.bf16.msra.mxu0 %v3930
  %5186 = vmatpush.bf16.msra.mxu0 %v3929
  %5187 = vmatpush.bf16.msra.mxu0 %v3928
  %5188 = vmatmul.bf16.gmra.mxu0 %v1340
  %v5189 = vpop.f32.mrf.mxu0
  %v5190 = vadd.f32 %v5177, %v5189
  %v5191 = vpop.f32.mrf.mxu0
  %5192 = vdwg.mxu0
  %5193 = vmatpush.bf16.msra.mxu0 %v3943
  %5194 = vmatpush.bf16.msra.mxu0 %v3942
  %5195 = vmatpush.bf16.msra.mxu0 %v3941
  %5196 = vmatpush.bf16.msra.mxu0 %v3940
  %5197 = vmatpush.bf16.msra.mxu0 %v3939
  %5198 = vmatpush.bf16.msra.mxu0 %v3938
  %5199 = vmatpush.bf16.msra.mxu0 %v3937
  %5200 = vmatpush.bf16.msra.mxu0 %v3936
  %5201 = vmatmul.bf16.gmra.mxu0 %v1341
  %v5202 = vpop.f32.mrf.mxu0
  %v5203 = vadd.f32 %v5190, %v5202
  %v5204 = vpop.f32.mrf.mxu0
  %5205 = vdwg.mxu0
  %5206 = vmatpush.bf16.msra.mxu0 %v3951
  %5207 = vmatpush.bf16.msra.mxu0 %v3950
  %5208 = vmatpush.bf16.msra.mxu0 %v3949
  %5209 = vmatpush.bf16.msra.mxu0 %v3948
  %5210 = vmatpush.bf16.msra.mxu0 %v3947
  %5211 = vmatpush.bf16.msra.mxu0 %v3946
  %5212 = vmatpush.bf16.msra.mxu0 %v3945
  %5213 = vmatpush.bf16.msra.mxu0 %v3944
  %5214 = vmatmul.bf16.gmra.mxu0 %v1342
  %v5215 = vpop.f32.mrf.mxu0
  %v5216 = vadd.f32 %v5203, %v5215
  %v5217 = vpop.f32.mrf.mxu0
  %5218 = vdwg.mxu0
  %5219 = vmatpush.bf16.msra.mxu0 %v3959
  %5220 = vmatpush.bf16.msra.mxu0 %v3958
  %5221 = vmatpush.bf16.msra.mxu0 %v3957
  %5222 = vmatpush.bf16.msra.mxu0 %v3956
  %5223 = vmatpush.bf16.msra.mxu0 %v3955
  %5224 = vmatpush.bf16.msra.mxu0 %v3954
  %5225 = vmatpush.bf16.msra.mxu0 %v3953
  %5226 = vmatpush.bf16.msra.mxu0 %v3952
  %5227 = vmatmul.bf16.gmra.mxu0 %v1343
  %v5228 = vpop.f32.mrf.mxu0
  %v5229 = vadd.f32 %v5216, %v5228
  %v5230 = vpop.f32.mrf.mxu0
  %5231 = vdwg.mxu0
  %5232 = vmatpush.bf16.msra.mxu0 %v3967
  %5233 = vmatpush.bf16.msra.mxu0 %v3966
  %5234 = vmatpush.bf16.msra.mxu0 %v3965
  %5235 = vmatpush.bf16.msra.mxu0 %v3964
  %5236 = vmatpush.bf16.msra.mxu0 %v3963
  %5237 = vmatpush.bf16.msra.mxu0 %v3962
  %5238 = vmatpush.bf16.msra.mxu0 %v3961
  %5239 = vmatpush.bf16.msra.mxu0 %v3960
  %5240 = vmatmul.bf16.gmra.mxu0 %v1344
  %v5241 = vpop.f32.mrf.mxu0
  %v5242 = vadd.f32 %v5229, %v5241
  %v5243 = vpop.f32.mrf.mxu0
  %5244 = vdwg.mxu0
  %5245 = vmatpush.bf16.msra.mxu0 %v3975
  %5246 = vmatpush.bf16.msra.mxu0 %v3974
  %5247 = vmatpush.bf16.msra.mxu0 %v3973
  %5248 = vmatpush.bf16.msra.mxu0 %v3972
  %5249 = vmatpush.bf16.msra.mxu0 %v3971
  %5250 = vmatpush.bf16.msra.mxu0 %v3970
  %5251 = vmatpush.bf16.msra.mxu0 %v3969
  %5252 = vmatpush.bf16.msra.mxu0 %v3968
  %5253 = vmatmul.bf16.gmra.mxu0 %v1345
  %v5254 = vpop.f32.mrf.mxu0
  %v5255 = vadd.f32 %v5242, %v5254
  %v5256 = vpop.f32.mrf.mxu0
  %5257 = vdwg.mxu0
  %5258 = vmatpush.bf16.msra.mxu0 %v3983
  %5259 = vmatpush.bf16.msra.mxu0 %v3982
  %5260 = vmatpush.bf16.msra.mxu0 %v3981
  %5261 = vmatpush.bf16.msra.mxu0 %v3980
  %5262 = vmatpush.bf16.msra.mxu0 %v3979
  %5263 = vmatpush.bf16.msra.mxu0 %v3978
  %5264 = vmatpush.bf16.msra.mxu0 %v3977
  %5265 = vmatpush.bf16.msra.mxu0 %v3976
  %5266 = vmatmul.bf16.gmra.mxu0 %v1346
  %v5267 = vpop.f32.mrf.mxu0
  %v5268 = vadd.f32 %v5255, %v5267
  %v5269 = vpop.f32.mrf.mxu0
  %5270 = vdwg.mxu0
  %5271 = vmatpush.bf16.msra.mxu0 %v3991
  %5272 = vmatpush.bf16.msra.mxu0 %v3990
  %5273 = vmatpush.bf16.msra.mxu0 %v3989
  %5274 = vmatpush.bf16.msra.mxu0 %v3988
  %5275 = vmatpush.bf16.msra.mxu0 %v3987
  %5276 = vmatpush.bf16.msra.mxu0 %v3986
  %5277 = vmatpush.bf16.msra.mxu0 %v3985
  %5278 = vmatpush.bf16.msra.mxu0 %v3984
  %5279 = vmatmul.bf16.gmra.mxu0 %v1347
  %v5280 = vpop.f32.mrf.mxu0
  %v5281 = vadd.f32 %v5268, %v5280
  %v5282 = vpop.f32.mrf.mxu0
  %5283 = vdwg.mxu0
  %5284 = vmatpush.bf16.msra.mxu0 %v3999
  %5285 = vmatpush.bf16.msra.mxu0 %v3998
  %5286 = vmatpush.bf16.msra.mxu0 %v3997
  %5287 = vmatpush.bf16.msra.mxu0 %v3996
  %5288 = vmatpush.bf16.msra.mxu0 %v3995
  %5289 = vmatpush.bf16.msra.mxu0 %v3994
  %5290 = vmatpush.bf16.msra.mxu0 %v3993
  %5291 = vmatpush.bf16.msra.mxu0 %v3992
  %5292 = vmatmul.bf16.gmra.mxu0 %v1348
  %v5293 = vpop.f32.mrf.mxu0
  %v5294 = vadd.f32 %v5281, %v5293
  %v5295 = vpop.f32.mrf.mxu0
  %5296 = vdwg.mxu0
  %5297 = vmatpush.bf16.msra.mxu0 %v4007
  %5298 = vmatpush.bf16.msra.mxu0 %v4006
  %5299 = vmatpush.bf16.msra.mxu0 %v4005
  %5300 = vmatpush.bf16.msra.mxu0 %v4004
  %5301 = vmatpush.bf16.msra.mxu0 %v4003
  %5302 = vmatpush.bf16.msra.mxu0 %v4002
  %5303 = vmatpush.bf16.msra.mxu0 %v4001
  %5304 = vmatpush.bf16.msra.mxu0 %v4000
  %5305 = vmatmul.bf16.gmra.mxu0 %v1349
  %v5306 = vpop.f32.mrf.mxu0
  %v5307 = vadd.f32 %v5294, %v5306
  %v5308 = vpop.f32.mrf.mxu0
  %5309 = vdwg.mxu0
  %5310 = vmatpush.bf16.msra.mxu0 %v4015
  %5311 = vmatpush.bf16.msra.mxu0 %v4014
  %5312 = vmatpush.bf16.msra.mxu0 %v4013
  %5313 = vmatpush.bf16.msra.mxu0 %v4012
  %5314 = vmatpush.bf16.msra.mxu0 %v4011
  %5315 = vmatpush.bf16.msra.mxu0 %v4010
  %5316 = vmatpush.bf16.msra.mxu0 %v4009
  %5317 = vmatpush.bf16.msra.mxu0 %v4008
  %5318 = vmatmul.bf16.gmra.mxu0 %v1350
  %v5319 = vpop.f32.mrf.mxu0
  %v5320 = vadd.f32 %v5307, %v5319
  %v5321 = vpop.f32.mrf.mxu0
  %5322 = vdwg.mxu0
  %5323 = vmatpush.bf16.msra.mxu0 %v4023
  %5324 = vmatpush.bf16.msra.mxu0 %v4022
  %5325 = vmatpush.bf16.msra.mxu0 %v4021
  %5326 = vmatpush.bf16.msra.mxu0 %v4020
  %5327 = vmatpush.bf16.msra.mxu0 %v4019
  %5328 = vmatpush.bf16.msra.mxu0 %v4018
  %5329 = vmatpush.bf16.msra.mxu0 %v4017
  %5330 = vmatpush.bf16.msra.mxu0 %v4016
  %5331 = vmatmul.bf16.gmra.mxu0 %v1351
  %v5332 = vpop.f32.mrf.mxu0
  %v5333 = vadd.f32 %v5320, %v5332
  %v5334 = vpop.f32.mrf.mxu0
  %5335 = vdwg.mxu0
  %5336 = vmatpush.bf16.msra.mxu0 %v4031
  %5337 = vmatpush.bf16.msra.mxu0 %v4030
  %5338 = vmatpush.bf16.msra.mxu0 %v4029
  %5339 = vmatpush.bf16.msra.mxu0 %v4028
  %5340 = vmatpush.bf16.msra.mxu0 %v4027
  %5341 = vmatpush.bf16.msra.mxu0 %v4026
  %5342 = vmatpush.bf16.msra.mxu0 %v4025
  %5343 = vmatpush.bf16.msra.mxu0 %v4024
  %5344 = vmatmul.bf16.gmra.mxu0 %v1352
  %v5345 = vpop.f32.mrf.mxu0
  %v5346 = vadd.f32 %v5333, %v5345
  %v5347 = vpop.f32.mrf.mxu0
  %5348 = vdwg.mxu0
  %5349 = vmatpush.bf16.msra.mxu0 %v4039
  %5350 = vmatpush.bf16.msra.mxu0 %v4038
  %5351 = vmatpush.bf16.msra.mxu0 %v4037
  %5352 = vmatpush.bf16.msra.mxu0 %v4036
  %5353 = vmatpush.bf16.msra.mxu0 %v4035
  %5354 = vmatpush.bf16.msra.mxu0 %v4034
  %5355 = vmatpush.bf16.msra.mxu0 %v4033
  %5356 = vmatpush.bf16.msra.mxu0 %v4032
  %5357 = vmatmul.bf16.gmra.mxu0 %v1353
  %v5358 = vpop.f32.mrf.mxu0
  %v5359 = vadd.f32 %v5346, %v5358
  %v5360 = vpop.f32.mrf.mxu0
  %5361 = vdwg.mxu0
  %5362 = vmatpush.bf16.msra.mxu0 %v4047
  %5363 = vmatpush.bf16.msra.mxu0 %v4046
  %5364 = vmatpush.bf16.msra.mxu0 %v4045
  %5365 = vmatpush.bf16.msra.mxu0 %v4044
  %5366 = vmatpush.bf16.msra.mxu0 %v4043
  %5367 = vmatpush.bf16.msra.mxu0 %v4042
  %5368 = vmatpush.bf16.msra.mxu0 %v4041
  %5369 = vmatpush.bf16.msra.mxu0 %v4040
  %5370 = vmatmul.bf16.gmra.mxu0 %v1354
  %v5371 = vpop.f32.mrf.mxu0
  %v5372 = vadd.f32 %v5359, %v5371
  %v5373 = vpop.f32.mrf.mxu0
  %5374 = vdwg.mxu0
  %5375 = vmatpush.bf16.msra.mxu0 %v4055
  %5376 = vmatpush.bf16.msra.mxu0 %v4054
  %5377 = vmatpush.bf16.msra.mxu0 %v4053
  %5378 = vmatpush.bf16.msra.mxu0 %v4052
  %5379 = vmatpush.bf16.msra.mxu0 %v4051
  %5380 = vmatpush.bf16.msra.mxu0 %v4050
  %5381 = vmatpush.bf16.msra.mxu0 %v4049
  %5382 = vmatpush.bf16.msra.mxu0 %v4048
  %5383 = vmatmul.bf16.gmra.mxu0 %v1355
  %v5384 = vpop.f32.mrf.mxu0
  %v5385 = vadd.f32 %v5372, %v5384
  %v5386 = vpop.f32.mrf.mxu0
  %5387 = vdwg.mxu0
  %5388 = vmatpush.bf16.msra.mxu0 %v4063
  %5389 = vmatpush.bf16.msra.mxu0 %v4062
  %5390 = vmatpush.bf16.msra.mxu0 %v4061
  %5391 = vmatpush.bf16.msra.mxu0 %v4060
  %5392 = vmatpush.bf16.msra.mxu0 %v4059
  %5393 = vmatpush.bf16.msra.mxu0 %v4058
  %5394 = vmatpush.bf16.msra.mxu0 %v4057
  %5395 = vmatpush.bf16.msra.mxu0 %v4056
  %5396 = vmatmul.bf16.gmra.mxu0 %v1356
  %v5397 = vpop.f32.mrf.mxu0
  %v5398 = vadd.f32 %v5385, %v5397
  %v5399 = vpop.f32.mrf.mxu0
  %5400 = vdwg.mxu0
  %5401 = vmatpush.bf16.msra.mxu0 %v4071
  %5402 = vmatpush.bf16.msra.mxu0 %v4070
  %5403 = vmatpush.bf16.msra.mxu0 %v4069
  %5404 = vmatpush.bf16.msra.mxu0 %v4068
  %5405 = vmatpush.bf16.msra.mxu0 %v4067
  %5406 = vmatpush.bf16.msra.mxu0 %v4066
  %5407 = vmatpush.bf16.msra.mxu0 %v4065
  %5408 = vmatpush.bf16.msra.mxu0 %v4064
  %5409 = vmatmul.bf16.gmra.mxu0 %v1357
  %v5410 = vpop.f32.mrf.mxu0
  %v5411 = vadd.f32 %v5398, %v5410
  %v5412 = vpop.f32.mrf.mxu0
  %5413 = vdwg.mxu0
  %5414 = vmatpush.bf16.msra.mxu0 %v4079
  %5415 = vmatpush.bf16.msra.mxu0 %v4078
  %5416 = vmatpush.bf16.msra.mxu0 %v4077
  %5417 = vmatpush.bf16.msra.mxu0 %v4076
  %5418 = vmatpush.bf16.msra.mxu0 %v4075
  %5419 = vmatpush.bf16.msra.mxu0 %v4074
  %5420 = vmatpush.bf16.msra.mxu0 %v4073
  %5421 = vmatpush.bf16.msra.mxu0 %v4072
  %5422 = vmatmul.bf16.gmra.mxu0 %v1358
  %v5423 = vpop.f32.mrf.mxu0
  %v5424 = vadd.f32 %v5411, %v5423
  %v5425 = vpop.f32.mrf.mxu0
  %5426 = vdwg.mxu0
  %5427 = vmatpush.bf16.msra.mxu0 %v4087
  %5428 = vmatpush.bf16.msra.mxu0 %v4086
  %5429 = vmatpush.bf16.msra.mxu0 %v4085
  %5430 = vmatpush.bf16.msra.mxu0 %v4084
  %5431 = vmatpush.bf16.msra.mxu0 %v4083
  %5432 = vmatpush.bf16.msra.mxu0 %v4082
  %5433 = vmatpush.bf16.msra.mxu0 %v4081
  %5434 = vmatpush.bf16.msra.mxu0 %v4080
  %5435 = vmatmul.bf16.gmra.mxu0 %v1359
  %v5436 = vpop.f32.mrf.mxu0
  %v5437 = vadd.f32 %v5424, %v5436
  %v5438 = vpop.f32.mrf.mxu0
  %5439 = vdwg.mxu0
  %5440 = vmatpush.bf16.msra.mxu0 %v4095
  %5441 = vmatpush.bf16.msra.mxu0 %v4094
  %5442 = vmatpush.bf16.msra.mxu0 %v4093
  %5443 = vmatpush.bf16.msra.mxu0 %v4092
  %5444 = vmatpush.bf16.msra.mxu0 %v4091
  %5445 = vmatpush.bf16.msra.mxu0 %v4090
  %5446 = vmatpush.bf16.msra.mxu0 %v4089
  %5447 = vmatpush.bf16.msra.mxu0 %v4088
  %5448 = vmatmul.bf16.gmra.mxu0 %v1360
  %v5449 = vpop.f32.mrf.mxu0
  %v5450 = vadd.f32 %v5437, %v5449
  %v5451 = vpop.f32.mrf.mxu0
  %5452 = vdwg.mxu0
  %5453 = vmatpush.bf16.msra.mxu0 %v4103
  %5454 = vmatpush.bf16.msra.mxu0 %v4102
  %5455 = vmatpush.bf16.msra.mxu0 %v4101
  %5456 = vmatpush.bf16.msra.mxu0 %v4100
  %5457 = vmatpush.bf16.msra.mxu0 %v4099
  %5458 = vmatpush.bf16.msra.mxu0 %v4098
  %5459 = vmatpush.bf16.msra.mxu0 %v4097
  %5460 = vmatpush.bf16.msra.mxu0 %v4096
  %5461 = vmatmul.bf16.gmra.mxu0 %v1361
  %v5462 = vpop.f32.mrf.mxu0
  %v5463 = vadd.f32 %v5450, %v5462
  %v5464 = vpop.f32.mrf.mxu0
  %5465 = vdwg.mxu0
  %5466 = vmatpush.bf16.msra.mxu0 %v4111
  %5467 = vmatpush.bf16.msra.mxu0 %v4110
  %5468 = vmatpush.bf16.msra.mxu0 %v4109
  %5469 = vmatpush.bf16.msra.mxu0 %v4108
  %5470 = vmatpush.bf16.msra.mxu0 %v4107
  %5471 = vmatpush.bf16.msra.mxu0 %v4106
  %5472 = vmatpush.bf16.msra.mxu0 %v4105
  %5473 = vmatpush.bf16.msra.mxu0 %v4104
  %5474 = vmatmul.bf16.gmra.mxu0 %v1362
  %v5475 = vpop.f32.mrf.mxu0
  %v5476 = vadd.f32 %v5463, %v5475
  %v5477 = vpop.f32.mrf.mxu0
  %5478 = vdwg.mxu0
  %5479 = vmatpush.bf16.msra.mxu0 %v4119
  %5480 = vmatpush.bf16.msra.mxu0 %v4118
  %5481 = vmatpush.bf16.msra.mxu0 %v4117
  %5482 = vmatpush.bf16.msra.mxu0 %v4116
  %5483 = vmatpush.bf16.msra.mxu0 %v4115
  %5484 = vmatpush.bf16.msra.mxu0 %v4114
  %5485 = vmatpush.bf16.msra.mxu0 %v4113
  %5486 = vmatpush.bf16.msra.mxu0 %v4112
  %5487 = vmatmul.bf16.gmra.mxu0 %v1363
  %v5488 = vpop.f32.mrf.mxu0
  %v5489 = vadd.f32 %v5476, %v5488
  %v5490 = vpop.f32.mrf.mxu0
  %5491 = vdwg.mxu0
  %5492 = vmatpush.bf16.msra.mxu0 %v4127
  %5493 = vmatpush.bf16.msra.mxu0 %v4126
  %5494 = vmatpush.bf16.msra.mxu0 %v4125
  %5495 = vmatpush.bf16.msra.mxu0 %v4124
  %5496 = vmatpush.bf16.msra.mxu0 %v4123
  %5497 = vmatpush.bf16.msra.mxu0 %v4122
  %5498 = vmatpush.bf16.msra.mxu0 %v4121
  %5499 = vmatpush.bf16.msra.mxu0 %v4120
  %5500 = vmatmul.bf16.gmra.mxu0 %v1364
  %v5501 = vpop.f32.mrf.mxu0
  %v5502 = vadd.f32 %v5489, %v5501
  %v5503 = vpop.f32.mrf.mxu0
  %5504 = vdwg.mxu0
  %5505 = vmatpush.bf16.msra.mxu0 %v4135
  %5506 = vmatpush.bf16.msra.mxu0 %v4134
  %5507 = vmatpush.bf16.msra.mxu0 %v4133
  %5508 = vmatpush.bf16.msra.mxu0 %v4132
  %5509 = vmatpush.bf16.msra.mxu0 %v4131
  %5510 = vmatpush.bf16.msra.mxu0 %v4130
  %5511 = vmatpush.bf16.msra.mxu0 %v4129
  %5512 = vmatpush.bf16.msra.mxu0 %v4128
  %5513 = vmatmul.bf16.gmra.mxu0 %v1365
  %v5514 = vpop.f32.mrf.mxu0
  %v5515 = vadd.f32 %v5502, %v5514
  %v5516 = vpop.f32.mrf.mxu0
  %5517 = vdwg.mxu0
  %5518 = vmatpush.bf16.msra.mxu0 %v4143
  %5519 = vmatpush.bf16.msra.mxu0 %v4142
  %5520 = vmatpush.bf16.msra.mxu0 %v4141
  %5521 = vmatpush.bf16.msra.mxu0 %v4140
  %5522 = vmatpush.bf16.msra.mxu0 %v4139
  %5523 = vmatpush.bf16.msra.mxu0 %v4138
  %5524 = vmatpush.bf16.msra.mxu0 %v4137
  %5525 = vmatpush.bf16.msra.mxu0 %v4136
  %5526 = vmatmul.bf16.gmra.mxu0 %v1366
  %v5527 = vpop.f32.mrf.mxu0
  %v5528 = vadd.f32 %v5515, %v5527
  %v5529 = vpop.f32.mrf.mxu0
  %5530 = vdwg.mxu0
  %5531 = vmatpush.bf16.msra.mxu0 %v4151
  %5532 = vmatpush.bf16.msra.mxu0 %v4150
  %5533 = vmatpush.bf16.msra.mxu0 %v4149
  %5534 = vmatpush.bf16.msra.mxu0 %v4148
  %5535 = vmatpush.bf16.msra.mxu0 %v4147
  %5536 = vmatpush.bf16.msra.mxu0 %v4146
  %5537 = vmatpush.bf16.msra.mxu0 %v4145
  %5538 = vmatpush.bf16.msra.mxu0 %v4144
  %5539 = vmatmul.bf16.gmra.mxu0 %v1367
  %v5540 = vpop.f32.mrf.mxu0
  %v5541 = vadd.f32 %v5528, %v5540
  %v5542 = vpop.f32.mrf.mxu0
  %5543 = vdwg.mxu0
  %5544 = vmatpush.bf16.msra.mxu0 %v4159
  %5545 = vmatpush.bf16.msra.mxu0 %v4158
  %5546 = vmatpush.bf16.msra.mxu0 %v4157
  %5547 = vmatpush.bf16.msra.mxu0 %v4156
  %5548 = vmatpush.bf16.msra.mxu0 %v4155
  %5549 = vmatpush.bf16.msra.mxu0 %v4154
  %5550 = vmatpush.bf16.msra.mxu0 %v4153
  %5551 = vmatpush.bf16.msra.mxu0 %v4152
  %5552 = vmatmul.bf16.gmra.mxu0 %v1368
  %v5553 = vpop.f32.mrf.mxu0
  %v5554 = vadd.f32 %v5541, %v5553
  %v5555 = vpop.f32.mrf.mxu0
  %5556 = vdwg.mxu0
  %5557 = vmatpush.bf16.msra.mxu0 %v4167
  %5558 = vmatpush.bf16.msra.mxu0 %v4166
  %5559 = vmatpush.bf16.msra.mxu0 %v4165
  %5560 = vmatpush.bf16.msra.mxu0 %v4164
  %5561 = vmatpush.bf16.msra.mxu0 %v4163
  %5562 = vmatpush.bf16.msra.mxu0 %v4162
  %5563 = vmatpush.bf16.msra.mxu0 %v4161
  %5564 = vmatpush.bf16.msra.mxu0 %v4160
  %5565 = vmatmul.bf16.gmra.mxu0 %v1369
  %v5566 = vpop.f32.mrf.mxu0
  %v5567 = vadd.f32 %v5554, %v5566
  %v5568 = vpop.f32.mrf.mxu0
  %5569 = vdwg.mxu0
  %5570 = vmatpush.bf16.msra.mxu0 %v4175
  %5571 = vmatpush.bf16.msra.mxu0 %v4174
  %5572 = vmatpush.bf16.msra.mxu0 %v4173
  %5573 = vmatpush.bf16.msra.mxu0 %v4172
  %5574 = vmatpush.bf16.msra.mxu0 %v4171
  %5575 = vmatpush.bf16.msra.mxu0 %v4170
  %5576 = vmatpush.bf16.msra.mxu0 %v4169
  %5577 = vmatpush.bf16.msra.mxu0 %v4168
  %5578 = vmatmul.bf16.gmra.mxu0 %v1370
  %v5579 = vpop.f32.mrf.mxu0
  %v5580 = vadd.f32 %v5567, %v5579
  %v5581 = vpop.f32.mrf.mxu0
  %5582 = vdwg.mxu0
  %5583 = vmatpush.bf16.msra.mxu0 %v4183
  %5584 = vmatpush.bf16.msra.mxu0 %v4182
  %5585 = vmatpush.bf16.msra.mxu0 %v4181
  %5586 = vmatpush.bf16.msra.mxu0 %v4180
  %5587 = vmatpush.bf16.msra.mxu0 %v4179
  %5588 = vmatpush.bf16.msra.mxu0 %v4178
  %5589 = vmatpush.bf16.msra.mxu0 %v4177
  %5590 = vmatpush.bf16.msra.mxu0 %v4176
  %5591 = vmatmul.bf16.gmra.mxu0 %v1371
  %v5592 = vpop.f32.mrf.mxu0
  %v5593 = vadd.f32 %v5580, %v5592
  %v5594 = vpop.f32.mrf.mxu0
  %5595 = vdwg.mxu0
  %5596 = vmatpush.bf16.msra.mxu0 %v4191
  %5597 = vmatpush.bf16.msra.mxu0 %v4190
  %5598 = vmatpush.bf16.msra.mxu0 %v4189
  %5599 = vmatpush.bf16.msra.mxu0 %v4188
  %5600 = vmatpush.bf16.msra.mxu0 %v4187
  %5601 = vmatpush.bf16.msra.mxu0 %v4186
  %5602 = vmatpush.bf16.msra.mxu0 %v4185
  %5603 = vmatpush.bf16.msra.mxu0 %v4184
  %5604 = vmatmul.bf16.gmra.mxu0 %v1372
  %v5605 = vpop.f32.mrf.mxu0
  %v5606 = vadd.f32 %v5593, %v5605
  %v5607 = vpop.f32.mrf.mxu0
  %5608 = vdwg.mxu0
  %5609 = vmatpush.bf16.msra.mxu0 %v4199
  %5610 = vmatpush.bf16.msra.mxu0 %v4198
  %5611 = vmatpush.bf16.msra.mxu0 %v4197
  %5612 = vmatpush.bf16.msra.mxu0 %v4196
  %5613 = vmatpush.bf16.msra.mxu0 %v4195
  %5614 = vmatpush.bf16.msra.mxu0 %v4194
  %5615 = vmatpush.bf16.msra.mxu0 %v4193
  %5616 = vmatpush.bf16.msra.mxu0 %v4192
  %5617 = vmatmul.bf16.gmra.mxu0 %v1373
  %v5618 = vpop.f32.mrf.mxu0
  %v5619 = vadd.f32 %v5606, %v5618
  %v5620 = vpop.f32.mrf.mxu0
  %5621 = vdwg.mxu0
  %5622 = vmatpush.bf16.msra.mxu0 %v4207
  %5623 = vmatpush.bf16.msra.mxu0 %v4206
  %5624 = vmatpush.bf16.msra.mxu0 %v4205
  %5625 = vmatpush.bf16.msra.mxu0 %v4204
  %5626 = vmatpush.bf16.msra.mxu0 %v4203
  %5627 = vmatpush.bf16.msra.mxu0 %v4202
  %5628 = vmatpush.bf16.msra.mxu0 %v4201
  %5629 = vmatpush.bf16.msra.mxu0 %v4200
  %5630 = vmatmul.bf16.gmra.mxu0 %v1374
  %v5631 = vpop.f32.mrf.mxu0
  %v5632 = vadd.f32 %v5619, %v5631
  %v5633 = vpop.f32.mrf.mxu0
  %5634 = vdwg.mxu0
  %5635 = vmatpush.bf16.msra.mxu0 %v4215
  %5636 = vmatpush.bf16.msra.mxu0 %v4214
  %5637 = vmatpush.bf16.msra.mxu0 %v4213
  %5638 = vmatpush.bf16.msra.mxu0 %v4212
  %5639 = vmatpush.bf16.msra.mxu0 %v4211
  %5640 = vmatpush.bf16.msra.mxu0 %v4210
  %5641 = vmatpush.bf16.msra.mxu0 %v4209
  %5642 = vmatpush.bf16.msra.mxu0 %v4208
  %5643 = vmatmul.bf16.gmra.mxu0 %v1375
  %v5644 = vpop.f32.mrf.mxu0
  %v5645 = vadd.f32 %v5632, %v5644
  %v5646 = vpop.f32.mrf.mxu0
  %5647 = vdwg.mxu0
  %5648 = vmatpush.bf16.msra.mxu0 %v4223
  %5649 = vmatpush.bf16.msra.mxu0 %v4222
  %5650 = vmatpush.bf16.msra.mxu0 %v4221
  %5651 = vmatpush.bf16.msra.mxu0 %v4220
  %5652 = vmatpush.bf16.msra.mxu0 %v4219
  %5653 = vmatpush.bf16.msra.mxu0 %v4218
  %5654 = vmatpush.bf16.msra.mxu0 %v4217
  %5655 = vmatpush.bf16.msra.mxu0 %v4216
  %5656 = vmatmul.bf16.gmra.mxu0 %v1376
  %v5657 = vpop.f32.mrf.mxu0
  %v5658 = vadd.f32 %v5645, %v5657
  %v5659 = vpop.f32.mrf.mxu0
  %5660 = vdwg.mxu0
  %5661 = vmatpush.bf16.msra.mxu0 %v4231
  %5662 = vmatpush.bf16.msra.mxu0 %v4230
  %5663 = vmatpush.bf16.msra.mxu0 %v4229
  %5664 = vmatpush.bf16.msra.mxu0 %v4228
  %5665 = vmatpush.bf16.msra.mxu0 %v4227
  %5666 = vmatpush.bf16.msra.mxu0 %v4226
  %5667 = vmatpush.bf16.msra.mxu0 %v4225
  %5668 = vmatpush.bf16.msra.mxu0 %v4224
  %5669 = vmatmul.bf16.gmra.mxu0 %v1377
  %v5670 = vpop.f32.mrf.mxu0
  %v5671 = vadd.f32 %v5658, %v5670
  %v5672 = vpop.f32.mrf.mxu0
  %5673 = vdwg.mxu0
  %5674 = vmatpush.bf16.msra.mxu0 %v4239
  %5675 = vmatpush.bf16.msra.mxu0 %v4238
  %5676 = vmatpush.bf16.msra.mxu0 %v4237
  %5677 = vmatpush.bf16.msra.mxu0 %v4236
  %5678 = vmatpush.bf16.msra.mxu0 %v4235
  %5679 = vmatpush.bf16.msra.mxu0 %v4234
  %5680 = vmatpush.bf16.msra.mxu0 %v4233
  %5681 = vmatpush.bf16.msra.mxu0 %v4232
  %5682 = vmatmul.bf16.gmra.mxu0 %v1378
  %v5683 = vpop.f32.mrf.mxu0
  %v5684 = vadd.f32 %v5671, %v5683
  %v5685 = vpop.f32.mrf.mxu0
  %5686 = vdwg.mxu0
  %5687 = vmatpush.bf16.msra.mxu0 %v4247
  %5688 = vmatpush.bf16.msra.mxu0 %v4246
  %5689 = vmatpush.bf16.msra.mxu0 %v4245
  %5690 = vmatpush.bf16.msra.mxu0 %v4244
  %5691 = vmatpush.bf16.msra.mxu0 %v4243
  %5692 = vmatpush.bf16.msra.mxu0 %v4242
  %5693 = vmatpush.bf16.msra.mxu0 %v4241
  %5694 = vmatpush.bf16.msra.mxu0 %v4240
  %5695 = vmatmul.bf16.gmra.mxu0 %v1379
  %v5696 = vpop.f32.mrf.mxu0
  %v5697 = vadd.f32 %v5684, %v5696
  %v5698 = vpop.f32.mrf.mxu0
  %5699 = vdwg.mxu0
  %5700 = vmatpush.bf16.msra.mxu0 %v4255
  %5701 = vmatpush.bf16.msra.mxu0 %v4254
  %5702 = vmatpush.bf16.msra.mxu0 %v4253
  %5703 = vmatpush.bf16.msra.mxu0 %v4252
  %5704 = vmatpush.bf16.msra.mxu0 %v4251
  %5705 = vmatpush.bf16.msra.mxu0 %v4250
  %5706 = vmatpush.bf16.msra.mxu0 %v4249
  %5707 = vmatpush.bf16.msra.mxu0 %v4248
  %5708 = vmatmul.bf16.gmra.mxu0 %v1380
  %v5709 = vpop.f32.mrf.mxu0
  %v5710 = vadd.f32 %v5697, %v5709
  %v5711 = vpop.f32.mrf.mxu0
  %5712 = vdwg.mxu0
  %5713 = vmatpush.bf16.msra.mxu0 %v4263
  %5714 = vmatpush.bf16.msra.mxu0 %v4262
  %5715 = vmatpush.bf16.msra.mxu0 %v4261
  %5716 = vmatpush.bf16.msra.mxu0 %v4260
  %5717 = vmatpush.bf16.msra.mxu0 %v4259
  %5718 = vmatpush.bf16.msra.mxu0 %v4258
  %5719 = vmatpush.bf16.msra.mxu0 %v4257
  %5720 = vmatpush.bf16.msra.mxu0 %v4256
  %5721 = vmatmul.bf16.gmra.mxu0 %v1381
  %v5722 = vpop.f32.mrf.mxu0
  %v5723 = vadd.f32 %v5710, %v5722
  %v5724 = vpop.f32.mrf.mxu0
  %5725 = vdwg.mxu0
  %5726 = vmatpush.bf16.msra.mxu0 %v4271
  %5727 = vmatpush.bf16.msra.mxu0 %v4270
  %5728 = vmatpush.bf16.msra.mxu0 %v4269
  %5729 = vmatpush.bf16.msra.mxu0 %v4268
  %5730 = vmatpush.bf16.msra.mxu0 %v4267
  %5731 = vmatpush.bf16.msra.mxu0 %v4266
  %5732 = vmatpush.bf16.msra.mxu0 %v4265
  %5733 = vmatpush.bf16.msra.mxu0 %v4264
  %5734 = vmatmul.bf16.gmra.mxu0 %v1382
  %v5735 = vpop.f32.mrf.mxu0
  %v5736 = vadd.f32 %v5723, %v5735
  %v5737 = vpop.f32.mrf.mxu0
  %5738 = vdwg.mxu0
  %5739 = vmatpush.bf16.msra.mxu0 %v4279
  %5740 = vmatpush.bf16.msra.mxu0 %v4278
  %5741 = vmatpush.bf16.msra.mxu0 %v4277
  %5742 = vmatpush.bf16.msra.mxu0 %v4276
  %5743 = vmatpush.bf16.msra.mxu0 %v4275
  %5744 = vmatpush.bf16.msra.mxu0 %v4274
  %5745 = vmatpush.bf16.msra.mxu0 %v4273
  %5746 = vmatpush.bf16.msra.mxu0 %v4272
  %5747 = vmatmul.bf16.gmra.mxu0 %v1383
  %v5748 = vpop.f32.mrf.mxu0
  %v5749 = vadd.f32 %v5736, %v5748
  %v5750 = vpop.f32.mrf.mxu0
  %5751 = vdwg.mxu0
  %5752 = vmatpush.bf16.msra.mxu0 %v4287
  %5753 = vmatpush.bf16.msra.mxu0 %v4286
  %5754 = vmatpush.bf16.msra.mxu0 %v4285
  %5755 = vmatpush.bf16.msra.mxu0 %v4284
  %5756 = vmatpush.bf16.msra.mxu0 %v4283
  %5757 = vmatpush.bf16.msra.mxu0 %v4282
  %5758 = vmatpush.bf16.msra.mxu0 %v4281
  %5759 = vmatpush.bf16.msra.mxu0 %v4280
  %5760 = vmatmul.bf16.gmra.mxu0 %v1384
  %v5761 = vpop.f32.mrf.mxu0
  %v5762 = vadd.f32 %v5749, %v5761
  %v5763 = vpop.f32.mrf.mxu0
  %5764 = vdwg.mxu0
  %5765 = vmatpush.bf16.msra.mxu0 %v4295
  %5766 = vmatpush.bf16.msra.mxu0 %v4294
  %5767 = vmatpush.bf16.msra.mxu0 %v4293
  %5768 = vmatpush.bf16.msra.mxu0 %v4292
  %5769 = vmatpush.bf16.msra.mxu0 %v4291
  %5770 = vmatpush.bf16.msra.mxu0 %v4290
  %5771 = vmatpush.bf16.msra.mxu0 %v4289
  %5772 = vmatpush.bf16.msra.mxu0 %v4288
  %5773 = vmatmul.bf16.gmra.mxu0 %v1385
  %v5774 = vpop.f32.mrf.mxu0
  %v5775 = vadd.f32 %v5762, %v5774
  %v5776 = vpop.f32.mrf.mxu0
  %5777 = vdwg.mxu0
  %5778 = vmatpush.bf16.msra.mxu0 %v4303
  %5779 = vmatpush.bf16.msra.mxu0 %v4302
  %5780 = vmatpush.bf16.msra.mxu0 %v4301
  %5781 = vmatpush.bf16.msra.mxu0 %v4300
  %5782 = vmatpush.bf16.msra.mxu0 %v4299
  %5783 = vmatpush.bf16.msra.mxu0 %v4298
  %5784 = vmatpush.bf16.msra.mxu0 %v4297
  %5785 = vmatpush.bf16.msra.mxu0 %v4296
  %5786 = vmatmul.bf16.gmra.mxu0 %v1386
  %v5787 = vpop.f32.mrf.mxu0
  %v5788 = vadd.f32 %v5775, %v5787
  %v5789 = vpop.f32.mrf.mxu0
  %5790 = vdwg.mxu0
  %5791 = vmatpush.bf16.msra.mxu0 %v4311
  %5792 = vmatpush.bf16.msra.mxu0 %v4310
  %5793 = vmatpush.bf16.msra.mxu0 %v4309
  %5794 = vmatpush.bf16.msra.mxu0 %v4308
  %5795 = vmatpush.bf16.msra.mxu0 %v4307
  %5796 = vmatpush.bf16.msra.mxu0 %v4306
  %5797 = vmatpush.bf16.msra.mxu0 %v4305
  %5798 = vmatpush.bf16.msra.mxu0 %v4304
  %5799 = vmatmul.bf16.gmra.mxu0 %v1387
  %v5800 = vpop.f32.mrf.mxu0
  %v5801 = vadd.f32 %v5788, %v5800
  %v5802 = vpop.f32.mrf.mxu0
  %5803 = vdwg.mxu0
  %5804 = vmatpush.bf16.msra.mxu0 %v4319
  %5805 = vmatpush.bf16.msra.mxu0 %v4318
  %5806 = vmatpush.bf16.msra.mxu0 %v4317
  %5807 = vmatpush.bf16.msra.mxu0 %v4316
  %5808 = vmatpush.bf16.msra.mxu0 %v4315
  %5809 = vmatpush.bf16.msra.mxu0 %v4314
  %5810 = vmatpush.bf16.msra.mxu0 %v4313
  %5811 = vmatpush.bf16.msra.mxu0 %v4312
  %5812 = vmatmul.bf16.gmra.mxu0 %v1388
  %v5813 = vpop.f32.mrf.mxu0
  %v5814 = vadd.f32 %v5801, %v5813
  %v5815 = vpop.f32.mrf.mxu0
  %5816 = vdwg.mxu0
  %5817 = vmatpush.bf16.msra.mxu0 %v4327
  %5818 = vmatpush.bf16.msra.mxu0 %v4326
  %5819 = vmatpush.bf16.msra.mxu0 %v4325
  %5820 = vmatpush.bf16.msra.mxu0 %v4324
  %5821 = vmatpush.bf16.msra.mxu0 %v4323
  %5822 = vmatpush.bf16.msra.mxu0 %v4322
  %5823 = vmatpush.bf16.msra.mxu0 %v4321
  %5824 = vmatpush.bf16.msra.mxu0 %v4320
  %5825 = vmatmul.bf16.gmra.mxu0 %v1389
  %v5826 = vpop.f32.mrf.mxu0
  %v5827 = vadd.f32 %v5814, %v5826
  %v5828 = vpop.f32.mrf.mxu0
  %5829 = vdwg.mxu0
  %5830 = vmatpush.bf16.msra.mxu0 %v4335
  %5831 = vmatpush.bf16.msra.mxu0 %v4334
  %5832 = vmatpush.bf16.msra.mxu0 %v4333
  %5833 = vmatpush.bf16.msra.mxu0 %v4332
  %5834 = vmatpush.bf16.msra.mxu0 %v4331
  %5835 = vmatpush.bf16.msra.mxu0 %v4330
  %5836 = vmatpush.bf16.msra.mxu0 %v4329
  %5837 = vmatpush.bf16.msra.mxu0 %v4328
  %5838 = vmatmul.bf16.gmra.mxu0 %v1390
  %v5839 = vpop.f32.mrf.mxu0
  %v5840 = vadd.f32 %v5827, %v5839
  %v5841 = vpop.f32.mrf.mxu0
  %5842 = vdwg.mxu0
  %5843 = vmatpush.bf16.msra.mxu0 %v4343
  %5844 = vmatpush.bf16.msra.mxu0 %v4342
  %5845 = vmatpush.bf16.msra.mxu0 %v4341
  %5846 = vmatpush.bf16.msra.mxu0 %v4340
  %5847 = vmatpush.bf16.msra.mxu0 %v4339
  %5848 = vmatpush.bf16.msra.mxu0 %v4338
  %5849 = vmatpush.bf16.msra.mxu0 %v4337
  %5850 = vmatpush.bf16.msra.mxu0 %v4336
  %5851 = vmatmul.bf16.gmra.mxu0 %v1391
  %v5852 = vpop.f32.mrf.mxu0
  %v5853 = vadd.f32 %v5840, %v5852
  %v5854 = vpop.f32.mrf.mxu0
  %5855 = vdwg.mxu0
  %v5856 = vmax.f32 %v5853, 0.0
  %v5857 = vpack.c.bf16 %v5856, %v5856
  %v5858 = vld [vmem:[%s3] sm:$0xf]
  %v5859 = vld [vmem:[%s3 + $0x4] sm:$0xf]
  %v5860 = vld [vmem:[%s3 + $0x8] sm:$0xf]
  %v5861 = vld [vmem:[%s3 + $0xc] sm:$0xf]
  %v5862 = vld [vmem:[%s3 + $0x10] sm:$0xf]
  %v5863 = vld [vmem:[%s3 + $0x14] sm:$0xf]
  %v5864 = vld [vmem:[%s3 + $0x18] sm:$0xf]
  %v5865 = vld [vmem:[%s3 + $0x1c] sm:$0xf]
  %v5866 = vld [vmem:[%s3 + $0x20] sm:$0xf]
  %v5867 = vld [vmem:[%s3 + $0x24] sm:$0xf]
  %v5868 = vld [vmem:[%s3 + $0x28] sm:$0xf]
  %v5869 = vld [vmem:[%s3 + $0x2c] sm:$0xf]
  %v5870 = vld [vmem:[%s3 + $0x30] sm:$0xf]
  %v5871 = vld [vmem:[%s3 + $0x34] sm:$0xf]
  %v5872 = vld [vmem:[%s3 + $0x38] sm:$0xf]
  %v5873 = vld [vmem:[%s3 + $0x3c] sm:$0xf]
  %v5874 = vld [vmem:[%s4] sm:$0x1]
  %v5876 = vperm.slane %v5874, 0
  %v5894 = vunpack.c.l.b16 %v5858
  %v5895 = vunpack.c.l.b16 %v5859
  %v5896 = vunpack.c.l.b16 %v5860
  %v5897 = vunpack.c.l.b16 %v5861
  %v5898 = vunpack.c.l.b16 %v5862
  %v5899 = vunpack.c.l.b16 %v5863
  %v5900 = vunpack.c.l.b16 %v5864
  %v5901 = vunpack.c.l.b16 %v5865
  %v5902 = vunpack.c.l.b16 %v5866
  %v5903 = vunpack.c.l.b16 %v5867
  %v5904 = vunpack.c.l.b16 %v5868
  %v5905 = vunpack.c.l.b16 %v5869
  %v5906 = vunpack.c.l.b16 %v5870
  %v5907 = vunpack.c.l.b16 %v5871
  %v5908 = vunpack.c.l.b16 %v5872
  %v5909 = vunpack.c.l.b16 %v5873
  %v5910 = vpack.c.b16 %v5895, %v5894
  %v5911 = vpack.c.b16 %v5897, %v5896
  %v5912 = vpack.c.b16 %v5899, %v5898
  %v5913 = vpack.c.b16 %v5901, %v5900
  %v5914 = vpack.c.b16 %v5903, %v5902
  %v5915 = vpack.c.b16 %v5905, %v5904
  %v5916 = vpack.c.b16 %v5907, %v5906
  %v5917 = vpack.c.b16 %v5909, %v5908
  %5926 = vmatpush.bf16.msra.mxu0 %v5917
  %5927 = vmatpush.bf16.msra.mxu0 %v5916
  %5928 = vmatpush.bf16.msra.mxu0 %v5915
  %5929 = vmatpush.bf16.msra.mxu0 %v5914
  %5930 = vmatpush.bf16.msra.mxu0 %v5913
  %5931 = vmatpush.bf16.msra.mxu0 %v5912
  %5932 = vmatpush.bf16.msra.mxu0 %v5911
  %5933 = vmatpush.bf16.msra.mxu0 %v5910
  %5934 = vmatmul.bf16.gmra.mxu0 %v5857
  %v5935 = vpop.f32.mrf.mxu0
  %v5936 = vadd.f32 %v5876, %v5935
  %v5937 = vpop.f32.mrf.mxu0
  %5938 = vdwg.mxu0
  %5939 = vst [vmem:[%s5] sm:$0xff] %v5936
  // Predicated region
  $region22: #{cnn_dropout_forward.3} parent=0 // pred_check
    _
  $region23: #{cnn_dropout_forward.3} parent=0 // pred_check_branch
    %5941 = sbr.rel (0) target = $region25
  $region24: #{cnn_dropout_forward.3} parent=0 // pred_region
    _
  $region25: #{cnn_dropout_forward.3} parent=0 // pred_fallthru
    _
  // Predicated region
  $region26: #{cnn_dropout_forward.3} parent=0 // pred_check
    _
  $region27: #{cnn_dropout_forward.3} parent=0 // pred_check_branch
    %5943 = sbr.rel (0) target = $region29
  $region28: #{cnn_dropout_forward.3} parent=0 // pred_region
    _
  $region29: #{cnn_dropout_forward.3} parent=0 // pred_fallthru
    _

</llo_original>
